<compile_context>
chip_gen: v7x
topology: tpu7x:2x2x1
jax: 0.10.0
libtpu: 0.0.40
codegen_flags: <defaults>
</compile_context>

<pallas_src>
import functools

import numpy as np
import jax
import jax.numpy as jnp
from jax import lax
from jax.experimental import pallas as pl
from jax.experimental.pallas import tpu as pltpu

BN_EPS = 1e-5


# ---------------------------------------------------------------------------
# get_kernel_size (mirrors the PyTorch module helper)
# ---------------------------------------------------------------------------
def get_kernel_size(length):
    powers = np.floor(np.log2(length // 2))
    if powers >= 4:
        ks = 2 ** np.arange(4, int(min(powers + 1, 8)))[::-1]
        return [int(k) for k in ks]
    else:
        return [int(np.floor(length // 2))]


def _round_up(x, m):
    return ((x + m - 1) // m) * m


def _pad_kernel_centered(w, kmax):
    """(C_out, C_in, k) -> (C_out, C_in, kmax): zero-pad the tap axis so the
    shared pad_left = kmax//2 window reproduces the per-k 'same' conv."""
    k = w.shape[-1]
    off = kmax // 2 - k // 2
    return jnp.pad(w, ((0, 0), (0, 0), (off, kmax - k - off)))


# ---------------------------------------------------------------------------
# Pallas kernels (grid = (B,); channels on sublanes, length on the lane axis)
# ---------------------------------------------------------------------------
def _conv1_kernel(x_ref, w_ref, y_ref, s_ref, q_ref, *, kmax, lh, l, pad_l):
    """Layer-1 multiscale conv (tap-decomposed) + per-batch BN1 partial stats.

    x_ref: (1, Cin_p, L + 2*(kmax-1))  zero-haloed input slab, one batch elem
    w_ref: (kmax, C1_p, Cin_p)         merged multiscale weights (resident)
    y_ref: (1, C1_p, Lh)               conv output incl. halo columns
    s_ref, q_ref: (1, C1_p, 1)         partial sum / sum-of-squares (valid cols)
    """
    x = x_ref[0]
    c1p = w_ref.shape[1]
    acc = jnp.zeros((c1p, lh), jnp.float32)
    for t in range(kmax):                       # static unroll: in-VMEM im2col
        acc = acc + jnp.dot(w_ref[t], x[:, t:t + lh],
                            preferred_element_type=jnp.float32)
    y_ref[0] = acc.astype(y_ref.dtype)
    valid = acc[:, pad_l:pad_l + l]             # only the L real positions
    s_ref[0] = jnp.sum(valid, axis=1, keepdims=True)
    q_ref[0] = jnp.sum(valid * valid, axis=1, keepdims=True)


def _conv2_kernel(y1_ref, w_ref, sc_ref, sh_ref, y2_ref, s_ref, q_ref, *,
                  kmax, l, pad_l):
    """Fused BN1 (folded scale/shift) + ReLU + layer-2 block-sparse conv
    + per-batch BN2 partial stats.

    y1_ref: (1, C1_p, Lh) pre-BN layer-1 output (halo columns are garbage and
            are re-zeroed below so layer-2 sees proper zero 'same' padding).
    w_ref:  (kmax, C2, C1_p); sc/sh: (C1_p, 1); y2_ref: (1, C2, L).
    """
    a1 = jnp.maximum(y1_ref[0].astype(jnp.float32) * sc_ref[...] + sh_ref[...],
                     0.0)
    col = lax.broadcasted_iota(jnp.int32, a1.shape, 1)
    a1 = jnp.where((col >= pad_l) & (col < pad_l + l), a1, 0.0)
    a1 = a1.astype(w_ref.dtype)
    c2 = w_ref.shape[1]
    acc = jnp.zeros((c2, l), jnp.float32)
    for t in range(kmax):
        acc = acc + jnp.dot(w_ref[t], a1[:, t:t + l],
                            preferred_element_type=jnp.float32)
    y2_ref[0] = acc.astype(y2_ref.dtype)
    s_ref[0] = jnp.sum(acc, axis=1, keepdims=True)
    q_ref[0] = jnp.sum(acc * acc, axis=1, keepdims=True)


def _bn_relu_kernel(y_ref, sc_ref, sh_ref, o_ref):
    """Folded train-mode BatchNorm2 (per-channel scale/shift) + ReLU."""
    o_ref[0] = jnp.maximum(
        y_ref[0].astype(jnp.float32) * sc_ref[...] + sh_ref[...], 0.0)


# ---------------------------------------------------------------------------
# Wrapper
# ---------------------------------------------------------------------------
def _fold_bn(ssum, ssq, gamma, beta, n):
    """Fold training-mode (biased) batch statistics into scale/shift."""
    mean = ssum / n
    var = jnp.maximum(ssq / n - mean * mean, 0.0)
    scale = gamma * lax.rsqrt(var + BN_EPS)
    shift = beta - mean * scale
    return (scale.reshape(-1, 1).astype(jnp.float32),
            shift.reshape(-1, 1).astype(jnp.float32))


def multiscale_inv_conv_net_forward(x, params, *, use_bf16=True):
    """x: (B, C_in, L) f32.  Returns ((B, C_mid, L) f32, coef_matrix)."""
    b, c_in, l = x.shape
    w1_list, w2_list = params["w1"], params["w2"]
    kernel_sizes = [int(w.shape[-1]) for w in w1_list]
    kmax = max(kernel_sizes)
    n_scales = len(kernel_sizes)
    c_mid = w1_list[0].shape[0]
    c1, c2 = c_mid * n_scales, c_mid
    pad_l, pad_r = kmax // 2, kmax - 1 - (kmax // 2)
    lh = l + kmax - 1                   # conv-output columns incl. halo
    lx = l + 2 * (kmax - 1)             # layer-1 input slab length
    cin_p = _round_up(c_in, 8)          # contraction dims -> sublane multiples
    c1_p = _round_up(c1, 8)
    dt = jnp.bfloat16 if use_bf16 else jnp.float32
    n = b * l

    # Merged layer-1 weight bank (kmax, C1_p, Cin_p): branch s occupies output
    # rows [s*C_mid, (s+1)*C_mid); smaller kernels centered in the kmax window.
    w1_cat = jnp.concatenate([_pad_kernel_centered(w, kmax) for w in w1_list],
                             axis=0)
    w1_cat = jnp.pad(w1_cat, ((0, c1_p - c1), (0, cin_p - c_in), (0, 0)))
    w1_m = jnp.transpose(w1_cat, (2, 0, 1)).astype(dt)

    # Merged layer-2 weights (kmax, C2, C1_p): block-sparse over channel groups.
    w2_full = jnp.zeros((c2, c1_p, kmax), jnp.float32)
    for i, w in enumerate(w2_list):
        w2_full = w2_full.at[:, i * c_mid:(i + 1) * c_mid, :].set(
            _pad_kernel_centered(w, kmax))
    w2_m = jnp.transpose(w2_full, (2, 0, 1)).astype(dt)
    # NOTE: layer-2 bias b2 is added *before* train-mode BN2, so it cancels
    # exactly in the normalization and is deliberately omitted from the kernel.
    # TODO(synk): re-introduce b2 if BN2 ever runs with running (eval) stats.

    # Layer-1 input slab: (kmax-1) zero columns on each side so every output
    # column (incl. halo) needs only aligned block I/O + static value slices.
    x_slab = jnp.pad(x, ((0, 0), (0, cin_p - c_in),
                         (2 * pad_l, 2 * pad_r))).astype(dt)

    cparams = pltpu.CompilerParams(dimension_semantics=("parallel",))
    grid = (b,)

    # ---- Pass A: layer-1 conv (+ BN1 partial stats) ------------------------
    y1, s1, q1 = pl.pallas_call(
        functools.partial(_conv1_kernel, kmax=kmax, lh=lh, l=l, pad_l=pad_l),
        grid=grid,
        in_specs=[pl.BlockSpec((1, cin_p, lx), lambda i: (i, 0, 0)),
                  pl.BlockSpec((kmax, c1_p, cin_p), lambda i: (0, 0, 0))],
        out_specs=[pl.BlockSpec((1, c1_p, lh), lambda i: (i, 0, 0)),
                   pl.BlockSpec((1, c1_p, 1), lambda i: (i, 0, 0)),
                   pl.BlockSpec((1, c1_p, 1), lambda i: (i, 0, 0))],
        out_shape=[jax.ShapeDtypeStruct((b, c1_p, lh), dt),
                   jax.ShapeDtypeStruct((b, c1_p, 1), jnp.float32),
                   jax.ShapeDtypeStruct((b, c1_p, 1), jnp.float32)],
        compiler_params=cparams,
    )(x_slab, w1_m)

    g1 = jnp.pad(params["gamma1"], (0, c1_p - c1))
    be1 = jnp.pad(params["beta1"], (0, c1_p - c1))
    scale1, shift1 = _fold_bn(jnp.sum(s1[:, :, 0], axis=0),
                              jnp.sum(q1[:, :, 0], axis=0), g1, be1, n)

    # ---- Pass B: BN1+ReLU fused into layer-2 conv (+ BN2 partial stats) ----
    y2, s2, q2 = pl.pallas_call(
        functools.partial(_conv2_kernel, kmax=kmax, l=l, pad_l=pad_l),
        grid=grid,
        in_specs=[pl.BlockSpec((1, c1_p, lh), lambda i: (i, 0, 0)),
                  pl.BlockSpec((kmax, c2, c1_p), lambda i: (0, 0, 0)),
                  pl.BlockSpec((c1_p, 1), lambda i: (0, 0)),
                  pl.BlockSpec((c1_p, 1), lambda i: (0, 0))],
        out_specs=[pl.BlockSpec((1, c2, l), lambda i: (i, 0, 0)),
                   pl.BlockSpec((1, c2, 1), lambda i: (i, 0, 0)),
                   pl.BlockSpec((1, c2, 1), lambda i: (i, 0, 0))],
        out_shape=[jax.ShapeDtypeStruct((b, c2, l), jnp.float32),
                   jax.ShapeDtypeStruct((b, c2, 1), jnp.float32),
                   jax.ShapeDtypeStruct((b, c2, 1), jnp.float32)],
        compiler_params=cparams,
    )(y1, w2_m, scale1, shift1)

    scale2, shift2 = _fold_bn(jnp.sum(s2[:, :, 0], axis=0),
                              jnp.sum(q2[:, :, 0], axis=0),
                              params["gamma2"], params["beta2"], n)

    # ---- Pass C: BN2 + ReLU (output already in the module's NCL layout) ----
    out = pl.pallas_call(
        _bn_relu_kernel,
        grid=grid,
        in_specs=[pl.BlockSpec((1, c2, l), lambda i: (i, 0, 0)),
                  pl.BlockSpec((c2, 1), lambda i: (0, 0)),
                  pl.BlockSpec((c2, 1), lambda i: (0, 0))],
        out_specs=pl.BlockSpec((1, c2, l), lambda i: (i, 0, 0)),
        out_shape=jax.ShapeDtypeStruct((b, c2, l), jnp.float32),
        compiler_params=cparams,
    )(y2, scale2, shift2)

    # coef_matrix: learned coefficient bank of layer1 (centered-padded to kmax).
    # TODO(synk): align with the real MultiScaleInvConv.coef_matrix if available.
    coef_matrix = jnp.stack([_pad_kernel_centered(w, kmax) for w in w1_list],
                            axis=0)
    return out, coef_matrix


# ---------------------------------------------------------------------------
# Pure-JAX reference (correctness sanity check)
# ---------------------------------------------------------------------------
def _reference_forward(x, params):
    w1_list, w2_list = params["w1"], params["w2"]
    c_mid = w1_list[0].shape[0]

    def conv1d(inp, w):
        k = w.shape[-1]
        return lax.conv_general_dilated(
            inp, w, window_strides=(1,), padding=[(k // 2, k - 1 - k // 2)],
            dimension_numbers=("NCH", "OIH", "NCH"),
            precision=lax.Precision.HIGHEST)

    def bn_relu(y, gamma, beta):
        mean = jnp.mean(y, axis=(0, 2), keepdims=True)
        var = jnp.mean((y - mean) ** 2, axis=(0, 2), keepdims=True)
        yn = (y - mean) / jnp.sqrt(var + BN_EPS)
        return jnp.maximum(yn * gamma[None, :, None] + beta[None, :, None], 0.0)

    y1 = jnp.concatenate([conv1d(x, w) for w in w1_list], axis=1)
    a1 = bn_relu(y1, params["gamma1"], params["beta1"])
    y2 = sum(conv1d(a1[:, i * c_mid:(i + 1) * c_mid, :], w)
             for i, w in enumerate(w2_list))
    y2 = y2 + params["b2"][None, :, None]
    return bn_relu(y2, params["gamma2"], params["beta2"])


if __name__ == "__main__":
    # Module-consistent small shapes: original_length=128, original_dim=4,
    # hidden_dims=[4, 4, 4]  ->  kernel_sizes = [64, 32, 16].
    B, C_IN, L = 2, 4, 128
    hidden_dims = [4, 4, 4]
    kernel_sizes = get_kernel_size(L)
    C_MID = sum(hidden_dims)                  # 12
    S = len(kernel_sizes)                     # 3

    key = jax.random.PRNGKey(0)
    key, kx = jax.random.split(key)
    x = jax.random.normal(kx, (B, C_IN, L), jnp.float32)

    w1_list = []
    for k in kernel_sizes:
        key, kw = jax.random.split(key)
        w1_list.append(jax.random.normal(kw, (C_MID, C_IN, k), jnp.float32)
                       / np.sqrt(C_IN * k))
    w2_list = []
    for k in kernel_sizes:
        key, kw = jax.random.split(key)
        w2_list.append(jax.random.normal(kw, (C_MID, C_MID, k), jnp.float32)
                       / np.sqrt(C_MID * k))
    key, kb = jax.random.split(key)
    b2 = 0.1 * jax.random.normal(kb, (C_MID,), jnp.float32)

    # Non-trivial gamma/beta so the folded-BN fusion and halo re-zeroing are
    # actually exercised (beta != 0 makes relu(shift) != 0 in halo columns).
    key, k1, k2, k3, k4 = jax.random.split(key, 5)
    params = dict(
        w1=w1_list,
        gamma1=1.0 + 0.1 * jax.random.normal(k1, (C_MID * S,), jnp.float32),
        beta1=0.1 * jax.random.normal(k2, (C_MID * S,), jnp.float32),
        w2=w2_list, b2=b2,
        gamma2=1.0 + 0.1 * jax.random.normal(k3, (C_MID,), jnp.float32),
        beta2=0.1 * jax.random.normal(k4, (C_MID,), jnp.float32),
    )

    # Default path: bf16 data movement, f32 accumulation / BN statistics.
    out, coef = multiscale_inv_conv_net_forward(x, params)
    out = jax.block_until_ready(out)
    coef = jax.block_until_ready(coef)

    ref = _reference_forward(x, params)
    assert out.shape == (B, C_MID, L), out.shape
    assert coef.shape == (S, C_MID, C_IN, max(kernel_sizes)), coef.shape
    assert jnp.allclose(out, ref, atol=5e-2, rtol=5e-2), \
        float(jnp.max(jnp.abs(out - ref)))

    # Full-precision path: tighter check of the conv / fused-BN structure.
    out32, _ = multiscale_inv_conv_net_forward(x, params, use_bf16=False)
    out32 = jax.block_until_ready(out32)
    assert jnp.allclose(out32, ref, atol=5e-3, rtol=5e-3), \
        float(jnp.max(jnp.abs(out32 - ref)))

    print("KERNEL_OK")
</pallas_src>

<mosaic_0001>
module attributes {stable_mosaic.version = 11 : i64} {
  func.func @_conv1_kernel(%arg0: i32, %arg1: memref<1x8x254xbf16, #tpu.memory_space<vmem>>, %arg2: memref<64x40x8xbf16, #tpu.memory_space<vmem>>, %arg3: memref<1x40x191xbf16, #tpu.memory_space<vmem>>, %arg4: memref<1x40x1xf32, #tpu.memory_space<vmem>>, %arg5: memref<1x40x1xf32, #tpu.memory_space<vmem>>) attributes {dimension_semantics = [#tpu.dimension_semantics<parallel>], iteration_bounds = array<i64: 2>, scalar_prefetch = 0 : i64, scratch_operands = 0 : i64, tpu.core_type = #tpu.core_type<tc>, window_params = [{transform_indices = @transform_0, window_bounds = array<i64: 1, 8, 254>}, {pipeline_mode = #tpu.pipeline_mode<synchronous>, transform_indices = @transform_1, window_bounds = array<i64: 64, 40, 8>}, {transform_indices = @transform_2, window_bounds = array<i64: 1, 40, 191>}, {transform_indices = @transform_3, window_bounds = array<i64: 1, 40, 1>}, {transform_indices = @transform_4, window_bounds = array<i64: 1, 40, 1>}]} {
    %c0 = arith.constant 0 : index
    %c0_0 = arith.constant 0 : index
    %c0_1 = arith.constant 0 : index
    %0 = vector.load %arg1[%c0, %c0_0, %c0_1] : memref<1x8x254xbf16, #tpu.memory_space<vmem>>, vector<1x8x254xbf16>
    %1 = vector.shape_cast %0 : vector<1x8x254xbf16> to vector<8x254xbf16>
    %cst = arith.constant 0.000000e+00 : f32
    %2 = vector.broadcast %cst : f32 to vector<40x191xf32>
    %c0_2 = arith.constant 0 : index
    %c0_3 = arith.constant 0 : index
    %c0_4 = arith.constant 0 : index
    %3 = vector.load %arg2[%c0_2, %c0_3, %c0_4] : memref<64x40x8xbf16, #tpu.memory_space<vmem>>, vector<1x40x8xbf16>
    %4 = vector.shape_cast %3 : vector<1x40x8xbf16> to vector<40x8xbf16>
    %5 = vector.extract_strided_slice %1 {offsets = [0, 0], sizes = [8, 191], strides = [1, 1]} : vector<8x254xbf16> to vector<8x191xbf16>
    %cst_5 = arith.constant dense<0.000000e+00> : vector<40x191xf32>
    %6 = tpu.matmul %4, %5, %cst_5 {dimension_numbers = #tpu.dot_dimension_numbers<[1], [0], [0], [1], [0, 0, 1, 1], [], []>} : vector<40x8xbf16>, vector<8x191xbf16>, vector<40x191xf32> -> vector<40x191xf32>
    %7 = arith.addf %2, %6 : vector<40x191xf32>
    %c1 = arith.constant 1 : index
    %c0_6 = arith.constant 0 : index
    %c0_7 = arith.constant 0 : index
    %8 = vector.load %arg2[%c1, %c0_6, %c0_7] : memref<64x40x8xbf16, #tpu.memory_space<vmem>>, vector<1x40x8xbf16>
    %9 = vector.shape_cast %8 : vector<1x40x8xbf16> to vector<40x8xbf16>
    %10 = vector.extract_strided_slice %1 {offsets = [0, 1], sizes = [8, 191], strides = [1, 1]} : vector<8x254xbf16> to vector<8x191xbf16>
    %cst_8 = arith.constant dense<0.000000e+00> : vector<40x191xf32>
    %11 = tpu.matmul %9, %10, %cst_8 {dimension_numbers = #tpu.dot_dimension_numbers<[1], [0], [0], [1], [0, 0, 1, 1], [], []>} : vector<40x8xbf16>, vector<8x191xbf16>, vector<40x191xf32> -> vector<40x191xf32>
    %12 = arith.addf %7, %11 : vector<40x191xf32>
    %c2 = arith.constant 2 : index
    %c0_9 = arith.constant 0 : index
    %c0_10 = arith.constant 0 : index
    %13 = vector.load %arg2[%c2, %c0_9, %c0_10] : memref<64x40x8xbf16, #tpu.memory_space<vmem>>, vector<1x40x8xbf16>
    %14 = vector.shape_cast %13 : vector<1x40x8xbf16> to vector<40x8xbf16>
    %15 = vector.extract_strided_slice %1 {offsets = [0, 2], sizes = [8, 191], strides = [1, 1]} : vector<8x254xbf16> to vector<8x191xbf16>
    %cst_11 = arith.constant dense<0.000000e+00> : vector<40x191xf32>
    %16 = tpu.matmul %14, %15, %cst_11 {dimension_numbers = #tpu.dot_dimension_numbers<[1], [0], [0], [1], [0, 0, 1, 1], [], []>} : vector<40x8xbf16>, vector<8x191xbf16>, vector<40x191xf32> -> vector<40x191xf32>
    %17 = arith.addf %12, %16 : vector<40x191xf32>
    %c3 = arith.constant 3 : index
    %c0_12 = arith.constant 0 : index
    %c0_13 = arith.constant 0 : index
    %18 = vector.load %arg2[%c3, %c0_12, %c0_13] : memref<64x40x8xbf16, #tpu.memory_space<vmem>>, vector<1x40x8xbf16>
    %19 = vector.shape_cast %18 : vector<1x40x8xbf16> to vector<40x8xbf16>
    %20 = vector.extract_strided_slice %1 {offsets = [0, 3], sizes = [8, 191], strides = [1, 1]} : vector<8x254xbf16> to vector<8x191xbf16>
    %cst_14 = arith.constant dense<0.000000e+00> : vector<40x191xf32>
    %21 = tpu.matmul %19, %20, %cst_14 {dimension_numbers = #tpu.dot_dimension_numbers<[1], [0], [0], [1], [0, 0, 1, 1], [], []>} : vector<40x8xbf16>, vector<8x191xbf16>, vector<40x191xf32> -> vector<40x191xf32>
    %22 = arith.addf %17, %21 : vector<40x191xf32>
    %c4 = arith.constant 4 : index
    %c0_15 = arith.constant 0 : index
    %c0_16 = arith.constant 0 : index
    %23 = vector.load %arg2[%c4, %c0_15, %c0_16] : memref<64x40x8xbf16, #tpu.memory_space<vmem>>, vector<1x40x8xbf16>
    %24 = vector.shape_cast %23 : vector<1x40x8xbf16> to vector<40x8xbf16>
    %25 = vector.extract_strided_slice %1 {offsets = [0, 4], sizes = [8, 191], strides = [1, 1]} : vector<8x254xbf16> to vector<8x191xbf16>
    %cst_17 = arith.constant dense<0.000000e+00> : vector<40x191xf32>
    %26 = tpu.matmul %24, %25, %cst_17 {dimension_numbers = #tpu.dot_dimension_numbers<[1], [0], [0], [1], [0, 0, 1, 1], [], []>} : vector<40x8xbf16>, vector<8x191xbf16>, vector<40x191xf32> -> vector<40x191xf32>
    %27 = arith.addf %22, %26 : vector<40x191xf32>
    %c5 = arith.constant 5 : index
    %c0_18 = arith.constant 0 : index
    %c0_19 = arith.constant 0 : index
    %28 = vector.load %arg2[%c5, %c0_18, %c0_19] : memref<64x40x8xbf16, #tpu.memory_space<vmem>>, vector<1x40x8xbf16>
    %29 = vector.shape_cast %28 : vector<1x40x8xbf16> to vector<40x8xbf16>
    %30 = vector.extract_strided_slice %1 {offsets = [0, 5], sizes = [8, 191], strides = [1, 1]} : vector<8x254xbf16> to vector<8x191xbf16>
    %cst_20 = arith.constant dense<0.000000e+00> : vector<40x191xf32>
    %31 = tpu.matmul %29, %30, %cst_20 {dimension_numbers = #tpu.dot_dimension_numbers<[1], [0], [0], [1], [0, 0, 1, 1], [], []>} : vector<40x8xbf16>, vector<8x191xbf16>, vector<40x191xf32> -> vector<40x191xf32>
    %32 = arith.addf %27, %31 : vector<40x191xf32>
    %c6 = arith.constant 6 : index
    %c0_21 = arith.constant 0 : index
    %c0_22 = arith.constant 0 : index
    %33 = vector.load %arg2[%c6, %c0_21, %c0_22] : memref<64x40x8xbf16, #tpu.memory_space<vmem>>, vector<1x40x8xbf16>
    %34 = vector.shape_cast %33 : vector<1x40x8xbf16> to vector<40x8xbf16>
    %35 = vector.extract_strided_slice %1 {offsets = [0, 6], sizes = [8, 191], strides = [1, 1]} : vector<8x254xbf16> to vector<8x191xbf16>
    %cst_23 = arith.constant dense<0.000000e+00> : vector<40x191xf32>
    %36 = tpu.matmul %34, %35, %cst_23 {dimension_numbers = #tpu.dot_dimension_numbers<[1], [0], [0], [1], [0, 0, 1, 1], [], []>} : vector<40x8xbf16>, vector<8x191xbf16>, vector<40x191xf32> -> vector<40x191xf32>
    %37 = arith.addf %32, %36 : vector<40x191xf32>
    %c7 = arith.constant 7 : index
    %c0_24 = arith.constant 0 : index
    %c0_25 = arith.constant 0 : index
    %38 = vector.load %arg2[%c7, %c0_24, %c0_25] : memref<64x40x8xbf16, #tpu.memory_space<vmem>>, vector<1x40x8xbf16>
    %39 = vector.shape_cast %38 : vector<1x40x8xbf16> to vector<40x8xbf16>
    %40 = vector.extract_strided_slice %1 {offsets = [0, 7], sizes = [8, 191], strides = [1, 1]} : vector<8x254xbf16> to vector<8x191xbf16>
    %cst_26 = arith.constant dense<0.000000e+00> : vector<40x191xf32>
    %41 = tpu.matmul %39, %40, %cst_26 {dimension_numbers = #tpu.dot_dimension_numbers<[1], [0], [0], [1], [0, 0, 1, 1], [], []>} : vector<40x8xbf16>, vector<8x191xbf16>, vector<40x191xf32> -> vector<40x191xf32>
    %42 = arith.addf %37, %41 : vector<40x191xf32>
    %c8 = arith.constant 8 : index
    %c0_27 = arith.constant 0 : index
    %c0_28 = arith.constant 0 : index
    %43 = vector.load %arg2[%c8, %c0_27, %c0_28] : memref<64x40x8xbf16, #tpu.memory_space<vmem>>, vector<1x40x8xbf16>
    %44 = vector.shape_cast %43 : vector<1x40x8xbf16> to vector<40x8xbf16>
    %45 = vector.extract_strided_slice %1 {offsets = [0, 8], sizes = [8, 191], strides = [1, 1]} : vector<8x254xbf16> to vector<8x191xbf16>
    %cst_29 = arith.constant dense<0.000000e+00> : vector<40x191xf32>
    %46 = tpu.matmul %44, %45, %cst_29 {dimension_numbers = #tpu.dot_dimension_numbers<[1], [0], [0], [1], [0, 0, 1, 1], [], []>} : vector<40x8xbf16>, vector<8x191xbf16>, vector<40x191xf32> -> vector<40x191xf32>
    %47 = arith.addf %42, %46 : vector<40x191xf32>
    %c9 = arith.constant 9 : index
    %c0_30 = arith.constant 0 : index
    %c0_31 = arith.constant 0 : index
    %48 = vector.load %arg2[%c9, %c0_30, %c0_31] : memref<64x40x8xbf16, #tpu.memory_space<vmem>>, vector<1x40x8xbf16>
    %49 = vector.shape_cast %48 : vector<1x40x8xbf16> to vector<40x8xbf16>
    %50 = vector.extract_strided_slice %1 {offsets = [0, 9], sizes = [8, 191], strides = [1, 1]} : vector<8x254xbf16> to vector<8x191xbf16>
    %cst_32 = arith.constant dense<0.000000e+00> : vector<40x191xf32>
    %51 = tpu.matmul %49, %50, %cst_32 {dimension_numbers = #tpu.dot_dimension_numbers<[1], [0], [0], [1], [0, 0, 1, 1], [], []>} : vector<40x8xbf16>, vector<8x191xbf16>, vector<40x191xf32> -> vector<40x191xf32>
    %52 = arith.addf %47, %51 : vector<40x191xf32>
    %c10 = arith.constant 10 : index
    %c0_33 = arith.constant 0 : index
    %c0_34 = arith.constant 0 : index
    %53 = vector.load %arg2[%c10, %c0_33, %c0_34] : memref<64x40x8xbf16, #tpu.memory_space<vmem>>, vector<1x40x8xbf16>
    %54 = vector.shape_cast %53 : vector<1x40x8xbf16> to vector<40x8xbf16>
    %55 = vector.extract_strided_slice %1 {offsets = [0, 10], sizes = [8, 191], strides = [1, 1]} : vector<8x254xbf16> to vector<8x191xbf16>
    %cst_35 = arith.constant dense<0.000000e+00> : vector<40x191xf32>
    %56 = tpu.matmul %54, %55, %cst_35 {dimension_numbers = #tpu.dot_dimension_numbers<[1], [0], [0], [1], [0, 0, 1, 1], [], []>} : vector<40x8xbf16>, vector<8x191xbf16>, vector<40x191xf32> -> vector<40x191xf32>
    %57 = arith.addf %52, %56 : vector<40x191xf32>
    %c11 = arith.constant 11 : index
    %c0_36 = arith.constant 0 : index
    %c0_37 = arith.constant 0 : index
    %58 = vector.load %arg2[%c11, %c0_36, %c0_37] : memref<64x40x8xbf16, #tpu.memory_space<vmem>>, vector<1x40x8xbf16>
    %59 = vector.shape_cast %58 : vector<1x40x8xbf16> to vector<40x8xbf16>
    %60 = vector.extract_strided_slice %1 {offsets = [0, 11], sizes = [8, 191], strides = [1, 1]} : vector<8x254xbf16> to vector<8x191xbf16>
    %cst_38 = arith.constant dense<0.000000e+00> : vector<40x191xf32>
    %61 = tpu.matmul %59, %60, %cst_38 {dimension_numbers = #tpu.dot_dimension_numbers<[1], [0], [0], [1], [0, 0, 1, 1], [], []>} : vector<40x8xbf16>, vector<8x191xbf16>, vector<40x191xf32> -> vector<40x191xf32>
    %62 = arith.addf %57, %61 : vector<40x191xf32>
    %c12 = arith.constant 12 : index
    %c0_39 = arith.constant 0 : index
    %c0_40 = arith.constant 0 : index
    %63 = vector.load %arg2[%c12, %c0_39, %c0_40] : memref<64x40x8xbf16, #tpu.memory_space<vmem>>, vector<1x40x8xbf16>
    %64 = vector.shape_cast %63 : vector<1x40x8xbf16> to vector<40x8xbf16>
    %65 = vector.extract_strided_slice %1 {offsets = [0, 12], sizes = [8, 191], strides = [1, 1]} : vector<8x254xbf16> to vector<8x191xbf16>
    %cst_41 = arith.constant dense<0.000000e+00> : vector<40x191xf32>
    %66 = tpu.matmul %64, %65, %cst_41 {dimension_numbers = #tpu.dot_dimension_numbers<[1], [0], [0], [1], [0, 0, 1, 1], [], []>} : vector<40x8xbf16>, vector<8x191xbf16>, vector<40x191xf32> -> vector<40x191xf32>
    %67 = arith.addf %62, %66 : vector<40x191xf32>
    %c13 = arith.constant 13 : index
    %c0_42 = arith.constant 0 : index
    %c0_43 = arith.constant 0 : index
    %68 = vector.load %arg2[%c13, %c0_42, %c0_43] : memref<64x40x8xbf16, #tpu.memory_space<vmem>>, vector<1x40x8xbf16>
    %69 = vector.shape_cast %68 : vector<1x40x8xbf16> to vector<40x8xbf16>
    %70 = vector.extract_strided_slice %1 {offsets = [0, 13], sizes = [8, 191], strides = [1, 1]} : vector<8x254xbf16> to vector<8x191xbf16>
    %cst_44 = arith.constant dense<0.000000e+00> : vector<40x191xf32>
    %71 = tpu.matmul %69, %70, %cst_44 {dimension_numbers = #tpu.dot_dimension_numbers<[1], [0], [0], [1], [0, 0, 1, 1], [], []>} : vector<40x8xbf16>, vector<8x191xbf16>, vector<40x191xf32> -> vector<40x191xf32>
    %72 = arith.addf %67, %71 : vector<40x191xf32>
    %c14 = arith.constant 14 : index
    %c0_45 = arith.constant 0 : index
    %c0_46 = arith.constant 0 : index
    %73 = vector.load %arg2[%c14, %c0_45, %c0_46] : memref<64x40x8xbf16, #tpu.memory_space<vmem>>, vector<1x40x8xbf16>
    %74 = vector.shape_cast %73 : vector<1x40x8xbf16> to vector<40x8xbf16>
    %75 = vector.extract_strided_slice %1 {offsets = [0, 14], sizes = [8, 191], strides = [1, 1]} : vector<8x254xbf16> to vector<8x191xbf16>
    %cst_47 = arith.constant dense<0.000000e+00> : vector<40x191xf32>
    %76 = tpu.matmul %74, %75, %cst_47 {dimension_numbers = #tpu.dot_dimension_numbers<[1], [0], [0], [1], [0, 0, 1, 1], [], []>} : vector<40x8xbf16>, vector<8x191xbf16>, vector<40x191xf32> -> vector<40x191xf32>
    %77 = arith.addf %72, %76 : vector<40x191xf32>
    %c15 = arith.constant 15 : index
    %c0_48 = arith.constant 0 : index
    %c0_49 = arith.constant 0 : index
    %78 = vector.load %arg2[%c15, %c0_48, %c0_49] : memref<64x40x8xbf16, #tpu.memory_space<vmem>>, vector<1x40x8xbf16>
    %79 = vector.shape_cast %78 : vector<1x40x8xbf16> to vector<40x8xbf16>
    %80 = vector.extract_strided_slice %1 {offsets = [0, 15], sizes = [8, 191], strides = [1, 1]} : vector<8x254xbf16> to vector<8x191xbf16>
    %cst_50 = arith.constant dense<0.000000e+00> : vector<40x191xf32>
    %81 = tpu.matmul %79, %80, %cst_50 {dimension_numbers = #tpu.dot_dimension_numbers<[1], [0], [0], [1], [0, 0, 1, 1], [], []>} : vector<40x8xbf16>, vector<8x191xbf16>, vector<40x191xf32> -> vector<40x191xf32>
    %82 = arith.addf %77, %81 : vector<40x191xf32>
    %c16 = arith.constant 16 : index
    %c0_51 = arith.constant 0 : index
    %c0_52 = arith.constant 0 : index
    %83 = vector.load %arg2[%c16, %c0_51, %c0_52] : memref<64x40x8xbf16, #tpu.memory_space<vmem>>, vector<1x40x8xbf16>
    %84 = vector.shape_cast %83 : vector<1x40x8xbf16> to vector<40x8xbf16>
    %85 = vector.extract_strided_slice %1 {offsets = [0, 16], sizes = [8, 191], strides = [1, 1]} : vector<8x254xbf16> to vector<8x191xbf16>
    %cst_53 = arith.constant dense<0.000000e+00> : vector<40x191xf32>
    %86 = tpu.matmul %84, %85, %cst_53 {dimension_numbers = #tpu.dot_dimension_numbers<[1], [0], [0], [1], [0, 0, 1, 1], [], []>} : vector<40x8xbf16>, vector<8x191xbf16>, vector<40x191xf32> -> vector<40x191xf32>
    %87 = arith.addf %82, %86 : vector<40x191xf32>
    %c17 = arith.constant 17 : index
    %c0_54 = arith.constant 0 : index
    %c0_55 = arith.constant 0 : index
    %88 = vector.load %arg2[%c17, %c0_54, %c0_55] : memref<64x40x8xbf16, #tpu.memory_space<vmem>>, vector<1x40x8xbf16>
    %89 = vector.shape_cast %88 : vector<1x40x8xbf16> to vector<40x8xbf16>
    %90 = vector.extract_strided_slice %1 {offsets = [0, 17], sizes = [8, 191], strides = [1, 1]} : vector<8x254xbf16> to vector<8x191xbf16>
    %cst_56 = arith.constant dense<0.000000e+00> : vector<40x191xf32>
    %91 = tpu.matmul %89, %90, %cst_56 {dimension_numbers = #tpu.dot_dimension_numbers<[1], [0], [0], [1], [0, 0, 1, 1], [], []>} : vector<40x8xbf16>, vector<8x191xbf16>, vector<40x191xf32> -> vector<40x191xf32>
    %92 = arith.addf %87, %91 : vector<40x191xf32>
    %c18 = arith.constant 18 : index
    %c0_57 = arith.constant 0 : index
    %c0_58 = arith.constant 0 : index
    %93 = vector.load %arg2[%c18, %c0_57, %c0_58] : memref<64x40x8xbf16, #tpu.memory_space<vmem>>, vector<1x40x8xbf16>
    %94 = vector.shape_cast %93 : vector<1x40x8xbf16> to vector<40x8xbf16>
    %95 = vector.extract_strided_slice %1 {offsets = [0, 18], sizes = [8, 191], strides = [1, 1]} : vector<8x254xbf16> to vector<8x191xbf16>
    %cst_59 = arith.constant dense<0.000000e+00> : vector<40x191xf32>
    %96 = tpu.matmul %94, %95, %cst_59 {dimension_numbers = #tpu.dot_dimension_numbers<[1], [0], [0], [1], [0, 0, 1, 1], [], []>} : vector<40x8xbf16>, vector<8x191xbf16>, vector<40x191xf32> -> vector<40x191xf32>
    %97 = arith.addf %92, %96 : vector<40x191xf32>
    %c19 = arith.constant 19 : index
    %c0_60 = arith.constant 0 : index
    %c0_61 = arith.constant 0 : index
    %98 = vector.load %arg2[%c19, %c0_60, %c0_61] : memref<64x40x8xbf16, #tpu.memory_space<vmem>>, vector<1x40x8xbf16>
    %99 = vector.shape_cast %98 : vector<1x40x8xbf16> to vector<40x8xbf16>
    %100 = vector.extract_strided_slice %1 {offsets = [0, 19], sizes = [8, 191], strides = [1, 1]} : vector<8x254xbf16> to vector<8x191xbf16>
    %cst_62 = arith.constant dense<0.000000e+00> : vector<40x191xf32>
    %101 = tpu.matmul %99, %100, %cst_62 {dimension_numbers = #tpu.dot_dimension_numbers<[1], [0], [0], [1], [0, 0, 1, 1], [], []>} : vector<40x8xbf16>, vector<8x191xbf16>, vector<40x191xf32> -> vector<40x191xf32>
    %102 = arith.addf %97, %101 : vector<40x191xf32>
    %c20 = arith.constant 20 : index
    %c0_63 = arith.constant 0 : index
    %c0_64 = arith.constant 0 : index
    %103 = vector.load %arg2[%c20, %c0_63, %c0_64] : memref<64x40x8xbf16, #tpu.memory_space<vmem>>, vector<1x40x8xbf16>
    %104 = vector.shape_cast %103 : vector<1x40x8xbf16> to vector<40x8xbf16>
    %105 = vector.extract_strided_slice %1 {offsets = [0, 20], sizes = [8, 191], strides = [1, 1]} : vector<8x254xbf16> to vector<8x191xbf16>
    %cst_65 = arith.constant dense<0.000000e+00> : vector<40x191xf32>
    %106 = tpu.matmul %104, %105, %cst_65 {dimension_numbers = #tpu.dot_dimension_numbers<[1], [0], [0], [1], [0, 0, 1, 1], [], []>} : vector<40x8xbf16>, vector<8x191xbf16>, vector<40x191xf32> -> vector<40x191xf32>
    %107 = arith.addf %102, %106 : vector<40x191xf32>
    %c21 = arith.constant 21 : index
    %c0_66 = arith.constant 0 : index
    %c0_67 = arith.constant 0 : index
    %108 = vector.load %arg2[%c21, %c0_66, %c0_67] : memref<64x40x8xbf16, #tpu.memory_space<vmem>>, vector<1x40x8xbf16>
    %109 = vector.shape_cast %108 : vector<1x40x8xbf16> to vector<40x8xbf16>
    %110 = vector.extract_strided_slice %1 {offsets = [0, 21], sizes = [8, 191], strides = [1, 1]} : vector<8x254xbf16> to vector<8x191xbf16>
    %cst_68 = arith.constant dense<0.000000e+00> : vector<40x191xf32>
    %111 = tpu.matmul %109, %110, %cst_68 {dimension_numbers = #tpu.dot_dimension_numbers<[1], [0], [0], [1], [0, 0, 1, 1], [], []>} : vector<40x8xbf16>, vector<8x191xbf16>, vector<40x191xf32> -> vector<40x191xf32>
    %112 = arith.addf %107, %111 : vector<40x191xf32>
    %c22 = arith.constant 22 : index
    %c0_69 = arith.constant 0 : index
    %c0_70 = arith.constant 0 : index
    %113 = vector.load %arg2[%c22, %c0_69, %c0_70] : memref<64x40x8xbf16, #tpu.memory_space<vmem>>, vector<1x40x8xbf16>
    %114 = vector.shape_cast %113 : vector<1x40x8xbf16> to vector<40x8xbf16>
    %115 = vector.extract_strided_slice %1 {offsets = [0, 22], sizes = [8, 191], strides = [1, 1]} : vector<8x254xbf16> to vector<8x191xbf16>
    %cst_71 = arith.constant dense<0.000000e+00> : vector<40x191xf32>
    %116 = tpu.matmul %114, %115, %cst_71 {dimension_numbers = #tpu.dot_dimension_numbers<[1], [0], [0], [1], [0, 0, 1, 1], [], []>} : vector<40x8xbf16>, vector<8x191xbf16>, vector<40x191xf32> -> vector<40x191xf32>
    %117 = arith.addf %112, %116 : vector<40x191xf32>
    %c23 = arith.constant 23 : index
    %c0_72 = arith.constant 0 : index
    %c0_73 = arith.constant 0 : index
    %118 = vector.load %arg2[%c23, %c0_72, %c0_73] : memref<64x40x8xbf16, #tpu.memory_space<vmem>>, vector<1x40x8xbf16>
    %119 = vector.shape_cast %118 : vector<1x40x8xbf16> to vector<40x8xbf16>
    %120 = vector.extract_strided_slice %1 {offsets = [0, 23], sizes = [8, 191], strides = [1, 1]} : vector<8x254xbf16> to vector<8x191xbf16>
    %cst_74 = arith.constant dense<0.000000e+00> : vector<40x191xf32>
    %121 = tpu.matmul %119, %120, %cst_74 {dimension_numbers = #tpu.dot_dimension_numbers<[1], [0], [0], [1], [0, 0, 1, 1], [], []>} : vector<40x8xbf16>, vector<8x191xbf16>, vector<40x191xf32> -> vector<40x191xf32>
    %122 = arith.addf %117, %121 : vector<40x191xf32>
    %c24 = arith.constant 24 : index
    %c0_75 = arith.constant 0 : index
    %c0_76 = arith.constant 0 : index
    %123 = vector.load %arg2[%c24, %c0_75, %c0_76] : memref<64x40x8xbf16, #tpu.memory_space<vmem>>, vector<1x40x8xbf16>
    %124 = vector.shape_cast %123 : vector<1x40x8xbf16> to vector<40x8xbf16>
    %125 = vector.extract_strided_slice %1 {offsets = [0, 24], sizes = [8, 191], strides = [1, 1]} : vector<8x254xbf16> to vector<8x191xbf16>
    %cst_77 = arith.constant dense<0.000000e+00> : vector<40x191xf32>
    %126 = tpu.matmul %124, %125, %cst_77 {dimension_numbers = #tpu.dot_dimension_numbers<[1], [0], [0], [1], [0, 0, 1, 1], [], []>} : vector<40x8xbf16>, vector<8x191xbf16>, vector<40x191xf32> -> vector<40x191xf32>
    %127 = arith.addf %122, %126 : vector<40x191xf32>
    %c25 = arith.constant 25 : index
    %c0_78 = arith.constant 0 : index
    %c0_79 = arith.constant 0 : index
    %128 = vector.load %arg2[%c25, %c0_78, %c0_79] : memref<64x40x8xbf16, #tpu.memory_space<vmem>>, vector<1x40x8xbf16>
    %129 = vector.shape_cast %128 : vector<1x40x8xbf16> to vector<40x8xbf16>
    %130 = vector.extract_strided_slice %1 {offsets = [0, 25], sizes = [8, 191], strides = [1, 1]} : vector<8x254xbf16> to vector<8x191xbf16>
    %cst_80 = arith.constant dense<0.000000e+00> : vector<40x191xf32>
    %131 = tpu.matmul %129, %130, %cst_80 {dimension_numbers = #tpu.dot_dimension_numbers<[1], [0], [0], [1], [0, 0, 1, 1], [], []>} : vector<40x8xbf16>, vector<8x191xbf16>, vector<40x191xf32> -> vector<40x191xf32>
    %132 = arith.addf %127, %131 : vector<40x191xf32>
    %c26 = arith.constant 26 : index
    %c0_81 = arith.constant 0 : index
    %c0_82 = arith.constant 0 : index
    %133 = vector.load %arg2[%c26, %c0_81, %c0_82] : memref<64x40x8xbf16, #tpu.memory_space<vmem>>, vector<1x40x8xbf16>
    %134 = vector.shape_cast %133 : vector<1x40x8xbf16> to vector<40x8xbf16>
    %135 = vector.extract_strided_slice %1 {offsets = [0, 26], sizes = [8, 191], strides = [1, 1]} : vector<8x254xbf16> to vector<8x191xbf16>
    %cst_83 = arith.constant dense<0.000000e+00> : vector<40x191xf32>
    %136 = tpu.matmul %134, %135, %cst_83 {dimension_numbers = #tpu.dot_dimension_numbers<[1], [0], [0], [1], [0, 0, 1, 1], [], []>} : vector<40x8xbf16>, vector<8x191xbf16>, vector<40x191xf32> -> vector<40x191xf32>
    %137 = arith.addf %132, %136 : vector<40x191xf32>
    %c27 = arith.constant 27 : index
    %c0_84 = arith.constant 0 : index
    %c0_85 = arith.constant 0 : index
    %138 = vector.load %arg2[%c27, %c0_84, %c0_85] : memref<64x40x8xbf16, #tpu.memory_space<vmem>>, vector<1x40x8xbf16>
    %139 = vector.shape_cast %138 : vector<1x40x8xbf16> to vector<40x8xbf16>
    %140 = vector.extract_strided_slice %1 {offsets = [0, 27], sizes = [8, 191], strides = [1, 1]} : vector<8x254xbf16> to vector<8x191xbf16>
    %cst_86 = arith.constant dense<0.000000e+00> : vector<40x191xf32>
    %141 = tpu.matmul %139, %140, %cst_86 {dimension_numbers = #tpu.dot_dimension_numbers<[1], [0], [0], [1], [0, 0, 1, 1], [], []>} : vector<40x8xbf16>, vector<8x191xbf16>, vector<40x191xf32> -> vector<40x191xf32>
    %142 = arith.addf %137, %141 : vector<40x191xf32>
    %c28 = arith.constant 28 : index
    %c0_87 = arith.constant 0 : index
    %c0_88 = arith.constant 0 : index
    %143 = vector.load %arg2[%c28, %c0_87, %c0_88] : memref<64x40x8xbf16, #tpu.memory_space<vmem>>, vector<1x40x8xbf16>
    %144 = vector.shape_cast %143 : vector<1x40x8xbf16> to vector<40x8xbf16>
    %145 = vector.extract_strided_slice %1 {offsets = [0, 28], sizes = [8, 191], strides = [1, 1]} : vector<8x254xbf16> to vector<8x191xbf16>
    %cst_89 = arith.constant dense<0.000000e+00> : vector<40x191xf32>
    %146 = tpu.matmul %144, %145, %cst_89 {dimension_numbers = #tpu.dot_dimension_numbers<[1], [0], [0], [1], [0, 0, 1, 1], [], []>} : vector<40x8xbf16>, vector<8x191xbf16>, vector<40x191xf32> -> vector<40x191xf32>
    %147 = arith.addf %142, %146 : vector<40x191xf32>
    %c29 = arith.constant 29 : index
    %c0_90 = arith.constant 0 : index
    %c0_91 = arith.constant 0 : index
    %148 = vector.load %arg2[%c29, %c0_90, %c0_91] : memref<64x40x8xbf16, #tpu.memory_space<vmem>>, vector<1x40x8xbf16>
    %149 = vector.shape_cast %148 : vector<1x40x8xbf16> to vector<40x8xbf16>
    %150 = vector.extract_strided_slice %1 {offsets = [0, 29], sizes = [8, 191], strides = [1, 1]} : vector<8x254xbf16> to vector<8x191xbf16>
    %cst_92 = arith.constant dense<0.000000e+00> : vector<40x191xf32>
    %151 = tpu.matmul %149, %150, %cst_92 {dimension_numbers = #tpu.dot_dimension_numbers<[1], [0], [0], [1], [0, 0, 1, 1], [], []>} : vector<40x8xbf16>, vector<8x191xbf16>, vector<40x191xf32> -> vector<40x191xf32>
    %152 = arith.addf %147, %151 : vector<40x191xf32>
    %c30 = arith.constant 30 : index
    %c0_93 = arith.constant 0 : index
    %c0_94 = arith.constant 0 : index
    %153 = vector.load %arg2[%c30, %c0_93, %c0_94] : memref<64x40x8xbf16, #tpu.memory_space<vmem>>, vector<1x40x8xbf16>
    %154 = vector.shape_cast %153 : vector<1x40x8xbf16> to vector<40x8xbf16>
    %155 = vector.extract_strided_slice %1 {offsets = [0, 30], sizes = [8, 191], strides = [1, 1]} : vector<8x254xbf16> to vector<8x191xbf16>
    %cst_95 = arith.constant dense<0.000000e+00> : vector<40x191xf32>
    %156 = tpu.matmul %154, %155, %cst_95 {dimension_numbers = #tpu.dot_dimension_numbers<[1], [0], [0], [1], [0, 0, 1, 1], [], []>} : vector<40x8xbf16>, vector<8x191xbf16>, vector<40x191xf32> -> vector<40x191xf32>
    %157 = arith.addf %152, %156 : vector<40x191xf32>
    %c31 = arith.constant 31 : index
    %c0_96 = arith.constant 0 : index
    %c0_97 = arith.constant 0 : index
    %158 = vector.load %arg2[%c31, %c0_96, %c0_97] : memref<64x40x8xbf16, #tpu.memory_space<vmem>>, vector<1x40x8xbf16>
    %159 = vector.shape_cast %158 : vector<1x40x8xbf16> to vector<40x8xbf16>
    %160 = vector.extract_strided_slice %1 {offsets = [0, 31], sizes = [8, 191], strides = [1, 1]} : vector<8x254xbf16> to vector<8x191xbf16>
    %cst_98 = arith.constant dense<0.000000e+00> : vector<40x191xf32>
    %161 = tpu.matmul %159, %160, %cst_98 {dimension_numbers = #tpu.dot_dimension_numbers<[1], [0], [0], [1], [0, 0, 1, 1], [], []>} : vector<40x8xbf16>, vector<8x191xbf16>, vector<40x191xf32> -> vector<40x191xf32>
    %162 = arith.addf %157, %161 : vector<40x191xf32>
    %c32 = arith.constant 32 : index
    %c0_99 = arith.constant 0 : index
    %c0_100 = arith.constant 0 : index
    %163 = vector.load %arg2[%c32, %c0_99, %c0_100] : memref<64x40x8xbf16, #tpu.memory_space<vmem>>, vector<1x40x8xbf16>
    %164 = vector.shape_cast %163 : vector<1x40x8xbf16> to vector<40x8xbf16>
    %165 = vector.extract_strided_slice %1 {offsets = [0, 32], sizes = [8, 191], strides = [1, 1]} : vector<8x254xbf16> to vector<8x191xbf16>
    %cst_101 = arith.constant dense<0.000000e+00> : vector<40x191xf32>
    %166 = tpu.matmul %164, %165, %cst_101 {dimension_numbers = #tpu.dot_dimension_numbers<[1], [0], [0], [1], [0, 0, 1, 1], [], []>} : vector<40x8xbf16>, vector<8x191xbf16>, vector<40x191xf32> -> vector<40x191xf32>
    %167 = arith.addf %162, %166 : vector<40x191xf32>
    %c33 = arith.constant 33 : index
    %c0_102 = arith.constant 0 : index
    %c0_103 = arith.constant 0 : index
    %168 = vector.load %arg2[%c33, %c0_102, %c0_103] : memref<64x40x8xbf16, #tpu.memory_space<vmem>>, vector<1x40x8xbf16>
    %169 = vector.shape_cast %168 : vector<1x40x8xbf16> to vector<40x8xbf16>
    %170 = vector.extract_strided_slice %1 {offsets = [0, 33], sizes = [8, 191], strides = [1, 1]} : vector<8x254xbf16> to vector<8x191xbf16>
    %cst_104 = arith.constant dense<0.000000e+00> : vector<40x191xf32>
    %171 = tpu.matmul %169, %170, %cst_104 {dimension_numbers = #tpu.dot_dimension_numbers<[1], [0], [0], [1], [0, 0, 1, 1], [], []>} : vector<40x8xbf16>, vector<8x191xbf16>, vector<40x191xf32> -> vector<40x191xf32>
    %172 = arith.addf %167, %171 : vector<40x191xf32>
    %c34 = arith.constant 34 : index
    %c0_105 = arith.constant 0 : index
    %c0_106 = arith.constant 0 : index
    %173 = vector.load %arg2[%c34, %c0_105, %c0_106] : memref<64x40x8xbf16, #tpu.memory_space<vmem>>, vector<1x40x8xbf16>
    %174 = vector.shape_cast %173 : vector<1x40x8xbf16> to vector<40x8xbf16>
    %175 = vector.extract_strided_slice %1 {offsets = [0, 34], sizes = [8, 191], strides = [1, 1]} : vector<8x254xbf16> to vector<8x191xbf16>
    %cst_107 = arith.constant dense<0.000000e+00> : vector<40x191xf32>
    %176 = tpu.matmul %174, %175, %cst_107 {dimension_numbers = #tpu.dot_dimension_numbers<[1], [0], [0], [1], [0, 0, 1, 1], [], []>} : vector<40x8xbf16>, vector<8x191xbf16>, vector<40x191xf32> -> vector<40x191xf32>
    %177 = arith.addf %172, %176 : vector<40x191xf32>
    %c35 = arith.constant 35 : index
    %c0_108 = arith.constant 0 : index
    %c0_109 = arith.constant 0 : index
    %178 = vector.load %arg2[%c35, %c0_108, %c0_109] : memref<64x40x8xbf16, #tpu.memory_space<vmem>>, vector<1x40x8xbf16>
    %179 = vector.shape_cast %178 : vector<1x40x8xbf16> to vector<40x8xbf16>
    %180 = vector.extract_strided_slice %1 {offsets = [0, 35], sizes = [8, 191], strides = [1, 1]} : vector<8x254xbf16> to vector<8x191xbf16>
    %cst_110 = arith.constant dense<0.000000e+00> : vector<40x191xf32>
    %181 = tpu.matmul %179, %180, %cst_110 {dimension_numbers = #tpu.dot_dimension_numbers<[1], [0], [0], [1], [0, 0, 1, 1], [], []>} : vector<40x8xbf16>, vector<8x191xbf16>, vector<40x191xf32> -> vector<40x191xf32>
    %182 = arith.addf %177, %181 : vector<40x191xf32>
    %c36 = arith.constant 36 : index
    %c0_111 = arith.constant 0 : index
    %c0_112 = arith.constant 0 : index
    %183 = vector.load %arg2[%c36, %c0_111, %c0_112] : memref<64x40x8xbf16, #tpu.memory_space<vmem>>, vector<1x40x8xbf16>
    %184 = vector.shape_cast %183 : vector<1x40x8xbf16> to vector<40x8xbf16>
    %185 = vector.extract_strided_slice %1 {offsets = [0, 36], sizes = [8, 191], strides = [1, 1]} : vector<8x254xbf16> to vector<8x191xbf16>
    %cst_113 = arith.constant dense<0.000000e+00> : vector<40x191xf32>
    %186 = tpu.matmul %184, %185, %cst_113 {dimension_numbers = #tpu.dot_dimension_numbers<[1], [0], [0], [1], [0, 0, 1, 1], [], []>} : vector<40x8xbf16>, vector<8x191xbf16>, vector<40x191xf32> -> vector<40x191xf32>
    %187 = arith.addf %182, %186 : vector<40x191xf32>
    %c37 = arith.constant 37 : index
    %c0_114 = arith.constant 0 : index
    %c0_115 = arith.constant 0 : index
    %188 = vector.load %arg2[%c37, %c0_114, %c0_115] : memref<64x40x8xbf16, #tpu.memory_space<vmem>>, vector<1x40x8xbf16>
    %189 = vector.shape_cast %188 : vector<1x40x8xbf16> to vector<40x8xbf16>
    %190 = vector.extract_strided_slice %1 {offsets = [0, 37], sizes = [8, 191], strides = [1, 1]} : vector<8x254xbf16> to vector<8x191xbf16>
    %cst_116 = arith.constant dense<0.000000e+00> : vector<40x191xf32>
    %191 = tpu.matmul %189, %190, %cst_116 {dimension_numbers = #tpu.dot_dimension_numbers<[1], [0], [0], [1], [0, 0, 1, 1], [], []>} : vector<40x8xbf16>, vector<8x191xbf16>, vector<40x191xf32> -> vector<40x191xf32>
    %192 = arith.addf %187, %191 : vector<40x191xf32>
    %c38 = arith.constant 38 : index
    %c0_117 = arith.constant 0 : index
    %c0_118 = arith.constant 0 : index
    %193 = vector.load %arg2[%c38, %c0_117, %c0_118] : memref<64x40x8xbf16, #tpu.memory_space<vmem>>, vector<1x40x8xbf16>
    %194 = vector.shape_cast %193 : vector<1x40x8xbf16> to vector<40x8xbf16>
    %195 = vector.extract_strided_slice %1 {offsets = [0, 38], sizes = [8, 191], strides = [1, 1]} : vector<8x254xbf16> to vector<8x191xbf16>
    %cst_119 = arith.constant dense<0.000000e+00> : vector<40x191xf32>
    %196 = tpu.matmul %194, %195, %cst_119 {dimension_numbers = #tpu.dot_dimension_numbers<[1], [0], [0], [1], [0, 0, 1, 1], [], []>} : vector<40x8xbf16>, vector<8x191xbf16>, vector<40x191xf32> -> vector<40x191xf32>
    %197 = arith.addf %192, %196 : vector<40x191xf32>
    %c39 = arith.constant 39 : index
    %c0_120 = arith.constant 0 : index
    %c0_121 = arith.constant 0 : index
    %198 = vector.load %arg2[%c39, %c0_120, %c0_121] : memref<64x40x8xbf16, #tpu.memory_space<vmem>>, vector<1x40x8xbf16>
    %199 = vector.shape_cast %198 : vector<1x40x8xbf16> to vector<40x8xbf16>
    %200 = vector.extract_strided_slice %1 {offsets = [0, 39], sizes = [8, 191], strides = [1, 1]} : vector<8x254xbf16> to vector<8x191xbf16>
    %cst_122 = arith.constant dense<0.000000e+00> : vector<40x191xf32>
    %201 = tpu.matmul %199, %200, %cst_122 {dimension_numbers = #tpu.dot_dimension_numbers<[1], [0], [0], [1], [0, 0, 1, 1], [], []>} : vector<40x8xbf16>, vector<8x191xbf16>, vector<40x191xf32> -> vector<40x191xf32>
    %202 = arith.addf %197, %201 : vector<40x191xf32>
    %c40 = arith.constant 40 : index
    %c0_123 = arith.constant 0 : index
    %c0_124 = arith.constant 0 : index
    %203 = vector.load %arg2[%c40, %c0_123, %c0_124] : memref<64x40x8xbf16, #tpu.memory_space<vmem>>, vector<1x40x8xbf16>
    %204 = vector.shape_cast %203 : vector<1x40x8xbf16> to vector<40x8xbf16>
    %205 = vector.extract_strided_slice %1 {offsets = [0, 40], sizes = [8, 191], strides = [1, 1]} : vector<8x254xbf16> to vector<8x191xbf16>
    %cst_125 = arith.constant dense<0.000000e+00> : vector<40x191xf32>
    %206 = tpu.matmul %204, %205, %cst_125 {dimension_numbers = #tpu.dot_dimension_numbers<[1], [0], [0], [1], [0, 0, 1, 1], [], []>} : vector<40x8xbf16>, vector<8x191xbf16>, vector<40x191xf32> -> vector<40x191xf32>
    %207 = arith.addf %202, %206 : vector<40x191xf32>
    %c41 = arith.constant 41 : index
    %c0_126 = arith.constant 0 : index
    %c0_127 = arith.constant 0 : index
    %208 = vector.load %arg2[%c41, %c0_126, %c0_127] : memref<64x40x8xbf16, #tpu.memory_space<vmem>>, vector<1x40x8xbf16>
    %209 = vector.shape_cast %208 : vector<1x40x8xbf16> to vector<40x8xbf16>
    %210 = vector.extract_strided_slice %1 {offsets = [0, 41], sizes = [8, 191], strides = [1, 1]} : vector<8x254xbf16> to vector<8x191xbf16>
    %cst_128 = arith.constant dense<0.000000e+00> : vector<40x191xf32>
    %211 = tpu.matmul %209, %210, %cst_128 {dimension_numbers = #tpu.dot_dimension_numbers<[1], [0], [0], [1], [0, 0, 1, 1], [], []>} : vector<40x8xbf16>, vector<8x191xbf16>, vector<40x191xf32> -> vector<40x191xf32>
    %212 = arith.addf %207, %211 : vector<40x191xf32>
    %c42 = arith.constant 42 : index
    %c0_129 = arith.constant 0 : index
    %c0_130 = arith.constant 0 : index
    %213 = vector.load %arg2[%c42, %c0_129, %c0_130] : memref<64x40x8xbf16, #tpu.memory_space<vmem>>, vector<1x40x8xbf16>
    %214 = vector.shape_cast %213 : vector<1x40x8xbf16> to vector<40x8xbf16>
    %215 = vector.extract_strided_slice %1 {offsets = [0, 42], sizes = [8, 191], strides = [1, 1]} : vector<8x254xbf16> to vector<8x191xbf16>
    %cst_131 = arith.constant dense<0.000000e+00> : vector<40x191xf32>
    %216 = tpu.matmul %214, %215, %cst_131 {dimension_numbers = #tpu.dot_dimension_numbers<[1], [0], [0], [1], [0, 0, 1, 1], [], []>} : vector<40x8xbf16>, vector<8x191xbf16>, vector<40x191xf32> -> vector<40x191xf32>
    %217 = arith.addf %212, %216 : vector<40x191xf32>
    %c43 = arith.constant 43 : index
    %c0_132 = arith.constant 0 : index
    %c0_133 = arith.constant 0 : index
    %218 = vector.load %arg2[%c43, %c0_132, %c0_133] : memref<64x40x8xbf16, #tpu.memory_space<vmem>>, vector<1x40x8xbf16>
    %219 = vector.shape_cast %218 : vector<1x40x8xbf16> to vector<40x8xbf16>
    %220 = vector.extract_strided_slice %1 {offsets = [0, 43], sizes = [8, 191], strides = [1, 1]} : vector<8x254xbf16> to vector<8x191xbf16>
    %cst_134 = arith.constant dense<0.000000e+00> : vector<40x191xf32>
    %221 = tpu.matmul %219, %220, %cst_134 {dimension_numbers = #tpu.dot_dimension_numbers<[1], [0], [0], [1], [0, 0, 1, 1], [], []>} : vector<40x8xbf16>, vector<8x191xbf16>, vector<40x191xf32> -> vector<40x191xf32>
    %222 = arith.addf %217, %221 : vector<40x191xf32>
    %c44 = arith.constant 44 : index
    %c0_135 = arith.constant 0 : index
    %c0_136 = arith.constant 0 : index
    %223 = vector.load %arg2[%c44, %c0_135, %c0_136] : memref<64x40x8xbf16, #tpu.memory_space<vmem>>, vector<1x40x8xbf16>
    %224 = vector.shape_cast %223 : vector<1x40x8xbf16> to vector<40x8xbf16>
    %225 = vector.extract_strided_slice %1 {offsets = [0, 44], sizes = [8, 191], strides = [1, 1]} : vector<8x254xbf16> to vector<8x191xbf16>
    %cst_137 = arith.constant dense<0.000000e+00> : vector<40x191xf32>
    %226 = tpu.matmul %224, %225, %cst_137 {dimension_numbers = #tpu.dot_dimension_numbers<[1], [0], [0], [1], [0, 0, 1, 1], [], []>} : vector<40x8xbf16>, vector<8x191xbf16>, vector<40x191xf32> -> vector<40x191xf32>
    %227 = arith.addf %222, %226 : vector<40x191xf32>
    %c45 = arith.constant 45 : index
    %c0_138 = arith.constant 0 : index
    %c0_139 = arith.constant 0 : index
    %228 = vector.load %arg2[%c45, %c0_138, %c0_139] : memref<64x40x8xbf16, #tpu.memory_space<vmem>>, vector<1x40x8xbf16>
    %229 = vector.shape_cast %228 : vector<1x40x8xbf16> to vector<40x8xbf16>
    %230 = vector.extract_strided_slice %1 {offsets = [0, 45], sizes = [8, 191], strides = [1, 1]} : vector<8x254xbf16> to vector<8x191xbf16>
    %cst_140 = arith.constant dense<0.000000e+00> : vector<40x191xf32>
    %231 = tpu.matmul %229, %230, %cst_140 {dimension_numbers = #tpu.dot_dimension_numbers<[1], [0], [0], [1], [0, 0, 1, 1], [], []>} : vector<40x8xbf16>, vector<8x191xbf16>, vector<40x191xf32> -> vector<40x191xf32>
    %232 = arith.addf %227, %231 : vector<40x191xf32>
    %c46 = arith.constant 46 : index
    %c0_141 = arith.constant 0 : index
    %c0_142 = arith.constant 0 : index
    %233 = vector.load %arg2[%c46, %c0_141, %c0_142] : memref<64x40x8xbf16, #tpu.memory_space<vmem>>, vector<1x40x8xbf16>
    %234 = vector.shape_cast %233 : vector<1x40x8xbf16> to vector<40x8xbf16>
    %235 = vector.extract_strided_slice %1 {offsets = [0, 46], sizes = [8, 191], strides = [1, 1]} : vector<8x254xbf16> to vector<8x191xbf16>
    %cst_143 = arith.constant dense<0.000000e+00> : vector<40x191xf32>
    %236 = tpu.matmul %234, %235, %cst_143 {dimension_numbers = #tpu.dot_dimension_numbers<[1], [0], [0], [1], [0, 0, 1, 1], [], []>} : vector<40x8xbf16>, vector<8x191xbf16>, vector<40x191xf32> -> vector<40x191xf32>
    %237 = arith.addf %232, %236 : vector<40x191xf32>
    %c47 = arith.constant 47 : index
    %c0_144 = arith.constant 0 : index
    %c0_145 = arith.constant 0 : index
    %238 = vector.load %arg2[%c47, %c0_144, %c0_145] : memref<64x40x8xbf16, #tpu.memory_space<vmem>>, vector<1x40x8xbf16>
    %239 = vector.shape_cast %238 : vector<1x40x8xbf16> to vector<40x8xbf16>
    %240 = vector.extract_strided_slice %1 {offsets = [0, 47], sizes = [8, 191], strides = [1, 1]} : vector<8x254xbf16> to vector<8x191xbf16>
    %cst_146 = arith.constant dense<0.000000e+00> : vector<40x191xf32>
    %241 = tpu.matmul %239, %240, %cst_146 {dimension_numbers = #tpu.dot_dimension_numbers<[1], [0], [0], [1], [0, 0, 1, 1], [], []>} : vector<40x8xbf16>, vector<8x191xbf16>, vector<40x191xf32> -> vector<40x191xf32>
    %242 = arith.addf %237, %241 : vector<40x191xf32>
    %c48 = arith.constant 48 : index
    %c0_147 = arith.constant 0 : index
    %c0_148 = arith.constant 0 : index
    %243 = vector.load %arg2[%c48, %c0_147, %c0_148] : memref<64x40x8xbf16, #tpu.memory_space<vmem>>, vector<1x40x8xbf16>
    %244 = vector.shape_cast %243 : vector<1x40x8xbf16> to vector<40x8xbf16>
    %245 = vector.extract_strided_slice %1 {offsets = [0, 48], sizes = [8, 191], strides = [1, 1]} : vector<8x254xbf16> to vector<8x191xbf16>
    %cst_149 = arith.constant dense<0.000000e+00> : vector<40x191xf32>
    %246 = tpu.matmul %244, %245, %cst_149 {dimension_numbers = #tpu.dot_dimension_numbers<[1], [0], [0], [1], [0, 0, 1, 1], [], []>} : vector<40x8xbf16>, vector<8x191xbf16>, vector<40x191xf32> -> vector<40x191xf32>
    %247 = arith.addf %242, %246 : vector<40x191xf32>
    %c49 = arith.constant 49 : index
    %c0_150 = arith.constant 0 : index
    %c0_151 = arith.constant 0 : index
    %248 = vector.load %arg2[%c49, %c0_150, %c0_151] : memref<64x40x8xbf16, #tpu.memory_space<vmem>>, vector<1x40x8xbf16>
    %249 = vector.shape_cast %248 : vector<1x40x8xbf16> to vector<40x8xbf16>
    %250 = vector.extract_strided_slice %1 {offsets = [0, 49], sizes = [8, 191], strides = [1, 1]} : vector<8x254xbf16> to vector<8x191xbf16>
    %cst_152 = arith.constant dense<0.000000e+00> : vector<40x191xf32>
    %251 = tpu.matmul %249, %250, %cst_152 {dimension_numbers = #tpu.dot_dimension_numbers<[1], [0], [0], [1], [0, 0, 1, 1], [], []>} : vector<40x8xbf16>, vector<8x191xbf16>, vector<40x191xf32> -> vector<40x191xf32>
    %252 = arith.addf %247, %251 : vector<40x191xf32>
    %c50 = arith.constant 50 : index
    %c0_153 = arith.constant 0 : index
    %c0_154 = arith.constant 0 : index
    %253 = vector.load %arg2[%c50, %c0_153, %c0_154] : memref<64x40x8xbf16, #tpu.memory_space<vmem>>, vector<1x40x8xbf16>
    %254 = vector.shape_cast %253 : vector<1x40x8xbf16> to vector<40x8xbf16>
    %255 = vector.extract_strided_slice %1 {offsets = [0, 50], sizes = [8, 191], strides = [1, 1]} : vector<8x254xbf16> to vector<8x191xbf16>
    %cst_155 = arith.constant dense<0.000000e+00> : vector<40x191xf32>
    %256 = tpu.matmul %254, %255, %cst_155 {dimension_numbers = #tpu.dot_dimension_numbers<[1], [0], [0], [1], [0, 0, 1, 1], [], []>} : vector<40x8xbf16>, vector<8x191xbf16>, vector<40x191xf32> -> vector<40x191xf32>
    %257 = arith.addf %252, %256 : vector<40x191xf32>
    %c51 = arith.constant 51 : index
    %c0_156 = arith.constant 0 : index
    %c0_157 = arith.constant 0 : index
    %258 = vector.load %arg2[%c51, %c0_156, %c0_157] : memref<64x40x8xbf16, #tpu.memory_space<vmem>>, vector<1x40x8xbf16>
    %259 = vector.shape_cast %258 : vector<1x40x8xbf16> to vector<40x8xbf16>
    %260 = vector.extract_strided_slice %1 {offsets = [0, 51], sizes = [8, 191], strides = [1, 1]} : vector<8x254xbf16> to vector<8x191xbf16>
    %cst_158 = arith.constant dense<0.000000e+00> : vector<40x191xf32>
    %261 = tpu.matmul %259, %260, %cst_158 {dimension_numbers = #tpu.dot_dimension_numbers<[1], [0], [0], [1], [0, 0, 1, 1], [], []>} : vector<40x8xbf16>, vector<8x191xbf16>, vector<40x191xf32> -> vector<40x191xf32>
    %262 = arith.addf %257, %261 : vector<40x191xf32>
    %c52 = arith.constant 52 : index
    %c0_159 = arith.constant 0 : index
    %c0_160 = arith.constant 0 : index
    %263 = vector.load %arg2[%c52, %c0_159, %c0_160] : memref<64x40x8xbf16, #tpu.memory_space<vmem>>, vector<1x40x8xbf16>
    %264 = vector.shape_cast %263 : vector<1x40x8xbf16> to vector<40x8xbf16>
    %265 = vector.extract_strided_slice %1 {offsets = [0, 52], sizes = [8, 191], strides = [1, 1]} : vector<8x254xbf16> to vector<8x191xbf16>
    %cst_161 = arith.constant dense<0.000000e+00> : vector<40x191xf32>
    %266 = tpu.matmul %264, %265, %cst_161 {dimension_numbers = #tpu.dot_dimension_numbers<[1], [0], [0], [1], [0, 0, 1, 1], [], []>} : vector<40x8xbf16>, vector<8x191xbf16>, vector<40x191xf32> -> vector<40x191xf32>
    %267 = arith.addf %262, %266 : vector<40x191xf32>
    %c53 = arith.constant 53 : index
    %c0_162 = arith.constant 0 : index
    %c0_163 = arith.constant 0 : index
    %268 = vector.load %arg2[%c53, %c0_162, %c0_163] : memref<64x40x8xbf16, #tpu.memory_space<vmem>>, vector<1x40x8xbf16>
    %269 = vector.shape_cast %268 : vector<1x40x8xbf16> to vector<40x8xbf16>
    %270 = vector.extract_strided_slice %1 {offsets = [0, 53], sizes = [8, 191], strides = [1, 1]} : vector<8x254xbf16> to vector<8x191xbf16>
    %cst_164 = arith.constant dense<0.000000e+00> : vector<40x191xf32>
    %271 = tpu.matmul %269, %270, %cst_164 {dimension_numbers = #tpu.dot_dimension_numbers<[1], [0], [0], [1], [0, 0, 1, 1], [], []>} : vector<40x8xbf16>, vector<8x191xbf16>, vector<40x191xf32> -> vector<40x191xf32>
    %272 = arith.addf %267, %271 : vector<40x191xf32>
    %c54 = arith.constant 54 : index
    %c0_165 = arith.constant 0 : index
    %c0_166 = arith.constant 0 : index
    %273 = vector.load %arg2[%c54, %c0_165, %c0_166] : memref<64x40x8xbf16, #tpu.memory_space<vmem>>, vector<1x40x8xbf16>
    %274 = vector.shape_cast %273 : vector<1x40x8xbf16> to vector<40x8xbf16>
    %275 = vector.extract_strided_slice %1 {offsets = [0, 54], sizes = [8, 191], strides = [1, 1]} : vector<8x254xbf16> to vector<8x191xbf16>
    %cst_167 = arith.constant dense<0.000000e+00> : vector<40x191xf32>
    %276 = tpu.matmul %274, %275, %cst_167 {dimension_numbers = #tpu.dot_dimension_numbers<[1], [0], [0], [1], [0, 0, 1, 1], [], []>} : vector<40x8xbf16>, vector<8x191xbf16>, vector<40x191xf32> -> vector<40x191xf32>
    %277 = arith.addf %272, %276 : vector<40x191xf32>
    %c55 = arith.constant 55 : index
    %c0_168 = arith.constant 0 : index
    %c0_169 = arith.constant 0 : index
    %278 = vector.load %arg2[%c55, %c0_168, %c0_169] : memref<64x40x8xbf16, #tpu.memory_space<vmem>>, vector<1x40x8xbf16>
    %279 = vector.shape_cast %278 : vector<1x40x8xbf16> to vector<40x8xbf16>
    %280 = vector.extract_strided_slice %1 {offsets = [0, 55], sizes = [8, 191], strides = [1, 1]} : vector<8x254xbf16> to vector<8x191xbf16>
    %cst_170 = arith.constant dense<0.000000e+00> : vector<40x191xf32>
    %281 = tpu.matmul %279, %280, %cst_170 {dimension_numbers = #tpu.dot_dimension_numbers<[1], [0], [0], [1], [0, 0, 1, 1], [], []>} : vector<40x8xbf16>, vector<8x191xbf16>, vector<40x191xf32> -> vector<40x191xf32>
    %282 = arith.addf %277, %281 : vector<40x191xf32>
    %c56 = arith.constant 56 : index
    %c0_171 = arith.constant 0 : index
    %c0_172 = arith.constant 0 : index
    %283 = vector.load %arg2[%c56, %c0_171, %c0_172] : memref<64x40x8xbf16, #tpu.memory_space<vmem>>, vector<1x40x8xbf16>
    %284 = vector.shape_cast %283 : vector<1x40x8xbf16> to vector<40x8xbf16>
    %285 = vector.extract_strided_slice %1 {offsets = [0, 56], sizes = [8, 191], strides = [1, 1]} : vector<8x254xbf16> to vector<8x191xbf16>
    %cst_173 = arith.constant dense<0.000000e+00> : vector<40x191xf32>
    %286 = tpu.matmul %284, %285, %cst_173 {dimension_numbers = #tpu.dot_dimension_numbers<[1], [0], [0], [1], [0, 0, 1, 1], [], []>} : vector<40x8xbf16>, vector<8x191xbf16>, vector<40x191xf32> -> vector<40x191xf32>
    %287 = arith.addf %282, %286 : vector<40x191xf32>
    %c57 = arith.constant 57 : index
    %c0_174 = arith.constant 0 : index
    %c0_175 = arith.constant 0 : index
    %288 = vector.load %arg2[%c57, %c0_174, %c0_175] : memref<64x40x8xbf16, #tpu.memory_space<vmem>>, vector<1x40x8xbf16>
    %289 = vector.shape_cast %288 : vector<1x40x8xbf16> to vector<40x8xbf16>
    %290 = vector.extract_strided_slice %1 {offsets = [0, 57], sizes = [8, 191], strides = [1, 1]} : vector<8x254xbf16> to vector<8x191xbf16>
    %cst_176 = arith.constant dense<0.000000e+00> : vector<40x191xf32>
    %291 = tpu.matmul %289, %290, %cst_176 {dimension_numbers = #tpu.dot_dimension_numbers<[1], [0], [0], [1], [0, 0, 1, 1], [], []>} : vector<40x8xbf16>, vector<8x191xbf16>, vector<40x191xf32> -> vector<40x191xf32>
    %292 = arith.addf %287, %291 : vector<40x191xf32>
    %c58 = arith.constant 58 : index
    %c0_177 = arith.constant 0 : index
    %c0_178 = arith.constant 0 : index
    %293 = vector.load %arg2[%c58, %c0_177, %c0_178] : memref<64x40x8xbf16, #tpu.memory_space<vmem>>, vector<1x40x8xbf16>
    %294 = vector.shape_cast %293 : vector<1x40x8xbf16> to vector<40x8xbf16>
    %295 = vector.extract_strided_slice %1 {offsets = [0, 58], sizes = [8, 191], strides = [1, 1]} : vector<8x254xbf16> to vector<8x191xbf16>
    %cst_179 = arith.constant dense<0.000000e+00> : vector<40x191xf32>
    %296 = tpu.matmul %294, %295, %cst_179 {dimension_numbers = #tpu.dot_dimension_numbers<[1], [0], [0], [1], [0, 0, 1, 1], [], []>} : vector<40x8xbf16>, vector<8x191xbf16>, vector<40x191xf32> -> vector<40x191xf32>
    %297 = arith.addf %292, %296 : vector<40x191xf32>
    %c59 = arith.constant 59 : index
    %c0_180 = arith.constant 0 : index
    %c0_181 = arith.constant 0 : index
    %298 = vector.load %arg2[%c59, %c0_180, %c0_181] : memref<64x40x8xbf16, #tpu.memory_space<vmem>>, vector<1x40x8xbf16>
    %299 = vector.shape_cast %298 : vector<1x40x8xbf16> to vector<40x8xbf16>
    %300 = vector.extract_strided_slice %1 {offsets = [0, 59], sizes = [8, 191], strides = [1, 1]} : vector<8x254xbf16> to vector<8x191xbf16>
    %cst_182 = arith.constant dense<0.000000e+00> : vector<40x191xf32>
    %301 = tpu.matmul %299, %300, %cst_182 {dimension_numbers = #tpu.dot_dimension_numbers<[1], [0], [0], [1], [0, 0, 1, 1], [], []>} : vector<40x8xbf16>, vector<8x191xbf16>, vector<40x191xf32> -> vector<40x191xf32>
    %302 = arith.addf %297, %301 : vector<40x191xf32>
    %c60 = arith.constant 60 : index
    %c0_183 = arith.constant 0 : index
    %c0_184 = arith.constant 0 : index
    %303 = vector.load %arg2[%c60, %c0_183, %c0_184] : memref<64x40x8xbf16, #tpu.memory_space<vmem>>, vector<1x40x8xbf16>
    %304 = vector.shape_cast %303 : vector<1x40x8xbf16> to vector<40x8xbf16>
    %305 = vector.extract_strided_slice %1 {offsets = [0, 60], sizes = [8, 191], strides = [1, 1]} : vector<8x254xbf16> to vector<8x191xbf16>
    %cst_185 = arith.constant dense<0.000000e+00> : vector<40x191xf32>
    %306 = tpu.matmul %304, %305, %cst_185 {dimension_numbers = #tpu.dot_dimension_numbers<[1], [0], [0], [1], [0, 0, 1, 1], [], []>} : vector<40x8xbf16>, vector<8x191xbf16>, vector<40x191xf32> -> vector<40x191xf32>
    %307 = arith.addf %302, %306 : vector<40x191xf32>
    %c61 = arith.constant 61 : index
    %c0_186 = arith.constant 0 : index
    %c0_187 = arith.constant 0 : index
    %308 = vector.load %arg2[%c61, %c0_186, %c0_187] : memref<64x40x8xbf16, #tpu.memory_space<vmem>>, vector<1x40x8xbf16>
    %309 = vector.shape_cast %308 : vector<1x40x8xbf16> to vector<40x8xbf16>
    %310 = vector.extract_strided_slice %1 {offsets = [0, 61], sizes = [8, 191], strides = [1, 1]} : vector<8x254xbf16> to vector<8x191xbf16>
    %cst_188 = arith.constant dense<0.000000e+00> : vector<40x191xf32>
    %311 = tpu.matmul %309, %310, %cst_188 {dimension_numbers = #tpu.dot_dimension_numbers<[1], [0], [0], [1], [0, 0, 1, 1], [], []>} : vector<40x8xbf16>, vector<8x191xbf16>, vector<40x191xf32> -> vector<40x191xf32>
    %312 = arith.addf %307, %311 : vector<40x191xf32>
    %c62 = arith.constant 62 : index
    %c0_189 = arith.constant 0 : index
    %c0_190 = arith.constant 0 : index
    %313 = vector.load %arg2[%c62, %c0_189, %c0_190] : memref<64x40x8xbf16, #tpu.memory_space<vmem>>, vector<1x40x8xbf16>
    %314 = vector.shape_cast %313 : vector<1x40x8xbf16> to vector<40x8xbf16>
    %315 = vector.extract_strided_slice %1 {offsets = [0, 62], sizes = [8, 191], strides = [1, 1]} : vector<8x254xbf16> to vector<8x191xbf16>
    %cst_191 = arith.constant dense<0.000000e+00> : vector<40x191xf32>
    %316 = tpu.matmul %314, %315, %cst_191 {dimension_numbers = #tpu.dot_dimension_numbers<[1], [0], [0], [1], [0, 0, 1, 1], [], []>} : vector<40x8xbf16>, vector<8x191xbf16>, vector<40x191xf32> -> vector<40x191xf32>
    %317 = arith.addf %312, %316 : vector<40x191xf32>
    %c63 = arith.constant 63 : index
    %c0_192 = arith.constant 0 : index
    %c0_193 = arith.constant 0 : index
    %318 = vector.load %arg2[%c63, %c0_192, %c0_193] : memref<64x40x8xbf16, #tpu.memory_space<vmem>>, vector<1x40x8xbf16>
    %319 = vector.shape_cast %318 : vector<1x40x8xbf16> to vector<40x8xbf16>
    %320 = vector.extract_strided_slice %1 {offsets = [0, 63], sizes = [8, 191], strides = [1, 1]} : vector<8x254xbf16> to vector<8x191xbf16>
    %cst_194 = arith.constant dense<0.000000e+00> : vector<40x191xf32>
    %321 = tpu.matmul %319, %320, %cst_194 {dimension_numbers = #tpu.dot_dimension_numbers<[1], [0], [0], [1], [0, 0, 1, 1], [], []>} : vector<40x8xbf16>, vector<8x191xbf16>, vector<40x191xf32> -> vector<40x191xf32>
    %322 = arith.addf %317, %321 : vector<40x191xf32>
    %323 = arith.truncf %322 : vector<40x191xf32> to vector<40x191xbf16>
    %c0_195 = arith.constant 0 : index
    %c0_196 = arith.constant 0 : index
    %c0_197 = arith.constant 0 : index
    %324 = vector.load %arg3[%c0_195, %c0_196, %c0_197] : memref<1x40x191xbf16, #tpu.memory_space<vmem>>, vector<1x40x191xbf16>
    %325 = vector.shape_cast %324 : vector<1x40x191xbf16> to vector<40x191xbf16>
    %326 = vector.shape_cast %323 : vector<40x191xbf16> to vector<1x40x191xbf16>
    tpu.vector_store %arg3[%c0_195, %c0_196, %c0_197], %326 {strides = array<i32>} : memref<1x40x191xbf16, #tpu.memory_space<vmem>>, vector<1x40x191xbf16>,
    %327 = vector.extract_strided_slice %322 {offsets = [0, 32], sizes = [40, 128], strides = [1, 1]} : vector<40x191xf32> to vector<40x128xf32>
    %cst_198 = arith.constant dense<0.000000e+00> : vector<40xf32>
    %328 = vector.multi_reduction <add>, %327, %cst_198 [1] : vector<40x128xf32> to vector<40xf32>
    %329 = vector.shape_cast %328 : vector<40xf32> to vector<40x1xf32>
    %c0_199 = arith.constant 0 : index
    %c0_200 = arith.constant 0 : index
    %c0_201 = arith.constant 0 : index
    %330 = vector.load %arg4[%c0_199, %c0_200, %c0_201] : memref<1x40x1xf32, #tpu.memory_space<vmem>>, vector<1x40x1xf32>
    %331 = vector.shape_cast %330 : vector<1x40x1xf32> to vector<40x1xf32>
    %332 = vector.shape_cast %329 : vector<40x1xf32> to vector<1x40x1xf32>
    tpu.vector_store %arg4[%c0_199, %c0_200, %c0_201], %332 {strides = array<i32>} : memref<1x40x1xf32, #tpu.memory_space<vmem>>, vector<1x40x1xf32>,
    %333 = arith.mulf %327, %327 : vector<40x128xf32>
    %cst_202 = arith.constant dense<0.000000e+00> : vector<40xf32>
    %334 = vector.multi_reduction <add>, %333, %cst_202 [1] : vector<40x128xf32> to vector<40xf32>
    %335 = vector.shape_cast %334 : vector<40xf32> to vector<40x1xf32>
    %c0_203 = arith.constant 0 : index
    %c0_204 = arith.constant 0 : index
    %c0_205 = arith.constant 0 : index
    %336 = vector.load %arg5[%c0_203, %c0_204, %c0_205] : memref<1x40x1xf32, #tpu.memory_space<vmem>>, vector<1x40x1xf32>
    %337 = vector.shape_cast %336 : vector<1x40x1xf32> to vector<40x1xf32>
    %338 = vector.shape_cast %335 : vector<40x1xf32> to vector<1x40x1xf32>
    tpu.vector_store %arg5[%c0_203, %c0_204, %c0_205], %338 {strides = array<i32>} : memref<1x40x1xf32, #tpu.memory_space<vmem>>, vector<1x40x1xf32>,
    return
  }
  func.func @transform_0(%arg0: i32) -> (i32, i32, i32) {
    %c0_i32 = arith.constant 0 : i32
    %c0_i32_0 = arith.constant 0 : i32
    %c0_i32_1 = arith.constant 0 : i32
    return %arg0, %c0_i32, %c0_i32_0 : i32, i32, i32
  }
  func.func @transform_1(%arg0: i32) -> (i32, i32, i32) {
    %c0_i32 = arith.constant 0 : i32
    %c0_i32_0 = arith.constant 0 : i32
    %c0_i32_1 = arith.constant 0 : i32
    %c0_i32_2 = arith.constant 0 : i32
    return %c0_i32, %c0_i32_0, %c0_i32_1 : i32, i32, i32
  }
  func.func @transform_2(%arg0: i32) -> (i32, i32, i32) {
    %c0_i32 = arith.constant 0 : i32
    %c0_i32_0 = arith.constant 0 : i32
    %c0_i32_1 = arith.constant 0 : i32
    return %arg0, %c0_i32, %c0_i32_0 : i32, i32, i32
  }
  func.func @transform_3(%arg0: i32) -> (i32, i32, i32) {
    %c0_i32 = arith.constant 0 : i32
    %c0_i32_0 = arith.constant 0 : i32
    %c0_i32_1 = arith.constant 0 : i32
    return %arg0, %c0_i32, %c0_i32_0 : i32, i32, i32
  }
  func.func @transform_4(%arg0: i32) -> (i32, i32, i32) {
    %c0_i32 = arith.constant 0 : i32
    %c0_i32_0 = arith.constant 0 : i32
    %c0_i32_1 = arith.constant 0 : i32
    return %arg0, %c0_i32, %c0_i32_0 : i32, i32, i32
  }
}

</mosaic_0001>

<llo_original>
// kernel: tpu_custom_call.1
$region0: #{tpu_custom_call.1}
  #allocation0 [shape = 'u32[]', space=smem, size = 0x4, offset = 0x4, fixed_abs, tag = 'smem constant byte address 0x4 - core index']
  #allocation1 [shape = 'u32[144,128]{1,0:T(1,128)}', space=vmem, size = 0x12000, scoped, tag = 'internal scratch']
  %s0 = inlined_call_operand.vmem [shape: bf16[2,8,254], index: 0, kind: input, shape index: {}]
  %s1 = inlined_call_operand.vmem [shape: bf16[64,40,8], index: 1, kind: input, shape index: {}]
  %s2 = inlined_call_operand.hbm [shape: bf16[2,40,191], index: 2, kind: output, shape index: {0}]
  %s3 = inlined_call_operand.vmem [shape: f32[2,40,1], index: 3, kind: output, shape index: {1}]
  %s4 = inlined_call_operand.vmem [shape: f32[2,40,1], index: 4, kind: output, shape index: {2}]
  %5 = xla_tuple %s2, %s3, %s4
  %s6 = sld [smem:[#allocation0]]
  $region57: #{tpu_custom_call.1} parent=0
    _
  %s8 = ssub.s32 1, %s6
  %s9 = scalar_select 0, %s8, %s6
  $region1: #{tpu_custom_call.1} parent=0
    #allocation2 [shape = 'u8[40960]{0}', space=vmem, size = 0xa000, scoped, tag = 'output window, operand 0']
    #allocation3 [shape = 's32[2]{0}', space=sflag, size = 0x8, scoped, tag = 'scoped memory for tpu_custom_call.1']
    %10 = vsyncpa [#allocation3], 0
    %s11 = scalar_lea.sflag [#allocation3], 1
    %12 = vsyncpa %s11, 0
    loop: start=0, step=1, limit=4
    $region2: #{tpu_custom_call.1} parent=1 // loop_pre_header
      _
    $region3: #{tpu_custom_call.1} parent=1 // loop_header
      %s14 = sphi 0, %s18
      %p15 = scmp.ge.s32.totalorder %s14, 4
      %s24 = sphi 0, %s26
      %s27 = sphi 0, %s24
      %s28 = sphi 0, %s27
      %s44 = sphi 0, %s28
      %s48 = sphi 0, %s48
      %s50 = sphi 0, %s48
      %s51 = sphi 0, %s50
      %s65 = sphi 0, %s51
      %s71 = sphi 0, %s73
      %s74 = sphi 0, %s71
      %s75 = sphi 0, %s74
      %s91 = sphi 0, %s75
      %s97 = sphi 0, %s99
      %s100 = sphi 0, %s97
      %s101 = sphi 0, %s100
      %s117 = sphi 0, %s101
      %s123 = sphi 0, %s125
      %s126 = sphi 0, %s123
      %s127 = sphi 0, %s126
      %s143 = sphi 0, %s127
    $region4: #{tpu_custom_call.1} parent=1 // loop_header_branch
      %17 = sbr.rel (%p15) target = $region8
    $region5: #{tpu_custom_call.1} parent=1 // loop_body
      %s19 = ssub.s32 %s14, 1
      %s20 = ssub.s32 %s14, 2
      %s21 = sadd.s32 %s14, 1
      %s22 = ssub.s32 %s14, %s21
      %p23 = scmp.eq.s32.totalorder %s22, 0
      %s25 = sadd.s32 %s24, 1
      %s26 = scalar_select %p23, %s24, %s25
      %p29 = pneg %p23
      %p30 = scmp.eq.s32.totalorder %s14, 1
      %p31 = por %p29, %p30
      %p32 = scmp.ne.s32.totalorder %s24, %s27
      %p33 = scmp.eq.s32.totalorder %s14, 0
      %p34 = por %p32, %p33
      %p35 = scmp.ne.s32.totalorder %s24, %s27
      %p36 = scmp.eq.s32.totalorder %s19, 1
      %p37 = por %p35, %p36
      %p38 = scmp.ne.s32.totalorder %s27, %s28
      %p39 = scmp.eq.s32.totalorder %s19, 0
      %p40 = por %p38, %p39
      %p41 = scmp.ne.s32.totalorder %s27, %s28
      %p42 = scmp.eq.s32.totalorder %s20, 1
      %p43 = por %p41, %p42
      %p45 = scmp.ne.s32.totalorder %s28, %s44
      %p46 = scmp.eq.s32.totalorder %s20, 0
      %p47 = por %p45, %p46
      %s49 = sadd.s32 %s48, 1
      %p52 = scmp.eq.s32.totalorder %s14, 1
      %p53 = scmp.ne.s32.totalorder %s48, %s50
      %p54 = scmp.eq.s32.totalorder %s14, 0
      %p55 = por %p53, %p54
      %p56 = scmp.ne.s32.totalorder %s48, %s50
      %p57 = scmp.eq.s32.totalorder %s19, 1
      %p58 = por %p56, %p57
      %p59 = scmp.ne.s32.totalorder %s50, %s51
      %p60 = scmp.eq.s32.totalorder %s19, 0
      %p61 = por %p59, %p60
      %p62 = scmp.ne.s32.totalorder %s50, %s51
      %p63 = scmp.eq.s32.totalorder %s20, 1
      %p64 = por %p62, %p63
      %p66 = scmp.ne.s32.totalorder %s51, %s65
      %p67 = scmp.eq.s32.totalorder %s20, 0
      %p68 = por %p66, %p67
      %s69 = ssub.s32 %s14, %s21
      %p70 = scmp.eq.s32.totalorder %s69, 0
      %s72 = sadd.s32 %s71, 1
      %s73 = scalar_select %p70, %s71, %s72
      %p76 = pneg %p70
      %p77 = scmp.eq.s32.totalorder %s14, 1
      %p78 = por %p76, %p77
      %p79 = scmp.ne.s32.totalorder %s71, %s74
      %p80 = scmp.eq.s32.totalorder %s14, 0
      %p81 = por %p79, %p80
      %p82 = scmp.ne.s32.totalorder %s71, %s74
      %p83 = scmp.eq.s32.totalorder %s19, 1
      %p84 = por %p82, %p83
      %p85 = scmp.ne.s32.totalorder %s74, %s75
      %p86 = scmp.eq.s32.totalorder %s19, 0
      %p87 = por %p85, %p86
      %p88 = scmp.ne.s32.totalorder %s74, %s75
      %p89 = scmp.eq.s32.totalorder %s20, 1
      %p90 = por %p88, %p89
      %p92 = scmp.ne.s32.totalorder %s75, %s91
      %p93 = scmp.eq.s32.totalorder %s20, 0
      %p94 = por %p92, %p93
      %s95 = ssub.s32 %s14, %s21
      %p96 = scmp.eq.s32.totalorder %s95, 0
      %s98 = sadd.s32 %s97, 1
      %s99 = scalar_select %p96, %s97, %s98
      %p102 = pneg %p96
      %p103 = scmp.eq.s32.totalorder %s14, 1
      %p104 = por %p102, %p103
      %p105 = scmp.ne.s32.totalorder %s97, %s100
      %p106 = scmp.eq.s32.totalorder %s14, 0
      %p107 = por %p105, %p106
      %p108 = scmp.ne.s32.totalorder %s97, %s100
      %p109 = scmp.eq.s32.totalorder %s19, 1
      %p110 = por %p108, %p109
      %p111 = scmp.ne.s32.totalorder %s100, %s101
      %p112 = scmp.eq.s32.totalorder %s19, 0
      %p113 = por %p111, %p112
      %p114 = scmp.ne.s32.totalorder %s100, %s101
      %p115 = scmp.eq.s32.totalorder %s20, 1
      %p116 = por %p114, %p115
      %p118 = scmp.ne.s32.totalorder %s101, %s117
      %p119 = scmp.eq.s32.totalorder %s20, 0
      %p120 = por %p118, %p119
      %s121 = ssub.s32 %s14, %s21
      %p122 = scmp.eq.s32.totalorder %s121, 0
      %s124 = sadd.s32 %s123, 1
      %s125 = scalar_select %p122, %s123, %s124
      %p128 = pneg %p122
      %p129 = scmp.eq.s32.totalorder %s14, 1
      %p130 = por %p128, %p129
      %p131 = scmp.ne.s32.totalorder %s123, %s126
      %p132 = scmp.eq.s32.totalorder %s14, 0
      %p133 = por %p131, %p132
      %p134 = scmp.ne.s32.totalorder %s123, %s126
      %p135 = scmp.eq.s32.totalorder %s19, 1
      %p136 = por %p134, %p135
      %p137 = scmp.ne.s32.totalorder %s126, %s127
      %p138 = scmp.eq.s32.totalorder %s19, 0
      %p139 = por %p137, %p138
      %p140 = scmp.ne.s32.totalorder %s126, %s127
      %p141 = scmp.eq.s32.totalorder %s20, 1
      %p142 = por %p140, %p141
      %p144 = scmp.ne.s32.totalorder %s127, %s143
      %p145 = scmp.eq.s32.totalorder %s20, 0
      %p146 = por %p144, %p145
      %p147 = scmp.le.s32.totalorder 1, %s14
      %p148 = scmp.lt.s32.totalorder %s14, 3
      %p149 = pnand %p147, %p148
      %p150 = pneg %p149
      // Predicated region
      $region9: #{tpu_custom_call.1} parent=5 // pred_check
        _
      $region10: #{tpu_custom_call.1} parent=5 // pred_check_branch
        %152 = sbr.rel (%p149) target = $region12
      $region11: #{tpu_custom_call.1} parent=5 // pred_region
        %s153 = ssub.s32 %s14, 1
        // Predicated region
        $region13: #{tpu_custom_call.1} parent=11 // pred_check
          %p154 = pneg %p61
        $region14: #{tpu_custom_call.1} parent=11 // pred_check_branch
          %156 = sbr.rel (%p154) target = $region16
        $region15: #{tpu_custom_call.1} parent=11 // pred_region
          _
        $region16: #{tpu_custom_call.1} parent=11 // pred_fallthru
          _
      $region12: #{tpu_custom_call.1} parent=5 // pred_fallthru
        _
      %p157 = scmp.lt.s32.totalorder %s14, 2
      // Predicated region
      $region17: #{tpu_custom_call.1} parent=5 // pred_check
        %p158 = pneg %p157
      $region18: #{tpu_custom_call.1} parent=5 // pred_check_branch
        %160 = sbr.rel (%p158) target = $region20
      $region19: #{tpu_custom_call.1} parent=5 // pred_region
        // Predicated region
        $region21: #{tpu_custom_call.1} parent=19 // pred_check
          %p161 = pneg %p34
        $region22: #{tpu_custom_call.1} parent=19 // pred_check_branch
          %163 = sbr.rel (%p161) target = $region24
        $region23: #{tpu_custom_call.1} parent=19 // pred_region
          %p164 = scmp.lt.s32.totalorder %s14, 1
          %s165 = scalar_select %p164, %s14, 1
          %s166 = smul.addr %s165, 2
          %s167 = smul.addr %s166, 4
          %s168 = scalar_lea.vmem %s0, %s167
        $region24: #{tpu_custom_call.1} parent=19 // pred_fallthru
          _
      $region20: #{tpu_custom_call.1} parent=5 // pred_fallthru
        _
      %p169 = scmp.le.s32.totalorder 1, %s14
      %p170 = scmp.lt.s32.totalorder %s14, 3
      %p171 = pnand %p169, %p170
      %p172 = pneg %p171
      // Predicated region
      $region25: #{tpu_custom_call.1} parent=5 // pred_check
        _
      $region26: #{tpu_custom_call.1} parent=5 // pred_check_branch
        %174 = sbr.rel (%p171) target = $region28
      $region27: #{tpu_custom_call.1} parent=5 // pred_region
        %s175 = ssub.s32 %s14, 1
        %p176 = scmp.lt.s32.totalorder %s19, 1
        %s177 = scalar_select %p176, %s19, 1
        %s178 = smul.addr %s177, 2
        %s179 = smul.addr %s178, 4
        %s180 = scalar_lea.vmem %s0, %s179
        %p181 = pneg %p40
        %p182 = pneg %p37
        %p183 = pneg %p61
        %p184 = pneg %p58
        %p185 = pneg %p87
        %p186 = pneg %p84
        %s187 = sand.u32 %s74, 1
        %s188 = scalar_lea.sflag [#allocation3], %s187
        %s189 = sand.u32 %s74, 1
        %s190 = smul.addr %s189, 40
        %s191 = scalar_lea.vmem [#allocation2], %s190
        %p192 = pneg %p113
        %p193 = pneg %p110
        %p194 = scmp.lt.s32.totalorder %s19, 1
        %s195 = scalar_select %p194, %s19, 1
        %s196 = smul.addr %s195, 5
        %s197 = smul.addr %s196, 8
        %s198 = scalar_lea.vmem %s3, %s197
        %p199 = pneg %p139
        %p200 = pneg %p136
        %p201 = scmp.lt.s32.totalorder %s19, 1
        %s202 = scalar_select %p201, %s19, 1
        %s203 = smul.addr %s202, 5
        %s204 = smul.addr %s203, 8
        %s205 = scalar_lea.vmem %s4, %s204
        %p206 = scmp.lt.s32.totalorder %s19, 1
        %s207 = scalar_select %p206, %s19, 1
        %s208 = smul.addr %s207, 2
        %s209 = smul.addr %s208, 4
        %s210 = scalar_lea.vmem %s0, %s209
        %p211 = scmp.lt.s32.totalorder %s19, 1
        %s212 = scalar_select %p211, %s19, 1
        %s213 = smul.addr %s212, 5
        %s214 = smul.addr %s213, 8
        %s215 = scalar_lea.vmem %s3, %s214
        %p216 = scmp.lt.s32.totalorder %s19, 1
        %s217 = scalar_select %p216, %s19, 1
        %s218 = smul.addr %s217, 5
        %s219 = smul.addr %s218, 8
        %s220 = scalar_lea.vmem %s4, %s219
        %v222 = vld [vmem:[%s210] sm:$0xff]
        %v223 = vld [vmem:[%s1] sm:$0xf]
        %v224 = vld [vmem:[%s1 + $0x4] sm:$0xf]
        %v225 = vld [vmem:[%s1 + $0x8] sm:$0xf]
        %v226 = vld [vmem:[%s1 + $0xc] sm:$0xf]
        %v227 = vld [vmem:[%s1 + $0x10] sm:$0xf]
        %s228 = scalar_lea.vmem %s1, 20
        %v229 = vld [vmem:[%s228] sm:$0xf]
        %v230 = vld [vmem:[%s228 + $0x4] sm:$0xf]
        %v231 = vld [vmem:[%s228 + $0x8] sm:$0xf]
        %v232 = vld [vmem:[%s228 + $0xc] sm:$0xf]
        %v233 = vld [vmem:[%s228 + $0x10] sm:$0xf]
        %v239 = vunpack.c.l.b16 %v229
        %v240 = vunpack.c.l.b16 %v230
        %v241 = vunpack.c.l.b16 %v231
        %v242 = vunpack.c.l.b16 %v232
        %v243 = vunpack.c.l.b16 %v233
        %v244 = vpack.c.b16 %v240, %v239
        %v245 = vpack.c.b16 %v242, %v241
        %v246 = vpack.c.b16 %v243, %v243
        %v248 = vunpack.c.l.b16 %v222
        %v249 = vunpack.c.h.b16 %v222
        %v250 = vpack.c.b16 %v248, %v248
        %v251 = vpack.c.b16 %v249, %v249
        %252 = vrot.lane.b32.xlu0 %v250, 127
        %v253 = vpop.permute.xlu0 %252
        %254 = vrot.lane.b32.xlu0 %v251, 127
        %v255 = vpop.permute.xlu0 %254
        %vm256 = vcmask 1039360
        %v257 = vsel %vm256, %v253, %v255
        %vm258 = vcmask 64512
        %v260 = vsel %vm258, %v244, 0
        %v263 = vsel %vm258, %v245, 0
        %v266 = vsel %vm258, %v246, 0
        %vm268 = vcmask 1043456
        %v270 = vsel %vm268, %v257, 0
        %v273 = vsel %vm268, %v255, 0
        %275 = vmatprep.subr.bf16.mxu0 %v273
        %276 = vmatpush1.bf16.msra.mxu0 %v270
        %277 = vmatprep.subr.bf16.mxu0 0
        %278 = vmatpush1.bf16.msra.mxu0 0
        %279 = vmatprep.subr.bf16.mxu0 0
        %280 = vmatpush1.bf16.msra.mxu0 0
        %281 = vmatprep.subr.bf16.mxu0 0
        %282 = vmatpush1.bf16.msra.mxu0 0
        %283 = vmatprep.subr.bf16.mxu0 0
        %284 = vmatpush1.bf16.msra.mxu0 0
        %285 = vmatprep.subr.bf16.mxu0 0
        %286 = vmatpush1.bf16.msra.mxu0 0
        %287 = vmatprep.subr.bf16.mxu0 0
        %288 = vmatpush1.bf16.msra.mxu0 0
        %289 = vmatprep.subr.bf16.mxu0 0
        %290 = vmatpush1.bf16.msra.mxu0 0
        %291 = vmatprep.subr.bf16.mxu0 0
        %292 = vmatpush1.bf16.msra.mxu0 0
        %293 = vmatprep.subr.bf16.mxu0 0
        %294 = vmatpush1.bf16.msra.mxu0 0
        %295 = vmatprep.subr.bf16.mxu0 0
        %296 = vmatpush1.bf16.msra.mxu0 0
        %297 = vmatprep.subr.bf16.mxu0 0
        %298 = vmatpush1.bf16.msra.mxu0 0
        %299 = vmatprep.subr.bf16.mxu0 0
        %300 = vmatpush1.bf16.msra.mxu0 0
        %301 = vmatprep.subr.bf16.mxu0 0
        %302 = vmatpush1.bf16.msra.mxu0 0
        %303 = vmatprep.subr.bf16.mxu0 0
        %304 = vmatpush1.bf16.msra.mxu0 0
        %305 = vmatprep.subr.bf16.mxu0 0
        %306 = vmatpush1.bf16.msra.mxu0 0
        %307 = vmatprep.mubr.bf16.mxu0 0
        %308 = vmatmul.mubr.bf16.gmra.mrb[0].mxu0 %v260
        %v309 = vpop.f32.mrb[0].mxu0
        %v310 = vadd.f32 0.0, %v309
        %v311 = vpop.f32.mrb[0].mxu0
        %v312 = vadd.f32 0.0, %v311
        %v313 = vpop.f32.mrb[0].mxu0
        %v314 = vadd.f32 0.0, %v313
        %v315 = vpop.f32.mrb[0].mxu0
        %v316 = vadd.f32 0.0, %v315
        %317 = vmatprep.mubr.bf16.mxu0 0
        %318 = vmatmul.mubr.bf16.gmra.mrb[0].mxu0 %v263
        %v319 = vpop.f32.mrb[0].mxu0
        %v320 = vadd.f32 0.0, %v319
        %v321 = vpop.f32.mrb[0].mxu0
        %v322 = vadd.f32 0.0, %v321
        %v323 = vpop.f32.mrb[0].mxu0
        %v324 = vadd.f32 0.0, %v323
        %v325 = vpop.f32.mrb[0].mxu0
        %v326 = vadd.f32 0.0, %v325
        %327 = vmatprep.mubr.bf16.mxu0 0
        %328 = vmatmul.mubr.bf16.gmra.mrb[0].mxu0 %v266
        %v329 = vpop.f32.mrb[0].mxu0
        %v330 = vadd.f32 0.0, %v329
        %v331 = vpop.f32.mrb[0].mxu0
        %v332 = vadd.f32 0.0, %v331
        %v333 = vpop.f32.mrb[0].mxu0
        %v334 = vpop.f32.mrb[0].mxu0
        %335 = vdwg.mxu0
        %v341 = vunpack.c.l.b16 %v223
        %v342 = vunpack.c.l.b16 %v224
        %v343 = vunpack.c.l.b16 %v225
        %v344 = vunpack.c.l.b16 %v226
        %v345 = vunpack.c.l.b16 %v227
        %v346 = vpack.c.b16 %v342, %v341
        %v347 = vpack.c.b16 %v344, %v343
        %v348 = vpack.c.b16 %v345, %v345
        %v350 = vsel %vm258, %v346, 0
        %v353 = vsel %vm258, %v347, 0
        %v356 = vsel %vm258, %v348, 0
        %v359 = vsel %vm268, %v250, 0
        %v362 = vsel %vm268, %v251, 0
        %364 = vmatprep.subr.bf16.mxu0 %v362
        %365 = vmatpush1.bf16.msra.mxu0 %v359
        %366 = vmatprep.subr.bf16.mxu0 0
        %367 = vmatpush1.bf16.msra.mxu0 0
        %368 = vmatprep.subr.bf16.mxu0 0
        %369 = vmatpush1.bf16.msra.mxu0 0
        %370 = vmatprep.subr.bf16.mxu0 0
        %371 = vmatpush1.bf16.msra.mxu0 0
        %372 = vmatprep.subr.bf16.mxu0 0
        %373 = vmatpush1.bf16.msra.mxu0 0
        %374 = vmatprep.subr.bf16.mxu0 0
        %375 = vmatpush1.bf16.msra.mxu0 0
        %376 = vmatprep.subr.bf16.mxu0 0
        %377 = vmatpush1.bf16.msra.mxu0 0
        %378 = vmatprep.subr.bf16.mxu0 0
        %379 = vmatpush1.bf16.msra.mxu0 0
        %380 = vmatprep.subr.bf16.mxu0 0
        %381 = vmatpush1.bf16.msra.mxu0 0
        %382 = vmatprep.subr.bf16.mxu0 0
        %383 = vmatpush1.bf16.msra.mxu0 0
        %384 = vmatprep.subr.bf16.mxu0 0
        %385 = vmatpush1.bf16.msra.mxu0 0
        %386 = vmatprep.subr.bf16.mxu0 0
        %387 = vmatpush1.bf16.msra.mxu0 0
        %388 = vmatprep.subr.bf16.mxu0 0
        %389 = vmatpush1.bf16.msra.mxu0 0
        %390 = vmatprep.subr.bf16.mxu0 0
        %391 = vmatpush1.bf16.msra.mxu0 0
        %392 = vmatprep.subr.bf16.mxu0 0
        %393 = vmatpush1.bf16.msra.mxu0 0
        %394 = vmatprep.subr.bf16.mxu0 0
        %395 = vmatpush1.bf16.msra.mxu0 0
        %396 = vmatprep.mubr.bf16.mxu0 0
        %397 = vmatmul.mubr.bf16.gmra.mrb[0].mxu0 %v350
        %v398 = vpop.f32.mrb[0].mxu0
        %v399 = vadd.f32 %v310, %v398
        %v400 = vpop.f32.mrb[0].mxu0
        %v401 = vadd.f32 %v312, %v400
        %v402 = vpop.f32.mrb[0].mxu0
        %v403 = vadd.f32 %v314, %v402
        %v404 = vpop.f32.mrb[0].mxu0
        %v405 = vadd.f32 %v316, %v404
        %406 = vmatprep.mubr.bf16.mxu0 0
        %407 = vmatmul.mubr.bf16.gmra.mrb[0].mxu0 %v353
        %v408 = vpop.f32.mrb[0].mxu0
        %v409 = vadd.f32 %v320, %v408
        %v410 = vpop.f32.mrb[0].mxu0
        %v411 = vadd.f32 %v322, %v410
        %v412 = vpop.f32.mrb[0].mxu0
        %v413 = vadd.f32 %v324, %v412
        %v414 = vpop.f32.mrb[0].mxu0
        %v415 = vadd.f32 %v326, %v414
        %416 = vmatprep.mubr.bf16.mxu0 0
        %417 = vmatmul.mubr.bf16.gmra.mrb[0].mxu0 %v356
        %v418 = vpop.f32.mrb[0].mxu0
        %v419 = vadd.f32 %v330, %v418
        %v420 = vpop.f32.mrb[0].mxu0
        %v421 = vadd.f32 %v332, %v420
        %v422 = vpop.f32.mrb[0].mxu0
        %v423 = vpop.f32.mrb[0].mxu0
        %424 = vdwg.mxu0
        %s425 = scalar_lea.vmem %s1, 40
        %v426 = vld [vmem:[%s425] sm:$0xf]
        %v427 = vld [vmem:[%s425 + $0x4] sm:$0xf]
        %v428 = vld [vmem:[%s425 + $0x8] sm:$0xf]
        %v429 = vld [vmem:[%s425 + $0xc] sm:$0xf]
        %v430 = vld [vmem:[%s425 + $0x10] sm:$0xf]
        %v436 = vunpack.c.l.b16 %v426
        %v437 = vunpack.c.l.b16 %v427
        %v438 = vunpack.c.l.b16 %v428
        %v439 = vunpack.c.l.b16 %v429
        %v440 = vunpack.c.l.b16 %v430
        %v441 = vpack.c.b16 %v437, %v436
        %v442 = vpack.c.b16 %v439, %v438
        %v443 = vpack.c.b16 %v440, %v440
        %444 = vrot.lane.b32.xlu0 %v250, 126
        %v445 = vpop.permute.xlu0 %444
        %446 = vrot.lane.b32.xlu0 %v251, 126
        %v447 = vpop.permute.xlu0 %446
        %vm448 = vcmask 1031168
        %v449 = vsel %vm448, %v445, %v447
        %v451 = vsel %vm258, %v441, 0
        %v454 = vsel %vm258, %v442, 0
        %v457 = vsel %vm258, %v443, 0
        %v460 = vsel %vm268, %v449, 0
        %v463 = vsel %vm268, %v447, 0
        %465 = vmatprep.subr.bf16.mxu0 %v463
        %466 = vmatpush1.bf16.msra.mxu0 %v460
        %467 = vmatprep.subr.bf16.mxu0 0
        %468 = vmatpush1.bf16.msra.mxu0 0
        %469 = vmatprep.subr.bf16.mxu0 0
        %470 = vmatpush1.bf16.msra.mxu0 0
        %471 = vmatprep.subr.bf16.mxu0 0
        %472 = vmatpush1.bf16.msra.mxu0 0
        %473 = vmatprep.subr.bf16.mxu0 0
        %474 = vmatpush1.bf16.msra.mxu0 0
        %475 = vmatprep.subr.bf16.mxu0 0
        %476 = vmatpush1.bf16.msra.mxu0 0
        %477 = vmatprep.subr.bf16.mxu0 0
        %478 = vmatpush1.bf16.msra.mxu0 0
        %479 = vmatprep.subr.bf16.mxu0 0
        %480 = vmatpush1.bf16.msra.mxu0 0
        %481 = vmatprep.subr.bf16.mxu0 0
        %482 = vmatpush1.bf16.msra.mxu0 0
        %483 = vmatprep.subr.bf16.mxu0 0
        %484 = vmatpush1.bf16.msra.mxu0 0
        %485 = vmatprep.subr.bf16.mxu0 0
        %486 = vmatpush1.bf16.msra.mxu0 0
        %487 = vmatprep.subr.bf16.mxu0 0
        %488 = vmatpush1.bf16.msra.mxu0 0
        %489 = vmatprep.subr.bf16.mxu0 0
        %490 = vmatpush1.bf16.msra.mxu0 0
        %491 = vmatprep.subr.bf16.mxu0 0
        %492 = vmatpush1.bf16.msra.mxu0 0
        %493 = vmatprep.subr.bf16.mxu0 0
        %494 = vmatpush1.bf16.msra.mxu0 0
        %495 = vmatprep.subr.bf16.mxu0 0
        %496 = vmatpush1.bf16.msra.mxu0 0
        %497 = vmatprep.mubr.bf16.mxu0 0
        %498 = vmatmul.mubr.bf16.gmra.mrb[0].mxu0 %v451
        %v499 = vpop.f32.mrb[0].mxu0
        %v500 = vadd.f32 0.0, %v499
        %v501 = vpop.f32.mrb[0].mxu0
        %v502 = vadd.f32 0.0, %v501
        %v503 = vpop.f32.mrb[0].mxu0
        %v504 = vadd.f32 0.0, %v503
        %v505 = vpop.f32.mrb[0].mxu0
        %v506 = vadd.f32 0.0, %v505
        %507 = vmatprep.mubr.bf16.mxu0 0
        %508 = vmatmul.mubr.bf16.gmra.mrb[0].mxu0 %v454
        %v509 = vpop.f32.mrb[0].mxu0
        %v510 = vadd.f32 0.0, %v509
        %v511 = vpop.f32.mrb[0].mxu0
        %v512 = vadd.f32 0.0, %v511
        %v513 = vpop.f32.mrb[0].mxu0
        %v514 = vadd.f32 0.0, %v513
        %v515 = vpop.f32.mrb[0].mxu0
        %v516 = vadd.f32 0.0, %v515
        %517 = vmatprep.mubr.bf16.mxu0 0
        %518 = vmatmul.mubr.bf16.gmra.mrb[0].mxu0 %v457
        %v519 = vpop.f32.mrb[0].mxu0
        %v520 = vadd.f32 0.0, %v519
        %v521 = vpop.f32.mrb[0].mxu0
        %v522 = vadd.f32 0.0, %v521
        %v523 = vpop.f32.mrb[0].mxu0
        %v524 = vpop.f32.mrb[0].mxu0
        %525 = vdwg.mxu0
        %v526 = vadd.f32 %v399, %v500
        %v527 = vadd.f32 %v401, %v502
        %v528 = vadd.f32 %v403, %v504
        %v529 = vadd.f32 %v405, %v506
        %v530 = vadd.f32 %v409, %v510
        %v531 = vadd.f32 %v411, %v512
        %v532 = vadd.f32 %v413, %v514
        %v533 = vadd.f32 %v415, %v516
        %v534 = vadd.f32 %v419, %v520
        %v535 = vadd.f32 %v421, %v522
        %s536 = scalar_lea.vmem %s1, 60
        %v537 = vld [vmem:[%s536] sm:$0xf]
        %v538 = vld [vmem:[%s536 + $0x4] sm:$0xf]
        %v539 = vld [vmem:[%s536 + $0x8] sm:$0xf]
        %v540 = vld [vmem:[%s536 + $0xc] sm:$0xf]
        %v541 = vld [vmem:[%s536 + $0x10] sm:$0xf]
        %v547 = vunpack.c.l.b16 %v537
        %v548 = vunpack.c.l.b16 %v538
        %v549 = vunpack.c.l.b16 %v539
        %v550 = vunpack.c.l.b16 %v540
        %v551 = vunpack.c.l.b16 %v541
        %v552 = vpack.c.b16 %v548, %v547
        %v553 = vpack.c.b16 %v550, %v549
        %v554 = vpack.c.b16 %v551, %v551
        %555 = vrot.lane.b32.xlu0 %v250, 125
        %v556 = vpop.permute.xlu0 %555
        %557 = vrot.lane.b32.xlu0 %v251, 125
        %v558 = vpop.permute.xlu0 %557
        %vm559 = vcmask 1022976
        %v560 = vsel %vm559, %v556, %v558
        %v562 = vsel %vm258, %v552, 0
        %v565 = vsel %vm258, %v553, 0
        %v568 = vsel %vm258, %v554, 0
        %v571 = vsel %vm268, %v560, 0
        %v574 = vsel %vm268, %v558, 0
        %576 = vmatprep.subr.bf16.mxu0 %v574
        %577 = vmatpush1.bf16.msra.mxu0 %v571
        %578 = vmatprep.subr.bf16.mxu0 0
        %579 = vmatpush1.bf16.msra.mxu0 0
        %580 = vmatprep.subr.bf16.mxu0 0
        %581 = vmatpush1.bf16.msra.mxu0 0
        %582 = vmatprep.subr.bf16.mxu0 0
        %583 = vmatpush1.bf16.msra.mxu0 0
        %584 = vmatprep.subr.bf16.mxu0 0
        %585 = vmatpush1.bf16.msra.mxu0 0
        %586 = vmatprep.subr.bf16.mxu0 0
        %587 = vmatpush1.bf16.msra.mxu0 0
        %588 = vmatprep.subr.bf16.mxu0 0
        %589 = vmatpush1.bf16.msra.mxu0 0
        %590 = vmatprep.subr.bf16.mxu0 0
        %591 = vmatpush1.bf16.msra.mxu0 0
        %592 = vmatprep.subr.bf16.mxu0 0
        %593 = vmatpush1.bf16.msra.mxu0 0
        %594 = vmatprep.subr.bf16.mxu0 0
        %595 = vmatpush1.bf16.msra.mxu0 0
        %596 = vmatprep.subr.bf16.mxu0 0
        %597 = vmatpush1.bf16.msra.mxu0 0
        %598 = vmatprep.subr.bf16.mxu0 0
        %599 = vmatpush1.bf16.msra.mxu0 0
        %600 = vmatprep.subr.bf16.mxu0 0
        %601 = vmatpush1.bf16.msra.mxu0 0
        %602 = vmatprep.subr.bf16.mxu0 0
        %603 = vmatpush1.bf16.msra.mxu0 0
        %604 = vmatprep.subr.bf16.mxu0 0
        %605 = vmatpush1.bf16.msra.mxu0 0
        %606 = vmatprep.subr.bf16.mxu0 0
        %607 = vmatpush1.bf16.msra.mxu0 0
        %608 = vmatprep.mubr.bf16.mxu0 0
        %609 = vmatmul.mubr.bf16.gmra.mrb[0].mxu0 %v562
        %v610 = vpop.f32.mrb[0].mxu0
        %v611 = vadd.f32 0.0, %v610
        %v612 = vpop.f32.mrb[0].mxu0
        %v613 = vadd.f32 0.0, %v612
        %v614 = vpop.f32.mrb[0].mxu0
        %v615 = vadd.f32 0.0, %v614
        %v616 = vpop.f32.mrb[0].mxu0
        %v617 = vadd.f32 0.0, %v616
        %618 = vmatprep.mubr.bf16.mxu0 0
        %619 = vmatmul.mubr.bf16.gmra.mrb[0].mxu0 %v565
        %v620 = vpop.f32.mrb[0].mxu0
        %v621 = vadd.f32 0.0, %v620
        %v622 = vpop.f32.mrb[0].mxu0
        %v623 = vadd.f32 0.0, %v622
        %v624 = vpop.f32.mrb[0].mxu0
        %v625 = vadd.f32 0.0, %v624
        %v626 = vpop.f32.mrb[0].mxu0
        %v627 = vadd.f32 0.0, %v626
        %628 = vmatprep.mubr.bf16.mxu0 0
        %629 = vmatmul.mubr.bf16.gmra.mrb[0].mxu0 %v568
        %v630 = vpop.f32.mrb[0].mxu0
        %v631 = vadd.f32 0.0, %v630
        %v632 = vpop.f32.mrb[0].mxu0
        %v633 = vadd.f32 0.0, %v632
        %v634 = vpop.f32.mrb[0].mxu0
        %v635 = vpop.f32.mrb[0].mxu0
        %636 = vdwg.mxu0
        %v637 = vadd.f32 %v526, %v611
        %v638 = vadd.f32 %v527, %v613
        %v639 = vadd.f32 %v528, %v615
        %v640 = vadd.f32 %v529, %v617
        %v641 = vadd.f32 %v530, %v621
        %v642 = vadd.f32 %v531, %v623
        %v643 = vadd.f32 %v532, %v625
        %v644 = vadd.f32 %v533, %v627
        %v645 = vadd.f32 %v534, %v631
        %v646 = vadd.f32 %v535, %v633
        %s647 = scalar_lea.vmem %s1, 80
        %v648 = vld [vmem:[%s647] sm:$0xf]
        %v649 = vld [vmem:[%s647 + $0x4] sm:$0xf]
        %v650 = vld [vmem:[%s647 + $0x8] sm:$0xf]
        %v651 = vld [vmem:[%s647 + $0xc] sm:$0xf]
        %v652 = vld [vmem:[%s647 + $0x10] sm:$0xf]
        %v658 = vunpack.c.l.b16 %v648
        %v659 = vunpack.c.l.b16 %v649
        %v660 = vunpack.c.l.b16 %v650
        %v661 = vunpack.c.l.b16 %v651
        %v662 = vunpack.c.l.b16 %v652
        %v663 = vpack.c.b16 %v659, %v658
        %v664 = vpack.c.b16 %v661, %v660
        %v665 = vpack.c.b16 %v662, %v662
        %666 = vrot.lane.b32.xlu0 %v250, 124
        %v667 = vpop.permute.xlu0 %666
        %668 = vrot.lane.b32.xlu0 %v251, 124
        %v669 = vpop.permute.xlu0 %668
        %vm670 = vcmask 1014784
        %v671 = vsel %vm670, %v667, %v669
        %v673 = vsel %vm258, %v663, 0
        %v676 = vsel %vm258, %v664, 0
        %v679 = vsel %vm258, %v665, 0
        %v682 = vsel %vm268, %v671, 0
        %v685 = vsel %vm268, %v669, 0
        %687 = vmatprep.subr.bf16.mxu0 %v685
        %688 = vmatpush1.bf16.msra.mxu0 %v682
        %689 = vmatprep.subr.bf16.mxu0 0
        %690 = vmatpush1.bf16.msra.mxu0 0
        %691 = vmatprep.subr.bf16.mxu0 0
        %692 = vmatpush1.bf16.msra.mxu0 0
        %693 = vmatprep.subr.bf16.mxu0 0
        %694 = vmatpush1.bf16.msra.mxu0 0
        %695 = vmatprep.subr.bf16.mxu0 0
        %696 = vmatpush1.bf16.msra.mxu0 0
        %697 = vmatprep.subr.bf16.mxu0 0
        %698 = vmatpush1.bf16.msra.mxu0 0
        %699 = vmatprep.subr.bf16.mxu0 0
        %700 = vmatpush1.bf16.msra.mxu0 0
        %701 = vmatprep.subr.bf16.mxu0 0
        %702 = vmatpush1.bf16.msra.mxu0 0
        %703 = vmatprep.subr.bf16.mxu0 0
        %704 = vmatpush1.bf16.msra.mxu0 0
        %705 = vmatprep.subr.bf16.mxu0 0
        %706 = vmatpush1.bf16.msra.mxu0 0
        %707 = vmatprep.subr.bf16.mxu0 0
        %708 = vmatpush1.bf16.msra.mxu0 0
        %709 = vmatprep.subr.bf16.mxu0 0
        %710 = vmatpush1.bf16.msra.mxu0 0
        %711 = vmatprep.subr.bf16.mxu0 0
        %712 = vmatpush1.bf16.msra.mxu0 0
        %713 = vmatprep.subr.bf16.mxu0 0
        %714 = vmatpush1.bf16.msra.mxu0 0
        %715 = vmatprep.subr.bf16.mxu0 0
        %716 = vmatpush1.bf16.msra.mxu0 0
        %717 = vmatprep.subr.bf16.mxu0 0
        %718 = vmatpush1.bf16.msra.mxu0 0
        %719 = vmatprep.mubr.bf16.mxu0 0
        %720 = vmatmul.mubr.bf16.gmra.mrb[0].mxu0 %v673
        %v721 = vpop.f32.mrb[0].mxu0
        %v722 = vadd.f32 0.0, %v721
        %v723 = vpop.f32.mrb[0].mxu0
        %v724 = vadd.f32 0.0, %v723
        %v725 = vpop.f32.mrb[0].mxu0
        %v726 = vadd.f32 0.0, %v725
        %v727 = vpop.f32.mrb[0].mxu0
        %v728 = vadd.f32 0.0, %v727
        %729 = vmatprep.mubr.bf16.mxu0 0
        %730 = vmatmul.mubr.bf16.gmra.mrb[0].mxu0 %v676
        %v731 = vpop.f32.mrb[0].mxu0
        %v732 = vadd.f32 0.0, %v731
        %v733 = vpop.f32.mrb[0].mxu0
        %v734 = vadd.f32 0.0, %v733
        %v735 = vpop.f32.mrb[0].mxu0
        %v736 = vadd.f32 0.0, %v735
        %v737 = vpop.f32.mrb[0].mxu0
        %v738 = vadd.f32 0.0, %v737
        %739 = vmatprep.mubr.bf16.mxu0 0
        %740 = vmatmul.mubr.bf16.gmra.mrb[0].mxu0 %v679
        %v741 = vpop.f32.mrb[0].mxu0
        %v742 = vadd.f32 0.0, %v741
        %v743 = vpop.f32.mrb[0].mxu0
        %v744 = vadd.f32 0.0, %v743
        %v745 = vpop.f32.mrb[0].mxu0
        %v746 = vpop.f32.mrb[0].mxu0
        %747 = vdwg.mxu0
        %v748 = vadd.f32 %v637, %v722
        %v749 = vadd.f32 %v638, %v724
        %v750 = vadd.f32 %v639, %v726
        %v751 = vadd.f32 %v640, %v728
        %v752 = vadd.f32 %v641, %v732
        %v753 = vadd.f32 %v642, %v734
        %v754 = vadd.f32 %v643, %v736
        %v755 = vadd.f32 %v644, %v738
        %v756 = vadd.f32 %v645, %v742
        %v757 = vadd.f32 %v646, %v744
        %s758 = scalar_lea.vmem %s1, 100
        %v759 = vld [vmem:[%s758] sm:$0xf]
        %v760 = vld [vmem:[%s758 + $0x4] sm:$0xf]
        %v761 = vld [vmem:[%s758 + $0x8] sm:$0xf]
        %v762 = vld [vmem:[%s758 + $0xc] sm:$0xf]
        %v763 = vld [vmem:[%s758 + $0x10] sm:$0xf]
        %v769 = vunpack.c.l.b16 %v759
        %v770 = vunpack.c.l.b16 %v760
        %v771 = vunpack.c.l.b16 %v761
        %v772 = vunpack.c.l.b16 %v762
        %v773 = vunpack.c.l.b16 %v763
        %v774 = vpack.c.b16 %v770, %v769
        %v775 = vpack.c.b16 %v772, %v771
        %v776 = vpack.c.b16 %v773, %v773
        %777 = vrot.lane.b32.xlu0 %v250, 123
        %v778 = vpop.permute.xlu0 %777
        %779 = vrot.lane.b32.xlu0 %v251, 123
        %v780 = vpop.permute.xlu0 %779
        %vm781 = vcmask 1006592
        %v782 = vsel %vm781, %v778, %v780
        %v784 = vsel %vm258, %v774, 0
        %v787 = vsel %vm258, %v775, 0
        %v790 = vsel %vm258, %v776, 0
        %v793 = vsel %vm268, %v782, 0
        %v796 = vsel %vm268, %v780, 0
        %798 = vmatprep.subr.bf16.mxu0 %v796
        %799 = vmatpush1.bf16.msra.mxu0 %v793
        %800 = vmatprep.subr.bf16.mxu0 0
        %801 = vmatpush1.bf16.msra.mxu0 0
        %802 = vmatprep.subr.bf16.mxu0 0
        %803 = vmatpush1.bf16.msra.mxu0 0
        %804 = vmatprep.subr.bf16.mxu0 0
        %805 = vmatpush1.bf16.msra.mxu0 0
        %806 = vmatprep.subr.bf16.mxu0 0
        %807 = vmatpush1.bf16.msra.mxu0 0
        %808 = vmatprep.subr.bf16.mxu0 0
        %809 = vmatpush1.bf16.msra.mxu0 0
        %810 = vmatprep.subr.bf16.mxu0 0
        %811 = vmatpush1.bf16.msra.mxu0 0
        %812 = vmatprep.subr.bf16.mxu0 0
        %813 = vmatpush1.bf16.msra.mxu0 0
        %814 = vmatprep.subr.bf16.mxu0 0
        %815 = vmatpush1.bf16.msra.mxu0 0
        %816 = vmatprep.subr.bf16.mxu0 0
        %817 = vmatpush1.bf16.msra.mxu0 0
        %818 = vmatprep.subr.bf16.mxu0 0
        %819 = vmatpush1.bf16.msra.mxu0 0
        %820 = vmatprep.subr.bf16.mxu0 0
        %821 = vmatpush1.bf16.msra.mxu0 0
        %822 = vmatprep.subr.bf16.mxu0 0
        %823 = vmatpush1.bf16.msra.mxu0 0
        %824 = vmatprep.subr.bf16.mxu0 0
        %825 = vmatpush1.bf16.msra.mxu0 0
        %826 = vmatprep.subr.bf16.mxu0 0
        %827 = vmatpush1.bf16.msra.mxu0 0
        %828 = vmatprep.subr.bf16.mxu0 0
        %829 = vmatpush1.bf16.msra.mxu0 0
        %830 = vmatprep.mubr.bf16.mxu0 0
        %831 = vmatmul.mubr.bf16.gmra.mrb[0].mxu0 %v784
        %v832 = vpop.f32.mrb[0].mxu0
        %v833 = vadd.f32 0.0, %v832
        %v834 = vpop.f32.mrb[0].mxu0
        %v835 = vadd.f32 0.0, %v834
        %v836 = vpop.f32.mrb[0].mxu0
        %v837 = vadd.f32 0.0, %v836
        %v838 = vpop.f32.mrb[0].mxu0
        %v839 = vadd.f32 0.0, %v838
        %840 = vmatprep.mubr.bf16.mxu0 0
        %841 = vmatmul.mubr.bf16.gmra.mrb[0].mxu0 %v787
        %v842 = vpop.f32.mrb[0].mxu0
        %v843 = vadd.f32 0.0, %v842
        %v844 = vpop.f32.mrb[0].mxu0
        %v845 = vadd.f32 0.0, %v844
        %v846 = vpop.f32.mrb[0].mxu0
        %v847 = vadd.f32 0.0, %v846
        %v848 = vpop.f32.mrb[0].mxu0
        %v849 = vadd.f32 0.0, %v848
        %850 = vmatprep.mubr.bf16.mxu0 0
        %851 = vmatmul.mubr.bf16.gmra.mrb[0].mxu0 %v790
        %v852 = vpop.f32.mrb[0].mxu0
        %v853 = vadd.f32 0.0, %v852
        %v854 = vpop.f32.mrb[0].mxu0
        %v855 = vadd.f32 0.0, %v854
        %v856 = vpop.f32.mrb[0].mxu0
        %v857 = vpop.f32.mrb[0].mxu0
        %858 = vdwg.mxu0
        %v859 = vadd.f32 %v748, %v833
        %v860 = vadd.f32 %v749, %v835
        %v861 = vadd.f32 %v750, %v837
        %v862 = vadd.f32 %v751, %v839
        %v863 = vadd.f32 %v752, %v843
        %v864 = vadd.f32 %v753, %v845
        %v865 = vadd.f32 %v754, %v847
        %v866 = vadd.f32 %v755, %v849
        %v867 = vadd.f32 %v756, %v853
        %v868 = vadd.f32 %v757, %v855
        %s869 = scalar_lea.vmem %s1, 120
        %v870 = vld [vmem:[%s869] sm:$0xf]
        %v871 = vld [vmem:[%s869 + $0x4] sm:$0xf]
        %v872 = vld [vmem:[%s869 + $0x8] sm:$0xf]
        %v873 = vld [vmem:[%s869 + $0xc] sm:$0xf]
        %v874 = vld [vmem:[%s869 + $0x10] sm:$0xf]
        %v880 = vunpack.c.l.b16 %v870
        %v881 = vunpack.c.l.b16 %v871
        %v882 = vunpack.c.l.b16 %v872
        %v883 = vunpack.c.l.b16 %v873
        %v884 = vunpack.c.l.b16 %v874
        %v885 = vpack.c.b16 %v881, %v880
        %v886 = vpack.c.b16 %v883, %v882
        %v887 = vpack.c.b16 %v884, %v884
        %888 = vrot.lane.b32.xlu0 %v250, 122
        %v889 = vpop.permute.xlu0 %888
        %890 = vrot.lane.b32.xlu0 %v251, 122
        %v891 = vpop.permute.xlu0 %890
        %vm892 = vcmask 998400
        %v893 = vsel %vm892, %v889, %v891
        %v895 = vsel %vm258, %v885, 0
        %v898 = vsel %vm258, %v886, 0
        %v901 = vsel %vm258, %v887, 0
        %v904 = vsel %vm268, %v893, 0
        %v907 = vsel %vm268, %v891, 0
        %909 = vmatprep.subr.bf16.mxu0 %v907
        %910 = vmatpush1.bf16.msra.mxu0 %v904
        %911 = vmatprep.subr.bf16.mxu0 0
        %912 = vmatpush1.bf16.msra.mxu0 0
        %913 = vmatprep.subr.bf16.mxu0 0
        %914 = vmatpush1.bf16.msra.mxu0 0
        %915 = vmatprep.subr.bf16.mxu0 0
        %916 = vmatpush1.bf16.msra.mxu0 0
        %917 = vmatprep.subr.bf16.mxu0 0
        %918 = vmatpush1.bf16.msra.mxu0 0
        %919 = vmatprep.subr.bf16.mxu0 0
        %920 = vmatpush1.bf16.msra.mxu0 0
        %921 = vmatprep.subr.bf16.mxu0 0
        %922 = vmatpush1.bf16.msra.mxu0 0
        %923 = vmatprep.subr.bf16.mxu0 0
        %924 = vmatpush1.bf16.msra.mxu0 0
        %925 = vmatprep.subr.bf16.mxu0 0
        %926 = vmatpush1.bf16.msra.mxu0 0
        %927 = vmatprep.subr.bf16.mxu0 0
        %928 = vmatpush1.bf16.msra.mxu0 0
        %929 = vmatprep.subr.bf16.mxu0 0
        %930 = vmatpush1.bf16.msra.mxu0 0
        %931 = vmatprep.subr.bf16.mxu0 0
        %932 = vmatpush1.bf16.msra.mxu0 0
        %933 = vmatprep.subr.bf16.mxu0 0
        %934 = vmatpush1.bf16.msra.mxu0 0
        %935 = vmatprep.subr.bf16.mxu0 0
        %936 = vmatpush1.bf16.msra.mxu0 0
        %937 = vmatprep.subr.bf16.mxu0 0
        %938 = vmatpush1.bf16.msra.mxu0 0
        %939 = vmatprep.subr.bf16.mxu0 0
        %940 = vmatpush1.bf16.msra.mxu0 0
        %941 = vmatprep.mubr.bf16.mxu0 0
        %942 = vmatmul.mubr.bf16.gmra.mrb[0].mxu0 %v895
        %v943 = vpop.f32.mrb[0].mxu0
        %v944 = vadd.f32 0.0, %v943
        %v945 = vpop.f32.mrb[0].mxu0
        %v946 = vadd.f32 0.0, %v945
        %v947 = vpop.f32.mrb[0].mxu0
        %v948 = vadd.f32 0.0, %v947
        %v949 = vpop.f32.mrb[0].mxu0
        %v950 = vadd.f32 0.0, %v949
        %951 = vmatprep.mubr.bf16.mxu0 0
        %952 = vmatmul.mubr.bf16.gmra.mrb[0].mxu0 %v898
        %v953 = vpop.f32.mrb[0].mxu0
        %v954 = vadd.f32 0.0, %v953
        %v955 = vpop.f32.mrb[0].mxu0
        %v956 = vadd.f32 0.0, %v955
        %v957 = vpop.f32.mrb[0].mxu0
        %v958 = vadd.f32 0.0, %v957
        %v959 = vpop.f32.mrb[0].mxu0
        %v960 = vadd.f32 0.0, %v959
        %961 = vmatprep.mubr.bf16.mxu0 0
        %962 = vmatmul.mubr.bf16.gmra.mrb[0].mxu0 %v901
        %v963 = vpop.f32.mrb[0].mxu0
        %v964 = vadd.f32 0.0, %v963
        %v965 = vpop.f32.mrb[0].mxu0
        %v966 = vadd.f32 0.0, %v965
        %v967 = vpop.f32.mrb[0].mxu0
        %v968 = vpop.f32.mrb[0].mxu0
        %969 = vdwg.mxu0
        %v970 = vadd.f32 %v859, %v944
        %v971 = vadd.f32 %v860, %v946
        %v972 = vadd.f32 %v861, %v948
        %v973 = vadd.f32 %v862, %v950
        %v974 = vadd.f32 %v863, %v954
        %v975 = vadd.f32 %v864, %v956
        %v976 = vadd.f32 %v865, %v958
        %v977 = vadd.f32 %v866, %v960
        %v978 = vadd.f32 %v867, %v964
        %v979 = vadd.f32 %v868, %v966
        %s980 = scalar_lea.vmem %s1, 140
        %v981 = vld [vmem:[%s980] sm:$0xf]
        %v982 = vld [vmem:[%s980 + $0x4] sm:$0xf]
        %v983 = vld [vmem:[%s980 + $0x8] sm:$0xf]
        %v984 = vld [vmem:[%s980 + $0xc] sm:$0xf]
        %v985 = vld [vmem:[%s980 + $0x10] sm:$0xf]
        %v991 = vunpack.c.l.b16 %v981
        %v992 = vunpack.c.l.b16 %v982
        %v993 = vunpack.c.l.b16 %v983
        %v994 = vunpack.c.l.b16 %v984
        %v995 = vunpack.c.l.b16 %v985
        %v996 = vpack.c.b16 %v992, %v991
        %v997 = vpack.c.b16 %v994, %v993
        %v998 = vpack.c.b16 %v995, %v995
        %999 = vrot.lane.b32.xlu0 %v250, 121
        %v1000 = vpop.permute.xlu0 %999
        %1001 = vrot.lane.b32.xlu0 %v251, 121
        %v1002 = vpop.permute.xlu0 %1001
        %vm1003 = vcmask 990208
        %v1004 = vsel %vm1003, %v1000, %v1002
        %v1006 = vsel %vm258, %v996, 0
        %v1009 = vsel %vm258, %v997, 0
        %v1012 = vsel %vm258, %v998, 0
        %v1015 = vsel %vm268, %v1004, 0
        %v1018 = vsel %vm268, %v1002, 0
        %1020 = vmatprep.subr.bf16.mxu0 %v1018
        %1021 = vmatpush1.bf16.msra.mxu0 %v1015
        %1022 = vmatprep.subr.bf16.mxu0 0
        %1023 = vmatpush1.bf16.msra.mxu0 0
        %1024 = vmatprep.subr.bf16.mxu0 0
        %1025 = vmatpush1.bf16.msra.mxu0 0
        %1026 = vmatprep.subr.bf16.mxu0 0
        %1027 = vmatpush1.bf16.msra.mxu0 0
        %1028 = vmatprep.subr.bf16.mxu0 0
        %1029 = vmatpush1.bf16.msra.mxu0 0
        %1030 = vmatprep.subr.bf16.mxu0 0
        %1031 = vmatpush1.bf16.msra.mxu0 0
        %1032 = vmatprep.subr.bf16.mxu0 0
        %1033 = vmatpush1.bf16.msra.mxu0 0
        %1034 = vmatprep.subr.bf16.mxu0 0
        %1035 = vmatpush1.bf16.msra.mxu0 0
        %1036 = vmatprep.subr.bf16.mxu0 0
        %1037 = vmatpush1.bf16.msra.mxu0 0
        %1038 = vmatprep.subr.bf16.mxu0 0
        %1039 = vmatpush1.bf16.msra.mxu0 0
        %1040 = vmatprep.subr.bf16.mxu0 0
        %1041 = vmatpush1.bf16.msra.mxu0 0
        %1042 = vmatprep.subr.bf16.mxu0 0
        %1043 = vmatpush1.bf16.msra.mxu0 0
        %1044 = vmatprep.subr.bf16.mxu0 0
        %1045 = vmatpush1.bf16.msra.mxu0 0
        %1046 = vmatprep.subr.bf16.mxu0 0
        %1047 = vmatpush1.bf16.msra.mxu0 0
        %1048 = vmatprep.subr.bf16.mxu0 0
        %1049 = vmatpush1.bf16.msra.mxu0 0
        %1050 = vmatprep.subr.bf16.mxu0 0
        %1051 = vmatpush1.bf16.msra.mxu0 0
        %1052 = vmatprep.mubr.bf16.mxu0 0
        %1053 = vmatmul.mubr.bf16.gmra.mrb[0].mxu0 %v1006
        %v1054 = vpop.f32.mrb[0].mxu0
        %v1055 = vadd.f32 0.0, %v1054
        %v1056 = vpop.f32.mrb[0].mxu0
        %v1057 = vadd.f32 0.0, %v1056
        %v1058 = vpop.f32.mrb[0].mxu0
        %v1059 = vadd.f32 0.0, %v1058
        %v1060 = vpop.f32.mrb[0].mxu0
        %v1061 = vadd.f32 0.0, %v1060
        %1062 = vmatprep.mubr.bf16.mxu0 0
        %1063 = vmatmul.mubr.bf16.gmra.mrb[0].mxu0 %v1009
        %v1064 = vpop.f32.mrb[0].mxu0
        %v1065 = vadd.f32 0.0, %v1064
        %v1066 = vpop.f32.mrb[0].mxu0
        %v1067 = vadd.f32 0.0, %v1066
        %v1068 = vpop.f32.mrb[0].mxu0
        %v1069 = vadd.f32 0.0, %v1068
        %v1070 = vpop.f32.mrb[0].mxu0
        %v1071 = vadd.f32 0.0, %v1070
        %1072 = vmatprep.mubr.bf16.mxu0 0
        %1073 = vmatmul.mubr.bf16.gmra.mrb[0].mxu0 %v1012
        %v1074 = vpop.f32.mrb[0].mxu0
        %v1075 = vadd.f32 0.0, %v1074
        %v1076 = vpop.f32.mrb[0].mxu0
        %v1077 = vadd.f32 0.0, %v1076
        %v1078 = vpop.f32.mrb[0].mxu0
        %v1079 = vpop.f32.mrb[0].mxu0
        %1080 = vdwg.mxu0
        %v1081 = vadd.f32 %v970, %v1055
        %v1082 = vadd.f32 %v971, %v1057
        %v1083 = vadd.f32 %v972, %v1059
        %v1084 = vadd.f32 %v973, %v1061
        %v1085 = vadd.f32 %v974, %v1065
        %v1086 = vadd.f32 %v975, %v1067
        %v1087 = vadd.f32 %v976, %v1069
        %v1088 = vadd.f32 %v977, %v1071
        %v1089 = vadd.f32 %v978, %v1075
        %v1090 = vadd.f32 %v979, %v1077
        %s1091 = scalar_lea.vmem %s1, 160
        %v1092 = vld [vmem:[%s1091] sm:$0xf]
        %v1093 = vld [vmem:[%s1091 + $0x4] sm:$0xf]
        %v1094 = vld [vmem:[%s1091 + $0x8] sm:$0xf]
        %v1095 = vld [vmem:[%s1091 + $0xc] sm:$0xf]
        %v1096 = vld [vmem:[%s1091 + $0x10] sm:$0xf]
        %v1102 = vunpack.c.l.b16 %v1092
        %v1103 = vunpack.c.l.b16 %v1093
        %v1104 = vunpack.c.l.b16 %v1094
        %v1105 = vunpack.c.l.b16 %v1095
        %v1106 = vunpack.c.l.b16 %v1096
        %v1107 = vpack.c.b16 %v1103, %v1102
        %v1108 = vpack.c.b16 %v1105, %v1104
        %v1109 = vpack.c.b16 %v1106, %v1106
        %1110 = vrot.lane.b32.xlu0 %v250, 120
        %v1111 = vpop.permute.xlu0 %1110
        %1112 = vrot.lane.b32.xlu0 %v251, 120
        %v1113 = vpop.permute.xlu0 %1112
        %vm1114 = vcmask 982016
        %v1115 = vsel %vm1114, %v1111, %v1113
        %v1117 = vsel %vm258, %v1107, 0
        %v1120 = vsel %vm258, %v1108, 0
        %v1123 = vsel %vm258, %v1109, 0
        %v1126 = vsel %vm268, %v1115, 0
        %v1129 = vsel %vm268, %v1113, 0
        %1131 = vmatprep.subr.bf16.mxu0 %v1129
        %1132 = vmatpush1.bf16.msra.mxu0 %v1126
        %1133 = vmatprep.subr.bf16.mxu0 0
        %1134 = vmatpush1.bf16.msra.mxu0 0
        %1135 = vmatprep.subr.bf16.mxu0 0
        %1136 = vmatpush1.bf16.msra.mxu0 0
        %1137 = vmatprep.subr.bf16.mxu0 0
        %1138 = vmatpush1.bf16.msra.mxu0 0
        %1139 = vmatprep.subr.bf16.mxu0 0
        %1140 = vmatpush1.bf16.msra.mxu0 0
        %1141 = vmatprep.subr.bf16.mxu0 0
        %1142 = vmatpush1.bf16.msra.mxu0 0
        %1143 = vmatprep.subr.bf16.mxu0 0
        %1144 = vmatpush1.bf16.msra.mxu0 0
        %1145 = vmatprep.subr.bf16.mxu0 0
        %1146 = vmatpush1.bf16.msra.mxu0 0
        %1147 = vmatprep.subr.bf16.mxu0 0
        %1148 = vmatpush1.bf16.msra.mxu0 0
        %1149 = vmatprep.subr.bf16.mxu0 0
        %1150 = vmatpush1.bf16.msra.mxu0 0
        %1151 = vmatprep.subr.bf16.mxu0 0
        %1152 = vmatpush1.bf16.msra.mxu0 0
        %1153 = vmatprep.subr.bf16.mxu0 0
        %1154 = vmatpush1.bf16.msra.mxu0 0
        %1155 = vmatprep.subr.bf16.mxu0 0
        %1156 = vmatpush1.bf16.msra.mxu0 0
        %1157 = vmatprep.subr.bf16.mxu0 0
        %1158 = vmatpush1.bf16.msra.mxu0 0
        %1159 = vmatprep.subr.bf16.mxu0 0
        %1160 = vmatpush1.bf16.msra.mxu0 0
        %1161 = vmatprep.subr.bf16.mxu0 0
        %1162 = vmatpush1.bf16.msra.mxu0 0
        %1163 = vmatprep.mubr.bf16.mxu0 0
        %1164 = vmatmul.mubr.bf16.gmra.mrb[0].mxu0 %v1117
        %v1165 = vpop.f32.mrb[0].mxu0
        %v1166 = vadd.f32 0.0, %v1165
        %v1167 = vpop.f32.mrb[0].mxu0
        %v1168 = vadd.f32 0.0, %v1167
        %v1169 = vpop.f32.mrb[0].mxu0
        %v1170 = vadd.f32 0.0, %v1169
        %v1171 = vpop.f32.mrb[0].mxu0
        %v1172 = vadd.f32 0.0, %v1171
        %1173 = vmatprep.mubr.bf16.mxu0 0
        %1174 = vmatmul.mubr.bf16.gmra.mrb[0].mxu0 %v1120
        %v1175 = vpop.f32.mrb[0].mxu0
        %v1176 = vadd.f32 0.0, %v1175
        %v1177 = vpop.f32.mrb[0].mxu0
        %v1178 = vadd.f32 0.0, %v1177
        %v1179 = vpop.f32.mrb[0].mxu0
        %v1180 = vadd.f32 0.0, %v1179
        %v1181 = vpop.f32.mrb[0].mxu0
        %v1182 = vadd.f32 0.0, %v1181
        %1183 = vmatprep.mubr.bf16.mxu0 0
        %1184 = vmatmul.mubr.bf16.gmra.mrb[0].mxu0 %v1123
        %v1185 = vpop.f32.mrb[0].mxu0
        %v1186 = vadd.f32 0.0, %v1185
        %v1187 = vpop.f32.mrb[0].mxu0
        %v1188 = vadd.f32 0.0, %v1187
        %v1189 = vpop.f32.mrb[0].mxu0
        %v1190 = vpop.f32.mrb[0].mxu0
        %1191 = vdwg.mxu0
        %v1192 = vadd.f32 %v1081, %v1166
        %v1193 = vadd.f32 %v1082, %v1168
        %v1194 = vadd.f32 %v1083, %v1170
        %v1195 = vadd.f32 %v1084, %v1172
        %v1196 = vadd.f32 %v1085, %v1176
        %v1197 = vadd.f32 %v1086, %v1178
        %v1198 = vadd.f32 %v1087, %v1180
        %v1199 = vadd.f32 %v1088, %v1182
        %v1200 = vadd.f32 %v1089, %v1186
        %v1201 = vadd.f32 %v1090, %v1188
        %s1202 = scalar_lea.vmem %s1, 180
        %v1203 = vld [vmem:[%s1202] sm:$0xf]
        %v1204 = vld [vmem:[%s1202 + $0x4] sm:$0xf]
        %v1205 = vld [vmem:[%s1202 + $0x8] sm:$0xf]
        %v1206 = vld [vmem:[%s1202 + $0xc] sm:$0xf]
        %v1207 = vld [vmem:[%s1202 + $0x10] sm:$0xf]
        %v1213 = vunpack.c.l.b16 %v1203
        %v1214 = vunpack.c.l.b16 %v1204
        %v1215 = vunpack.c.l.b16 %v1205
        %v1216 = vunpack.c.l.b16 %v1206
        %v1217 = vunpack.c.l.b16 %v1207
        %v1218 = vpack.c.b16 %v1214, %v1213
        %v1219 = vpack.c.b16 %v1216, %v1215
        %v1220 = vpack.c.b16 %v1217, %v1217
        %1221 = vrot.lane.b32.xlu0 %v250, 119
        %v1222 = vpop.permute.xlu0 %1221
        %1223 = vrot.lane.b32.xlu0 %v251, 119
        %v1224 = vpop.permute.xlu0 %1223
        %vm1225 = vcmask 973824
        %v1226 = vsel %vm1225, %v1222, %v1224
        %v1228 = vsel %vm258, %v1218, 0
        %v1231 = vsel %vm258, %v1219, 0
        %v1234 = vsel %vm258, %v1220, 0
        %v1237 = vsel %vm268, %v1226, 0
        %v1240 = vsel %vm268, %v1224, 0
        %1242 = vmatprep.subr.bf16.mxu0 %v1240
        %1243 = vmatpush1.bf16.msra.mxu0 %v1237
        %1244 = vmatprep.subr.bf16.mxu0 0
        %1245 = vmatpush1.bf16.msra.mxu0 0
        %1246 = vmatprep.subr.bf16.mxu0 0
        %1247 = vmatpush1.bf16.msra.mxu0 0
        %1248 = vmatprep.subr.bf16.mxu0 0
        %1249 = vmatpush1.bf16.msra.mxu0 0
        %1250 = vmatprep.subr.bf16.mxu0 0
        %1251 = vmatpush1.bf16.msra.mxu0 0
        %1252 = vmatprep.subr.bf16.mxu0 0
        %1253 = vmatpush1.bf16.msra.mxu0 0
        %1254 = vmatprep.subr.bf16.mxu0 0
        %1255 = vmatpush1.bf16.msra.mxu0 0
        %1256 = vmatprep.subr.bf16.mxu0 0
        %1257 = vmatpush1.bf16.msra.mxu0 0
        %1258 = vmatprep.subr.bf16.mxu0 0
        %1259 = vmatpush1.bf16.msra.mxu0 0
        %1260 = vmatprep.subr.bf16.mxu0 0
        %1261 = vmatpush1.bf16.msra.mxu0 0
        %1262 = vmatprep.subr.bf16.mxu0 0
        %1263 = vmatpush1.bf16.msra.mxu0 0
        %1264 = vmatprep.subr.bf16.mxu0 0
        %1265 = vmatpush1.bf16.msra.mxu0 0
        %1266 = vmatprep.subr.bf16.mxu0 0
        %1267 = vmatpush1.bf16.msra.mxu0 0
        %1268 = vmatprep.subr.bf16.mxu0 0
        %1269 = vmatpush1.bf16.msra.mxu0 0
        %1270 = vmatprep.subr.bf16.mxu0 0
        %1271 = vmatpush1.bf16.msra.mxu0 0
        %1272 = vmatprep.subr.bf16.mxu0 0
        %1273 = vmatpush1.bf16.msra.mxu0 0
        %1274 = vmatprep.mubr.bf16.mxu0 0
        %1275 = vmatmul.mubr.bf16.gmra.mrb[0].mxu0 %v1228
        %v1276 = vpop.f32.mrb[0].mxu0
        %v1277 = vadd.f32 0.0, %v1276
        %v1278 = vpop.f32.mrb[0].mxu0
        %v1279 = vadd.f32 0.0, %v1278
        %v1280 = vpop.f32.mrb[0].mxu0
        %v1281 = vadd.f32 0.0, %v1280
        %v1282 = vpop.f32.mrb[0].mxu0
        %v1283 = vadd.f32 0.0, %v1282
        %1284 = vmatprep.mubr.bf16.mxu0 0
        %1285 = vmatmul.mubr.bf16.gmra.mrb[0].mxu0 %v1231
        %v1286 = vpop.f32.mrb[0].mxu0
        %v1287 = vadd.f32 0.0, %v1286
        %v1288 = vpop.f32.mrb[0].mxu0
        %v1289 = vadd.f32 0.0, %v1288
        %v1290 = vpop.f32.mrb[0].mxu0
        %v1291 = vadd.f32 0.0, %v1290
        %v1292 = vpop.f32.mrb[0].mxu0
        %v1293 = vadd.f32 0.0, %v1292
        %1294 = vmatprep.mubr.bf16.mxu0 0
        %1295 = vmatmul.mubr.bf16.gmra.mrb[0].mxu0 %v1234
        %v1296 = vpop.f32.mrb[0].mxu0
        %v1297 = vadd.f32 0.0, %v1296
        %v1298 = vpop.f32.mrb[0].mxu0
        %v1299 = vadd.f32 0.0, %v1298
        %v1300 = vpop.f32.mrb[0].mxu0
        %v1301 = vpop.f32.mrb[0].mxu0
        %1302 = vdwg.mxu0
        %v1303 = vadd.f32 %v1192, %v1277
        %v1304 = vadd.f32 %v1193, %v1279
        %v1305 = vadd.f32 %v1194, %v1281
        %v1306 = vadd.f32 %v1195, %v1283
        %v1307 = vadd.f32 %v1196, %v1287
        %v1308 = vadd.f32 %v1197, %v1289
        %v1309 = vadd.f32 %v1198, %v1291
        %v1310 = vadd.f32 %v1199, %v1293
        %v1311 = vadd.f32 %v1200, %v1297
        %v1312 = vadd.f32 %v1201, %v1299
        %s1313 = scalar_lea.vmem %s1, 200
        %v1314 = vld [vmem:[%s1313] sm:$0xf]
        %v1315 = vld [vmem:[%s1313 + $0x4] sm:$0xf]
        %v1316 = vld [vmem:[%s1313 + $0x8] sm:$0xf]
        %v1317 = vld [vmem:[%s1313 + $0xc] sm:$0xf]
        %v1318 = vld [vmem:[%s1313 + $0x10] sm:$0xf]
        %v1324 = vunpack.c.l.b16 %v1314
        %v1325 = vunpack.c.l.b16 %v1315
        %v1326 = vunpack.c.l.b16 %v1316
        %v1327 = vunpack.c.l.b16 %v1317
        %v1328 = vunpack.c.l.b16 %v1318
        %v1329 = vpack.c.b16 %v1325, %v1324
        %v1330 = vpack.c.b16 %v1327, %v1326
        %v1331 = vpack.c.b16 %v1328, %v1328
        %1332 = vrot.lane.b32.xlu0 %v250, 118
        %v1333 = vpop.permute.xlu0 %1332
        %1334 = vrot.lane.b32.xlu0 %v251, 118
        %v1335 = vpop.permute.xlu0 %1334
        %vm1336 = vcmask 965632
        %v1337 = vsel %vm1336, %v1333, %v1335
        %v1339 = vsel %vm258, %v1329, 0
        %v1342 = vsel %vm258, %v1330, 0
        %v1345 = vsel %vm258, %v1331, 0
        %v1348 = vsel %vm268, %v1337, 0
        %v1351 = vsel %vm268, %v1335, 0
        %1353 = vmatprep.subr.bf16.mxu0 %v1351
        %1354 = vmatpush1.bf16.msra.mxu0 %v1348
        %1355 = vmatprep.subr.bf16.mxu0 0
        %1356 = vmatpush1.bf16.msra.mxu0 0
        %1357 = vmatprep.subr.bf16.mxu0 0
        %1358 = vmatpush1.bf16.msra.mxu0 0
        %1359 = vmatprep.subr.bf16.mxu0 0
        %1360 = vmatpush1.bf16.msra.mxu0 0
        %1361 = vmatprep.subr.bf16.mxu0 0
        %1362 = vmatpush1.bf16.msra.mxu0 0
        %1363 = vmatprep.subr.bf16.mxu0 0
        %1364 = vmatpush1.bf16.msra.mxu0 0
        %1365 = vmatprep.subr.bf16.mxu0 0
        %1366 = vmatpush1.bf16.msra.mxu0 0
        %1367 = vmatprep.subr.bf16.mxu0 0
        %1368 = vmatpush1.bf16.msra.mxu0 0
        %1369 = vmatprep.subr.bf16.mxu0 0
        %1370 = vmatpush1.bf16.msra.mxu0 0
        %1371 = vmatprep.subr.bf16.mxu0 0
        %1372 = vmatpush1.bf16.msra.mxu0 0
        %1373 = vmatprep.subr.bf16.mxu0 0
        %1374 = vmatpush1.bf16.msra.mxu0 0
        %1375 = vmatprep.subr.bf16.mxu0 0
        %1376 = vmatpush1.bf16.msra.mxu0 0
        %1377 = vmatprep.subr.bf16.mxu0 0
        %1378 = vmatpush1.bf16.msra.mxu0 0
        %1379 = vmatprep.subr.bf16.mxu0 0
        %1380 = vmatpush1.bf16.msra.mxu0 0
        %1381 = vmatprep.subr.bf16.mxu0 0
        %1382 = vmatpush1.bf16.msra.mxu0 0
        %1383 = vmatprep.subr.bf16.mxu0 0
        %1384 = vmatpush1.bf16.msra.mxu0 0
        %1385 = vmatprep.mubr.bf16.mxu0 0
        %1386 = vmatmul.mubr.bf16.gmra.mrb[0].mxu0 %v1339
        %v1387 = vpop.f32.mrb[0].mxu0
        %v1388 = vadd.f32 0.0, %v1387
        %v1389 = vpop.f32.mrb[0].mxu0
        %v1390 = vadd.f32 0.0, %v1389
        %v1391 = vpop.f32.mrb[0].mxu0
        %v1392 = vadd.f32 0.0, %v1391
        %v1393 = vpop.f32.mrb[0].mxu0
        %v1394 = vadd.f32 0.0, %v1393
        %1395 = vmatprep.mubr.bf16.mxu0 0
        %1396 = vmatmul.mubr.bf16.gmra.mrb[0].mxu0 %v1342
        %v1397 = vpop.f32.mrb[0].mxu0
        %v1398 = vadd.f32 0.0, %v1397
        %v1399 = vpop.f32.mrb[0].mxu0
        %v1400 = vadd.f32 0.0, %v1399
        %v1401 = vpop.f32.mrb[0].mxu0
        %v1402 = vadd.f32 0.0, %v1401
        %v1403 = vpop.f32.mrb[0].mxu0
        %v1404 = vadd.f32 0.0, %v1403
        %1405 = vmatprep.mubr.bf16.mxu0 0
        %1406 = vmatmul.mubr.bf16.gmra.mrb[0].mxu0 %v1345
        %v1407 = vpop.f32.mrb[0].mxu0
        %v1408 = vadd.f32 0.0, %v1407
        %v1409 = vpop.f32.mrb[0].mxu0
        %v1410 = vadd.f32 0.0, %v1409
        %v1411 = vpop.f32.mrb[0].mxu0
        %v1412 = vpop.f32.mrb[0].mxu0
        %1413 = vdwg.mxu0
        %v1414 = vadd.f32 %v1303, %v1388
        %v1415 = vadd.f32 %v1304, %v1390
        %v1416 = vadd.f32 %v1305, %v1392
        %v1417 = vadd.f32 %v1306, %v1394
        %v1418 = vadd.f32 %v1307, %v1398
        %v1419 = vadd.f32 %v1308, %v1400
        %v1420 = vadd.f32 %v1309, %v1402
        %v1421 = vadd.f32 %v1310, %v1404
        %v1422 = vadd.f32 %v1311, %v1408
        %v1423 = vadd.f32 %v1312, %v1410
        %s1424 = scalar_lea.vmem %s1, 220
        %v1425 = vld [vmem:[%s1424] sm:$0xf]
        %v1426 = vld [vmem:[%s1424 + $0x4] sm:$0xf]
        %v1427 = vld [vmem:[%s1424 + $0x8] sm:$0xf]
        %v1428 = vld [vmem:[%s1424 + $0xc] sm:$0xf]
        %v1429 = vld [vmem:[%s1424 + $0x10] sm:$0xf]
        %v1435 = vunpack.c.l.b16 %v1425
        %v1436 = vunpack.c.l.b16 %v1426
        %v1437 = vunpack.c.l.b16 %v1427
        %v1438 = vunpack.c.l.b16 %v1428
        %v1439 = vunpack.c.l.b16 %v1429
        %v1440 = vpack.c.b16 %v1436, %v1435
        %v1441 = vpack.c.b16 %v1438, %v1437
        %v1442 = vpack.c.b16 %v1439, %v1439
        %1443 = vrot.lane.b32.xlu0 %v250, 117
        %v1444 = vpop.permute.xlu0 %1443
        %1445 = vrot.lane.b32.xlu0 %v251, 117
        %v1446 = vpop.permute.xlu0 %1445
        %vm1447 = vcmask 957440
        %v1448 = vsel %vm1447, %v1444, %v1446
        %v1450 = vsel %vm258, %v1440, 0
        %v1453 = vsel %vm258, %v1441, 0
        %v1456 = vsel %vm258, %v1442, 0
        %v1459 = vsel %vm268, %v1448, 0
        %v1462 = vsel %vm268, %v1446, 0
        %1464 = vmatprep.subr.bf16.mxu0 %v1462
        %1465 = vmatpush1.bf16.msra.mxu0 %v1459
        %1466 = vmatprep.subr.bf16.mxu0 0
        %1467 = vmatpush1.bf16.msra.mxu0 0
        %1468 = vmatprep.subr.bf16.mxu0 0
        %1469 = vmatpush1.bf16.msra.mxu0 0
        %1470 = vmatprep.subr.bf16.mxu0 0
        %1471 = vmatpush1.bf16.msra.mxu0 0
        %1472 = vmatprep.subr.bf16.mxu0 0
        %1473 = vmatpush1.bf16.msra.mxu0 0
        %1474 = vmatprep.subr.bf16.mxu0 0
        %1475 = vmatpush1.bf16.msra.mxu0 0
        %1476 = vmatprep.subr.bf16.mxu0 0
        %1477 = vmatpush1.bf16.msra.mxu0 0
        %1478 = vmatprep.subr.bf16.mxu0 0
        %1479 = vmatpush1.bf16.msra.mxu0 0
        %1480 = vmatprep.subr.bf16.mxu0 0
        %1481 = vmatpush1.bf16.msra.mxu0 0
        %1482 = vmatprep.subr.bf16.mxu0 0
        %1483 = vmatpush1.bf16.msra.mxu0 0
        %1484 = vmatprep.subr.bf16.mxu0 0
        %1485 = vmatpush1.bf16.msra.mxu0 0
        %1486 = vmatprep.subr.bf16.mxu0 0
        %1487 = vmatpush1.bf16.msra.mxu0 0
        %1488 = vmatprep.subr.bf16.mxu0 0
        %1489 = vmatpush1.bf16.msra.mxu0 0
        %1490 = vmatprep.subr.bf16.mxu0 0
        %1491 = vmatpush1.bf16.msra.mxu0 0
        %1492 = vmatprep.subr.bf16.mxu0 0
        %1493 = vmatpush1.bf16.msra.mxu0 0
        %1494 = vmatprep.subr.bf16.mxu0 0
        %1495 = vmatpush1.bf16.msra.mxu0 0
        %1496 = vmatprep.mubr.bf16.mxu0 0
        %1497 = vmatmul.mubr.bf16.gmra.mrb[0].mxu0 %v1450
        %v1498 = vpop.f32.mrb[0].mxu0
        %v1499 = vadd.f32 0.0, %v1498
        %v1500 = vpop.f32.mrb[0].mxu0
        %v1501 = vadd.f32 0.0, %v1500
        %v1502 = vpop.f32.mrb[0].mxu0
        %v1503 = vadd.f32 0.0, %v1502
        %v1504 = vpop.f32.mrb[0].mxu0
        %v1505 = vadd.f32 0.0, %v1504
        %1506 = vmatprep.mubr.bf16.mxu0 0
        %1507 = vmatmul.mubr.bf16.gmra.mrb[0].mxu0 %v1453
        %v1508 = vpop.f32.mrb[0].mxu0
        %v1509 = vadd.f32 0.0, %v1508
        %v1510 = vpop.f32.mrb[0].mxu0
        %v1511 = vadd.f32 0.0, %v1510
        %v1512 = vpop.f32.mrb[0].mxu0
        %v1513 = vadd.f32 0.0, %v1512
        %v1514 = vpop.f32.mrb[0].mxu0
        %v1515 = vadd.f32 0.0, %v1514
        %1516 = vmatprep.mubr.bf16.mxu0 0
        %1517 = vmatmul.mubr.bf16.gmra.mrb[0].mxu0 %v1456
        %v1518 = vpop.f32.mrb[0].mxu0
        %v1519 = vadd.f32 0.0, %v1518
        %v1520 = vpop.f32.mrb[0].mxu0
        %v1521 = vadd.f32 0.0, %v1520
        %v1522 = vpop.f32.mrb[0].mxu0
        %v1523 = vpop.f32.mrb[0].mxu0
        %1524 = vdwg.mxu0
        %v1525 = vadd.f32 %v1414, %v1499
        %v1526 = vadd.f32 %v1415, %v1501
        %v1527 = vadd.f32 %v1416, %v1503
        %v1528 = vadd.f32 %v1417, %v1505
        %v1529 = vadd.f32 %v1418, %v1509
        %v1530 = vadd.f32 %v1419, %v1511
        %v1531 = vadd.f32 %v1420, %v1513
        %v1532 = vadd.f32 %v1421, %v1515
        %v1533 = vadd.f32 %v1422, %v1519
        %v1534 = vadd.f32 %v1423, %v1521
        %s1535 = scalar_lea.vmem %s1, 240
        %v1536 = vld [vmem:[%s1535] sm:$0xf]
        %v1537 = vld [vmem:[%s1535 + $0x4] sm:$0xf]
        %v1538 = vld [vmem:[%s1535 + $0x8] sm:$0xf]
        %v1539 = vld [vmem:[%s1535 + $0xc] sm:$0xf]
        %v1540 = vld [vmem:[%s1535 + $0x10] sm:$0xf]
        %v1546 = vunpack.c.l.b16 %v1536
        %v1547 = vunpack.c.l.b16 %v1537
        %v1548 = vunpack.c.l.b16 %v1538
        %v1549 = vunpack.c.l.b16 %v1539
        %v1550 = vunpack.c.l.b16 %v1540
        %v1551 = vpack.c.b16 %v1547, %v1546
        %v1552 = vpack.c.b16 %v1549, %v1548
        %v1553 = vpack.c.b16 %v1550, %v1550
        %1554 = vrot.lane.b32.xlu0 %v250, 116
        %v1555 = vpop.permute.xlu0 %1554
        %1556 = vrot.lane.b32.xlu0 %v251, 116
        %v1557 = vpop.permute.xlu0 %1556
        %vm1558 = vcmask 949248
        %v1559 = vsel %vm1558, %v1555, %v1557
        %v1561 = vsel %vm258, %v1551, 0
        %v1564 = vsel %vm258, %v1552, 0
        %v1567 = vsel %vm258, %v1553, 0
        %v1570 = vsel %vm268, %v1559, 0
        %v1573 = vsel %vm268, %v1557, 0
        %1575 = vmatprep.subr.bf16.mxu0 %v1573
        %1576 = vmatpush1.bf16.msra.mxu0 %v1570
        %1577 = vmatprep.subr.bf16.mxu0 0
        %1578 = vmatpush1.bf16.msra.mxu0 0
        %1579 = vmatprep.subr.bf16.mxu0 0
        %1580 = vmatpush1.bf16.msra.mxu0 0
        %1581 = vmatprep.subr.bf16.mxu0 0
        %1582 = vmatpush1.bf16.msra.mxu0 0
        %1583 = vmatprep.subr.bf16.mxu0 0
        %1584 = vmatpush1.bf16.msra.mxu0 0
        %1585 = vmatprep.subr.bf16.mxu0 0
        %1586 = vmatpush1.bf16.msra.mxu0 0
        %1587 = vmatprep.subr.bf16.mxu0 0
        %1588 = vmatpush1.bf16.msra.mxu0 0
        %1589 = vmatprep.subr.bf16.mxu0 0
        %1590 = vmatpush1.bf16.msra.mxu0 0
        %1591 = vmatprep.subr.bf16.mxu0 0
        %1592 = vmatpush1.bf16.msra.mxu0 0
        %1593 = vmatprep.subr.bf16.mxu0 0
        %1594 = vmatpush1.bf16.msra.mxu0 0
        %1595 = vmatprep.subr.bf16.mxu0 0
        %1596 = vmatpush1.bf16.msra.mxu0 0
        %1597 = vmatprep.subr.bf16.mxu0 0
        %1598 = vmatpush1.bf16.msra.mxu0 0
        %1599 = vmatprep.subr.bf16.mxu0 0
        %1600 = vmatpush1.bf16.msra.mxu0 0
        %1601 = vmatprep.subr.bf16.mxu0 0
        %1602 = vmatpush1.bf16.msra.mxu0 0
        %1603 = vmatprep.subr.bf16.mxu0 0
        %1604 = vmatpush1.bf16.msra.mxu0 0
        %1605 = vmatprep.subr.bf16.mxu0 0
        %1606 = vmatpush1.bf16.msra.mxu0 0
        %1607 = vmatprep.mubr.bf16.mxu0 0
        %1608 = vmatmul.mubr.bf16.gmra.mrb[0].mxu0 %v1561
        %v1609 = vpop.f32.mrb[0].mxu0
        %v1610 = vadd.f32 0.0, %v1609
        %v1611 = vpop.f32.mrb[0].mxu0
        %v1612 = vadd.f32 0.0, %v1611
        %v1613 = vpop.f32.mrb[0].mxu0
        %v1614 = vadd.f32 0.0, %v1613
        %v1615 = vpop.f32.mrb[0].mxu0
        %v1616 = vadd.f32 0.0, %v1615
        %1617 = vmatprep.mubr.bf16.mxu0 0
        %1618 = vmatmul.mubr.bf16.gmra.mrb[0].mxu0 %v1564
        %v1619 = vpop.f32.mrb[0].mxu0
        %v1620 = vadd.f32 0.0, %v1619
        %v1621 = vpop.f32.mrb[0].mxu0
        %v1622 = vadd.f32 0.0, %v1621
        %v1623 = vpop.f32.mrb[0].mxu0
        %v1624 = vadd.f32 0.0, %v1623
        %v1625 = vpop.f32.mrb[0].mxu0
        %v1626 = vadd.f32 0.0, %v1625
        %1627 = vmatprep.mubr.bf16.mxu0 0
        %1628 = vmatmul.mubr.bf16.gmra.mrb[0].mxu0 %v1567
        %v1629 = vpop.f32.mrb[0].mxu0
        %v1630 = vadd.f32 0.0, %v1629
        %v1631 = vpop.f32.mrb[0].mxu0
        %v1632 = vadd.f32 0.0, %v1631
        %v1633 = vpop.f32.mrb[0].mxu0
        %v1634 = vpop.f32.mrb[0].mxu0
        %1635 = vdwg.mxu0
        %v1636 = vadd.f32 %v1525, %v1610
        %v1637 = vadd.f32 %v1526, %v1612
        %v1638 = vadd.f32 %v1527, %v1614
        %v1639 = vadd.f32 %v1528, %v1616
        %v1640 = vadd.f32 %v1529, %v1620
        %v1641 = vadd.f32 %v1530, %v1622
        %v1642 = vadd.f32 %v1531, %v1624
        %v1643 = vadd.f32 %v1532, %v1626
        %v1644 = vadd.f32 %v1533, %v1630
        %v1645 = vadd.f32 %v1534, %v1632
        %s1646 = scalar_lea.vmem %s1, 260
        %v1647 = vld [vmem:[%s1646] sm:$0xf]
        %v1648 = vld [vmem:[%s1646 + $0x4] sm:$0xf]
        %v1649 = vld [vmem:[%s1646 + $0x8] sm:$0xf]
        %v1650 = vld [vmem:[%s1646 + $0xc] sm:$0xf]
        %v1651 = vld [vmem:[%s1646 + $0x10] sm:$0xf]
        %v1657 = vunpack.c.l.b16 %v1647
        %v1658 = vunpack.c.l.b16 %v1648
        %v1659 = vunpack.c.l.b16 %v1649
        %v1660 = vunpack.c.l.b16 %v1650
        %v1661 = vunpack.c.l.b16 %v1651
        %v1662 = vpack.c.b16 %v1658, %v1657
        %v1663 = vpack.c.b16 %v1660, %v1659
        %v1664 = vpack.c.b16 %v1661, %v1661
        %1665 = vrot.lane.b32.xlu0 %v250, 115
        %v1666 = vpop.permute.xlu0 %1665
        %1667 = vrot.lane.b32.xlu0 %v251, 115
        %v1668 = vpop.permute.xlu0 %1667
        %vm1669 = vcmask 941056
        %v1670 = vsel %vm1669, %v1666, %v1668
        %v1672 = vsel %vm258, %v1662, 0
        %v1675 = vsel %vm258, %v1663, 0
        %v1678 = vsel %vm258, %v1664, 0
        %v1681 = vsel %vm268, %v1670, 0
        %v1684 = vsel %vm268, %v1668, 0
        %1686 = vmatprep.subr.bf16.mxu0 %v1684
        %1687 = vmatpush1.bf16.msra.mxu0 %v1681
        %1688 = vmatprep.subr.bf16.mxu0 0
        %1689 = vmatpush1.bf16.msra.mxu0 0
        %1690 = vmatprep.subr.bf16.mxu0 0
        %1691 = vmatpush1.bf16.msra.mxu0 0
        %1692 = vmatprep.subr.bf16.mxu0 0
        %1693 = vmatpush1.bf16.msra.mxu0 0
        %1694 = vmatprep.subr.bf16.mxu0 0
        %1695 = vmatpush1.bf16.msra.mxu0 0
        %1696 = vmatprep.subr.bf16.mxu0 0
        %1697 = vmatpush1.bf16.msra.mxu0 0
        %1698 = vmatprep.subr.bf16.mxu0 0
        %1699 = vmatpush1.bf16.msra.mxu0 0
        %1700 = vmatprep.subr.bf16.mxu0 0
        %1701 = vmatpush1.bf16.msra.mxu0 0
        %1702 = vmatprep.subr.bf16.mxu0 0
        %1703 = vmatpush1.bf16.msra.mxu0 0
        %1704 = vmatprep.subr.bf16.mxu0 0
        %1705 = vmatpush1.bf16.msra.mxu0 0
        %1706 = vmatprep.subr.bf16.mxu0 0
        %1707 = vmatpush1.bf16.msra.mxu0 0
        %1708 = vmatprep.subr.bf16.mxu0 0
        %1709 = vmatpush1.bf16.msra.mxu0 0
        %1710 = vmatprep.subr.bf16.mxu0 0
        %1711 = vmatpush1.bf16.msra.mxu0 0
        %1712 = vmatprep.subr.bf16.mxu0 0
        %1713 = vmatpush1.bf16.msra.mxu0 0
        %1714 = vmatprep.subr.bf16.mxu0 0
        %1715 = vmatpush1.bf16.msra.mxu0 0
        %1716 = vmatprep.subr.bf16.mxu0 0
        %1717 = vmatpush1.bf16.msra.mxu0 0
        %1718 = vmatprep.mubr.bf16.mxu0 0
        %1719 = vmatmul.mubr.bf16.gmra.mrb[0].mxu0 %v1672
        %v1720 = vpop.f32.mrb[0].mxu0
        %v1721 = vadd.f32 0.0, %v1720
        %v1722 = vpop.f32.mrb[0].mxu0
        %v1723 = vadd.f32 0.0, %v1722
        %v1724 = vpop.f32.mrb[0].mxu0
        %v1725 = vadd.f32 0.0, %v1724
        %v1726 = vpop.f32.mrb[0].mxu0
        %v1727 = vadd.f32 0.0, %v1726
        %1728 = vmatprep.mubr.bf16.mxu0 0
        %1729 = vmatmul.mubr.bf16.gmra.mrb[0].mxu0 %v1675
        %v1730 = vpop.f32.mrb[0].mxu0
        %v1731 = vadd.f32 0.0, %v1730
        %v1732 = vpop.f32.mrb[0].mxu0
        %v1733 = vadd.f32 0.0, %v1732
        %v1734 = vpop.f32.mrb[0].mxu0
        %v1735 = vadd.f32 0.0, %v1734
        %v1736 = vpop.f32.mrb[0].mxu0
        %v1737 = vadd.f32 0.0, %v1736
        %1738 = vmatprep.mubr.bf16.mxu0 0
        %1739 = vmatmul.mubr.bf16.gmra.mrb[0].mxu0 %v1678
        %v1740 = vpop.f32.mrb[0].mxu0
        %v1741 = vadd.f32 0.0, %v1740
        %v1742 = vpop.f32.mrb[0].mxu0
        %v1743 = vadd.f32 0.0, %v1742
        %v1744 = vpop.f32.mrb[0].mxu0
        %v1745 = vpop.f32.mrb[0].mxu0
        %1746 = vdwg.mxu0
        %v1747 = vadd.f32 %v1636, %v1721
        %v1748 = vadd.f32 %v1637, %v1723
        %v1749 = vadd.f32 %v1638, %v1725
        %v1750 = vadd.f32 %v1639, %v1727
        %v1751 = vadd.f32 %v1640, %v1731
        %v1752 = vadd.f32 %v1641, %v1733
        %v1753 = vadd.f32 %v1642, %v1735
        %v1754 = vadd.f32 %v1643, %v1737
        %v1755 = vadd.f32 %v1644, %v1741
        %v1756 = vadd.f32 %v1645, %v1743
        %s1757 = scalar_lea.vmem %s1, 280
        %v1758 = vld [vmem:[%s1757] sm:$0xf]
        %v1759 = vld [vmem:[%s1757 + $0x4] sm:$0xf]
        %v1760 = vld [vmem:[%s1757 + $0x8] sm:$0xf]
        %v1761 = vld [vmem:[%s1757 + $0xc] sm:$0xf]
        %v1762 = vld [vmem:[%s1757 + $0x10] sm:$0xf]
        %v1768 = vunpack.c.l.b16 %v1758
        %v1769 = vunpack.c.l.b16 %v1759
        %v1770 = vunpack.c.l.b16 %v1760
        %v1771 = vunpack.c.l.b16 %v1761
        %v1772 = vunpack.c.l.b16 %v1762
        %v1773 = vpack.c.b16 %v1769, %v1768
        %v1774 = vpack.c.b16 %v1771, %v1770
        %v1775 = vpack.c.b16 %v1772, %v1772
        %1776 = vrot.lane.b32.xlu0 %v250, 114
        %v1777 = vpop.permute.xlu0 %1776
        %1778 = vrot.lane.b32.xlu0 %v251, 114
        %v1779 = vpop.permute.xlu0 %1778
        %vm1780 = vcmask 932864
        %v1781 = vsel %vm1780, %v1777, %v1779
        %v1783 = vsel %vm258, %v1773, 0
        %v1786 = vsel %vm258, %v1774, 0
        %v1789 = vsel %vm258, %v1775, 0
        %v1792 = vsel %vm268, %v1781, 0
        %v1795 = vsel %vm268, %v1779, 0
        %1797 = vmatprep.subr.bf16.mxu0 %v1795
        %1798 = vmatpush1.bf16.msra.mxu0 %v1792
        %1799 = vmatprep.subr.bf16.mxu0 0
        %1800 = vmatpush1.bf16.msra.mxu0 0
        %1801 = vmatprep.subr.bf16.mxu0 0
        %1802 = vmatpush1.bf16.msra.mxu0 0
        %1803 = vmatprep.subr.bf16.mxu0 0
        %1804 = vmatpush1.bf16.msra.mxu0 0
        %1805 = vmatprep.subr.bf16.mxu0 0
        %1806 = vmatpush1.bf16.msra.mxu0 0
        %1807 = vmatprep.subr.bf16.mxu0 0
        %1808 = vmatpush1.bf16.msra.mxu0 0
        %1809 = vmatprep.subr.bf16.mxu0 0
        %1810 = vmatpush1.bf16.msra.mxu0 0
        %1811 = vmatprep.subr.bf16.mxu0 0
        %1812 = vmatpush1.bf16.msra.mxu0 0
        %1813 = vmatprep.subr.bf16.mxu0 0
        %1814 = vmatpush1.bf16.msra.mxu0 0
        %1815 = vmatprep.subr.bf16.mxu0 0
        %1816 = vmatpush1.bf16.msra.mxu0 0
        %1817 = vmatprep.subr.bf16.mxu0 0
        %1818 = vmatpush1.bf16.msra.mxu0 0
        %1819 = vmatprep.subr.bf16.mxu0 0
        %1820 = vmatpush1.bf16.msra.mxu0 0
        %1821 = vmatprep.subr.bf16.mxu0 0
        %1822 = vmatpush1.bf16.msra.mxu0 0
        %1823 = vmatprep.subr.bf16.mxu0 0
        %1824 = vmatpush1.bf16.msra.mxu0 0
        %1825 = vmatprep.subr.bf16.mxu0 0
        %1826 = vmatpush1.bf16.msra.mxu0 0
        %1827 = vmatprep.subr.bf16.mxu0 0
        %1828 = vmatpush1.bf16.msra.mxu0 0
        %1829 = vmatprep.mubr.bf16.mxu0 0
        %1830 = vmatmul.mubr.bf16.gmra.mrb[0].mxu0 %v1783
        %v1831 = vpop.f32.mrb[0].mxu0
        %v1832 = vadd.f32 0.0, %v1831
        %v1833 = vpop.f32.mrb[0].mxu0
        %v1834 = vadd.f32 0.0, %v1833
        %v1835 = vpop.f32.mrb[0].mxu0
        %v1836 = vadd.f32 0.0, %v1835
        %v1837 = vpop.f32.mrb[0].mxu0
        %v1838 = vadd.f32 0.0, %v1837
        %1839 = vmatprep.mubr.bf16.mxu0 0
        %1840 = vmatmul.mubr.bf16.gmra.mrb[0].mxu0 %v1786
        %v1841 = vpop.f32.mrb[0].mxu0
        %v1842 = vadd.f32 0.0, %v1841
        %v1843 = vpop.f32.mrb[0].mxu0
        %v1844 = vadd.f32 0.0, %v1843
        %v1845 = vpop.f32.mrb[0].mxu0
        %v1846 = vadd.f32 0.0, %v1845
        %v1847 = vpop.f32.mrb[0].mxu0
        %v1848 = vadd.f32 0.0, %v1847
        %1849 = vmatprep.mubr.bf16.mxu0 0
        %1850 = vmatmul.mubr.bf16.gmra.mrb[0].mxu0 %v1789
        %v1851 = vpop.f32.mrb[0].mxu0
        %v1852 = vadd.f32 0.0, %v1851
        %v1853 = vpop.f32.mrb[0].mxu0
        %v1854 = vadd.f32 0.0, %v1853
        %v1855 = vpop.f32.mrb[0].mxu0
        %v1856 = vpop.f32.mrb[0].mxu0
        %1857 = vdwg.mxu0
        %v1858 = vadd.f32 %v1747, %v1832
        %v1859 = vadd.f32 %v1748, %v1834
        %v1860 = vadd.f32 %v1749, %v1836
        %v1861 = vadd.f32 %v1750, %v1838
        %v1862 = vadd.f32 %v1751, %v1842
        %v1863 = vadd.f32 %v1752, %v1844
        %v1864 = vadd.f32 %v1753, %v1846
        %v1865 = vadd.f32 %v1754, %v1848
        %v1866 = vadd.f32 %v1755, %v1852
        %v1867 = vadd.f32 %v1756, %v1854
        %s1868 = scalar_lea.vmem %s1, 300
        %v1869 = vld [vmem:[%s1868] sm:$0xf]
        %v1870 = vld [vmem:[%s1868 + $0x4] sm:$0xf]
        %v1871 = vld [vmem:[%s1868 + $0x8] sm:$0xf]
        %v1872 = vld [vmem:[%s1868 + $0xc] sm:$0xf]
        %v1873 = vld [vmem:[%s1868 + $0x10] sm:$0xf]
        %v1879 = vunpack.c.l.b16 %v1869
        %v1880 = vunpack.c.l.b16 %v1870
        %v1881 = vunpack.c.l.b16 %v1871
        %v1882 = vunpack.c.l.b16 %v1872
        %v1883 = vunpack.c.l.b16 %v1873
        %v1884 = vpack.c.b16 %v1880, %v1879
        %v1885 = vpack.c.b16 %v1882, %v1881
        %v1886 = vpack.c.b16 %v1883, %v1883
        %1887 = vrot.lane.b32.xlu0 %v250, 113
        %v1888 = vpop.permute.xlu0 %1887
        %1889 = vrot.lane.b32.xlu0 %v251, 113
        %v1890 = vpop.permute.xlu0 %1889
        %vm1891 = vcmask 924672
        %v1892 = vsel %vm1891, %v1888, %v1890
        %v1894 = vsel %vm258, %v1884, 0
        %v1897 = vsel %vm258, %v1885, 0
        %v1900 = vsel %vm258, %v1886, 0
        %v1903 = vsel %vm268, %v1892, 0
        %v1906 = vsel %vm268, %v1890, 0
        %1908 = vmatprep.subr.bf16.mxu0 %v1906
        %1909 = vmatpush1.bf16.msra.mxu0 %v1903
        %1910 = vmatprep.subr.bf16.mxu0 0
        %1911 = vmatpush1.bf16.msra.mxu0 0
        %1912 = vmatprep.subr.bf16.mxu0 0
        %1913 = vmatpush1.bf16.msra.mxu0 0
        %1914 = vmatprep.subr.bf16.mxu0 0
        %1915 = vmatpush1.bf16.msra.mxu0 0
        %1916 = vmatprep.subr.bf16.mxu0 0
        %1917 = vmatpush1.bf16.msra.mxu0 0
        %1918 = vmatprep.subr.bf16.mxu0 0
        %1919 = vmatpush1.bf16.msra.mxu0 0
        %1920 = vmatprep.subr.bf16.mxu0 0
        %1921 = vmatpush1.bf16.msra.mxu0 0
        %1922 = vmatprep.subr.bf16.mxu0 0
        %1923 = vmatpush1.bf16.msra.mxu0 0
        %1924 = vmatprep.subr.bf16.mxu0 0
        %1925 = vmatpush1.bf16.msra.mxu0 0
        %1926 = vmatprep.subr.bf16.mxu0 0
        %1927 = vmatpush1.bf16.msra.mxu0 0
        %1928 = vmatprep.subr.bf16.mxu0 0
        %1929 = vmatpush1.bf16.msra.mxu0 0
        %1930 = vmatprep.subr.bf16.mxu0 0
        %1931 = vmatpush1.bf16.msra.mxu0 0
        %1932 = vmatprep.subr.bf16.mxu0 0
        %1933 = vmatpush1.bf16.msra.mxu0 0
        %1934 = vmatprep.subr.bf16.mxu0 0
        %1935 = vmatpush1.bf16.msra.mxu0 0
        %1936 = vmatprep.subr.bf16.mxu0 0
        %1937 = vmatpush1.bf16.msra.mxu0 0
        %1938 = vmatprep.subr.bf16.mxu0 0
        %1939 = vmatpush1.bf16.msra.mxu0 0
        %1940 = vmatprep.mubr.bf16.mxu0 0
        %1941 = vmatmul.mubr.bf16.gmra.mrb[0].mxu0 %v1894
        %v1942 = vpop.f32.mrb[0].mxu0
        %v1943 = vadd.f32 0.0, %v1942
        %v1944 = vpop.f32.mrb[0].mxu0
        %v1945 = vadd.f32 0.0, %v1944
        %v1946 = vpop.f32.mrb[0].mxu0
        %v1947 = vadd.f32 0.0, %v1946
        %v1948 = vpop.f32.mrb[0].mxu0
        %v1949 = vadd.f32 0.0, %v1948
        %1950 = vmatprep.mubr.bf16.mxu0 0
        %1951 = vmatmul.mubr.bf16.gmra.mrb[0].mxu0 %v1897
        %v1952 = vpop.f32.mrb[0].mxu0
        %v1953 = vadd.f32 0.0, %v1952
        %v1954 = vpop.f32.mrb[0].mxu0
        %v1955 = vadd.f32 0.0, %v1954
        %v1956 = vpop.f32.mrb[0].mxu0
        %v1957 = vadd.f32 0.0, %v1956
        %v1958 = vpop.f32.mrb[0].mxu0
        %v1959 = vadd.f32 0.0, %v1958
        %1960 = vmatprep.mubr.bf16.mxu0 0
        %1961 = vmatmul.mubr.bf16.gmra.mrb[0].mxu0 %v1900
        %v1962 = vpop.f32.mrb[0].mxu0
        %v1963 = vadd.f32 0.0, %v1962
        %v1964 = vpop.f32.mrb[0].mxu0
        %v1965 = vadd.f32 0.0, %v1964
        %v1966 = vpop.f32.mrb[0].mxu0
        %v1967 = vpop.f32.mrb[0].mxu0
        %1968 = vdwg.mxu0
        %v1969 = vadd.f32 %v1858, %v1943
        %v1970 = vadd.f32 %v1859, %v1945
        %v1971 = vadd.f32 %v1860, %v1947
        %v1972 = vadd.f32 %v1861, %v1949
        %v1973 = vadd.f32 %v1862, %v1953
        %v1974 = vadd.f32 %v1863, %v1955
        %v1975 = vadd.f32 %v1864, %v1957
        %v1976 = vadd.f32 %v1865, %v1959
        %v1977 = vadd.f32 %v1866, %v1963
        %v1978 = vadd.f32 %v1867, %v1965
        %s1979 = scalar_lea.vmem %s1, 320
        %v1980 = vld [vmem:[%s1979] sm:$0xf]
        %v1981 = vld [vmem:[%s1979 + $0x4] sm:$0xf]
        %v1982 = vld [vmem:[%s1979 + $0x8] sm:$0xf]
        %v1983 = vld [vmem:[%s1979 + $0xc] sm:$0xf]
        %v1984 = vld [vmem:[%s1979 + $0x10] sm:$0xf]
        %v1990 = vunpack.c.l.b16 %v1980
        %v1991 = vunpack.c.l.b16 %v1981
        %v1992 = vunpack.c.l.b16 %v1982
        %v1993 = vunpack.c.l.b16 %v1983
        %v1994 = vunpack.c.l.b16 %v1984
        %v1995 = vpack.c.b16 %v1991, %v1990
        %v1996 = vpack.c.b16 %v1993, %v1992
        %v1997 = vpack.c.b16 %v1994, %v1994
        %1998 = vrot.lane.b32.xlu0 %v250, 112
        %v1999 = vpop.permute.xlu0 %1998
        %2000 = vrot.lane.b32.xlu0 %v251, 112
        %v2001 = vpop.permute.xlu0 %2000
        %vm2002 = vcmask 916480
        %v2003 = vsel %vm2002, %v1999, %v2001
        %v2005 = vsel %vm258, %v1995, 0
        %v2008 = vsel %vm258, %v1996, 0
        %v2011 = vsel %vm258, %v1997, 0
        %v2014 = vsel %vm268, %v2003, 0
        %v2017 = vsel %vm268, %v2001, 0
        %2019 = vmatprep.subr.bf16.mxu0 %v2017
        %2020 = vmatpush1.bf16.msra.mxu0 %v2014
        %2021 = vmatprep.subr.bf16.mxu0 0
        %2022 = vmatpush1.bf16.msra.mxu0 0
        %2023 = vmatprep.subr.bf16.mxu0 0
        %2024 = vmatpush1.bf16.msra.mxu0 0
        %2025 = vmatprep.subr.bf16.mxu0 0
        %2026 = vmatpush1.bf16.msra.mxu0 0
        %2027 = vmatprep.subr.bf16.mxu0 0
        %2028 = vmatpush1.bf16.msra.mxu0 0
        %2029 = vmatprep.subr.bf16.mxu0 0
        %2030 = vmatpush1.bf16.msra.mxu0 0
        %2031 = vmatprep.subr.bf16.mxu0 0
        %2032 = vmatpush1.bf16.msra.mxu0 0
        %2033 = vmatprep.subr.bf16.mxu0 0
        %2034 = vmatpush1.bf16.msra.mxu0 0
        %2035 = vmatprep.subr.bf16.mxu0 0
        %2036 = vmatpush1.bf16.msra.mxu0 0
        %2037 = vmatprep.subr.bf16.mxu0 0
        %2038 = vmatpush1.bf16.msra.mxu0 0
        %2039 = vmatprep.subr.bf16.mxu0 0
        %2040 = vmatpush1.bf16.msra.mxu0 0
        %2041 = vmatprep.subr.bf16.mxu0 0
        %2042 = vmatpush1.bf16.msra.mxu0 0
        %2043 = vmatprep.subr.bf16.mxu0 0
        %2044 = vmatpush1.bf16.msra.mxu0 0
        %2045 = vmatprep.subr.bf16.mxu0 0
        %2046 = vmatpush1.bf16.msra.mxu0 0
        %2047 = vmatprep.subr.bf16.mxu0 0
        %2048 = vmatpush1.bf16.msra.mxu0 0
        %2049 = vmatprep.subr.bf16.mxu0 0
        %2050 = vmatpush1.bf16.msra.mxu0 0
        %2051 = vmatprep.mubr.bf16.mxu0 0
        %2052 = vmatmul.mubr.bf16.gmra.mrb[0].mxu0 %v2005
        %v2053 = vpop.f32.mrb[0].mxu0
        %v2054 = vadd.f32 0.0, %v2053
        %v2055 = vpop.f32.mrb[0].mxu0
        %v2056 = vadd.f32 0.0, %v2055
        %v2057 = vpop.f32.mrb[0].mxu0
        %v2058 = vadd.f32 0.0, %v2057
        %v2059 = vpop.f32.mrb[0].mxu0
        %v2060 = vadd.f32 0.0, %v2059
        %2061 = vmatprep.mubr.bf16.mxu0 0
        %2062 = vmatmul.mubr.bf16.gmra.mrb[0].mxu0 %v2008
        %v2063 = vpop.f32.mrb[0].mxu0
        %v2064 = vadd.f32 0.0, %v2063
        %v2065 = vpop.f32.mrb[0].mxu0
        %v2066 = vadd.f32 0.0, %v2065
        %v2067 = vpop.f32.mrb[0].mxu0
        %v2068 = vadd.f32 0.0, %v2067
        %v2069 = vpop.f32.mrb[0].mxu0
        %v2070 = vadd.f32 0.0, %v2069
        %2071 = vmatprep.mubr.bf16.mxu0 0
        %2072 = vmatmul.mubr.bf16.gmra.mrb[0].mxu0 %v2011
        %v2073 = vpop.f32.mrb[0].mxu0
        %v2074 = vadd.f32 0.0, %v2073
        %v2075 = vpop.f32.mrb[0].mxu0
        %v2076 = vadd.f32 0.0, %v2075
        %v2077 = vpop.f32.mrb[0].mxu0
        %v2078 = vpop.f32.mrb[0].mxu0
        %2079 = vdwg.mxu0
        %v2080 = vadd.f32 %v1969, %v2054
        %v2081 = vadd.f32 %v1970, %v2056
        %v2082 = vadd.f32 %v1971, %v2058
        %v2083 = vadd.f32 %v1972, %v2060
        %v2084 = vadd.f32 %v1973, %v2064
        %v2085 = vadd.f32 %v1974, %v2066
        %v2086 = vadd.f32 %v1975, %v2068
        %v2087 = vadd.f32 %v1976, %v2070
        %v2088 = vadd.f32 %v1977, %v2074
        %v2089 = vadd.f32 %v1978, %v2076
        %s2090 = scalar_lea.vmem %s1, 340
        %v2091 = vld [vmem:[%s2090] sm:$0xf]
        %v2092 = vld [vmem:[%s2090 + $0x4] sm:$0xf]
        %v2093 = vld [vmem:[%s2090 + $0x8] sm:$0xf]
        %v2094 = vld [vmem:[%s2090 + $0xc] sm:$0xf]
        %v2095 = vld [vmem:[%s2090 + $0x10] sm:$0xf]
        %v2101 = vunpack.c.l.b16 %v2091
        %v2102 = vunpack.c.l.b16 %v2092
        %v2103 = vunpack.c.l.b16 %v2093
        %v2104 = vunpack.c.l.b16 %v2094
        %v2105 = vunpack.c.l.b16 %v2095
        %v2106 = vpack.c.b16 %v2102, %v2101
        %v2107 = vpack.c.b16 %v2104, %v2103
        %v2108 = vpack.c.b16 %v2105, %v2105
        %2109 = vrot.lane.b32.xlu0 %v250, 111
        %v2110 = vpop.permute.xlu0 %2109
        %2111 = vrot.lane.b32.xlu0 %v251, 111
        %v2112 = vpop.permute.xlu0 %2111
        %vm2113 = vcmask 908288
        %v2114 = vsel %vm2113, %v2110, %v2112
        %v2116 = vsel %vm258, %v2106, 0
        %v2119 = vsel %vm258, %v2107, 0
        %v2122 = vsel %vm258, %v2108, 0
        %v2125 = vsel %vm268, %v2114, 0
        %v2128 = vsel %vm268, %v2112, 0
        %2130 = vmatprep.subr.bf16.mxu0 %v2128
        %2131 = vmatpush1.bf16.msra.mxu0 %v2125
        %2132 = vmatprep.subr.bf16.mxu0 0
        %2133 = vmatpush1.bf16.msra.mxu0 0
        %2134 = vmatprep.subr.bf16.mxu0 0
        %2135 = vmatpush1.bf16.msra.mxu0 0
        %2136 = vmatprep.subr.bf16.mxu0 0
        %2137 = vmatpush1.bf16.msra.mxu0 0
        %2138 = vmatprep.subr.bf16.mxu0 0
        %2139 = vmatpush1.bf16.msra.mxu0 0
        %2140 = vmatprep.subr.bf16.mxu0 0
        %2141 = vmatpush1.bf16.msra.mxu0 0
        %2142 = vmatprep.subr.bf16.mxu0 0
        %2143 = vmatpush1.bf16.msra.mxu0 0
        %2144 = vmatprep.subr.bf16.mxu0 0
        %2145 = vmatpush1.bf16.msra.mxu0 0
        %2146 = vmatprep.subr.bf16.mxu0 0
        %2147 = vmatpush1.bf16.msra.mxu0 0
        %2148 = vmatprep.subr.bf16.mxu0 0
        %2149 = vmatpush1.bf16.msra.mxu0 0
        %2150 = vmatprep.subr.bf16.mxu0 0
        %2151 = vmatpush1.bf16.msra.mxu0 0
        %2152 = vmatprep.subr.bf16.mxu0 0
        %2153 = vmatpush1.bf16.msra.mxu0 0
        %2154 = vmatprep.subr.bf16.mxu0 0
        %2155 = vmatpush1.bf16.msra.mxu0 0
        %2156 = vmatprep.subr.bf16.mxu0 0
        %2157 = vmatpush1.bf16.msra.mxu0 0
        %2158 = vmatprep.subr.bf16.mxu0 0
        %2159 = vmatpush1.bf16.msra.mxu0 0
        %2160 = vmatprep.subr.bf16.mxu0 0
        %2161 = vmatpush1.bf16.msra.mxu0 0
        %2162 = vmatprep.mubr.bf16.mxu0 0
        %2163 = vmatmul.mubr.bf16.gmra.mrb[0].mxu0 %v2116
        %v2164 = vpop.f32.mrb[0].mxu0
        %v2165 = vadd.f32 0.0, %v2164
        %v2166 = vpop.f32.mrb[0].mxu0
        %v2167 = vadd.f32 0.0, %v2166
        %v2168 = vpop.f32.mrb[0].mxu0
        %v2169 = vadd.f32 0.0, %v2168
        %v2170 = vpop.f32.mrb[0].mxu0
        %v2171 = vadd.f32 0.0, %v2170
        %2172 = vmatprep.mubr.bf16.mxu0 0
        %2173 = vmatmul.mubr.bf16.gmra.mrb[0].mxu0 %v2119
        %v2174 = vpop.f32.mrb[0].mxu0
        %v2175 = vadd.f32 0.0, %v2174
        %v2176 = vpop.f32.mrb[0].mxu0
        %v2177 = vadd.f32 0.0, %v2176
        %v2178 = vpop.f32.mrb[0].mxu0
        %v2179 = vadd.f32 0.0, %v2178
        %v2180 = vpop.f32.mrb[0].mxu0
        %v2181 = vadd.f32 0.0, %v2180
        %2182 = vmatprep.mubr.bf16.mxu0 0
        %2183 = vmatmul.mubr.bf16.gmra.mrb[0].mxu0 %v2122
        %v2184 = vpop.f32.mrb[0].mxu0
        %v2185 = vadd.f32 0.0, %v2184
        %v2186 = vpop.f32.mrb[0].mxu0
        %v2187 = vadd.f32 0.0, %v2186
        %v2188 = vpop.f32.mrb[0].mxu0
        %v2189 = vpop.f32.mrb[0].mxu0
        %2190 = vdwg.mxu0
        %v2191 = vadd.f32 %v2080, %v2165
        %v2192 = vadd.f32 %v2081, %v2167
        %v2193 = vadd.f32 %v2082, %v2169
        %v2194 = vadd.f32 %v2083, %v2171
        %v2195 = vadd.f32 %v2084, %v2175
        %v2196 = vadd.f32 %v2085, %v2177
        %v2197 = vadd.f32 %v2086, %v2179
        %v2198 = vadd.f32 %v2087, %v2181
        %v2199 = vadd.f32 %v2088, %v2185
        %v2200 = vadd.f32 %v2089, %v2187
        %s2201 = scalar_lea.vmem %s1, 360
        %v2202 = vld [vmem:[%s2201] sm:$0xf]
        %v2203 = vld [vmem:[%s2201 + $0x4] sm:$0xf]
        %v2204 = vld [vmem:[%s2201 + $0x8] sm:$0xf]
        %v2205 = vld [vmem:[%s2201 + $0xc] sm:$0xf]
        %v2206 = vld [vmem:[%s2201 + $0x10] sm:$0xf]
        %v2212 = vunpack.c.l.b16 %v2202
        %v2213 = vunpack.c.l.b16 %v2203
        %v2214 = vunpack.c.l.b16 %v2204
        %v2215 = vunpack.c.l.b16 %v2205
        %v2216 = vunpack.c.l.b16 %v2206
        %v2217 = vpack.c.b16 %v2213, %v2212
        %v2218 = vpack.c.b16 %v2215, %v2214
        %v2219 = vpack.c.b16 %v2216, %v2216
        %2220 = vrot.lane.b32.xlu0 %v250, 110
        %v2221 = vpop.permute.xlu0 %2220
        %2222 = vrot.lane.b32.xlu0 %v251, 110
        %v2223 = vpop.permute.xlu0 %2222
        %vm2224 = vcmask 900096
        %v2225 = vsel %vm2224, %v2221, %v2223
        %v2227 = vsel %vm258, %v2217, 0
        %v2230 = vsel %vm258, %v2218, 0
        %v2233 = vsel %vm258, %v2219, 0
        %v2236 = vsel %vm268, %v2225, 0
        %v2239 = vsel %vm268, %v2223, 0
        %2241 = vmatprep.subr.bf16.mxu0 %v2239
        %2242 = vmatpush1.bf16.msra.mxu0 %v2236
        %2243 = vmatprep.subr.bf16.mxu0 0
        %2244 = vmatpush1.bf16.msra.mxu0 0
        %2245 = vmatprep.subr.bf16.mxu0 0
        %2246 = vmatpush1.bf16.msra.mxu0 0
        %2247 = vmatprep.subr.bf16.mxu0 0
        %2248 = vmatpush1.bf16.msra.mxu0 0
        %2249 = vmatprep.subr.bf16.mxu0 0
        %2250 = vmatpush1.bf16.msra.mxu0 0
        %2251 = vmatprep.subr.bf16.mxu0 0
        %2252 = vmatpush1.bf16.msra.mxu0 0
        %2253 = vmatprep.subr.bf16.mxu0 0
        %2254 = vmatpush1.bf16.msra.mxu0 0
        %2255 = vmatprep.subr.bf16.mxu0 0
        %2256 = vmatpush1.bf16.msra.mxu0 0
        %2257 = vmatprep.subr.bf16.mxu0 0
        %2258 = vmatpush1.bf16.msra.mxu0 0
        %2259 = vmatprep.subr.bf16.mxu0 0
        %2260 = vmatpush1.bf16.msra.mxu0 0
        %2261 = vmatprep.subr.bf16.mxu0 0
        %2262 = vmatpush1.bf16.msra.mxu0 0
        %2263 = vmatprep.subr.bf16.mxu0 0
        %2264 = vmatpush1.bf16.msra.mxu0 0
        %2265 = vmatprep.subr.bf16.mxu0 0
        %2266 = vmatpush1.bf16.msra.mxu0 0
        %2267 = vmatprep.subr.bf16.mxu0 0
        %2268 = vmatpush1.bf16.msra.mxu0 0
        %2269 = vmatprep.subr.bf16.mxu0 0
        %2270 = vmatpush1.bf16.msra.mxu0 0
        %2271 = vmatprep.subr.bf16.mxu0 0
        %2272 = vmatpush1.bf16.msra.mxu0 0
        %2273 = vmatprep.mubr.bf16.mxu0 0
        %2274 = vmatmul.mubr.bf16.gmra.mrb[0].mxu0 %v2227
        %v2275 = vpop.f32.mrb[0].mxu0
        %v2276 = vadd.f32 0.0, %v2275
        %v2277 = vpop.f32.mrb[0].mxu0
        %v2278 = vadd.f32 0.0, %v2277
        %v2279 = vpop.f32.mrb[0].mxu0
        %v2280 = vadd.f32 0.0, %v2279
        %v2281 = vpop.f32.mrb[0].mxu0
        %v2282 = vadd.f32 0.0, %v2281
        %2283 = vmatprep.mubr.bf16.mxu0 0
        %2284 = vmatmul.mubr.bf16.gmra.mrb[0].mxu0 %v2230
        %v2285 = vpop.f32.mrb[0].mxu0
        %v2286 = vadd.f32 0.0, %v2285
        %v2287 = vpop.f32.mrb[0].mxu0
        %v2288 = vadd.f32 0.0, %v2287
        %v2289 = vpop.f32.mrb[0].mxu0
        %v2290 = vadd.f32 0.0, %v2289
        %v2291 = vpop.f32.mrb[0].mxu0
        %v2292 = vadd.f32 0.0, %v2291
        %2293 = vmatprep.mubr.bf16.mxu0 0
        %2294 = vmatmul.mubr.bf16.gmra.mrb[0].mxu0 %v2233
        %v2295 = vpop.f32.mrb[0].mxu0
        %v2296 = vadd.f32 0.0, %v2295
        %v2297 = vpop.f32.mrb[0].mxu0
        %v2298 = vadd.f32 0.0, %v2297
        %v2299 = vpop.f32.mrb[0].mxu0
        %v2300 = vpop.f32.mrb[0].mxu0
        %2301 = vdwg.mxu0
        %v2302 = vadd.f32 %v2191, %v2276
        %v2303 = vadd.f32 %v2192, %v2278
        %v2304 = vadd.f32 %v2193, %v2280
        %v2305 = vadd.f32 %v2194, %v2282
        %v2306 = vadd.f32 %v2195, %v2286
        %v2307 = vadd.f32 %v2196, %v2288
        %v2308 = vadd.f32 %v2197, %v2290
        %v2309 = vadd.f32 %v2198, %v2292
        %v2310 = vadd.f32 %v2199, %v2296
        %v2311 = vadd.f32 %v2200, %v2298
        %s2312 = scalar_lea.vmem %s1, 380
        %v2313 = vld [vmem:[%s2312] sm:$0xf]
        %v2314 = vld [vmem:[%s2312 + $0x4] sm:$0xf]
        %v2315 = vld [vmem:[%s2312 + $0x8] sm:$0xf]
        %v2316 = vld [vmem:[%s2312 + $0xc] sm:$0xf]
        %v2317 = vld [vmem:[%s2312 + $0x10] sm:$0xf]
        %v2323 = vunpack.c.l.b16 %v2313
        %v2324 = vunpack.c.l.b16 %v2314
        %v2325 = vunpack.c.l.b16 %v2315
        %v2326 = vunpack.c.l.b16 %v2316
        %v2327 = vunpack.c.l.b16 %v2317
        %v2328 = vpack.c.b16 %v2324, %v2323
        %v2329 = vpack.c.b16 %v2326, %v2325
        %v2330 = vpack.c.b16 %v2327, %v2327
        %2331 = vrot.lane.b32.xlu0 %v250, 109
        %v2332 = vpop.permute.xlu0 %2331
        %2333 = vrot.lane.b32.xlu0 %v251, 109
        %v2334 = vpop.permute.xlu0 %2333
        %vm2335 = vcmask 891904
        %v2336 = vsel %vm2335, %v2332, %v2334
        %v2338 = vsel %vm258, %v2328, 0
        %v2341 = vsel %vm258, %v2329, 0
        %v2344 = vsel %vm258, %v2330, 0
        %v2347 = vsel %vm268, %v2336, 0
        %v2350 = vsel %vm268, %v2334, 0
        %2352 = vmatprep.subr.bf16.mxu0 %v2350
        %2353 = vmatpush1.bf16.msra.mxu0 %v2347
        %2354 = vmatprep.subr.bf16.mxu0 0
        %2355 = vmatpush1.bf16.msra.mxu0 0
        %2356 = vmatprep.subr.bf16.mxu0 0
        %2357 = vmatpush1.bf16.msra.mxu0 0
        %2358 = vmatprep.subr.bf16.mxu0 0
        %2359 = vmatpush1.bf16.msra.mxu0 0
        %2360 = vmatprep.subr.bf16.mxu0 0
        %2361 = vmatpush1.bf16.msra.mxu0 0
        %2362 = vmatprep.subr.bf16.mxu0 0
        %2363 = vmatpush1.bf16.msra.mxu0 0
        %2364 = vmatprep.subr.bf16.mxu0 0
        %2365 = vmatpush1.bf16.msra.mxu0 0
        %2366 = vmatprep.subr.bf16.mxu0 0
        %2367 = vmatpush1.bf16.msra.mxu0 0
        %2368 = vmatprep.subr.bf16.mxu0 0
        %2369 = vmatpush1.bf16.msra.mxu0 0
        %2370 = vmatprep.subr.bf16.mxu0 0
        %2371 = vmatpush1.bf16.msra.mxu0 0
        %2372 = vmatprep.subr.bf16.mxu0 0
        %2373 = vmatpush1.bf16.msra.mxu0 0
        %2374 = vmatprep.subr.bf16.mxu0 0
        %2375 = vmatpush1.bf16.msra.mxu0 0
        %2376 = vmatprep.subr.bf16.mxu0 0
        %2377 = vmatpush1.bf16.msra.mxu0 0
        %2378 = vmatprep.subr.bf16.mxu0 0
        %2379 = vmatpush1.bf16.msra.mxu0 0
        %2380 = vmatprep.subr.bf16.mxu0 0
        %2381 = vmatpush1.bf16.msra.mxu0 0
        %2382 = vmatprep.subr.bf16.mxu0 0
        %2383 = vmatpush1.bf16.msra.mxu0 0
        %2384 = vmatprep.mubr.bf16.mxu0 0
        %2385 = vmatmul.mubr.bf16.gmra.mrb[0].mxu0 %v2338
        %v2386 = vpop.f32.mrb[0].mxu0
        %v2387 = vadd.f32 0.0, %v2386
        %v2388 = vpop.f32.mrb[0].mxu0
        %v2389 = vadd.f32 0.0, %v2388
        %v2390 = vpop.f32.mrb[0].mxu0
        %v2391 = vadd.f32 0.0, %v2390
        %v2392 = vpop.f32.mrb[0].mxu0
        %v2393 = vadd.f32 0.0, %v2392
        %2394 = vmatprep.mubr.bf16.mxu0 0
        %2395 = vmatmul.mubr.bf16.gmra.mrb[0].mxu0 %v2341
        %v2396 = vpop.f32.mrb[0].mxu0
        %v2397 = vadd.f32 0.0, %v2396
        %v2398 = vpop.f32.mrb[0].mxu0
        %v2399 = vadd.f32 0.0, %v2398
        %v2400 = vpop.f32.mrb[0].mxu0
        %v2401 = vadd.f32 0.0, %v2400
        %v2402 = vpop.f32.mrb[0].mxu0
        %v2403 = vadd.f32 0.0, %v2402
        %2404 = vmatprep.mubr.bf16.mxu0 0
        %2405 = vmatmul.mubr.bf16.gmra.mrb[0].mxu0 %v2344
        %v2406 = vpop.f32.mrb[0].mxu0
        %v2407 = vadd.f32 0.0, %v2406
        %v2408 = vpop.f32.mrb[0].mxu0
        %v2409 = vadd.f32 0.0, %v2408
        %v2410 = vpop.f32.mrb[0].mxu0
        %v2411 = vpop.f32.mrb[0].mxu0
        %2412 = vdwg.mxu0
        %v2413 = vadd.f32 %v2302, %v2387
        %v2414 = vadd.f32 %v2303, %v2389
        %v2415 = vadd.f32 %v2304, %v2391
        %v2416 = vadd.f32 %v2305, %v2393
        %v2417 = vadd.f32 %v2306, %v2397
        %v2418 = vadd.f32 %v2307, %v2399
        %v2419 = vadd.f32 %v2308, %v2401
        %v2420 = vadd.f32 %v2309, %v2403
        %v2421 = vadd.f32 %v2310, %v2407
        %v2422 = vadd.f32 %v2311, %v2409
        %s2423 = scalar_lea.vmem %s1, 400
        %v2424 = vld [vmem:[%s2423] sm:$0xf]
        %v2425 = vld [vmem:[%s2423 + $0x4] sm:$0xf]
        %v2426 = vld [vmem:[%s2423 + $0x8] sm:$0xf]
        %v2427 = vld [vmem:[%s2423 + $0xc] sm:$0xf]
        %v2428 = vld [vmem:[%s2423 + $0x10] sm:$0xf]
        %v2434 = vunpack.c.l.b16 %v2424
        %v2435 = vunpack.c.l.b16 %v2425
        %v2436 = vunpack.c.l.b16 %v2426
        %v2437 = vunpack.c.l.b16 %v2427
        %v2438 = vunpack.c.l.b16 %v2428
        %v2439 = vpack.c.b16 %v2435, %v2434
        %v2440 = vpack.c.b16 %v2437, %v2436
        %v2441 = vpack.c.b16 %v2438, %v2438
        %2442 = vrot.lane.b32.xlu0 %v250, 108
        %v2443 = vpop.permute.xlu0 %2442
        %2444 = vrot.lane.b32.xlu0 %v251, 108
        %v2445 = vpop.permute.xlu0 %2444
        %vm2446 = vcmask 883712
        %v2447 = vsel %vm2446, %v2443, %v2445
        %v2449 = vsel %vm258, %v2439, 0
        %v2452 = vsel %vm258, %v2440, 0
        %v2455 = vsel %vm258, %v2441, 0
        %v2458 = vsel %vm268, %v2447, 0
        %v2461 = vsel %vm268, %v2445, 0
        %2463 = vmatprep.subr.bf16.mxu0 %v2461
        %2464 = vmatpush1.bf16.msra.mxu0 %v2458
        %2465 = vmatprep.subr.bf16.mxu0 0
        %2466 = vmatpush1.bf16.msra.mxu0 0
        %2467 = vmatprep.subr.bf16.mxu0 0
        %2468 = vmatpush1.bf16.msra.mxu0 0
        %2469 = vmatprep.subr.bf16.mxu0 0
        %2470 = vmatpush1.bf16.msra.mxu0 0
        %2471 = vmatprep.subr.bf16.mxu0 0
        %2472 = vmatpush1.bf16.msra.mxu0 0
        %2473 = vmatprep.subr.bf16.mxu0 0
        %2474 = vmatpush1.bf16.msra.mxu0 0
        %2475 = vmatprep.subr.bf16.mxu0 0
        %2476 = vmatpush1.bf16.msra.mxu0 0
        %2477 = vmatprep.subr.bf16.mxu0 0
        %2478 = vmatpush1.bf16.msra.mxu0 0
        %2479 = vmatprep.subr.bf16.mxu0 0
        %2480 = vmatpush1.bf16.msra.mxu0 0
        %2481 = vmatprep.subr.bf16.mxu0 0
        %2482 = vmatpush1.bf16.msra.mxu0 0
        %2483 = vmatprep.subr.bf16.mxu0 0
        %2484 = vmatpush1.bf16.msra.mxu0 0
        %2485 = vmatprep.subr.bf16.mxu0 0
        %2486 = vmatpush1.bf16.msra.mxu0 0
        %2487 = vmatprep.subr.bf16.mxu0 0
        %2488 = vmatpush1.bf16.msra.mxu0 0
        %2489 = vmatprep.subr.bf16.mxu0 0
        %2490 = vmatpush1.bf16.msra.mxu0 0
        %2491 = vmatprep.subr.bf16.mxu0 0
        %2492 = vmatpush1.bf16.msra.mxu0 0
        %2493 = vmatprep.subr.bf16.mxu0 0
        %2494 = vmatpush1.bf16.msra.mxu0 0
        %2495 = vmatprep.mubr.bf16.mxu0 0
        %2496 = vmatmul.mubr.bf16.gmra.mrb[0].mxu0 %v2449
        %v2497 = vpop.f32.mrb[0].mxu0
        %v2498 = vadd.f32 0.0, %v2497
        %v2499 = vpop.f32.mrb[0].mxu0
        %v2500 = vadd.f32 0.0, %v2499
        %v2501 = vpop.f32.mrb[0].mxu0
        %v2502 = vadd.f32 0.0, %v2501
        %v2503 = vpop.f32.mrb[0].mxu0
        %v2504 = vadd.f32 0.0, %v2503
        %2505 = vmatprep.mubr.bf16.mxu0 0
        %2506 = vmatmul.mubr.bf16.gmra.mrb[0].mxu0 %v2452
        %v2507 = vpop.f32.mrb[0].mxu0
        %v2508 = vadd.f32 0.0, %v2507
        %v2509 = vpop.f32.mrb[0].mxu0
        %v2510 = vadd.f32 0.0, %v2509
        %v2511 = vpop.f32.mrb[0].mxu0
        %v2512 = vadd.f32 0.0, %v2511
        %v2513 = vpop.f32.mrb[0].mxu0
        %v2514 = vadd.f32 0.0, %v2513
        %2515 = vmatprep.mubr.bf16.mxu0 0
        %2516 = vmatmul.mubr.bf16.gmra.mrb[0].mxu0 %v2455
        %v2517 = vpop.f32.mrb[0].mxu0
        %v2518 = vadd.f32 0.0, %v2517
        %v2519 = vpop.f32.mrb[0].mxu0
        %v2520 = vadd.f32 0.0, %v2519
        %v2521 = vpop.f32.mrb[0].mxu0
        %v2522 = vpop.f32.mrb[0].mxu0
        %2523 = vdwg.mxu0
        %v2524 = vadd.f32 %v2413, %v2498
        %v2525 = vadd.f32 %v2414, %v2500
        %v2526 = vadd.f32 %v2415, %v2502
        %v2527 = vadd.f32 %v2416, %v2504
        %v2528 = vadd.f32 %v2417, %v2508
        %v2529 = vadd.f32 %v2418, %v2510
        %v2530 = vadd.f32 %v2419, %v2512
        %v2531 = vadd.f32 %v2420, %v2514
        %v2532 = vadd.f32 %v2421, %v2518
        %v2533 = vadd.f32 %v2422, %v2520
        %s2534 = scalar_lea.vmem %s1, 420
        %v2535 = vld [vmem:[%s2534] sm:$0xf]
        %v2536 = vld [vmem:[%s2534 + $0x4] sm:$0xf]
        %v2537 = vld [vmem:[%s2534 + $0x8] sm:$0xf]
        %v2538 = vld [vmem:[%s2534 + $0xc] sm:$0xf]
        %v2539 = vld [vmem:[%s2534 + $0x10] sm:$0xf]
        %v2545 = vunpack.c.l.b16 %v2535
        %v2546 = vunpack.c.l.b16 %v2536
        %v2547 = vunpack.c.l.b16 %v2537
        %v2548 = vunpack.c.l.b16 %v2538
        %v2549 = vunpack.c.l.b16 %v2539
        %v2550 = vpack.c.b16 %v2546, %v2545
        %v2551 = vpack.c.b16 %v2548, %v2547
        %v2552 = vpack.c.b16 %v2549, %v2549
        %2553 = vrot.lane.b32.xlu0 %v250, 107
        %v2554 = vpop.permute.xlu0 %2553
        %2555 = vrot.lane.b32.xlu0 %v251, 107
        %v2556 = vpop.permute.xlu0 %2555
        %vm2557 = vcmask 875520
        %v2558 = vsel %vm2557, %v2554, %v2556
        %v2560 = vsel %vm258, %v2550, 0
        %v2563 = vsel %vm258, %v2551, 0
        %v2566 = vsel %vm258, %v2552, 0
        %v2569 = vsel %vm268, %v2558, 0
        %v2572 = vsel %vm268, %v2556, 0
        %2574 = vmatprep.subr.bf16.mxu0 %v2572
        %2575 = vmatpush1.bf16.msra.mxu0 %v2569
        %2576 = vmatprep.subr.bf16.mxu0 0
        %2577 = vmatpush1.bf16.msra.mxu0 0
        %2578 = vmatprep.subr.bf16.mxu0 0
        %2579 = vmatpush1.bf16.msra.mxu0 0
        %2580 = vmatprep.subr.bf16.mxu0 0
        %2581 = vmatpush1.bf16.msra.mxu0 0
        %2582 = vmatprep.subr.bf16.mxu0 0
        %2583 = vmatpush1.bf16.msra.mxu0 0
        %2584 = vmatprep.subr.bf16.mxu0 0
        %2585 = vmatpush1.bf16.msra.mxu0 0
        %2586 = vmatprep.subr.bf16.mxu0 0
        %2587 = vmatpush1.bf16.msra.mxu0 0
        %2588 = vmatprep.subr.bf16.mxu0 0
        %2589 = vmatpush1.bf16.msra.mxu0 0
        %2590 = vmatprep.subr.bf16.mxu0 0
        %2591 = vmatpush1.bf16.msra.mxu0 0
        %2592 = vmatprep.subr.bf16.mxu0 0
        %2593 = vmatpush1.bf16.msra.mxu0 0
        %2594 = vmatprep.subr.bf16.mxu0 0
        %2595 = vmatpush1.bf16.msra.mxu0 0
        %2596 = vmatprep.subr.bf16.mxu0 0
        %2597 = vmatpush1.bf16.msra.mxu0 0
        %2598 = vmatprep.subr.bf16.mxu0 0
        %2599 = vmatpush1.bf16.msra.mxu0 0
        %2600 = vmatprep.subr.bf16.mxu0 0
        %2601 = vmatpush1.bf16.msra.mxu0 0
        %2602 = vmatprep.subr.bf16.mxu0 0
        %2603 = vmatpush1.bf16.msra.mxu0 0
        %2604 = vmatprep.subr.bf16.mxu0 0
        %2605 = vmatpush1.bf16.msra.mxu0 0
        %2606 = vmatprep.mubr.bf16.mxu0 0
        %2607 = vmatmul.mubr.bf16.gmra.mrb[0].mxu0 %v2560
        %v2608 = vpop.f32.mrb[0].mxu0
        %v2609 = vadd.f32 0.0, %v2608
        %v2610 = vpop.f32.mrb[0].mxu0
        %v2611 = vadd.f32 0.0, %v2610
        %v2612 = vpop.f32.mrb[0].mxu0
        %v2613 = vadd.f32 0.0, %v2612
        %v2614 = vpop.f32.mrb[0].mxu0
        %v2615 = vadd.f32 0.0, %v2614
        %2616 = vmatprep.mubr.bf16.mxu0 0
        %2617 = vmatmul.mubr.bf16.gmra.mrb[0].mxu0 %v2563
        %v2618 = vpop.f32.mrb[0].mxu0
        %v2619 = vadd.f32 0.0, %v2618
        %v2620 = vpop.f32.mrb[0].mxu0
        %v2621 = vadd.f32 0.0, %v2620
        %v2622 = vpop.f32.mrb[0].mxu0
        %v2623 = vadd.f32 0.0, %v2622
        %v2624 = vpop.f32.mrb[0].mxu0
        %v2625 = vadd.f32 0.0, %v2624
        %2626 = vmatprep.mubr.bf16.mxu0 0
        %2627 = vmatmul.mubr.bf16.gmra.mrb[0].mxu0 %v2566
        %v2628 = vpop.f32.mrb[0].mxu0
        %v2629 = vadd.f32 0.0, %v2628
        %v2630 = vpop.f32.mrb[0].mxu0
        %v2631 = vadd.f32 0.0, %v2630
        %v2632 = vpop.f32.mrb[0].mxu0
        %v2633 = vpop.f32.mrb[0].mxu0
        %2634 = vdwg.mxu0
        %v2635 = vadd.f32 %v2524, %v2609
        %v2636 = vadd.f32 %v2525, %v2611
        %v2637 = vadd.f32 %v2526, %v2613
        %v2638 = vadd.f32 %v2527, %v2615
        %v2639 = vadd.f32 %v2528, %v2619
        %v2640 = vadd.f32 %v2529, %v2621
        %v2641 = vadd.f32 %v2530, %v2623
        %v2642 = vadd.f32 %v2531, %v2625
        %v2643 = vadd.f32 %v2532, %v2629
        %v2644 = vadd.f32 %v2533, %v2631
        %s2645 = scalar_lea.vmem %s1, 440
        %v2646 = vld [vmem:[%s2645] sm:$0xf]
        %v2647 = vld [vmem:[%s2645 + $0x4] sm:$0xf]
        %v2648 = vld [vmem:[%s2645 + $0x8] sm:$0xf]
        %v2649 = vld [vmem:[%s2645 + $0xc] sm:$0xf]
        %v2650 = vld [vmem:[%s2645 + $0x10] sm:$0xf]
        %v2656 = vunpack.c.l.b16 %v2646
        %v2657 = vunpack.c.l.b16 %v2647
        %v2658 = vunpack.c.l.b16 %v2648
        %v2659 = vunpack.c.l.b16 %v2649
        %v2660 = vunpack.c.l.b16 %v2650
        %v2661 = vpack.c.b16 %v2657, %v2656
        %v2662 = vpack.c.b16 %v2659, %v2658
        %v2663 = vpack.c.b16 %v2660, %v2660
        %2664 = vrot.lane.b32.xlu0 %v250, 106
        %v2665 = vpop.permute.xlu0 %2664
        %2666 = vrot.lane.b32.xlu0 %v251, 106
        %v2667 = vpop.permute.xlu0 %2666
        %vm2668 = vcmask 867328
        %v2669 = vsel %vm2668, %v2665, %v2667
        %v2671 = vsel %vm258, %v2661, 0
        %v2674 = vsel %vm258, %v2662, 0
        %v2677 = vsel %vm258, %v2663, 0
        %v2680 = vsel %vm268, %v2669, 0
        %v2683 = vsel %vm268, %v2667, 0
        %2685 = vmatprep.subr.bf16.mxu0 %v2683
        %2686 = vmatpush1.bf16.msra.mxu0 %v2680
        %2687 = vmatprep.subr.bf16.mxu0 0
        %2688 = vmatpush1.bf16.msra.mxu0 0
        %2689 = vmatprep.subr.bf16.mxu0 0
        %2690 = vmatpush1.bf16.msra.mxu0 0
        %2691 = vmatprep.subr.bf16.mxu0 0
        %2692 = vmatpush1.bf16.msra.mxu0 0
        %2693 = vmatprep.subr.bf16.mxu0 0
        %2694 = vmatpush1.bf16.msra.mxu0 0
        %2695 = vmatprep.subr.bf16.mxu0 0
        %2696 = vmatpush1.bf16.msra.mxu0 0
        %2697 = vmatprep.subr.bf16.mxu0 0
        %2698 = vmatpush1.bf16.msra.mxu0 0
        %2699 = vmatprep.subr.bf16.mxu0 0
        %2700 = vmatpush1.bf16.msra.mxu0 0
        %2701 = vmatprep.subr.bf16.mxu0 0
        %2702 = vmatpush1.bf16.msra.mxu0 0
        %2703 = vmatprep.subr.bf16.mxu0 0
        %2704 = vmatpush1.bf16.msra.mxu0 0
        %2705 = vmatprep.subr.bf16.mxu0 0
        %2706 = vmatpush1.bf16.msra.mxu0 0
        %2707 = vmatprep.subr.bf16.mxu0 0
        %2708 = vmatpush1.bf16.msra.mxu0 0
        %2709 = vmatprep.subr.bf16.mxu0 0
        %2710 = vmatpush1.bf16.msra.mxu0 0
        %2711 = vmatprep.subr.bf16.mxu0 0
        %2712 = vmatpush1.bf16.msra.mxu0 0
        %2713 = vmatprep.subr.bf16.mxu0 0
        %2714 = vmatpush1.bf16.msra.mxu0 0
        %2715 = vmatprep.subr.bf16.mxu0 0
        %2716 = vmatpush1.bf16.msra.mxu0 0
        %2717 = vmatprep.mubr.bf16.mxu0 0
        %2718 = vmatmul.mubr.bf16.gmra.mrb[0].mxu0 %v2671
        %v2719 = vpop.f32.mrb[0].mxu0
        %v2720 = vadd.f32 0.0, %v2719
        %v2721 = vpop.f32.mrb[0].mxu0
        %v2722 = vadd.f32 0.0, %v2721
        %v2723 = vpop.f32.mrb[0].mxu0
        %v2724 = vadd.f32 0.0, %v2723
        %v2725 = vpop.f32.mrb[0].mxu0
        %v2726 = vadd.f32 0.0, %v2725
        %2727 = vmatprep.mubr.bf16.mxu0 0
        %2728 = vmatmul.mubr.bf16.gmra.mrb[0].mxu0 %v2674
        %v2729 = vpop.f32.mrb[0].mxu0
        %v2730 = vadd.f32 0.0, %v2729
        %v2731 = vpop.f32.mrb[0].mxu0
        %v2732 = vadd.f32 0.0, %v2731
        %v2733 = vpop.f32.mrb[0].mxu0
        %v2734 = vadd.f32 0.0, %v2733
        %v2735 = vpop.f32.mrb[0].mxu0
        %v2736 = vadd.f32 0.0, %v2735
        %2737 = vmatprep.mubr.bf16.mxu0 0
        %2738 = vmatmul.mubr.bf16.gmra.mrb[0].mxu0 %v2677
        %v2739 = vpop.f32.mrb[0].mxu0
        %v2740 = vadd.f32 0.0, %v2739
        %v2741 = vpop.f32.mrb[0].mxu0
        %v2742 = vadd.f32 0.0, %v2741
        %v2743 = vpop.f32.mrb[0].mxu0
        %v2744 = vpop.f32.mrb[0].mxu0
        %2745 = vdwg.mxu0
        %v2746 = vadd.f32 %v2635, %v2720
        %v2747 = vadd.f32 %v2636, %v2722
        %v2748 = vadd.f32 %v2637, %v2724
        %v2749 = vadd.f32 %v2638, %v2726
        %v2750 = vadd.f32 %v2639, %v2730
        %v2751 = vadd.f32 %v2640, %v2732
        %v2752 = vadd.f32 %v2641, %v2734
        %v2753 = vadd.f32 %v2642, %v2736
        %v2754 = vadd.f32 %v2643, %v2740
        %v2755 = vadd.f32 %v2644, %v2742
        %s2756 = scalar_lea.vmem %s1, 460
        %v2757 = vld [vmem:[%s2756] sm:$0xf]
        %v2758 = vld [vmem:[%s2756 + $0x4] sm:$0xf]
        %v2759 = vld [vmem:[%s2756 + $0x8] sm:$0xf]
        %v2760 = vld [vmem:[%s2756 + $0xc] sm:$0xf]
        %v2761 = vld [vmem:[%s2756 + $0x10] sm:$0xf]
        %v2767 = vunpack.c.l.b16 %v2757
        %v2768 = vunpack.c.l.b16 %v2758
        %v2769 = vunpack.c.l.b16 %v2759
        %v2770 = vunpack.c.l.b16 %v2760
        %v2771 = vunpack.c.l.b16 %v2761
        %v2772 = vpack.c.b16 %v2768, %v2767
        %v2773 = vpack.c.b16 %v2770, %v2769
        %v2774 = vpack.c.b16 %v2771, %v2771
        %2775 = vrot.lane.b32.xlu0 %v250, 105
        %v2776 = vpop.permute.xlu0 %2775
        %2777 = vrot.lane.b32.xlu0 %v251, 105
        %v2778 = vpop.permute.xlu0 %2777
        %vm2779 = vcmask 859136
        %v2780 = vsel %vm2779, %v2776, %v2778
        %v2782 = vsel %vm258, %v2772, 0
        %v2785 = vsel %vm258, %v2773, 0
        %v2788 = vsel %vm258, %v2774, 0
        %v2791 = vsel %vm268, %v2780, 0
        %v2794 = vsel %vm268, %v2778, 0
        %2796 = vmatprep.subr.bf16.mxu0 %v2794
        %2797 = vmatpush1.bf16.msra.mxu0 %v2791
        %2798 = vmatprep.subr.bf16.mxu0 0
        %2799 = vmatpush1.bf16.msra.mxu0 0
        %2800 = vmatprep.subr.bf16.mxu0 0
        %2801 = vmatpush1.bf16.msra.mxu0 0
        %2802 = vmatprep.subr.bf16.mxu0 0
        %2803 = vmatpush1.bf16.msra.mxu0 0
        %2804 = vmatprep.subr.bf16.mxu0 0
        %2805 = vmatpush1.bf16.msra.mxu0 0
        %2806 = vmatprep.subr.bf16.mxu0 0
        %2807 = vmatpush1.bf16.msra.mxu0 0
        %2808 = vmatprep.subr.bf16.mxu0 0
        %2809 = vmatpush1.bf16.msra.mxu0 0
        %2810 = vmatprep.subr.bf16.mxu0 0
        %2811 = vmatpush1.bf16.msra.mxu0 0
        %2812 = vmatprep.subr.bf16.mxu0 0
        %2813 = vmatpush1.bf16.msra.mxu0 0
        %2814 = vmatprep.subr.bf16.mxu0 0
        %2815 = vmatpush1.bf16.msra.mxu0 0
        %2816 = vmatprep.subr.bf16.mxu0 0
        %2817 = vmatpush1.bf16.msra.mxu0 0
        %2818 = vmatprep.subr.bf16.mxu0 0
        %2819 = vmatpush1.bf16.msra.mxu0 0
        %2820 = vmatprep.subr.bf16.mxu0 0
        %2821 = vmatpush1.bf16.msra.mxu0 0
        %2822 = vmatprep.subr.bf16.mxu0 0
        %2823 = vmatpush1.bf16.msra.mxu0 0
        %2824 = vmatprep.subr.bf16.mxu0 0
        %2825 = vmatpush1.bf16.msra.mxu0 0
        %2826 = vmatprep.subr.bf16.mxu0 0
        %2827 = vmatpush1.bf16.msra.mxu0 0
        %2828 = vmatprep.mubr.bf16.mxu0 0
        %2829 = vmatmul.mubr.bf16.gmra.mrb[0].mxu0 %v2782
        %v2830 = vpop.f32.mrb[0].mxu0
        %v2831 = vadd.f32 0.0, %v2830
        %v2832 = vpop.f32.mrb[0].mxu0
        %v2833 = vadd.f32 0.0, %v2832
        %v2834 = vpop.f32.mrb[0].mxu0
        %v2835 = vadd.f32 0.0, %v2834
        %v2836 = vpop.f32.mrb[0].mxu0
        %v2837 = vadd.f32 0.0, %v2836
        %2838 = vmatprep.mubr.bf16.mxu0 0
        %2839 = vmatmul.mubr.bf16.gmra.mrb[0].mxu0 %v2785
        %v2840 = vpop.f32.mrb[0].mxu0
        %v2841 = vadd.f32 0.0, %v2840
        %v2842 = vpop.f32.mrb[0].mxu0
        %v2843 = vadd.f32 0.0, %v2842
        %v2844 = vpop.f32.mrb[0].mxu0
        %v2845 = vadd.f32 0.0, %v2844
        %v2846 = vpop.f32.mrb[0].mxu0
        %v2847 = vadd.f32 0.0, %v2846
        %2848 = vmatprep.mubr.bf16.mxu0 0
        %2849 = vmatmul.mubr.bf16.gmra.mrb[0].mxu0 %v2788
        %v2850 = vpop.f32.mrb[0].mxu0
        %v2851 = vadd.f32 0.0, %v2850
        %v2852 = vpop.f32.mrb[0].mxu0
        %v2853 = vadd.f32 0.0, %v2852
        %v2854 = vpop.f32.mrb[0].mxu0
        %v2855 = vpop.f32.mrb[0].mxu0
        %2856 = vdwg.mxu0
        %v2857 = vadd.f32 %v2746, %v2831
        %v2858 = vadd.f32 %v2747, %v2833
        %v2859 = vadd.f32 %v2748, %v2835
        %v2860 = vadd.f32 %v2749, %v2837
        %v2861 = vadd.f32 %v2750, %v2841
        %v2862 = vadd.f32 %v2751, %v2843
        %v2863 = vadd.f32 %v2752, %v2845
        %v2864 = vadd.f32 %v2753, %v2847
        %v2865 = vadd.f32 %v2754, %v2851
        %v2866 = vadd.f32 %v2755, %v2853
        %s2867 = scalar_lea.vmem %s1, 480
        %v2868 = vld [vmem:[%s2867] sm:$0xf]
        %v2869 = vld [vmem:[%s2867 + $0x4] sm:$0xf]
        %v2870 = vld [vmem:[%s2867 + $0x8] sm:$0xf]
        %v2871 = vld [vmem:[%s2867 + $0xc] sm:$0xf]
        %v2872 = vld [vmem:[%s2867 + $0x10] sm:$0xf]
        %v2878 = vunpack.c.l.b16 %v2868
        %v2879 = vunpack.c.l.b16 %v2869
        %v2880 = vunpack.c.l.b16 %v2870
        %v2881 = vunpack.c.l.b16 %v2871
        %v2882 = vunpack.c.l.b16 %v2872
        %v2883 = vpack.c.b16 %v2879, %v2878
        %v2884 = vpack.c.b16 %v2881, %v2880
        %v2885 = vpack.c.b16 %v2882, %v2882
        %2886 = vrot.lane.b32.xlu0 %v250, 104
        %v2887 = vpop.permute.xlu0 %2886
        %2888 = vrot.lane.b32.xlu0 %v251, 104
        %v2889 = vpop.permute.xlu0 %2888
        %vm2890 = vcmask 850944
        %v2891 = vsel %vm2890, %v2887, %v2889
        %v2893 = vsel %vm258, %v2883, 0
        %v2896 = vsel %vm258, %v2884, 0
        %v2899 = vsel %vm258, %v2885, 0
        %v2902 = vsel %vm268, %v2891, 0
        %v2905 = vsel %vm268, %v2889, 0
        %2907 = vmatprep.subr.bf16.mxu0 %v2905
        %2908 = vmatpush1.bf16.msra.mxu0 %v2902
        %2909 = vmatprep.subr.bf16.mxu0 0
        %2910 = vmatpush1.bf16.msra.mxu0 0
        %2911 = vmatprep.subr.bf16.mxu0 0
        %2912 = vmatpush1.bf16.msra.mxu0 0
        %2913 = vmatprep.subr.bf16.mxu0 0
        %2914 = vmatpush1.bf16.msra.mxu0 0
        %2915 = vmatprep.subr.bf16.mxu0 0
        %2916 = vmatpush1.bf16.msra.mxu0 0
        %2917 = vmatprep.subr.bf16.mxu0 0
        %2918 = vmatpush1.bf16.msra.mxu0 0
        %2919 = vmatprep.subr.bf16.mxu0 0
        %2920 = vmatpush1.bf16.msra.mxu0 0
        %2921 = vmatprep.subr.bf16.mxu0 0
        %2922 = vmatpush1.bf16.msra.mxu0 0
        %2923 = vmatprep.subr.bf16.mxu0 0
        %2924 = vmatpush1.bf16.msra.mxu0 0
        %2925 = vmatprep.subr.bf16.mxu0 0
        %2926 = vmatpush1.bf16.msra.mxu0 0
        %2927 = vmatprep.subr.bf16.mxu0 0
        %2928 = vmatpush1.bf16.msra.mxu0 0
        %2929 = vmatprep.subr.bf16.mxu0 0
        %2930 = vmatpush1.bf16.msra.mxu0 0
        %2931 = vmatprep.subr.bf16.mxu0 0
        %2932 = vmatpush1.bf16.msra.mxu0 0
        %2933 = vmatprep.subr.bf16.mxu0 0
        %2934 = vmatpush1.bf16.msra.mxu0 0
        %2935 = vmatprep.subr.bf16.mxu0 0
        %2936 = vmatpush1.bf16.msra.mxu0 0
        %2937 = vmatprep.subr.bf16.mxu0 0
        %2938 = vmatpush1.bf16.msra.mxu0 0
        %2939 = vmatprep.mubr.bf16.mxu0 0
        %2940 = vmatmul.mubr.bf16.gmra.mrb[0].mxu0 %v2893
        %v2941 = vpop.f32.mrb[0].mxu0
        %v2942 = vadd.f32 0.0, %v2941
        %v2943 = vpop.f32.mrb[0].mxu0
        %v2944 = vadd.f32 0.0, %v2943
        %v2945 = vpop.f32.mrb[0].mxu0
        %v2946 = vadd.f32 0.0, %v2945
        %v2947 = vpop.f32.mrb[0].mxu0
        %v2948 = vadd.f32 0.0, %v2947
        %2949 = vmatprep.mubr.bf16.mxu0 0
        %2950 = vmatmul.mubr.bf16.gmra.mrb[0].mxu0 %v2896
        %v2951 = vpop.f32.mrb[0].mxu0
        %v2952 = vadd.f32 0.0, %v2951
        %v2953 = vpop.f32.mrb[0].mxu0
        %v2954 = vadd.f32 0.0, %v2953
        %v2955 = vpop.f32.mrb[0].mxu0
        %v2956 = vadd.f32 0.0, %v2955
        %v2957 = vpop.f32.mrb[0].mxu0
        %v2958 = vadd.f32 0.0, %v2957
        %2959 = vmatprep.mubr.bf16.mxu0 0
        %2960 = vmatmul.mubr.bf16.gmra.mrb[0].mxu0 %v2899
        %v2961 = vpop.f32.mrb[0].mxu0
        %v2962 = vadd.f32 0.0, %v2961
        %v2963 = vpop.f32.mrb[0].mxu0
        %v2964 = vadd.f32 0.0, %v2963
        %v2965 = vpop.f32.mrb[0].mxu0
        %v2966 = vpop.f32.mrb[0].mxu0
        %2967 = vdwg.mxu0
        %v2968 = vadd.f32 %v2857, %v2942
        %v2969 = vadd.f32 %v2858, %v2944
        %v2970 = vadd.f32 %v2859, %v2946
        %v2971 = vadd.f32 %v2860, %v2948
        %v2972 = vadd.f32 %v2861, %v2952
        %v2973 = vadd.f32 %v2862, %v2954
        %v2974 = vadd.f32 %v2863, %v2956
        %v2975 = vadd.f32 %v2864, %v2958
        %v2976 = vadd.f32 %v2865, %v2962
        %v2977 = vadd.f32 %v2866, %v2964
        %s2978 = scalar_lea.vmem %s1, 500
        %v2979 = vld [vmem:[%s2978] sm:$0xf]
        %v2980 = vld [vmem:[%s2978 + $0x4] sm:$0xf]
        %v2981 = vld [vmem:[%s2978 + $0x8] sm:$0xf]
        %v2982 = vld [vmem:[%s2978 + $0xc] sm:$0xf]
        %v2983 = vld [vmem:[%s2978 + $0x10] sm:$0xf]
        %v2989 = vunpack.c.l.b16 %v2979
        %v2990 = vunpack.c.l.b16 %v2980
        %v2991 = vunpack.c.l.b16 %v2981
        %v2992 = vunpack.c.l.b16 %v2982
        %v2993 = vunpack.c.l.b16 %v2983
        %v2994 = vpack.c.b16 %v2990, %v2989
        %v2995 = vpack.c.b16 %v2992, %v2991
        %v2996 = vpack.c.b16 %v2993, %v2993
        %2997 = vrot.lane.b32.xlu0 %v250, 103
        %v2998 = vpop.permute.xlu0 %2997
        %2999 = vrot.lane.b32.xlu0 %v251, 103
        %v3000 = vpop.permute.xlu0 %2999
        %vm3001 = vcmask 842752
        %v3002 = vsel %vm3001, %v2998, %v3000
        %v3004 = vsel %vm258, %v2994, 0
        %v3007 = vsel %vm258, %v2995, 0
        %v3010 = vsel %vm258, %v2996, 0
        %v3013 = vsel %vm268, %v3002, 0
        %v3016 = vsel %vm268, %v3000, 0
        %3018 = vmatprep.subr.bf16.mxu0 %v3016
        %3019 = vmatpush1.bf16.msra.mxu0 %v3013
        %3020 = vmatprep.subr.bf16.mxu0 0
        %3021 = vmatpush1.bf16.msra.mxu0 0
        %3022 = vmatprep.subr.bf16.mxu0 0
        %3023 = vmatpush1.bf16.msra.mxu0 0
        %3024 = vmatprep.subr.bf16.mxu0 0
        %3025 = vmatpush1.bf16.msra.mxu0 0
        %3026 = vmatprep.subr.bf16.mxu0 0
        %3027 = vmatpush1.bf16.msra.mxu0 0
        %3028 = vmatprep.subr.bf16.mxu0 0
        %3029 = vmatpush1.bf16.msra.mxu0 0
        %3030 = vmatprep.subr.bf16.mxu0 0
        %3031 = vmatpush1.bf16.msra.mxu0 0
        %3032 = vmatprep.subr.bf16.mxu0 0
        %3033 = vmatpush1.bf16.msra.mxu0 0
        %3034 = vmatprep.subr.bf16.mxu0 0
        %3035 = vmatpush1.bf16.msra.mxu0 0
        %3036 = vmatprep.subr.bf16.mxu0 0
        %3037 = vmatpush1.bf16.msra.mxu0 0
        %3038 = vmatprep.subr.bf16.mxu0 0
        %3039 = vmatpush1.bf16.msra.mxu0 0
        %3040 = vmatprep.subr.bf16.mxu0 0
        %3041 = vmatpush1.bf16.msra.mxu0 0
        %3042 = vmatprep.subr.bf16.mxu0 0
        %3043 = vmatpush1.bf16.msra.mxu0 0
        %3044 = vmatprep.subr.bf16.mxu0 0
        %3045 = vmatpush1.bf16.msra.mxu0 0
        %3046 = vmatprep.subr.bf16.mxu0 0
        %3047 = vmatpush1.bf16.msra.mxu0 0
        %3048 = vmatprep.subr.bf16.mxu0 0
        %3049 = vmatpush1.bf16.msra.mxu0 0
        %3050 = vmatprep.mubr.bf16.mxu0 0
        %3051 = vmatmul.mubr.bf16.gmra.mrb[0].mxu0 %v3004
        %v3052 = vpop.f32.mrb[0].mxu0
        %v3053 = vadd.f32 0.0, %v3052
        %v3054 = vpop.f32.mrb[0].mxu0
        %v3055 = vadd.f32 0.0, %v3054
        %v3056 = vpop.f32.mrb[0].mxu0
        %v3057 = vadd.f32 0.0, %v3056
        %v3058 = vpop.f32.mrb[0].mxu0
        %v3059 = vadd.f32 0.0, %v3058
        %3060 = vmatprep.mubr.bf16.mxu0 0
        %3061 = vmatmul.mubr.bf16.gmra.mrb[0].mxu0 %v3007
        %v3062 = vpop.f32.mrb[0].mxu0
        %v3063 = vadd.f32 0.0, %v3062
        %v3064 = vpop.f32.mrb[0].mxu0
        %v3065 = vadd.f32 0.0, %v3064
        %v3066 = vpop.f32.mrb[0].mxu0
        %v3067 = vadd.f32 0.0, %v3066
        %v3068 = vpop.f32.mrb[0].mxu0
        %v3069 = vadd.f32 0.0, %v3068
        %3070 = vmatprep.mubr.bf16.mxu0 0
        %3071 = vmatmul.mubr.bf16.gmra.mrb[0].mxu0 %v3010
        %v3072 = vpop.f32.mrb[0].mxu0
        %v3073 = vadd.f32 0.0, %v3072
        %v3074 = vpop.f32.mrb[0].mxu0
        %v3075 = vadd.f32 0.0, %v3074
        %v3076 = vpop.f32.mrb[0].mxu0
        %v3077 = vpop.f32.mrb[0].mxu0
        %3078 = vdwg.mxu0
        %v3079 = vadd.f32 %v2968, %v3053
        %v3080 = vadd.f32 %v2969, %v3055
        %v3081 = vadd.f32 %v2970, %v3057
        %v3082 = vadd.f32 %v2971, %v3059
        %v3083 = vadd.f32 %v2972, %v3063
        %v3084 = vadd.f32 %v2973, %v3065
        %v3085 = vadd.f32 %v2974, %v3067
        %v3086 = vadd.f32 %v2975, %v3069
        %v3087 = vadd.f32 %v2976, %v3073
        %v3088 = vadd.f32 %v2977, %v3075
        %s3089 = scalar_lea.vmem %s1, 520
        %v3090 = vld [vmem:[%s3089] sm:$0xf]
        %v3091 = vld [vmem:[%s3089 + $0x4] sm:$0xf]
        %v3092 = vld [vmem:[%s3089 + $0x8] sm:$0xf]
        %v3093 = vld [vmem:[%s3089 + $0xc] sm:$0xf]
        %v3094 = vld [vmem:[%s3089 + $0x10] sm:$0xf]
        %v3100 = vunpack.c.l.b16 %v3090
        %v3101 = vunpack.c.l.b16 %v3091
        %v3102 = vunpack.c.l.b16 %v3092
        %v3103 = vunpack.c.l.b16 %v3093
        %v3104 = vunpack.c.l.b16 %v3094
        %v3105 = vpack.c.b16 %v3101, %v3100
        %v3106 = vpack.c.b16 %v3103, %v3102
        %v3107 = vpack.c.b16 %v3104, %v3104
        %3108 = vrot.lane.b32.xlu0 %v250, 102
        %v3109 = vpop.permute.xlu0 %3108
        %3110 = vrot.lane.b32.xlu0 %v251, 102
        %v3111 = vpop.permute.xlu0 %3110
        %vm3112 = vcmask 834560
        %v3113 = vsel %vm3112, %v3109, %v3111
        %v3115 = vsel %vm258, %v3105, 0
        %v3118 = vsel %vm258, %v3106, 0
        %v3121 = vsel %vm258, %v3107, 0
        %v3124 = vsel %vm268, %v3113, 0
        %v3127 = vsel %vm268, %v3111, 0
        %3129 = vmatprep.subr.bf16.mxu0 %v3127
        %3130 = vmatpush1.bf16.msra.mxu0 %v3124
        %3131 = vmatprep.subr.bf16.mxu0 0
        %3132 = vmatpush1.bf16.msra.mxu0 0
        %3133 = vmatprep.subr.bf16.mxu0 0
        %3134 = vmatpush1.bf16.msra.mxu0 0
        %3135 = vmatprep.subr.bf16.mxu0 0
        %3136 = vmatpush1.bf16.msra.mxu0 0
        %3137 = vmatprep.subr.bf16.mxu0 0
        %3138 = vmatpush1.bf16.msra.mxu0 0
        %3139 = vmatprep.subr.bf16.mxu0 0
        %3140 = vmatpush1.bf16.msra.mxu0 0
        %3141 = vmatprep.subr.bf16.mxu0 0
        %3142 = vmatpush1.bf16.msra.mxu0 0
        %3143 = vmatprep.subr.bf16.mxu0 0
        %3144 = vmatpush1.bf16.msra.mxu0 0
        %3145 = vmatprep.subr.bf16.mxu0 0
        %3146 = vmatpush1.bf16.msra.mxu0 0
        %3147 = vmatprep.subr.bf16.mxu0 0
        %3148 = vmatpush1.bf16.msra.mxu0 0
        %3149 = vmatprep.subr.bf16.mxu0 0
        %3150 = vmatpush1.bf16.msra.mxu0 0
        %3151 = vmatprep.subr.bf16.mxu0 0
        %3152 = vmatpush1.bf16.msra.mxu0 0
        %3153 = vmatprep.subr.bf16.mxu0 0
        %3154 = vmatpush1.bf16.msra.mxu0 0
        %3155 = vmatprep.subr.bf16.mxu0 0
        %3156 = vmatpush1.bf16.msra.mxu0 0
        %3157 = vmatprep.subr.bf16.mxu0 0
        %3158 = vmatpush1.bf16.msra.mxu0 0
        %3159 = vmatprep.subr.bf16.mxu0 0
        %3160 = vmatpush1.bf16.msra.mxu0 0
        %3161 = vmatprep.mubr.bf16.mxu0 0
        %3162 = vmatmul.mubr.bf16.gmra.mrb[0].mxu0 %v3115
        %v3163 = vpop.f32.mrb[0].mxu0
        %v3164 = vadd.f32 0.0, %v3163
        %v3165 = vpop.f32.mrb[0].mxu0
        %v3166 = vadd.f32 0.0, %v3165
        %v3167 = vpop.f32.mrb[0].mxu0
        %v3168 = vadd.f32 0.0, %v3167
        %v3169 = vpop.f32.mrb[0].mxu0
        %v3170 = vadd.f32 0.0, %v3169
        %3171 = vmatprep.mubr.bf16.mxu0 0
        %3172 = vmatmul.mubr.bf16.gmra.mrb[0].mxu0 %v3118
        %v3173 = vpop.f32.mrb[0].mxu0
        %v3174 = vadd.f32 0.0, %v3173
        %v3175 = vpop.f32.mrb[0].mxu0
        %v3176 = vadd.f32 0.0, %v3175
        %v3177 = vpop.f32.mrb[0].mxu0
        %v3178 = vadd.f32 0.0, %v3177
        %v3179 = vpop.f32.mrb[0].mxu0
        %v3180 = vadd.f32 0.0, %v3179
        %3181 = vmatprep.mubr.bf16.mxu0 0
        %3182 = vmatmul.mubr.bf16.gmra.mrb[0].mxu0 %v3121
        %v3183 = vpop.f32.mrb[0].mxu0
        %v3184 = vadd.f32 0.0, %v3183
        %v3185 = vpop.f32.mrb[0].mxu0
        %v3186 = vadd.f32 0.0, %v3185
        %v3187 = vpop.f32.mrb[0].mxu0
        %v3188 = vpop.f32.mrb[0].mxu0
        %3189 = vdwg.mxu0
        %v3190 = vadd.f32 %v3079, %v3164
        %v3191 = vadd.f32 %v3080, %v3166
        %v3192 = vadd.f32 %v3081, %v3168
        %v3193 = vadd.f32 %v3082, %v3170
        %v3194 = vadd.f32 %v3083, %v3174
        %v3195 = vadd.f32 %v3084, %v3176
        %v3196 = vadd.f32 %v3085, %v3178
        %v3197 = vadd.f32 %v3086, %v3180
        %v3198 = vadd.f32 %v3087, %v3184
        %v3199 = vadd.f32 %v3088, %v3186
        %s3200 = scalar_lea.vmem %s1, 540
        %v3201 = vld [vmem:[%s3200] sm:$0xf]
        %v3202 = vld [vmem:[%s3200 + $0x4] sm:$0xf]
        %v3203 = vld [vmem:[%s3200 + $0x8] sm:$0xf]
        %v3204 = vld [vmem:[%s3200 + $0xc] sm:$0xf]
        %v3205 = vld [vmem:[%s3200 + $0x10] sm:$0xf]
        %v3211 = vunpack.c.l.b16 %v3201
        %v3212 = vunpack.c.l.b16 %v3202
        %v3213 = vunpack.c.l.b16 %v3203
        %v3214 = vunpack.c.l.b16 %v3204
        %v3215 = vunpack.c.l.b16 %v3205
        %v3216 = vpack.c.b16 %v3212, %v3211
        %v3217 = vpack.c.b16 %v3214, %v3213
        %v3218 = vpack.c.b16 %v3215, %v3215
        %3219 = vrot.lane.b32.xlu0 %v250, 101
        %v3220 = vpop.permute.xlu0 %3219
        %3221 = vrot.lane.b32.xlu0 %v251, 101
        %v3222 = vpop.permute.xlu0 %3221
        %vm3223 = vcmask 826368
        %v3224 = vsel %vm3223, %v3220, %v3222
        %v3226 = vsel %vm258, %v3216, 0
        %v3229 = vsel %vm258, %v3217, 0
        %v3232 = vsel %vm258, %v3218, 0
        %v3235 = vsel %vm268, %v3224, 0
        %v3238 = vsel %vm268, %v3222, 0
        %3240 = vmatprep.subr.bf16.mxu0 %v3238
        %3241 = vmatpush1.bf16.msra.mxu0 %v3235
        %3242 = vmatprep.subr.bf16.mxu0 0
        %3243 = vmatpush1.bf16.msra.mxu0 0
        %3244 = vmatprep.subr.bf16.mxu0 0
        %3245 = vmatpush1.bf16.msra.mxu0 0
        %3246 = vmatprep.subr.bf16.mxu0 0
        %3247 = vmatpush1.bf16.msra.mxu0 0
        %3248 = vmatprep.subr.bf16.mxu0 0
        %3249 = vmatpush1.bf16.msra.mxu0 0
        %3250 = vmatprep.subr.bf16.mxu0 0
        %3251 = vmatpush1.bf16.msra.mxu0 0
        %3252 = vmatprep.subr.bf16.mxu0 0
        %3253 = vmatpush1.bf16.msra.mxu0 0
        %3254 = vmatprep.subr.bf16.mxu0 0
        %3255 = vmatpush1.bf16.msra.mxu0 0
        %3256 = vmatprep.subr.bf16.mxu0 0
        %3257 = vmatpush1.bf16.msra.mxu0 0
        %3258 = vmatprep.subr.bf16.mxu0 0
        %3259 = vmatpush1.bf16.msra.mxu0 0
        %3260 = vmatprep.subr.bf16.mxu0 0
        %3261 = vmatpush1.bf16.msra.mxu0 0
        %3262 = vmatprep.subr.bf16.mxu0 0
        %3263 = vmatpush1.bf16.msra.mxu0 0
        %3264 = vmatprep.subr.bf16.mxu0 0
        %3265 = vmatpush1.bf16.msra.mxu0 0
        %3266 = vmatprep.subr.bf16.mxu0 0
        %3267 = vmatpush1.bf16.msra.mxu0 0
        %3268 = vmatprep.subr.bf16.mxu0 0
        %3269 = vmatpush1.bf16.msra.mxu0 0
        %3270 = vmatprep.subr.bf16.mxu0 0
        %3271 = vmatpush1.bf16.msra.mxu0 0
        %3272 = vmatprep.mubr.bf16.mxu0 0
        %3273 = vmatmul.mubr.bf16.gmra.mrb[0].mxu0 %v3226
        %v3274 = vpop.f32.mrb[0].mxu0
        %v3275 = vadd.f32 0.0, %v3274
        %v3276 = vpop.f32.mrb[0].mxu0
        %v3277 = vadd.f32 0.0, %v3276
        %v3278 = vpop.f32.mrb[0].mxu0
        %v3279 = vadd.f32 0.0, %v3278
        %v3280 = vpop.f32.mrb[0].mxu0
        %v3281 = vadd.f32 0.0, %v3280
        %3282 = vmatprep.mubr.bf16.mxu0 0
        %3283 = vmatmul.mubr.bf16.gmra.mrb[0].mxu0 %v3229
        %v3284 = vpop.f32.mrb[0].mxu0
        %v3285 = vadd.f32 0.0, %v3284
        %v3286 = vpop.f32.mrb[0].mxu0
        %v3287 = vadd.f32 0.0, %v3286
        %v3288 = vpop.f32.mrb[0].mxu0
        %v3289 = vadd.f32 0.0, %v3288
        %v3290 = vpop.f32.mrb[0].mxu0
        %v3291 = vadd.f32 0.0, %v3290
        %3292 = vmatprep.mubr.bf16.mxu0 0
        %3293 = vmatmul.mubr.bf16.gmra.mrb[0].mxu0 %v3232
        %v3294 = vpop.f32.mrb[0].mxu0
        %v3295 = vadd.f32 0.0, %v3294
        %v3296 = vpop.f32.mrb[0].mxu0
        %v3297 = vadd.f32 0.0, %v3296
        %v3298 = vpop.f32.mrb[0].mxu0
        %v3299 = vpop.f32.mrb[0].mxu0
        %3300 = vdwg.mxu0
        %v3301 = vadd.f32 %v3190, %v3275
        %v3302 = vadd.f32 %v3191, %v3277
        %v3303 = vadd.f32 %v3192, %v3279
        %v3304 = vadd.f32 %v3193, %v3281
        %v3305 = vadd.f32 %v3194, %v3285
        %v3306 = vadd.f32 %v3195, %v3287
        %v3307 = vadd.f32 %v3196, %v3289
        %v3308 = vadd.f32 %v3197, %v3291
        %v3309 = vadd.f32 %v3198, %v3295
        %v3310 = vadd.f32 %v3199, %v3297
        %s3311 = scalar_lea.vmem %s1, 560
        %v3312 = vld [vmem:[%s3311] sm:$0xf]
        %v3313 = vld [vmem:[%s3311 + $0x4] sm:$0xf]
        %v3314 = vld [vmem:[%s3311 + $0x8] sm:$0xf]
        %v3315 = vld [vmem:[%s3311 + $0xc] sm:$0xf]
        %v3316 = vld [vmem:[%s3311 + $0x10] sm:$0xf]
        %v3322 = vunpack.c.l.b16 %v3312
        %v3323 = vunpack.c.l.b16 %v3313
        %v3324 = vunpack.c.l.b16 %v3314
        %v3325 = vunpack.c.l.b16 %v3315
        %v3326 = vunpack.c.l.b16 %v3316
        %v3327 = vpack.c.b16 %v3323, %v3322
        %v3328 = vpack.c.b16 %v3325, %v3324
        %v3329 = vpack.c.b16 %v3326, %v3326
        %3330 = vrot.lane.b32.xlu0 %v250, 100
        %v3331 = vpop.permute.xlu0 %3330
        %3332 = vrot.lane.b32.xlu0 %v251, 100
        %v3333 = vpop.permute.xlu0 %3332
        %vm3334 = vcmask 818176
        %v3335 = vsel %vm3334, %v3331, %v3333
        %v3337 = vsel %vm258, %v3327, 0
        %v3340 = vsel %vm258, %v3328, 0
        %v3343 = vsel %vm258, %v3329, 0
        %v3346 = vsel %vm268, %v3335, 0
        %v3349 = vsel %vm268, %v3333, 0
        %3351 = vmatprep.subr.bf16.mxu0 %v3349
        %3352 = vmatpush1.bf16.msra.mxu0 %v3346
        %3353 = vmatprep.subr.bf16.mxu0 0
        %3354 = vmatpush1.bf16.msra.mxu0 0
        %3355 = vmatprep.subr.bf16.mxu0 0
        %3356 = vmatpush1.bf16.msra.mxu0 0
        %3357 = vmatprep.subr.bf16.mxu0 0
        %3358 = vmatpush1.bf16.msra.mxu0 0
        %3359 = vmatprep.subr.bf16.mxu0 0
        %3360 = vmatpush1.bf16.msra.mxu0 0
        %3361 = vmatprep.subr.bf16.mxu0 0
        %3362 = vmatpush1.bf16.msra.mxu0 0
        %3363 = vmatprep.subr.bf16.mxu0 0
        %3364 = vmatpush1.bf16.msra.mxu0 0
        %3365 = vmatprep.subr.bf16.mxu0 0
        %3366 = vmatpush1.bf16.msra.mxu0 0
        %3367 = vmatprep.subr.bf16.mxu0 0
        %3368 = vmatpush1.bf16.msra.mxu0 0
        %3369 = vmatprep.subr.bf16.mxu0 0
        %3370 = vmatpush1.bf16.msra.mxu0 0
        %3371 = vmatprep.subr.bf16.mxu0 0
        %3372 = vmatpush1.bf16.msra.mxu0 0
        %3373 = vmatprep.subr.bf16.mxu0 0
        %3374 = vmatpush1.bf16.msra.mxu0 0
        %3375 = vmatprep.subr.bf16.mxu0 0
        %3376 = vmatpush1.bf16.msra.mxu0 0
        %3377 = vmatprep.subr.bf16.mxu0 0
        %3378 = vmatpush1.bf16.msra.mxu0 0
        %3379 = vmatprep.subr.bf16.mxu0 0
        %3380 = vmatpush1.bf16.msra.mxu0 0
        %3381 = vmatprep.subr.bf16.mxu0 0
        %3382 = vmatpush1.bf16.msra.mxu0 0
        %3383 = vmatprep.mubr.bf16.mxu0 0
        %3384 = vmatmul.mubr.bf16.gmra.mrb[0].mxu0 %v3337
        %v3385 = vpop.f32.mrb[0].mxu0
        %v3386 = vadd.f32 0.0, %v3385
        %v3387 = vpop.f32.mrb[0].mxu0
        %v3388 = vadd.f32 0.0, %v3387
        %v3389 = vpop.f32.mrb[0].mxu0
        %v3390 = vadd.f32 0.0, %v3389
        %v3391 = vpop.f32.mrb[0].mxu0
        %v3392 = vadd.f32 0.0, %v3391
        %3393 = vmatprep.mubr.bf16.mxu0 0
        %3394 = vmatmul.mubr.bf16.gmra.mrb[0].mxu0 %v3340
        %v3395 = vpop.f32.mrb[0].mxu0
        %v3396 = vadd.f32 0.0, %v3395
        %v3397 = vpop.f32.mrb[0].mxu0
        %v3398 = vadd.f32 0.0, %v3397
        %v3399 = vpop.f32.mrb[0].mxu0
        %v3400 = vadd.f32 0.0, %v3399
        %v3401 = vpop.f32.mrb[0].mxu0
        %v3402 = vadd.f32 0.0, %v3401
        %3403 = vmatprep.mubr.bf16.mxu0 0
        %3404 = vmatmul.mubr.bf16.gmra.mrb[0].mxu0 %v3343
        %v3405 = vpop.f32.mrb[0].mxu0
        %v3406 = vadd.f32 0.0, %v3405
        %v3407 = vpop.f32.mrb[0].mxu0
        %v3408 = vadd.f32 0.0, %v3407
        %v3409 = vpop.f32.mrb[0].mxu0
        %v3410 = vpop.f32.mrb[0].mxu0
        %3411 = vdwg.mxu0
        %v3412 = vadd.f32 %v3301, %v3386
        %v3413 = vadd.f32 %v3302, %v3388
        %v3414 = vadd.f32 %v3303, %v3390
        %v3415 = vadd.f32 %v3304, %v3392
        %v3416 = vadd.f32 %v3305, %v3396
        %v3417 = vadd.f32 %v3306, %v3398
        %v3418 = vadd.f32 %v3307, %v3400
        %v3419 = vadd.f32 %v3308, %v3402
        %v3420 = vadd.f32 %v3309, %v3406
        %v3421 = vadd.f32 %v3310, %v3408
        %s3422 = scalar_lea.vmem %s1, 580
        %v3423 = vld [vmem:[%s3422] sm:$0xf]
        %v3424 = vld [vmem:[%s3422 + $0x4] sm:$0xf]
        %v3425 = vld [vmem:[%s3422 + $0x8] sm:$0xf]
        %v3426 = vld [vmem:[%s3422 + $0xc] sm:$0xf]
        %v3427 = vld [vmem:[%s3422 + $0x10] sm:$0xf]
        %v3433 = vunpack.c.l.b16 %v3423
        %v3434 = vunpack.c.l.b16 %v3424
        %v3435 = vunpack.c.l.b16 %v3425
        %v3436 = vunpack.c.l.b16 %v3426
        %v3437 = vunpack.c.l.b16 %v3427
        %v3438 = vpack.c.b16 %v3434, %v3433
        %v3439 = vpack.c.b16 %v3436, %v3435
        %v3440 = vpack.c.b16 %v3437, %v3437
        %3441 = vrot.lane.b32.xlu0 %v250, 99
        %v3442 = vpop.permute.xlu0 %3441
        %3443 = vrot.lane.b32.xlu0 %v251, 99
        %v3444 = vpop.permute.xlu0 %3443
        %vm3445 = vcmask 809984
        %v3446 = vsel %vm3445, %v3442, %v3444
        %v3448 = vsel %vm258, %v3438, 0
        %v3451 = vsel %vm258, %v3439, 0
        %v3454 = vsel %vm258, %v3440, 0
        %v3457 = vsel %vm268, %v3446, 0
        %v3460 = vsel %vm268, %v3444, 0
        %3462 = vmatprep.subr.bf16.mxu0 %v3460
        %3463 = vmatpush1.bf16.msra.mxu0 %v3457
        %3464 = vmatprep.subr.bf16.mxu0 0
        %3465 = vmatpush1.bf16.msra.mxu0 0
        %3466 = vmatprep.subr.bf16.mxu0 0
        %3467 = vmatpush1.bf16.msra.mxu0 0
        %3468 = vmatprep.subr.bf16.mxu0 0
        %3469 = vmatpush1.bf16.msra.mxu0 0
        %3470 = vmatprep.subr.bf16.mxu0 0
        %3471 = vmatpush1.bf16.msra.mxu0 0
        %3472 = vmatprep.subr.bf16.mxu0 0
        %3473 = vmatpush1.bf16.msra.mxu0 0
        %3474 = vmatprep.subr.bf16.mxu0 0
        %3475 = vmatpush1.bf16.msra.mxu0 0
        %3476 = vmatprep.subr.bf16.mxu0 0
        %3477 = vmatpush1.bf16.msra.mxu0 0
        %3478 = vmatprep.subr.bf16.mxu0 0
        %3479 = vmatpush1.bf16.msra.mxu0 0
        %3480 = vmatprep.subr.bf16.mxu0 0
        %3481 = vmatpush1.bf16.msra.mxu0 0
        %3482 = vmatprep.subr.bf16.mxu0 0
        %3483 = vmatpush1.bf16.msra.mxu0 0
        %3484 = vmatprep.subr.bf16.mxu0 0
        %3485 = vmatpush1.bf16.msra.mxu0 0
        %3486 = vmatprep.subr.bf16.mxu0 0
        %3487 = vmatpush1.bf16.msra.mxu0 0
        %3488 = vmatprep.subr.bf16.mxu0 0
        %3489 = vmatpush1.bf16.msra.mxu0 0
        %3490 = vmatprep.subr.bf16.mxu0 0
        %3491 = vmatpush1.bf16.msra.mxu0 0
        %3492 = vmatprep.subr.bf16.mxu0 0
        %3493 = vmatpush1.bf16.msra.mxu0 0
        %3494 = vmatprep.mubr.bf16.mxu0 0
        %3495 = vmatmul.mubr.bf16.gmra.mrb[0].mxu0 %v3448
        %v3496 = vpop.f32.mrb[0].mxu0
        %v3497 = vadd.f32 0.0, %v3496
        %v3498 = vpop.f32.mrb[0].mxu0
        %v3499 = vadd.f32 0.0, %v3498
        %v3500 = vpop.f32.mrb[0].mxu0
        %v3501 = vadd.f32 0.0, %v3500
        %v3502 = vpop.f32.mrb[0].mxu0
        %v3503 = vadd.f32 0.0, %v3502
        %3504 = vmatprep.mubr.bf16.mxu0 0
        %3505 = vmatmul.mubr.bf16.gmra.mrb[0].mxu0 %v3451
        %v3506 = vpop.f32.mrb[0].mxu0
        %v3507 = vadd.f32 0.0, %v3506
        %v3508 = vpop.f32.mrb[0].mxu0
        %v3509 = vadd.f32 0.0, %v3508
        %v3510 = vpop.f32.mrb[0].mxu0
        %v3511 = vadd.f32 0.0, %v3510
        %v3512 = vpop.f32.mrb[0].mxu0
        %v3513 = vadd.f32 0.0, %v3512
        %3514 = vmatprep.mubr.bf16.mxu0 0
        %3515 = vmatmul.mubr.bf16.gmra.mrb[0].mxu0 %v3454
        %v3516 = vpop.f32.mrb[0].mxu0
        %v3517 = vadd.f32 0.0, %v3516
        %v3518 = vpop.f32.mrb[0].mxu0
        %v3519 = vadd.f32 0.0, %v3518
        %v3520 = vpop.f32.mrb[0].mxu0
        %v3521 = vpop.f32.mrb[0].mxu0
        %3522 = vdwg.mxu0
        %v3523 = vadd.f32 %v3412, %v3497
        %v3524 = vadd.f32 %v3413, %v3499
        %v3525 = vadd.f32 %v3414, %v3501
        %v3526 = vadd.f32 %v3415, %v3503
        %v3527 = vadd.f32 %v3416, %v3507
        %v3528 = vadd.f32 %v3417, %v3509
        %v3529 = vadd.f32 %v3418, %v3511
        %v3530 = vadd.f32 %v3419, %v3513
        %v3531 = vadd.f32 %v3420, %v3517
        %v3532 = vadd.f32 %v3421, %v3519
        %s3533 = scalar_lea.vmem %s1, 600
        %v3534 = vld [vmem:[%s3533] sm:$0xf]
        %v3535 = vld [vmem:[%s3533 + $0x4] sm:$0xf]
        %v3536 = vld [vmem:[%s3533 + $0x8] sm:$0xf]
        %v3537 = vld [vmem:[%s3533 + $0xc] sm:$0xf]
        %v3538 = vld [vmem:[%s3533 + $0x10] sm:$0xf]
        %v3544 = vunpack.c.l.b16 %v3534
        %v3545 = vunpack.c.l.b16 %v3535
        %v3546 = vunpack.c.l.b16 %v3536
        %v3547 = vunpack.c.l.b16 %v3537
        %v3548 = vunpack.c.l.b16 %v3538
        %v3549 = vpack.c.b16 %v3545, %v3544
        %v3550 = vpack.c.b16 %v3547, %v3546
        %v3551 = vpack.c.b16 %v3548, %v3548
        %3552 = vrot.lane.b32.xlu0 %v250, 98
        %v3553 = vpop.permute.xlu0 %3552
        %3554 = vrot.lane.b32.xlu0 %v251, 98
        %v3555 = vpop.permute.xlu0 %3554
        %vm3556 = vcmask 801792
        %v3557 = vsel %vm3556, %v3553, %v3555
        %v3559 = vsel %vm258, %v3549, 0
        %v3562 = vsel %vm258, %v3550, 0
        %v3565 = vsel %vm258, %v3551, 0
        %v3568 = vsel %vm268, %v3557, 0
        %v3571 = vsel %vm268, %v3555, 0
        %3573 = vmatprep.subr.bf16.mxu0 %v3571
        %3574 = vmatpush1.bf16.msra.mxu0 %v3568
        %3575 = vmatprep.subr.bf16.mxu0 0
        %3576 = vmatpush1.bf16.msra.mxu0 0
        %3577 = vmatprep.subr.bf16.mxu0 0
        %3578 = vmatpush1.bf16.msra.mxu0 0
        %3579 = vmatprep.subr.bf16.mxu0 0
        %3580 = vmatpush1.bf16.msra.mxu0 0
        %3581 = vmatprep.subr.bf16.mxu0 0
        %3582 = vmatpush1.bf16.msra.mxu0 0
        %3583 = vmatprep.subr.bf16.mxu0 0
        %3584 = vmatpush1.bf16.msra.mxu0 0
        %3585 = vmatprep.subr.bf16.mxu0 0
        %3586 = vmatpush1.bf16.msra.mxu0 0
        %3587 = vmatprep.subr.bf16.mxu0 0
        %3588 = vmatpush1.bf16.msra.mxu0 0
        %3589 = vmatprep.subr.bf16.mxu0 0
        %3590 = vmatpush1.bf16.msra.mxu0 0
        %3591 = vmatprep.subr.bf16.mxu0 0
        %3592 = vmatpush1.bf16.msra.mxu0 0
        %3593 = vmatprep.subr.bf16.mxu0 0
        %3594 = vmatpush1.bf16.msra.mxu0 0
        %3595 = vmatprep.subr.bf16.mxu0 0
        %3596 = vmatpush1.bf16.msra.mxu0 0
        %3597 = vmatprep.subr.bf16.mxu0 0
        %3598 = vmatpush1.bf16.msra.mxu0 0
        %3599 = vmatprep.subr.bf16.mxu0 0
        %3600 = vmatpush1.bf16.msra.mxu0 0
        %3601 = vmatprep.subr.bf16.mxu0 0
        %3602 = vmatpush1.bf16.msra.mxu0 0
        %3603 = vmatprep.subr.bf16.mxu0 0
        %3604 = vmatpush1.bf16.msra.mxu0 0
        %3605 = vmatprep.mubr.bf16.mxu0 0
        %3606 = vmatmul.mubr.bf16.gmra.mrb[0].mxu0 %v3559
        %v3607 = vpop.f32.mrb[0].mxu0
        %v3608 = vadd.f32 0.0, %v3607
        %v3609 = vpop.f32.mrb[0].mxu0
        %v3610 = vadd.f32 0.0, %v3609
        %v3611 = vpop.f32.mrb[0].mxu0
        %v3612 = vadd.f32 0.0, %v3611
        %v3613 = vpop.f32.mrb[0].mxu0
        %v3614 = vadd.f32 0.0, %v3613
        %3615 = vmatprep.mubr.bf16.mxu0 0
        %3616 = vmatmul.mubr.bf16.gmra.mrb[0].mxu0 %v3562
        %v3617 = vpop.f32.mrb[0].mxu0
        %v3618 = vadd.f32 0.0, %v3617
        %v3619 = vpop.f32.mrb[0].mxu0
        %v3620 = vadd.f32 0.0, %v3619
        %v3621 = vpop.f32.mrb[0].mxu0
        %v3622 = vadd.f32 0.0, %v3621
        %v3623 = vpop.f32.mrb[0].mxu0
        %v3624 = vadd.f32 0.0, %v3623
        %3625 = vmatprep.mubr.bf16.mxu0 0
        %3626 = vmatmul.mubr.bf16.gmra.mrb[0].mxu0 %v3565
        %v3627 = vpop.f32.mrb[0].mxu0
        %v3628 = vadd.f32 0.0, %v3627
        %v3629 = vpop.f32.mrb[0].mxu0
        %v3630 = vadd.f32 0.0, %v3629
        %v3631 = vpop.f32.mrb[0].mxu0
        %v3632 = vpop.f32.mrb[0].mxu0
        %3633 = vdwg.mxu0
        %v3634 = vadd.f32 %v3523, %v3608
        %v3635 = vadd.f32 %v3524, %v3610
        %v3636 = vadd.f32 %v3525, %v3612
        %v3637 = vadd.f32 %v3526, %v3614
        %v3638 = vadd.f32 %v3527, %v3618
        %v3639 = vadd.f32 %v3528, %v3620
        %v3640 = vadd.f32 %v3529, %v3622
        %v3641 = vadd.f32 %v3530, %v3624
        %v3642 = vadd.f32 %v3531, %v3628
        %v3643 = vadd.f32 %v3532, %v3630
        %s3644 = scalar_lea.vmem %s1, 620
        %v3645 = vld [vmem:[%s3644] sm:$0xf]
        %v3646 = vld [vmem:[%s3644 + $0x4] sm:$0xf]
        %v3647 = vld [vmem:[%s3644 + $0x8] sm:$0xf]
        %v3648 = vld [vmem:[%s3644 + $0xc] sm:$0xf]
        %v3649 = vld [vmem:[%s3644 + $0x10] sm:$0xf]
        %v3655 = vunpack.c.l.b16 %v3645
        %v3656 = vunpack.c.l.b16 %v3646
        %v3657 = vunpack.c.l.b16 %v3647
        %v3658 = vunpack.c.l.b16 %v3648
        %v3659 = vunpack.c.l.b16 %v3649
        %v3660 = vpack.c.b16 %v3656, %v3655
        %v3661 = vpack.c.b16 %v3658, %v3657
        %v3662 = vpack.c.b16 %v3659, %v3659
        %3663 = vrot.lane.b32.xlu0 %v250, 97
        %v3664 = vpop.permute.xlu0 %3663
        %3665 = vrot.lane.b32.xlu0 %v251, 97
        %v3666 = vpop.permute.xlu0 %3665
        %vm3667 = vcmask 793600
        %v3668 = vsel %vm3667, %v3664, %v3666
        %v3670 = vsel %vm258, %v3660, 0
        %v3673 = vsel %vm258, %v3661, 0
        %v3676 = vsel %vm258, %v3662, 0
        %v3679 = vsel %vm268, %v3668, 0
        %v3682 = vsel %vm268, %v3666, 0
        %3684 = vmatprep.subr.bf16.mxu0 %v3682
        %3685 = vmatpush1.bf16.msra.mxu0 %v3679
        %3686 = vmatprep.subr.bf16.mxu0 0
        %3687 = vmatpush1.bf16.msra.mxu0 0
        %3688 = vmatprep.subr.bf16.mxu0 0
        %3689 = vmatpush1.bf16.msra.mxu0 0
        %3690 = vmatprep.subr.bf16.mxu0 0
        %3691 = vmatpush1.bf16.msra.mxu0 0
        %3692 = vmatprep.subr.bf16.mxu0 0
        %3693 = vmatpush1.bf16.msra.mxu0 0
        %3694 = vmatprep.subr.bf16.mxu0 0
        %3695 = vmatpush1.bf16.msra.mxu0 0
        %3696 = vmatprep.subr.bf16.mxu0 0
        %3697 = vmatpush1.bf16.msra.mxu0 0
        %3698 = vmatprep.subr.bf16.mxu0 0
        %3699 = vmatpush1.bf16.msra.mxu0 0
        %3700 = vmatprep.subr.bf16.mxu0 0
        %3701 = vmatpush1.bf16.msra.mxu0 0
        %3702 = vmatprep.subr.bf16.mxu0 0
        %3703 = vmatpush1.bf16.msra.mxu0 0
        %3704 = vmatprep.subr.bf16.mxu0 0
        %3705 = vmatpush1.bf16.msra.mxu0 0
        %3706 = vmatprep.subr.bf16.mxu0 0
        %3707 = vmatpush1.bf16.msra.mxu0 0
        %3708 = vmatprep.subr.bf16.mxu0 0
        %3709 = vmatpush1.bf16.msra.mxu0 0
        %3710 = vmatprep.subr.bf16.mxu0 0
        %3711 = vmatpush1.bf16.msra.mxu0 0
        %3712 = vmatprep.subr.bf16.mxu0 0
        %3713 = vmatpush1.bf16.msra.mxu0 0
        %3714 = vmatprep.subr.bf16.mxu0 0
        %3715 = vmatpush1.bf16.msra.mxu0 0
        %3716 = vmatprep.mubr.bf16.mxu0 0
        %3717 = vmatmul.mubr.bf16.gmra.mrb[0].mxu0 %v3670
        %v3718 = vpop.f32.mrb[0].mxu0
        %v3719 = vadd.f32 0.0, %v3718
        %v3720 = vpop.f32.mrb[0].mxu0
        %v3721 = vadd.f32 0.0, %v3720
        %v3722 = vpop.f32.mrb[0].mxu0
        %v3723 = vadd.f32 0.0, %v3722
        %v3724 = vpop.f32.mrb[0].mxu0
        %v3725 = vadd.f32 0.0, %v3724
        %3726 = vmatprep.mubr.bf16.mxu0 0
        %3727 = vmatmul.mubr.bf16.gmra.mrb[0].mxu0 %v3673
        %v3728 = vpop.f32.mrb[0].mxu0
        %v3729 = vadd.f32 0.0, %v3728
        %v3730 = vpop.f32.mrb[0].mxu0
        %v3731 = vadd.f32 0.0, %v3730
        %v3732 = vpop.f32.mrb[0].mxu0
        %v3733 = vadd.f32 0.0, %v3732
        %v3734 = vpop.f32.mrb[0].mxu0
        %v3735 = vadd.f32 0.0, %v3734
        %3736 = vmatprep.mubr.bf16.mxu0 0
        %3737 = vmatmul.mubr.bf16.gmra.mrb[0].mxu0 %v3676
        %v3738 = vpop.f32.mrb[0].mxu0
        %v3739 = vadd.f32 0.0, %v3738
        %v3740 = vpop.f32.mrb[0].mxu0
        %v3741 = vadd.f32 0.0, %v3740
        %v3742 = vpop.f32.mrb[0].mxu0
        %v3743 = vpop.f32.mrb[0].mxu0
        %3744 = vdwg.mxu0
        %v3745 = vadd.f32 %v3634, %v3719
        %v3746 = vadd.f32 %v3635, %v3721
        %v3747 = vadd.f32 %v3636, %v3723
        %v3748 = vadd.f32 %v3637, %v3725
        %v3749 = vadd.f32 %v3638, %v3729
        %v3750 = vadd.f32 %v3639, %v3731
        %v3751 = vadd.f32 %v3640, %v3733
        %v3752 = vadd.f32 %v3641, %v3735
        %v3753 = vadd.f32 %v3642, %v3739
        %v3754 = vadd.f32 %v3643, %v3741
        %s3755 = scalar_lea.vmem %s1, 640
        %v3756 = vld [vmem:[%s3755] sm:$0xf]
        %v3757 = vld [vmem:[%s3755 + $0x4] sm:$0xf]
        %v3758 = vld [vmem:[%s3755 + $0x8] sm:$0xf]
        %v3759 = vld [vmem:[%s3755 + $0xc] sm:$0xf]
        %v3760 = vld [vmem:[%s3755 + $0x10] sm:$0xf]
        %v3766 = vunpack.c.l.b16 %v3756
        %v3767 = vunpack.c.l.b16 %v3757
        %v3768 = vunpack.c.l.b16 %v3758
        %v3769 = vunpack.c.l.b16 %v3759
        %v3770 = vunpack.c.l.b16 %v3760
        %v3771 = vpack.c.b16 %v3767, %v3766
        %v3772 = vpack.c.b16 %v3769, %v3768
        %v3773 = vpack.c.b16 %v3770, %v3770
        %3774 = vrot.lane.b32.xlu0 %v250, 96
        %v3775 = vpop.permute.xlu0 %3774
        %3776 = vrot.lane.b32.xlu0 %v251, 96
        %v3777 = vpop.permute.xlu0 %3776
        %vm3778 = vcmask 785408
        %v3779 = vsel %vm3778, %v3775, %v3777
        %v3781 = vsel %vm258, %v3771, 0
        %v3784 = vsel %vm258, %v3772, 0
        %v3787 = vsel %vm258, %v3773, 0
        %v3790 = vsel %vm268, %v3779, 0
        %v3793 = vsel %vm268, %v3777, 0
        %3795 = vmatprep.subr.bf16.mxu0 %v3793
        %3796 = vmatpush1.bf16.msra.mxu0 %v3790
        %3797 = vmatprep.subr.bf16.mxu0 0
        %3798 = vmatpush1.bf16.msra.mxu0 0
        %3799 = vmatprep.subr.bf16.mxu0 0
        %3800 = vmatpush1.bf16.msra.mxu0 0
        %3801 = vmatprep.subr.bf16.mxu0 0
        %3802 = vmatpush1.bf16.msra.mxu0 0
        %3803 = vmatprep.subr.bf16.mxu0 0
        %3804 = vmatpush1.bf16.msra.mxu0 0
        %3805 = vmatprep.subr.bf16.mxu0 0
        %3806 = vmatpush1.bf16.msra.mxu0 0
        %3807 = vmatprep.subr.bf16.mxu0 0
        %3808 = vmatpush1.bf16.msra.mxu0 0
        %3809 = vmatprep.subr.bf16.mxu0 0
        %3810 = vmatpush1.bf16.msra.mxu0 0
        %3811 = vmatprep.subr.bf16.mxu0 0
        %3812 = vmatpush1.bf16.msra.mxu0 0
        %3813 = vmatprep.subr.bf16.mxu0 0
        %3814 = vmatpush1.bf16.msra.mxu0 0
        %3815 = vmatprep.subr.bf16.mxu0 0
        %3816 = vmatpush1.bf16.msra.mxu0 0
        %3817 = vmatprep.subr.bf16.mxu0 0
        %3818 = vmatpush1.bf16.msra.mxu0 0
        %3819 = vmatprep.subr.bf16.mxu0 0
        %3820 = vmatpush1.bf16.msra.mxu0 0
        %3821 = vmatprep.subr.bf16.mxu0 0
        %3822 = vmatpush1.bf16.msra.mxu0 0
        %3823 = vmatprep.subr.bf16.mxu0 0
        %3824 = vmatpush1.bf16.msra.mxu0 0
        %3825 = vmatprep.subr.bf16.mxu0 0
        %3826 = vmatpush1.bf16.msra.mxu0 0
        %3827 = vmatprep.mubr.bf16.mxu0 0
        %3828 = vmatmul.mubr.bf16.gmra.mrb[0].mxu0 %v3781
        %v3829 = vpop.f32.mrb[0].mxu0
        %v3830 = vadd.f32 0.0, %v3829
        %v3831 = vpop.f32.mrb[0].mxu0
        %v3832 = vadd.f32 0.0, %v3831
        %v3833 = vpop.f32.mrb[0].mxu0
        %v3834 = vadd.f32 0.0, %v3833
        %v3835 = vpop.f32.mrb[0].mxu0
        %v3836 = vadd.f32 0.0, %v3835
        %3837 = vmatprep.mubr.bf16.mxu0 0
        %3838 = vmatmul.mubr.bf16.gmra.mrb[0].mxu0 %v3784
        %v3839 = vpop.f32.mrb[0].mxu0
        %v3840 = vadd.f32 0.0, %v3839
        %v3841 = vpop.f32.mrb[0].mxu0
        %v3842 = vadd.f32 0.0, %v3841
        %v3843 = vpop.f32.mrb[0].mxu0
        %v3844 = vadd.f32 0.0, %v3843
        %v3845 = vpop.f32.mrb[0].mxu0
        %v3846 = vadd.f32 0.0, %v3845
        %3847 = vmatprep.mubr.bf16.mxu0 0
        %3848 = vmatmul.mubr.bf16.gmra.mrb[0].mxu0 %v3787
        %v3849 = vpop.f32.mrb[0].mxu0
        %v3850 = vadd.f32 0.0, %v3849
        %v3851 = vpop.f32.mrb[0].mxu0
        %v3852 = vadd.f32 0.0, %v3851
        %v3853 = vpop.f32.mrb[0].mxu0
        %v3854 = vpop.f32.mrb[0].mxu0
        %3855 = vdwg.mxu0
        %v3856 = vadd.f32 %v3745, %v3830
        %v3857 = vadd.f32 %v3746, %v3832
        %v3858 = vadd.f32 %v3747, %v3834
        %v3859 = vadd.f32 %v3748, %v3836
        %v3860 = vadd.f32 %v3749, %v3840
        %v3861 = vadd.f32 %v3750, %v3842
        %v3862 = vadd.f32 %v3751, %v3844
        %v3863 = vadd.f32 %v3752, %v3846
        %v3864 = vadd.f32 %v3753, %v3850
        %v3865 = vadd.f32 %v3754, %v3852
        %s3866 = scalar_lea.vmem %s1, 660
        %v3867 = vld [vmem:[%s3866] sm:$0xf]
        %v3868 = vld [vmem:[%s3866 + $0x4] sm:$0xf]
        %v3869 = vld [vmem:[%s3866 + $0x8] sm:$0xf]
        %v3870 = vld [vmem:[%s3866 + $0xc] sm:$0xf]
        %v3871 = vld [vmem:[%s3866 + $0x10] sm:$0xf]
        %v3877 = vunpack.c.l.b16 %v3867
        %v3878 = vunpack.c.l.b16 %v3868
        %v3879 = vunpack.c.l.b16 %v3869
        %v3880 = vunpack.c.l.b16 %v3870
        %v3881 = vunpack.c.l.b16 %v3871
        %v3882 = vpack.c.b16 %v3878, %v3877
        %v3883 = vpack.c.b16 %v3880, %v3879
        %v3884 = vpack.c.b16 %v3881, %v3881
        %3885 = vrot.lane.b32.xlu0 %v250, 95
        %v3886 = vpop.permute.xlu0 %3885
        %3887 = vrot.lane.b32.xlu0 %v251, 95
        %v3888 = vpop.permute.xlu0 %3887
        %vm3889 = vcmask 777216
        %v3890 = vsel %vm3889, %v3886, %v3888
        %v3892 = vsel %vm258, %v3882, 0
        %v3895 = vsel %vm258, %v3883, 0
        %v3898 = vsel %vm258, %v3884, 0
        %v3901 = vsel %vm268, %v3890, 0
        %v3904 = vsel %vm268, %v3888, 0
        %3906 = vmatprep.subr.bf16.mxu0 %v3904
        %3907 = vmatpush1.bf16.msra.mxu0 %v3901
        %3908 = vmatprep.subr.bf16.mxu0 0
        %3909 = vmatpush1.bf16.msra.mxu0 0
        %3910 = vmatprep.subr.bf16.mxu0 0
        %3911 = vmatpush1.bf16.msra.mxu0 0
        %3912 = vmatprep.subr.bf16.mxu0 0
        %3913 = vmatpush1.bf16.msra.mxu0 0
        %3914 = vmatprep.subr.bf16.mxu0 0
        %3915 = vmatpush1.bf16.msra.mxu0 0
        %3916 = vmatprep.subr.bf16.mxu0 0
        %3917 = vmatpush1.bf16.msra.mxu0 0
        %3918 = vmatprep.subr.bf16.mxu0 0
        %3919 = vmatpush1.bf16.msra.mxu0 0
        %3920 = vmatprep.subr.bf16.mxu0 0
        %3921 = vmatpush1.bf16.msra.mxu0 0
        %3922 = vmatprep.subr.bf16.mxu0 0
        %3923 = vmatpush1.bf16.msra.mxu0 0
        %3924 = vmatprep.subr.bf16.mxu0 0
        %3925 = vmatpush1.bf16.msra.mxu0 0
        %3926 = vmatprep.subr.bf16.mxu0 0
        %3927 = vmatpush1.bf16.msra.mxu0 0
        %3928 = vmatprep.subr.bf16.mxu0 0
        %3929 = vmatpush1.bf16.msra.mxu0 0
        %3930 = vmatprep.subr.bf16.mxu0 0
        %3931 = vmatpush1.bf16.msra.mxu0 0
        %3932 = vmatprep.subr.bf16.mxu0 0
        %3933 = vmatpush1.bf16.msra.mxu0 0
        %3934 = vmatprep.subr.bf16.mxu0 0
        %3935 = vmatpush1.bf16.msra.mxu0 0
        %3936 = vmatprep.subr.bf16.mxu0 0
        %3937 = vmatpush1.bf16.msra.mxu0 0
        %3938 = vmatprep.mubr.bf16.mxu0 0
        %3939 = vmatmul.mubr.bf16.gmra.mrb[0].mxu0 %v3892
        %v3940 = vpop.f32.mrb[0].mxu0
        %v3941 = vadd.f32 0.0, %v3940
        %v3942 = vpop.f32.mrb[0].mxu0
        %v3943 = vadd.f32 0.0, %v3942
        %v3944 = vpop.f32.mrb[0].mxu0
        %v3945 = vadd.f32 0.0, %v3944
        %v3946 = vpop.f32.mrb[0].mxu0
        %v3947 = vadd.f32 0.0, %v3946
        %3948 = vmatprep.mubr.bf16.mxu0 0
        %3949 = vmatmul.mubr.bf16.gmra.mrb[0].mxu0 %v3895
        %v3950 = vpop.f32.mrb[0].mxu0
        %v3951 = vadd.f32 0.0, %v3950
        %v3952 = vpop.f32.mrb[0].mxu0
        %v3953 = vadd.f32 0.0, %v3952
        %v3954 = vpop.f32.mrb[0].mxu0
        %v3955 = vadd.f32 0.0, %v3954
        %v3956 = vpop.f32.mrb[0].mxu0
        %v3957 = vadd.f32 0.0, %v3956
        %3958 = vmatprep.mubr.bf16.mxu0 0
        %3959 = vmatmul.mubr.bf16.gmra.mrb[0].mxu0 %v3898
        %v3960 = vpop.f32.mrb[0].mxu0
        %v3961 = vadd.f32 0.0, %v3960
        %v3962 = vpop.f32.mrb[0].mxu0
        %v3963 = vadd.f32 0.0, %v3962
        %v3964 = vpop.f32.mrb[0].mxu0
        %v3965 = vpop.f32.mrb[0].mxu0
        %3966 = vdwg.mxu0
        %v3967 = vadd.f32 %v3856, %v3941
        %v3968 = vadd.f32 %v3857, %v3943
        %v3969 = vadd.f32 %v3858, %v3945
        %v3970 = vadd.f32 %v3859, %v3947
        %v3971 = vadd.f32 %v3860, %v3951
        %v3972 = vadd.f32 %v3861, %v3953
        %v3973 = vadd.f32 %v3862, %v3955
        %v3974 = vadd.f32 %v3863, %v3957
        %v3975 = vadd.f32 %v3864, %v3961
        %v3976 = vadd.f32 %v3865, %v3963
        %s3977 = scalar_lea.vmem %s1, 680
        %v3978 = vld [vmem:[%s3977] sm:$0xf]
        %v3979 = vld [vmem:[%s3977 + $0x4] sm:$0xf]
        %v3980 = vld [vmem:[%s3977 + $0x8] sm:$0xf]
        %v3981 = vld [vmem:[%s3977 + $0xc] sm:$0xf]
        %v3982 = vld [vmem:[%s3977 + $0x10] sm:$0xf]
        %v3988 = vunpack.c.l.b16 %v3978
        %v3989 = vunpack.c.l.b16 %v3979
        %v3990 = vunpack.c.l.b16 %v3980
        %v3991 = vunpack.c.l.b16 %v3981
        %v3992 = vunpack.c.l.b16 %v3982
        %v3993 = vpack.c.b16 %v3989, %v3988
        %v3994 = vpack.c.b16 %v3991, %v3990
        %v3995 = vpack.c.b16 %v3992, %v3992
        %3996 = vrot.lane.b32.xlu0 %v250, 94
        %v3997 = vpop.permute.xlu0 %3996
        %3998 = vrot.lane.b32.xlu0 %v251, 94
        %v3999 = vpop.permute.xlu0 %3998
        %vm4000 = vcmask 769024
        %v4001 = vsel %vm4000, %v3997, %v3999
        %v4003 = vsel %vm258, %v3993, 0
        %v4006 = vsel %vm258, %v3994, 0
        %v4009 = vsel %vm258, %v3995, 0
        %v4012 = vsel %vm268, %v4001, 0
        %v4015 = vsel %vm268, %v3999, 0
        %4017 = vmatprep.subr.bf16.mxu0 %v4015
        %4018 = vmatpush1.bf16.msra.mxu0 %v4012
        %4019 = vmatprep.subr.bf16.mxu0 0
        %4020 = vmatpush1.bf16.msra.mxu0 0
        %4021 = vmatprep.subr.bf16.mxu0 0
        %4022 = vmatpush1.bf16.msra.mxu0 0
        %4023 = vmatprep.subr.bf16.mxu0 0
        %4024 = vmatpush1.bf16.msra.mxu0 0
        %4025 = vmatprep.subr.bf16.mxu0 0
        %4026 = vmatpush1.bf16.msra.mxu0 0
        %4027 = vmatprep.subr.bf16.mxu0 0
        %4028 = vmatpush1.bf16.msra.mxu0 0
        %4029 = vmatprep.subr.bf16.mxu0 0
        %4030 = vmatpush1.bf16.msra.mxu0 0
        %4031 = vmatprep.subr.bf16.mxu0 0
        %4032 = vmatpush1.bf16.msra.mxu0 0
        %4033 = vmatprep.subr.bf16.mxu0 0
        %4034 = vmatpush1.bf16.msra.mxu0 0
        %4035 = vmatprep.subr.bf16.mxu0 0
        %4036 = vmatpush1.bf16.msra.mxu0 0
        %4037 = vmatprep.subr.bf16.mxu0 0
        %4038 = vmatpush1.bf16.msra.mxu0 0
        %4039 = vmatprep.subr.bf16.mxu0 0
        %4040 = vmatpush1.bf16.msra.mxu0 0
        %4041 = vmatprep.subr.bf16.mxu0 0
        %4042 = vmatpush1.bf16.msra.mxu0 0
        %4043 = vmatprep.subr.bf16.mxu0 0
        %4044 = vmatpush1.bf16.msra.mxu0 0
        %4045 = vmatprep.subr.bf16.mxu0 0
        %4046 = vmatpush1.bf16.msra.mxu0 0
        %4047 = vmatprep.subr.bf16.mxu0 0
        %4048 = vmatpush1.bf16.msra.mxu0 0
        %4049 = vmatprep.mubr.bf16.mxu0 0
        %4050 = vmatmul.mubr.bf16.gmra.mrb[0].mxu0 %v4003
        %v4051 = vpop.f32.mrb[0].mxu0
        %v4052 = vadd.f32 0.0, %v4051
        %v4053 = vpop.f32.mrb[0].mxu0
        %v4054 = vadd.f32 0.0, %v4053
        %v4055 = vpop.f32.mrb[0].mxu0
        %v4056 = vadd.f32 0.0, %v4055
        %v4057 = vpop.f32.mrb[0].mxu0
        %v4058 = vadd.f32 0.0, %v4057
        %4059 = vmatprep.mubr.bf16.mxu0 0
        %4060 = vmatmul.mubr.bf16.gmra.mrb[0].mxu0 %v4006
        %v4061 = vpop.f32.mrb[0].mxu0
        %v4062 = vadd.f32 0.0, %v4061
        %v4063 = vpop.f32.mrb[0].mxu0
        %v4064 = vadd.f32 0.0, %v4063
        %v4065 = vpop.f32.mrb[0].mxu0
        %v4066 = vadd.f32 0.0, %v4065
        %v4067 = vpop.f32.mrb[0].mxu0
        %v4068 = vadd.f32 0.0, %v4067
        %4069 = vmatprep.mubr.bf16.mxu0 0
        %4070 = vmatmul.mubr.bf16.gmra.mrb[0].mxu0 %v4009
        %v4071 = vpop.f32.mrb[0].mxu0
        %v4072 = vadd.f32 0.0, %v4071
        %v4073 = vpop.f32.mrb[0].mxu0
        %v4074 = vadd.f32 0.0, %v4073
        %v4075 = vpop.f32.mrb[0].mxu0
        %v4076 = vpop.f32.mrb[0].mxu0
        %4077 = vdwg.mxu0
        %v4078 = vadd.f32 %v3967, %v4052
        %v4079 = vadd.f32 %v3968, %v4054
        %v4080 = vadd.f32 %v3969, %v4056
        %v4081 = vadd.f32 %v3970, %v4058
        %v4082 = vadd.f32 %v3971, %v4062
        %v4083 = vadd.f32 %v3972, %v4064
        %v4084 = vadd.f32 %v3973, %v4066
        %v4085 = vadd.f32 %v3974, %v4068
        %v4086 = vadd.f32 %v3975, %v4072
        %v4087 = vadd.f32 %v3976, %v4074
        %s4088 = scalar_lea.vmem %s1, 700
        %v4089 = vld [vmem:[%s4088] sm:$0xf]
        %v4090 = vld [vmem:[%s4088 + $0x4] sm:$0xf]
        %v4091 = vld [vmem:[%s4088 + $0x8] sm:$0xf]
        %v4092 = vld [vmem:[%s4088 + $0xc] sm:$0xf]
        %v4093 = vld [vmem:[%s4088 + $0x10] sm:$0xf]
        %v4099 = vunpack.c.l.b16 %v4089
        %v4100 = vunpack.c.l.b16 %v4090
        %v4101 = vunpack.c.l.b16 %v4091
        %v4102 = vunpack.c.l.b16 %v4092
        %v4103 = vunpack.c.l.b16 %v4093
        %v4104 = vpack.c.b16 %v4100, %v4099
        %v4105 = vpack.c.b16 %v4102, %v4101
        %v4106 = vpack.c.b16 %v4103, %v4103
        %4107 = vrot.lane.b32.xlu0 %v250, 93
        %v4108 = vpop.permute.xlu0 %4107
        %4109 = vrot.lane.b32.xlu0 %v251, 93
        %v4110 = vpop.permute.xlu0 %4109
        %vm4111 = vcmask 760832
        %v4112 = vsel %vm4111, %v4108, %v4110
        %v4114 = vsel %vm258, %v4104, 0
        %v4117 = vsel %vm258, %v4105, 0
        %v4120 = vsel %vm258, %v4106, 0
        %v4123 = vsel %vm268, %v4112, 0
        %v4126 = vsel %vm268, %v4110, 0
        %4128 = vmatprep.subr.bf16.mxu0 %v4126
        %4129 = vmatpush1.bf16.msra.mxu0 %v4123
        %4130 = vmatprep.subr.bf16.mxu0 0
        %4131 = vmatpush1.bf16.msra.mxu0 0
        %4132 = vmatprep.subr.bf16.mxu0 0
        %4133 = vmatpush1.bf16.msra.mxu0 0
        %4134 = vmatprep.subr.bf16.mxu0 0
        %4135 = vmatpush1.bf16.msra.mxu0 0
        %4136 = vmatprep.subr.bf16.mxu0 0
        %4137 = vmatpush1.bf16.msra.mxu0 0
        %4138 = vmatprep.subr.bf16.mxu0 0
        %4139 = vmatpush1.bf16.msra.mxu0 0
        %4140 = vmatprep.subr.bf16.mxu0 0
        %4141 = vmatpush1.bf16.msra.mxu0 0
        %4142 = vmatprep.subr.bf16.mxu0 0
        %4143 = vmatpush1.bf16.msra.mxu0 0
        %4144 = vmatprep.subr.bf16.mxu0 0
        %4145 = vmatpush1.bf16.msra.mxu0 0
        %4146 = vmatprep.subr.bf16.mxu0 0
        %4147 = vmatpush1.bf16.msra.mxu0 0
        %4148 = vmatprep.subr.bf16.mxu0 0
        %4149 = vmatpush1.bf16.msra.mxu0 0
        %4150 = vmatprep.subr.bf16.mxu0 0
        %4151 = vmatpush1.bf16.msra.mxu0 0
        %4152 = vmatprep.subr.bf16.mxu0 0
        %4153 = vmatpush1.bf16.msra.mxu0 0
        %4154 = vmatprep.subr.bf16.mxu0 0
        %4155 = vmatpush1.bf16.msra.mxu0 0
        %4156 = vmatprep.subr.bf16.mxu0 0
        %4157 = vmatpush1.bf16.msra.mxu0 0
        %4158 = vmatprep.subr.bf16.mxu0 0
        %4159 = vmatpush1.bf16.msra.mxu0 0
        %4160 = vmatprep.mubr.bf16.mxu0 0
        %4161 = vmatmul.mubr.bf16.gmra.mrb[0].mxu0 %v4114
        %v4162 = vpop.f32.mrb[0].mxu0
        %v4163 = vadd.f32 0.0, %v4162
        %v4164 = vpop.f32.mrb[0].mxu0
        %v4165 = vadd.f32 0.0, %v4164
        %v4166 = vpop.f32.mrb[0].mxu0
        %v4167 = vadd.f32 0.0, %v4166
        %v4168 = vpop.f32.mrb[0].mxu0
        %v4169 = vadd.f32 0.0, %v4168
        %4170 = vmatprep.mubr.bf16.mxu0 0
        %4171 = vmatmul.mubr.bf16.gmra.mrb[0].mxu0 %v4117
        %v4172 = vpop.f32.mrb[0].mxu0
        %v4173 = vadd.f32 0.0, %v4172
        %v4174 = vpop.f32.mrb[0].mxu0
        %v4175 = vadd.f32 0.0, %v4174
        %v4176 = vpop.f32.mrb[0].mxu0
        %v4177 = vadd.f32 0.0, %v4176
        %v4178 = vpop.f32.mrb[0].mxu0
        %v4179 = vadd.f32 0.0, %v4178
        %4180 = vmatprep.mubr.bf16.mxu0 0
        %4181 = vmatmul.mubr.bf16.gmra.mrb[0].mxu0 %v4120
        %v4182 = vpop.f32.mrb[0].mxu0
        %v4183 = vadd.f32 0.0, %v4182
        %v4184 = vpop.f32.mrb[0].mxu0
        %v4185 = vadd.f32 0.0, %v4184
        %v4186 = vpop.f32.mrb[0].mxu0
        %v4187 = vpop.f32.mrb[0].mxu0
        %4188 = vdwg.mxu0
        %v4189 = vadd.f32 %v4078, %v4163
        %v4190 = vadd.f32 %v4079, %v4165
        %v4191 = vadd.f32 %v4080, %v4167
        %v4192 = vadd.f32 %v4081, %v4169
        %v4193 = vadd.f32 %v4082, %v4173
        %v4194 = vadd.f32 %v4083, %v4175
        %v4195 = vadd.f32 %v4084, %v4177
        %v4196 = vadd.f32 %v4085, %v4179
        %v4197 = vadd.f32 %v4086, %v4183
        %v4198 = vadd.f32 %v4087, %v4185
        %s4199 = scalar_lea.vmem %s1, 720
        %v4200 = vld [vmem:[%s4199] sm:$0xf]
        %v4201 = vld [vmem:[%s4199 + $0x4] sm:$0xf]
        %v4202 = vld [vmem:[%s4199 + $0x8] sm:$0xf]
        %v4203 = vld [vmem:[%s4199 + $0xc] sm:$0xf]
        %v4204 = vld [vmem:[%s4199 + $0x10] sm:$0xf]
        %v4210 = vunpack.c.l.b16 %v4200
        %v4211 = vunpack.c.l.b16 %v4201
        %v4212 = vunpack.c.l.b16 %v4202
        %v4213 = vunpack.c.l.b16 %v4203
        %v4214 = vunpack.c.l.b16 %v4204
        %v4215 = vpack.c.b16 %v4211, %v4210
        %v4216 = vpack.c.b16 %v4213, %v4212
        %v4217 = vpack.c.b16 %v4214, %v4214
        %4218 = vrot.lane.b32.xlu0 %v250, 92
        %v4219 = vpop.permute.xlu0 %4218
        %4220 = vrot.lane.b32.xlu0 %v251, 92
        %v4221 = vpop.permute.xlu0 %4220
        %vm4222 = vcmask 752640
        %v4223 = vsel %vm4222, %v4219, %v4221
        %v4225 = vsel %vm258, %v4215, 0
        %v4228 = vsel %vm258, %v4216, 0
        %v4231 = vsel %vm258, %v4217, 0
        %v4234 = vsel %vm268, %v4223, 0
        %v4237 = vsel %vm268, %v4221, 0
        %4239 = vmatprep.subr.bf16.mxu0 %v4237
        %4240 = vmatpush1.bf16.msra.mxu0 %v4234
        %4241 = vmatprep.subr.bf16.mxu0 0
        %4242 = vmatpush1.bf16.msra.mxu0 0
        %4243 = vmatprep.subr.bf16.mxu0 0
        %4244 = vmatpush1.bf16.msra.mxu0 0
        %4245 = vmatprep.subr.bf16.mxu0 0
        %4246 = vmatpush1.bf16.msra.mxu0 0
        %4247 = vmatprep.subr.bf16.mxu0 0
        %4248 = vmatpush1.bf16.msra.mxu0 0
        %4249 = vmatprep.subr.bf16.mxu0 0
        %4250 = vmatpush1.bf16.msra.mxu0 0
        %4251 = vmatprep.subr.bf16.mxu0 0
        %4252 = vmatpush1.bf16.msra.mxu0 0
        %4253 = vmatprep.subr.bf16.mxu0 0
        %4254 = vmatpush1.bf16.msra.mxu0 0
        %4255 = vmatprep.subr.bf16.mxu0 0
        %4256 = vmatpush1.bf16.msra.mxu0 0
        %4257 = vmatprep.subr.bf16.mxu0 0
        %4258 = vmatpush1.bf16.msra.mxu0 0
        %4259 = vmatprep.subr.bf16.mxu0 0
        %4260 = vmatpush1.bf16.msra.mxu0 0
        %4261 = vmatprep.subr.bf16.mxu0 0
        %4262 = vmatpush1.bf16.msra.mxu0 0
        %4263 = vmatprep.subr.bf16.mxu0 0
        %4264 = vmatpush1.bf16.msra.mxu0 0
        %4265 = vmatprep.subr.bf16.mxu0 0
        %4266 = vmatpush1.bf16.msra.mxu0 0
        %4267 = vmatprep.subr.bf16.mxu0 0
        %4268 = vmatpush1.bf16.msra.mxu0 0
        %4269 = vmatprep.subr.bf16.mxu0 0
        %4270 = vmatpush1.bf16.msra.mxu0 0
        %4271 = vmatprep.mubr.bf16.mxu0 0
        %4272 = vmatmul.mubr.bf16.gmra.mrb[0].mxu0 %v4225
        %v4273 = vpop.f32.mrb[0].mxu0
        %v4274 = vadd.f32 0.0, %v4273
        %v4275 = vpop.f32.mrb[0].mxu0
        %v4276 = vadd.f32 0.0, %v4275
        %v4277 = vpop.f32.mrb[0].mxu0
        %v4278 = vadd.f32 0.0, %v4277
        %v4279 = vpop.f32.mrb[0].mxu0
        %v4280 = vadd.f32 0.0, %v4279
        %4281 = vmatprep.mubr.bf16.mxu0 0
        %4282 = vmatmul.mubr.bf16.gmra.mrb[0].mxu0 %v4228
        %v4283 = vpop.f32.mrb[0].mxu0
        %v4284 = vadd.f32 0.0, %v4283
        %v4285 = vpop.f32.mrb[0].mxu0
        %v4286 = vadd.f32 0.0, %v4285
        %v4287 = vpop.f32.mrb[0].mxu0
        %v4288 = vadd.f32 0.0, %v4287
        %v4289 = vpop.f32.mrb[0].mxu0
        %v4290 = vadd.f32 0.0, %v4289
        %4291 = vmatprep.mubr.bf16.mxu0 0
        %4292 = vmatmul.mubr.bf16.gmra.mrb[0].mxu0 %v4231
        %v4293 = vpop.f32.mrb[0].mxu0
        %v4294 = vadd.f32 0.0, %v4293
        %v4295 = vpop.f32.mrb[0].mxu0
        %v4296 = vadd.f32 0.0, %v4295
        %v4297 = vpop.f32.mrb[0].mxu0
        %v4298 = vpop.f32.mrb[0].mxu0
        %4299 = vdwg.mxu0
        %v4300 = vadd.f32 %v4189, %v4274
        %v4301 = vadd.f32 %v4190, %v4276
        %v4302 = vadd.f32 %v4191, %v4278
        %v4303 = vadd.f32 %v4192, %v4280
        %v4304 = vadd.f32 %v4193, %v4284
        %v4305 = vadd.f32 %v4194, %v4286
        %v4306 = vadd.f32 %v4195, %v4288
        %v4307 = vadd.f32 %v4196, %v4290
        %v4308 = vadd.f32 %v4197, %v4294
        %v4309 = vadd.f32 %v4198, %v4296
        %s4310 = scalar_lea.vmem %s1, 740
        %v4311 = vld [vmem:[%s4310] sm:$0xf]
        %v4312 = vld [vmem:[%s4310 + $0x4] sm:$0xf]
        %v4313 = vld [vmem:[%s4310 + $0x8] sm:$0xf]
        %v4314 = vld [vmem:[%s4310 + $0xc] sm:$0xf]
        %v4315 = vld [vmem:[%s4310 + $0x10] sm:$0xf]
        %v4321 = vunpack.c.l.b16 %v4311
        %v4322 = vunpack.c.l.b16 %v4312
        %v4323 = vunpack.c.l.b16 %v4313
        %v4324 = vunpack.c.l.b16 %v4314
        %v4325 = vunpack.c.l.b16 %v4315
        %v4326 = vpack.c.b16 %v4322, %v4321
        %v4327 = vpack.c.b16 %v4324, %v4323
        %v4328 = vpack.c.b16 %v4325, %v4325
        %4329 = vrot.lane.b32.xlu0 %v250, 91
        %v4330 = vpop.permute.xlu0 %4329
        %4331 = vrot.lane.b32.xlu0 %v251, 91
        %v4332 = vpop.permute.xlu0 %4331
        %vm4333 = vcmask 744448
        %v4334 = vsel %vm4333, %v4330, %v4332
        %v4336 = vsel %vm258, %v4326, 0
        %v4339 = vsel %vm258, %v4327, 0
        %v4342 = vsel %vm258, %v4328, 0
        %v4345 = vsel %vm268, %v4334, 0
        %v4348 = vsel %vm268, %v4332, 0
        %4350 = vmatprep.subr.bf16.mxu0 %v4348
        %4351 = vmatpush1.bf16.msra.mxu0 %v4345
        %4352 = vmatprep.subr.bf16.mxu0 0
        %4353 = vmatpush1.bf16.msra.mxu0 0
        %4354 = vmatprep.subr.bf16.mxu0 0
        %4355 = vmatpush1.bf16.msra.mxu0 0
        %4356 = vmatprep.subr.bf16.mxu0 0
        %4357 = vmatpush1.bf16.msra.mxu0 0
        %4358 = vmatprep.subr.bf16.mxu0 0
        %4359 = vmatpush1.bf16.msra.mxu0 0
        %4360 = vmatprep.subr.bf16.mxu0 0
        %4361 = vmatpush1.bf16.msra.mxu0 0
        %4362 = vmatprep.subr.bf16.mxu0 0
        %4363 = vmatpush1.bf16.msra.mxu0 0
        %4364 = vmatprep.subr.bf16.mxu0 0
        %4365 = vmatpush1.bf16.msra.mxu0 0
        %4366 = vmatprep.subr.bf16.mxu0 0
        %4367 = vmatpush1.bf16.msra.mxu0 0
        %4368 = vmatprep.subr.bf16.mxu0 0
        %4369 = vmatpush1.bf16.msra.mxu0 0
        %4370 = vmatprep.subr.bf16.mxu0 0
        %4371 = vmatpush1.bf16.msra.mxu0 0
        %4372 = vmatprep.subr.bf16.mxu0 0
        %4373 = vmatpush1.bf16.msra.mxu0 0
        %4374 = vmatprep.subr.bf16.mxu0 0
        %4375 = vmatpush1.bf16.msra.mxu0 0
        %4376 = vmatprep.subr.bf16.mxu0 0
        %4377 = vmatpush1.bf16.msra.mxu0 0
        %4378 = vmatprep.subr.bf16.mxu0 0
        %4379 = vmatpush1.bf16.msra.mxu0 0
        %4380 = vmatprep.subr.bf16.mxu0 0
        %4381 = vmatpush1.bf16.msra.mxu0 0
        %4382 = vmatprep.mubr.bf16.mxu0 0
        %4383 = vmatmul.mubr.bf16.gmra.mrb[0].mxu0 %v4336
        %v4384 = vpop.f32.mrb[0].mxu0
        %v4385 = vadd.f32 0.0, %v4384
        %v4386 = vpop.f32.mrb[0].mxu0
        %v4387 = vadd.f32 0.0, %v4386
        %v4388 = vpop.f32.mrb[0].mxu0
        %v4389 = vadd.f32 0.0, %v4388
        %v4390 = vpop.f32.mrb[0].mxu0
        %v4391 = vadd.f32 0.0, %v4390
        %4392 = vmatprep.mubr.bf16.mxu0 0
        %4393 = vmatmul.mubr.bf16.gmra.mrb[0].mxu0 %v4339
        %v4394 = vpop.f32.mrb[0].mxu0
        %v4395 = vadd.f32 0.0, %v4394
        %v4396 = vpop.f32.mrb[0].mxu0
        %v4397 = vadd.f32 0.0, %v4396
        %v4398 = vpop.f32.mrb[0].mxu0
        %v4399 = vadd.f32 0.0, %v4398
        %v4400 = vpop.f32.mrb[0].mxu0
        %v4401 = vadd.f32 0.0, %v4400
        %4402 = vmatprep.mubr.bf16.mxu0 0
        %4403 = vmatmul.mubr.bf16.gmra.mrb[0].mxu0 %v4342
        %v4404 = vpop.f32.mrb[0].mxu0
        %v4405 = vadd.f32 0.0, %v4404
        %v4406 = vpop.f32.mrb[0].mxu0
        %v4407 = vadd.f32 0.0, %v4406
        %v4408 = vpop.f32.mrb[0].mxu0
        %v4409 = vpop.f32.mrb[0].mxu0
        %4410 = vdwg.mxu0
        %v4411 = vadd.f32 %v4300, %v4385
        %v4412 = vadd.f32 %v4301, %v4387
        %v4413 = vadd.f32 %v4302, %v4389
        %v4414 = vadd.f32 %v4303, %v4391
        %v4415 = vadd.f32 %v4304, %v4395
        %v4416 = vadd.f32 %v4305, %v4397
        %v4417 = vadd.f32 %v4306, %v4399
        %v4418 = vadd.f32 %v4307, %v4401
        %v4419 = vadd.f32 %v4308, %v4405
        %v4420 = vadd.f32 %v4309, %v4407
        %s4421 = scalar_lea.vmem %s1, 760
        %v4422 = vld [vmem:[%s4421] sm:$0xf]
        %v4423 = vld [vmem:[%s4421 + $0x4] sm:$0xf]
        %v4424 = vld [vmem:[%s4421 + $0x8] sm:$0xf]
        %v4425 = vld [vmem:[%s4421 + $0xc] sm:$0xf]
        %v4426 = vld [vmem:[%s4421 + $0x10] sm:$0xf]
        %v4432 = vunpack.c.l.b16 %v4422
        %v4433 = vunpack.c.l.b16 %v4423
        %v4434 = vunpack.c.l.b16 %v4424
        %v4435 = vunpack.c.l.b16 %v4425
        %v4436 = vunpack.c.l.b16 %v4426
        %v4437 = vpack.c.b16 %v4433, %v4432
        %v4438 = vpack.c.b16 %v4435, %v4434
        %v4439 = vpack.c.b16 %v4436, %v4436
        %4440 = vrot.lane.b32.xlu0 %v250, 90
        %v4441 = vpop.permute.xlu0 %4440
        %4442 = vrot.lane.b32.xlu0 %v251, 90
        %v4443 = vpop.permute.xlu0 %4442
        %vm4444 = vcmask 736256
        %v4445 = vsel %vm4444, %v4441, %v4443
        %v4447 = vsel %vm258, %v4437, 0
        %v4450 = vsel %vm258, %v4438, 0
        %v4453 = vsel %vm258, %v4439, 0
        %v4456 = vsel %vm268, %v4445, 0
        %v4459 = vsel %vm268, %v4443, 0
        %4461 = vmatprep.subr.bf16.mxu0 %v4459
        %4462 = vmatpush1.bf16.msra.mxu0 %v4456
        %4463 = vmatprep.subr.bf16.mxu0 0
        %4464 = vmatpush1.bf16.msra.mxu0 0
        %4465 = vmatprep.subr.bf16.mxu0 0
        %4466 = vmatpush1.bf16.msra.mxu0 0
        %4467 = vmatprep.subr.bf16.mxu0 0
        %4468 = vmatpush1.bf16.msra.mxu0 0
        %4469 = vmatprep.subr.bf16.mxu0 0
        %4470 = vmatpush1.bf16.msra.mxu0 0
        %4471 = vmatprep.subr.bf16.mxu0 0
        %4472 = vmatpush1.bf16.msra.mxu0 0
        %4473 = vmatprep.subr.bf16.mxu0 0
        %4474 = vmatpush1.bf16.msra.mxu0 0
        %4475 = vmatprep.subr.bf16.mxu0 0
        %4476 = vmatpush1.bf16.msra.mxu0 0
        %4477 = vmatprep.subr.bf16.mxu0 0
        %4478 = vmatpush1.bf16.msra.mxu0 0
        %4479 = vmatprep.subr.bf16.mxu0 0
        %4480 = vmatpush1.bf16.msra.mxu0 0
        %4481 = vmatprep.subr.bf16.mxu0 0
        %4482 = vmatpush1.bf16.msra.mxu0 0
        %4483 = vmatprep.subr.bf16.mxu0 0
        %4484 = vmatpush1.bf16.msra.mxu0 0
        %4485 = vmatprep.subr.bf16.mxu0 0
        %4486 = vmatpush1.bf16.msra.mxu0 0
        %4487 = vmatprep.subr.bf16.mxu0 0
        %4488 = vmatpush1.bf16.msra.mxu0 0
        %4489 = vmatprep.subr.bf16.mxu0 0
        %4490 = vmatpush1.bf16.msra.mxu0 0
        %4491 = vmatprep.subr.bf16.mxu0 0
        %4492 = vmatpush1.bf16.msra.mxu0 0
        %4493 = vmatprep.mubr.bf16.mxu0 0
        %4494 = vmatmul.mubr.bf16.gmra.mrb[0].mxu0 %v4447
        %v4495 = vpop.f32.mrb[0].mxu0
        %v4496 = vadd.f32 0.0, %v4495
        %v4497 = vpop.f32.mrb[0].mxu0
        %v4498 = vadd.f32 0.0, %v4497
        %v4499 = vpop.f32.mrb[0].mxu0
        %v4500 = vadd.f32 0.0, %v4499
        %v4501 = vpop.f32.mrb[0].mxu0
        %v4502 = vadd.f32 0.0, %v4501
        %4503 = vmatprep.mubr.bf16.mxu0 0
        %4504 = vmatmul.mubr.bf16.gmra.mrb[0].mxu0 %v4450
        %v4505 = vpop.f32.mrb[0].mxu0
        %v4506 = vadd.f32 0.0, %v4505
        %v4507 = vpop.f32.mrb[0].mxu0
        %v4508 = vadd.f32 0.0, %v4507
        %v4509 = vpop.f32.mrb[0].mxu0
        %v4510 = vadd.f32 0.0, %v4509
        %v4511 = vpop.f32.mrb[0].mxu0
        %v4512 = vadd.f32 0.0, %v4511
        %4513 = vmatprep.mubr.bf16.mxu0 0
        %4514 = vmatmul.mubr.bf16.gmra.mrb[0].mxu0 %v4453
        %v4515 = vpop.f32.mrb[0].mxu0
        %v4516 = vadd.f32 0.0, %v4515
        %v4517 = vpop.f32.mrb[0].mxu0
        %v4518 = vadd.f32 0.0, %v4517
        %v4519 = vpop.f32.mrb[0].mxu0
        %v4520 = vpop.f32.mrb[0].mxu0
        %4521 = vdwg.mxu0
        %v4522 = vadd.f32 %v4411, %v4496
        %v4523 = vadd.f32 %v4412, %v4498
        %v4524 = vadd.f32 %v4413, %v4500
        %v4525 = vadd.f32 %v4414, %v4502
        %v4526 = vadd.f32 %v4415, %v4506
        %v4527 = vadd.f32 %v4416, %v4508
        %v4528 = vadd.f32 %v4417, %v4510
        %v4529 = vadd.f32 %v4418, %v4512
        %v4530 = vadd.f32 %v4419, %v4516
        %v4531 = vadd.f32 %v4420, %v4518
        %s4532 = scalar_lea.vmem %s1, 780
        %v4533 = vld [vmem:[%s4532] sm:$0xf]
        %v4534 = vld [vmem:[%s4532 + $0x4] sm:$0xf]
        %v4535 = vld [vmem:[%s4532 + $0x8] sm:$0xf]
        %v4536 = vld [vmem:[%s4532 + $0xc] sm:$0xf]
        %v4537 = vld [vmem:[%s4532 + $0x10] sm:$0xf]
        %v4543 = vunpack.c.l.b16 %v4533
        %v4544 = vunpack.c.l.b16 %v4534
        %v4545 = vunpack.c.l.b16 %v4535
        %v4546 = vunpack.c.l.b16 %v4536
        %v4547 = vunpack.c.l.b16 %v4537
        %v4548 = vpack.c.b16 %v4544, %v4543
        %v4549 = vpack.c.b16 %v4546, %v4545
        %v4550 = vpack.c.b16 %v4547, %v4547
        %4551 = vrot.lane.b32.xlu0 %v250, 89
        %v4552 = vpop.permute.xlu0 %4551
        %4553 = vrot.lane.b32.xlu0 %v251, 89
        %v4554 = vpop.permute.xlu0 %4553
        %vm4555 = vcmask 728064
        %v4556 = vsel %vm4555, %v4552, %v4554
        %v4558 = vsel %vm258, %v4548, 0
        %v4561 = vsel %vm258, %v4549, 0
        %v4564 = vsel %vm258, %v4550, 0
        %v4567 = vsel %vm268, %v4556, 0
        %v4570 = vsel %vm268, %v4554, 0
        %4572 = vmatprep.subr.bf16.mxu0 %v4570
        %4573 = vmatpush1.bf16.msra.mxu0 %v4567
        %4574 = vmatprep.subr.bf16.mxu0 0
        %4575 = vmatpush1.bf16.msra.mxu0 0
        %4576 = vmatprep.subr.bf16.mxu0 0
        %4577 = vmatpush1.bf16.msra.mxu0 0
        %4578 = vmatprep.subr.bf16.mxu0 0
        %4579 = vmatpush1.bf16.msra.mxu0 0
        %4580 = vmatprep.subr.bf16.mxu0 0
        %4581 = vmatpush1.bf16.msra.mxu0 0
        %4582 = vmatprep.subr.bf16.mxu0 0
        %4583 = vmatpush1.bf16.msra.mxu0 0
        %4584 = vmatprep.subr.bf16.mxu0 0
        %4585 = vmatpush1.bf16.msra.mxu0 0
        %4586 = vmatprep.subr.bf16.mxu0 0
        %4587 = vmatpush1.bf16.msra.mxu0 0
        %4588 = vmatprep.subr.bf16.mxu0 0
        %4589 = vmatpush1.bf16.msra.mxu0 0
        %4590 = vmatprep.subr.bf16.mxu0 0
        %4591 = vmatpush1.bf16.msra.mxu0 0
        %4592 = vmatprep.subr.bf16.mxu0 0
        %4593 = vmatpush1.bf16.msra.mxu0 0
        %4594 = vmatprep.subr.bf16.mxu0 0
        %4595 = vmatpush1.bf16.msra.mxu0 0
        %4596 = vmatprep.subr.bf16.mxu0 0
        %4597 = vmatpush1.bf16.msra.mxu0 0
        %4598 = vmatprep.subr.bf16.mxu0 0
        %4599 = vmatpush1.bf16.msra.mxu0 0
        %4600 = vmatprep.subr.bf16.mxu0 0
        %4601 = vmatpush1.bf16.msra.mxu0 0
        %4602 = vmatprep.subr.bf16.mxu0 0
        %4603 = vmatpush1.bf16.msra.mxu0 0
        %4604 = vmatprep.mubr.bf16.mxu0 0
        %4605 = vmatmul.mubr.bf16.gmra.mrb[0].mxu0 %v4558
        %v4606 = vpop.f32.mrb[0].mxu0
        %v4607 = vadd.f32 0.0, %v4606
        %v4608 = vpop.f32.mrb[0].mxu0
        %v4609 = vadd.f32 0.0, %v4608
        %v4610 = vpop.f32.mrb[0].mxu0
        %v4611 = vadd.f32 0.0, %v4610
        %v4612 = vpop.f32.mrb[0].mxu0
        %v4613 = vadd.f32 0.0, %v4612
        %4614 = vmatprep.mubr.bf16.mxu0 0
        %4615 = vmatmul.mubr.bf16.gmra.mrb[0].mxu0 %v4561
        %v4616 = vpop.f32.mrb[0].mxu0
        %v4617 = vadd.f32 0.0, %v4616
        %v4618 = vpop.f32.mrb[0].mxu0
        %v4619 = vadd.f32 0.0, %v4618
        %v4620 = vpop.f32.mrb[0].mxu0
        %v4621 = vadd.f32 0.0, %v4620
        %v4622 = vpop.f32.mrb[0].mxu0
        %v4623 = vadd.f32 0.0, %v4622
        %4624 = vmatprep.mubr.bf16.mxu0 0
        %4625 = vmatmul.mubr.bf16.gmra.mrb[0].mxu0 %v4564
        %v4626 = vpop.f32.mrb[0].mxu0
        %v4627 = vadd.f32 0.0, %v4626
        %v4628 = vpop.f32.mrb[0].mxu0
        %v4629 = vadd.f32 0.0, %v4628
        %v4630 = vpop.f32.mrb[0].mxu0
        %v4631 = vpop.f32.mrb[0].mxu0
        %4632 = vdwg.mxu0
        %v4633 = vadd.f32 %v4522, %v4607
        %v4634 = vadd.f32 %v4523, %v4609
        %v4635 = vadd.f32 %v4524, %v4611
        %v4636 = vadd.f32 %v4525, %v4613
        %v4637 = vadd.f32 %v4526, %v4617
        %v4638 = vadd.f32 %v4527, %v4619
        %v4639 = vadd.f32 %v4528, %v4621
        %v4640 = vadd.f32 %v4529, %v4623
        %v4641 = vadd.f32 %v4530, %v4627
        %v4642 = vadd.f32 %v4531, %v4629
        %s4643 = scalar_lea.vmem %s1, 800
        %v4644 = vld [vmem:[%s4643] sm:$0xf]
        %v4645 = vld [vmem:[%s4643 + $0x4] sm:$0xf]
        %v4646 = vld [vmem:[%s4643 + $0x8] sm:$0xf]
        %v4647 = vld [vmem:[%s4643 + $0xc] sm:$0xf]
        %v4648 = vld [vmem:[%s4643 + $0x10] sm:$0xf]
        %v4654 = vunpack.c.l.b16 %v4644
        %v4655 = vunpack.c.l.b16 %v4645
        %v4656 = vunpack.c.l.b16 %v4646
        %v4657 = vunpack.c.l.b16 %v4647
        %v4658 = vunpack.c.l.b16 %v4648
        %v4659 = vpack.c.b16 %v4655, %v4654
        %v4660 = vpack.c.b16 %v4657, %v4656
        %v4661 = vpack.c.b16 %v4658, %v4658
        %4662 = vrot.lane.b32.xlu0 %v250, 88
        %v4663 = vpop.permute.xlu0 %4662
        %4664 = vrot.lane.b32.xlu0 %v251, 88
        %v4665 = vpop.permute.xlu0 %4664
        %vm4666 = vcmask 719872
        %v4667 = vsel %vm4666, %v4663, %v4665
        %v4669 = vsel %vm258, %v4659, 0
        %v4672 = vsel %vm258, %v4660, 0
        %v4675 = vsel %vm258, %v4661, 0
        %v4678 = vsel %vm268, %v4667, 0
        %v4681 = vsel %vm268, %v4665, 0
        %4683 = vmatprep.subr.bf16.mxu0 %v4681
        %4684 = vmatpush1.bf16.msra.mxu0 %v4678
        %4685 = vmatprep.subr.bf16.mxu0 0
        %4686 = vmatpush1.bf16.msra.mxu0 0
        %4687 = vmatprep.subr.bf16.mxu0 0
        %4688 = vmatpush1.bf16.msra.mxu0 0
        %4689 = vmatprep.subr.bf16.mxu0 0
        %4690 = vmatpush1.bf16.msra.mxu0 0
        %4691 = vmatprep.subr.bf16.mxu0 0
        %4692 = vmatpush1.bf16.msra.mxu0 0
        %4693 = vmatprep.subr.bf16.mxu0 0
        %4694 = vmatpush1.bf16.msra.mxu0 0
        %4695 = vmatprep.subr.bf16.mxu0 0
        %4696 = vmatpush1.bf16.msra.mxu0 0
        %4697 = vmatprep.subr.bf16.mxu0 0
        %4698 = vmatpush1.bf16.msra.mxu0 0
        %4699 = vmatprep.subr.bf16.mxu0 0
        %4700 = vmatpush1.bf16.msra.mxu0 0
        %4701 = vmatprep.subr.bf16.mxu0 0
        %4702 = vmatpush1.bf16.msra.mxu0 0
        %4703 = vmatprep.subr.bf16.mxu0 0
        %4704 = vmatpush1.bf16.msra.mxu0 0
        %4705 = vmatprep.subr.bf16.mxu0 0
        %4706 = vmatpush1.bf16.msra.mxu0 0
        %4707 = vmatprep.subr.bf16.mxu0 0
        %4708 = vmatpush1.bf16.msra.mxu0 0
        %4709 = vmatprep.subr.bf16.mxu0 0
        %4710 = vmatpush1.bf16.msra.mxu0 0
        %4711 = vmatprep.subr.bf16.mxu0 0
        %4712 = vmatpush1.bf16.msra.mxu0 0
        %4713 = vmatprep.subr.bf16.mxu0 0
        %4714 = vmatpush1.bf16.msra.mxu0 0
        %4715 = vmatprep.mubr.bf16.mxu0 0
        %4716 = vmatmul.mubr.bf16.gmra.mrb[0].mxu0 %v4669
        %v4717 = vpop.f32.mrb[0].mxu0
        %v4718 = vadd.f32 0.0, %v4717
        %v4719 = vpop.f32.mrb[0].mxu0
        %v4720 = vadd.f32 0.0, %v4719
        %v4721 = vpop.f32.mrb[0].mxu0
        %v4722 = vadd.f32 0.0, %v4721
        %v4723 = vpop.f32.mrb[0].mxu0
        %v4724 = vadd.f32 0.0, %v4723
        %4725 = vmatprep.mubr.bf16.mxu0 0
        %4726 = vmatmul.mubr.bf16.gmra.mrb[0].mxu0 %v4672
        %v4727 = vpop.f32.mrb[0].mxu0
        %v4728 = vadd.f32 0.0, %v4727
        %v4729 = vpop.f32.mrb[0].mxu0
        %v4730 = vadd.f32 0.0, %v4729
        %v4731 = vpop.f32.mrb[0].mxu0
        %v4732 = vadd.f32 0.0, %v4731
        %v4733 = vpop.f32.mrb[0].mxu0
        %v4734 = vadd.f32 0.0, %v4733
        %4735 = vmatprep.mubr.bf16.mxu0 0
        %4736 = vmatmul.mubr.bf16.gmra.mrb[0].mxu0 %v4675
        %v4737 = vpop.f32.mrb[0].mxu0
        %v4738 = vadd.f32 0.0, %v4737
        %v4739 = vpop.f32.mrb[0].mxu0
        %v4740 = vadd.f32 0.0, %v4739
        %v4741 = vpop.f32.mrb[0].mxu0
        %v4742 = vpop.f32.mrb[0].mxu0
        %4743 = vdwg.mxu0
        %v4744 = vadd.f32 %v4633, %v4718
        %v4745 = vadd.f32 %v4634, %v4720
        %v4746 = vadd.f32 %v4635, %v4722
        %v4747 = vadd.f32 %v4636, %v4724
        %v4748 = vadd.f32 %v4637, %v4728
        %v4749 = vadd.f32 %v4638, %v4730
        %v4750 = vadd.f32 %v4639, %v4732
        %v4751 = vadd.f32 %v4640, %v4734
        %v4752 = vadd.f32 %v4641, %v4738
        %v4753 = vadd.f32 %v4642, %v4740
        %s4754 = scalar_lea.vmem %s1, 820
        %v4755 = vld [vmem:[%s4754] sm:$0xf]
        %v4756 = vld [vmem:[%s4754 + $0x4] sm:$0xf]
        %v4757 = vld [vmem:[%s4754 + $0x8] sm:$0xf]
        %v4758 = vld [vmem:[%s4754 + $0xc] sm:$0xf]
        %v4759 = vld [vmem:[%s4754 + $0x10] sm:$0xf]
        %v4765 = vunpack.c.l.b16 %v4755
        %v4766 = vunpack.c.l.b16 %v4756
        %v4767 = vunpack.c.l.b16 %v4757
        %v4768 = vunpack.c.l.b16 %v4758
        %v4769 = vunpack.c.l.b16 %v4759
        %v4770 = vpack.c.b16 %v4766, %v4765
        %v4771 = vpack.c.b16 %v4768, %v4767
        %v4772 = vpack.c.b16 %v4769, %v4769
        %4773 = vrot.lane.b32.xlu0 %v250, 87
        %v4774 = vpop.permute.xlu0 %4773
        %4775 = vrot.lane.b32.xlu0 %v251, 87
        %v4776 = vpop.permute.xlu0 %4775
        %vm4777 = vcmask 711680
        %v4778 = vsel %vm4777, %v4774, %v4776
        %v4780 = vsel %vm258, %v4770, 0
        %v4783 = vsel %vm258, %v4771, 0
        %v4786 = vsel %vm258, %v4772, 0
        %v4789 = vsel %vm268, %v4778, 0
        %v4792 = vsel %vm268, %v4776, 0
        %4794 = vmatprep.subr.bf16.mxu0 %v4792
        %4795 = vmatpush1.bf16.msra.mxu0 %v4789
        %4796 = vmatprep.subr.bf16.mxu0 0
        %4797 = vmatpush1.bf16.msra.mxu0 0
        %4798 = vmatprep.subr.bf16.mxu0 0
        %4799 = vmatpush1.bf16.msra.mxu0 0
        %4800 = vmatprep.subr.bf16.mxu0 0
        %4801 = vmatpush1.bf16.msra.mxu0 0
        %4802 = vmatprep.subr.bf16.mxu0 0
        %4803 = vmatpush1.bf16.msra.mxu0 0
        %4804 = vmatprep.subr.bf16.mxu0 0
        %4805 = vmatpush1.bf16.msra.mxu0 0
        %4806 = vmatprep.subr.bf16.mxu0 0
        %4807 = vmatpush1.bf16.msra.mxu0 0
        %4808 = vmatprep.subr.bf16.mxu0 0
        %4809 = vmatpush1.bf16.msra.mxu0 0
        %4810 = vmatprep.subr.bf16.mxu0 0
        %4811 = vmatpush1.bf16.msra.mxu0 0
        %4812 = vmatprep.subr.bf16.mxu0 0
        %4813 = vmatpush1.bf16.msra.mxu0 0
        %4814 = vmatprep.subr.bf16.mxu0 0
        %4815 = vmatpush1.bf16.msra.mxu0 0
        %4816 = vmatprep.subr.bf16.mxu0 0
        %4817 = vmatpush1.bf16.msra.mxu0 0
        %4818 = vmatprep.subr.bf16.mxu0 0
        %4819 = vmatpush1.bf16.msra.mxu0 0
        %4820 = vmatprep.subr.bf16.mxu0 0
        %4821 = vmatpush1.bf16.msra.mxu0 0
        %4822 = vmatprep.subr.bf16.mxu0 0
        %4823 = vmatpush1.bf16.msra.mxu0 0
        %4824 = vmatprep.subr.bf16.mxu0 0
        %4825 = vmatpush1.bf16.msra.mxu0 0
        %4826 = vmatprep.mubr.bf16.mxu0 0
        %4827 = vmatmul.mubr.bf16.gmra.mrb[0].mxu0 %v4780
        %v4828 = vpop.f32.mrb[0].mxu0
        %v4829 = vadd.f32 0.0, %v4828
        %v4830 = vpop.f32.mrb[0].mxu0
        %v4831 = vadd.f32 0.0, %v4830
        %v4832 = vpop.f32.mrb[0].mxu0
        %v4833 = vadd.f32 0.0, %v4832
        %v4834 = vpop.f32.mrb[0].mxu0
        %v4835 = vadd.f32 0.0, %v4834
        %4836 = vmatprep.mubr.bf16.mxu0 0
        %4837 = vmatmul.mubr.bf16.gmra.mrb[0].mxu0 %v4783
        %v4838 = vpop.f32.mrb[0].mxu0
        %v4839 = vadd.f32 0.0, %v4838
        %v4840 = vpop.f32.mrb[0].mxu0
        %v4841 = vadd.f32 0.0, %v4840
        %v4842 = vpop.f32.mrb[0].mxu0
        %v4843 = vadd.f32 0.0, %v4842
        %v4844 = vpop.f32.mrb[0].mxu0
        %v4845 = vadd.f32 0.0, %v4844
        %4846 = vmatprep.mubr.bf16.mxu0 0
        %4847 = vmatmul.mubr.bf16.gmra.mrb[0].mxu0 %v4786
        %v4848 = vpop.f32.mrb[0].mxu0
        %v4849 = vadd.f32 0.0, %v4848
        %v4850 = vpop.f32.mrb[0].mxu0
        %v4851 = vadd.f32 0.0, %v4850
        %v4852 = vpop.f32.mrb[0].mxu0
        %v4853 = vpop.f32.mrb[0].mxu0
        %4854 = vdwg.mxu0
        %v4855 = vadd.f32 %v4744, %v4829
        %v4856 = vadd.f32 %v4745, %v4831
        %v4857 = vadd.f32 %v4746, %v4833
        %v4858 = vadd.f32 %v4747, %v4835
        %v4859 = vadd.f32 %v4748, %v4839
        %v4860 = vadd.f32 %v4749, %v4841
        %v4861 = vadd.f32 %v4750, %v4843
        %v4862 = vadd.f32 %v4751, %v4845
        %v4863 = vadd.f32 %v4752, %v4849
        %v4864 = vadd.f32 %v4753, %v4851
        %s4865 = scalar_lea.vmem %s1, 840
        %v4866 = vld [vmem:[%s4865] sm:$0xf]
        %v4867 = vld [vmem:[%s4865 + $0x4] sm:$0xf]
        %v4868 = vld [vmem:[%s4865 + $0x8] sm:$0xf]
        %v4869 = vld [vmem:[%s4865 + $0xc] sm:$0xf]
        %v4870 = vld [vmem:[%s4865 + $0x10] sm:$0xf]
        %v4876 = vunpack.c.l.b16 %v4866
        %v4877 = vunpack.c.l.b16 %v4867
        %v4878 = vunpack.c.l.b16 %v4868
        %v4879 = vunpack.c.l.b16 %v4869
        %v4880 = vunpack.c.l.b16 %v4870
        %v4881 = vpack.c.b16 %v4877, %v4876
        %v4882 = vpack.c.b16 %v4879, %v4878
        %v4883 = vpack.c.b16 %v4880, %v4880
        %4884 = vrot.lane.b32.xlu0 %v250, 86
        %v4885 = vpop.permute.xlu0 %4884
        %4886 = vrot.lane.b32.xlu0 %v251, 86
        %v4887 = vpop.permute.xlu0 %4886
        %vm4888 = vcmask 703488
        %v4889 = vsel %vm4888, %v4885, %v4887
        %v4891 = vsel %vm258, %v4881, 0
        %v4894 = vsel %vm258, %v4882, 0
        %v4897 = vsel %vm258, %v4883, 0
        %v4900 = vsel %vm268, %v4889, 0
        %v4903 = vsel %vm268, %v4887, 0
        %4905 = vmatprep.subr.bf16.mxu0 %v4903
        %4906 = vmatpush1.bf16.msra.mxu0 %v4900
        %4907 = vmatprep.subr.bf16.mxu0 0
        %4908 = vmatpush1.bf16.msra.mxu0 0
        %4909 = vmatprep.subr.bf16.mxu0 0
        %4910 = vmatpush1.bf16.msra.mxu0 0
        %4911 = vmatprep.subr.bf16.mxu0 0
        %4912 = vmatpush1.bf16.msra.mxu0 0
        %4913 = vmatprep.subr.bf16.mxu0 0
        %4914 = vmatpush1.bf16.msra.mxu0 0
        %4915 = vmatprep.subr.bf16.mxu0 0
        %4916 = vmatpush1.bf16.msra.mxu0 0
        %4917 = vmatprep.subr.bf16.mxu0 0
        %4918 = vmatpush1.bf16.msra.mxu0 0
        %4919 = vmatprep.subr.bf16.mxu0 0
        %4920 = vmatpush1.bf16.msra.mxu0 0
        %4921 = vmatprep.subr.bf16.mxu0 0
        %4922 = vmatpush1.bf16.msra.mxu0 0
        %4923 = vmatprep.subr.bf16.mxu0 0
        %4924 = vmatpush1.bf16.msra.mxu0 0
        %4925 = vmatprep.subr.bf16.mxu0 0
        %4926 = vmatpush1.bf16.msra.mxu0 0
        %4927 = vmatprep.subr.bf16.mxu0 0
        %4928 = vmatpush1.bf16.msra.mxu0 0
        %4929 = vmatprep.subr.bf16.mxu0 0
        %4930 = vmatpush1.bf16.msra.mxu0 0
        %4931 = vmatprep.subr.bf16.mxu0 0
        %4932 = vmatpush1.bf16.msra.mxu0 0
        %4933 = vmatprep.subr.bf16.mxu0 0
        %4934 = vmatpush1.bf16.msra.mxu0 0
        %4935 = vmatprep.subr.bf16.mxu0 0
        %4936 = vmatpush1.bf16.msra.mxu0 0
        %4937 = vmatprep.mubr.bf16.mxu0 0
        %4938 = vmatmul.mubr.bf16.gmra.mrb[0].mxu0 %v4891
        %v4939 = vpop.f32.mrb[0].mxu0
        %v4940 = vadd.f32 0.0, %v4939
        %v4941 = vpop.f32.mrb[0].mxu0
        %v4942 = vadd.f32 0.0, %v4941
        %v4943 = vpop.f32.mrb[0].mxu0
        %v4944 = vadd.f32 0.0, %v4943
        %v4945 = vpop.f32.mrb[0].mxu0
        %v4946 = vadd.f32 0.0, %v4945
        %4947 = vmatprep.mubr.bf16.mxu0 0
        %4948 = vmatmul.mubr.bf16.gmra.mrb[0].mxu0 %v4894
        %v4949 = vpop.f32.mrb[0].mxu0
        %v4950 = vadd.f32 0.0, %v4949
        %v4951 = vpop.f32.mrb[0].mxu0
        %v4952 = vadd.f32 0.0, %v4951
        %v4953 = vpop.f32.mrb[0].mxu0
        %v4954 = vadd.f32 0.0, %v4953
        %v4955 = vpop.f32.mrb[0].mxu0
        %v4956 = vadd.f32 0.0, %v4955
        %4957 = vmatprep.mubr.bf16.mxu0 0
        %4958 = vmatmul.mubr.bf16.gmra.mrb[0].mxu0 %v4897
        %v4959 = vpop.f32.mrb[0].mxu0
        %v4960 = vadd.f32 0.0, %v4959
        %v4961 = vpop.f32.mrb[0].mxu0
        %v4962 = vadd.f32 0.0, %v4961
        %v4963 = vpop.f32.mrb[0].mxu0
        %v4964 = vpop.f32.mrb[0].mxu0
        %4965 = vdwg.mxu0
        %v4966 = vadd.f32 %v4855, %v4940
        %v4967 = vadd.f32 %v4856, %v4942
        %v4968 = vadd.f32 %v4857, %v4944
        %v4969 = vadd.f32 %v4858, %v4946
        %v4970 = vadd.f32 %v4859, %v4950
        %v4971 = vadd.f32 %v4860, %v4952
        %v4972 = vadd.f32 %v4861, %v4954
        %v4973 = vadd.f32 %v4862, %v4956
        %v4974 = vadd.f32 %v4863, %v4960
        %v4975 = vadd.f32 %v4864, %v4962
        %s4976 = scalar_lea.vmem %s1, 860
        %v4977 = vld [vmem:[%s4976] sm:$0xf]
        %v4978 = vld [vmem:[%s4976 + $0x4] sm:$0xf]
        %v4979 = vld [vmem:[%s4976 + $0x8] sm:$0xf]
        %v4980 = vld [vmem:[%s4976 + $0xc] sm:$0xf]
        %v4981 = vld [vmem:[%s4976 + $0x10] sm:$0xf]
        %v4987 = vunpack.c.l.b16 %v4977
        %v4988 = vunpack.c.l.b16 %v4978
        %v4989 = vunpack.c.l.b16 %v4979
        %v4990 = vunpack.c.l.b16 %v4980
        %v4991 = vunpack.c.l.b16 %v4981
        %v4992 = vpack.c.b16 %v4988, %v4987
        %v4993 = vpack.c.b16 %v4990, %v4989
        %v4994 = vpack.c.b16 %v4991, %v4991
        %4995 = vrot.lane.b32.xlu0 %v250, 85
        %v4996 = vpop.permute.xlu0 %4995
        %4997 = vrot.lane.b32.xlu0 %v251, 85
        %v4998 = vpop.permute.xlu0 %4997
        %vm4999 = vcmask 695296
        %v5000 = vsel %vm4999, %v4996, %v4998
        %v5002 = vsel %vm258, %v4992, 0
        %v5005 = vsel %vm258, %v4993, 0
        %v5008 = vsel %vm258, %v4994, 0
        %v5011 = vsel %vm268, %v5000, 0
        %v5014 = vsel %vm268, %v4998, 0
        %5016 = vmatprep.subr.bf16.mxu0 %v5014
        %5017 = vmatpush1.bf16.msra.mxu0 %v5011
        %5018 = vmatprep.subr.bf16.mxu0 0
        %5019 = vmatpush1.bf16.msra.mxu0 0
        %5020 = vmatprep.subr.bf16.mxu0 0
        %5021 = vmatpush1.bf16.msra.mxu0 0
        %5022 = vmatprep.subr.bf16.mxu0 0
        %5023 = vmatpush1.bf16.msra.mxu0 0
        %5024 = vmatprep.subr.bf16.mxu0 0
        %5025 = vmatpush1.bf16.msra.mxu0 0
        %5026 = vmatprep.subr.bf16.mxu0 0
        %5027 = vmatpush1.bf16.msra.mxu0 0
        %5028 = vmatprep.subr.bf16.mxu0 0
        %5029 = vmatpush1.bf16.msra.mxu0 0
        %5030 = vmatprep.subr.bf16.mxu0 0
        %5031 = vmatpush1.bf16.msra.mxu0 0
        %5032 = vmatprep.subr.bf16.mxu0 0
        %5033 = vmatpush1.bf16.msra.mxu0 0
        %5034 = vmatprep.subr.bf16.mxu0 0
        %5035 = vmatpush1.bf16.msra.mxu0 0
        %5036 = vmatprep.subr.bf16.mxu0 0
        %5037 = vmatpush1.bf16.msra.mxu0 0
        %5038 = vmatprep.subr.bf16.mxu0 0
        %5039 = vmatpush1.bf16.msra.mxu0 0
        %5040 = vmatprep.subr.bf16.mxu0 0
        %5041 = vmatpush1.bf16.msra.mxu0 0
        %5042 = vmatprep.subr.bf16.mxu0 0
        %5043 = vmatpush1.bf16.msra.mxu0 0
        %5044 = vmatprep.subr.bf16.mxu0 0
        %5045 = vmatpush1.bf16.msra.mxu0 0
        %5046 = vmatprep.subr.bf16.mxu0 0
        %5047 = vmatpush1.bf16.msra.mxu0 0
        %5048 = vmatprep.mubr.bf16.mxu0 0
        %5049 = vmatmul.mubr.bf16.gmra.mrb[0].mxu0 %v5002
        %v5050 = vpop.f32.mrb[0].mxu0
        %v5051 = vadd.f32 0.0, %v5050
        %v5052 = vpop.f32.mrb[0].mxu0
        %v5053 = vadd.f32 0.0, %v5052
        %v5054 = vpop.f32.mrb[0].mxu0
        %v5055 = vadd.f32 0.0, %v5054
        %v5056 = vpop.f32.mrb[0].mxu0
        %v5057 = vadd.f32 0.0, %v5056
        %5058 = vmatprep.mubr.bf16.mxu0 0
        %5059 = vmatmul.mubr.bf16.gmra.mrb[0].mxu0 %v5005
        %v5060 = vpop.f32.mrb[0].mxu0
        %v5061 = vadd.f32 0.0, %v5060
        %v5062 = vpop.f32.mrb[0].mxu0
        %v5063 = vadd.f32 0.0, %v5062
        %v5064 = vpop.f32.mrb[0].mxu0
        %v5065 = vadd.f32 0.0, %v5064
        %v5066 = vpop.f32.mrb[0].mxu0
        %v5067 = vadd.f32 0.0, %v5066
        %5068 = vmatprep.mubr.bf16.mxu0 0
        %5069 = vmatmul.mubr.bf16.gmra.mrb[0].mxu0 %v5008
        %v5070 = vpop.f32.mrb[0].mxu0
        %v5071 = vadd.f32 0.0, %v5070
        %v5072 = vpop.f32.mrb[0].mxu0
        %v5073 = vadd.f32 0.0, %v5072
        %v5074 = vpop.f32.mrb[0].mxu0
        %v5075 = vpop.f32.mrb[0].mxu0
        %5076 = vdwg.mxu0
        %v5077 = vadd.f32 %v4966, %v5051
        %v5078 = vadd.f32 %v4967, %v5053
        %v5079 = vadd.f32 %v4968, %v5055
        %v5080 = vadd.f32 %v4969, %v5057
        %v5081 = vadd.f32 %v4970, %v5061
        %v5082 = vadd.f32 %v4971, %v5063
        %v5083 = vadd.f32 %v4972, %v5065
        %v5084 = vadd.f32 %v4973, %v5067
        %v5085 = vadd.f32 %v4974, %v5071
        %v5086 = vadd.f32 %v4975, %v5073
        %s5087 = scalar_lea.vmem %s1, 880
        %v5088 = vld [vmem:[%s5087] sm:$0xf]
        %v5089 = vld [vmem:[%s5087 + $0x4] sm:$0xf]
        %v5090 = vld [vmem:[%s5087 + $0x8] sm:$0xf]
        %v5091 = vld [vmem:[%s5087 + $0xc] sm:$0xf]
        %v5092 = vld [vmem:[%s5087 + $0x10] sm:$0xf]
        %v5098 = vunpack.c.l.b16 %v5088
        %v5099 = vunpack.c.l.b16 %v5089
        %v5100 = vunpack.c.l.b16 %v5090
        %v5101 = vunpack.c.l.b16 %v5091
        %v5102 = vunpack.c.l.b16 %v5092
        %v5103 = vpack.c.b16 %v5099, %v5098
        %v5104 = vpack.c.b16 %v5101, %v5100
        %v5105 = vpack.c.b16 %v5102, %v5102
        %5106 = vrot.lane.b32.xlu0 %v250, 84
        %v5107 = vpop.permute.xlu0 %5106
        %5108 = vrot.lane.b32.xlu0 %v251, 84
        %v5109 = vpop.permute.xlu0 %5108
        %vm5110 = vcmask 687104
        %v5111 = vsel %vm5110, %v5107, %v5109
        %v5113 = vsel %vm258, %v5103, 0
        %v5116 = vsel %vm258, %v5104, 0
        %v5119 = vsel %vm258, %v5105, 0
        %v5122 = vsel %vm268, %v5111, 0
        %v5125 = vsel %vm268, %v5109, 0
        %5127 = vmatprep.subr.bf16.mxu0 %v5125
        %5128 = vmatpush1.bf16.msra.mxu0 %v5122
        %5129 = vmatprep.subr.bf16.mxu0 0
        %5130 = vmatpush1.bf16.msra.mxu0 0
        %5131 = vmatprep.subr.bf16.mxu0 0
        %5132 = vmatpush1.bf16.msra.mxu0 0
        %5133 = vmatprep.subr.bf16.mxu0 0
        %5134 = vmatpush1.bf16.msra.mxu0 0
        %5135 = vmatprep.subr.bf16.mxu0 0
        %5136 = vmatpush1.bf16.msra.mxu0 0
        %5137 = vmatprep.subr.bf16.mxu0 0
        %5138 = vmatpush1.bf16.msra.mxu0 0
        %5139 = vmatprep.subr.bf16.mxu0 0
        %5140 = vmatpush1.bf16.msra.mxu0 0
        %5141 = vmatprep.subr.bf16.mxu0 0
        %5142 = vmatpush1.bf16.msra.mxu0 0
        %5143 = vmatprep.subr.bf16.mxu0 0
        %5144 = vmatpush1.bf16.msra.mxu0 0
        %5145 = vmatprep.subr.bf16.mxu0 0
        %5146 = vmatpush1.bf16.msra.mxu0 0
        %5147 = vmatprep.subr.bf16.mxu0 0
        %5148 = vmatpush1.bf16.msra.mxu0 0
        %5149 = vmatprep.subr.bf16.mxu0 0
        %5150 = vmatpush1.bf16.msra.mxu0 0
        %5151 = vmatprep.subr.bf16.mxu0 0
        %5152 = vmatpush1.bf16.msra.mxu0 0
        %5153 = vmatprep.subr.bf16.mxu0 0
        %5154 = vmatpush1.bf16.msra.mxu0 0
        %5155 = vmatprep.subr.bf16.mxu0 0
        %5156 = vmatpush1.bf16.msra.mxu0 0
        %5157 = vmatprep.subr.bf16.mxu0 0
        %5158 = vmatpush1.bf16.msra.mxu0 0
        %5159 = vmatprep.mubr.bf16.mxu0 0
        %5160 = vmatmul.mubr.bf16.gmra.mrb[0].mxu0 %v5113
        %v5161 = vpop.f32.mrb[0].mxu0
        %v5162 = vadd.f32 0.0, %v5161
        %v5163 = vpop.f32.mrb[0].mxu0
        %v5164 = vadd.f32 0.0, %v5163
        %v5165 = vpop.f32.mrb[0].mxu0
        %v5166 = vadd.f32 0.0, %v5165
        %v5167 = vpop.f32.mrb[0].mxu0
        %v5168 = vadd.f32 0.0, %v5167
        %5169 = vmatprep.mubr.bf16.mxu0 0
        %5170 = vmatmul.mubr.bf16.gmra.mrb[0].mxu0 %v5116
        %v5171 = vpop.f32.mrb[0].mxu0
        %v5172 = vadd.f32 0.0, %v5171
        %v5173 = vpop.f32.mrb[0].mxu0
        %v5174 = vadd.f32 0.0, %v5173
        %v5175 = vpop.f32.mrb[0].mxu0
        %v5176 = vadd.f32 0.0, %v5175
        %v5177 = vpop.f32.mrb[0].mxu0
        %v5178 = vadd.f32 0.0, %v5177
        %5179 = vmatprep.mubr.bf16.mxu0 0
        %5180 = vmatmul.mubr.bf16.gmra.mrb[0].mxu0 %v5119
        %v5181 = vpop.f32.mrb[0].mxu0
        %v5182 = vadd.f32 0.0, %v5181
        %v5183 = vpop.f32.mrb[0].mxu0
        %v5184 = vadd.f32 0.0, %v5183
        %v5185 = vpop.f32.mrb[0].mxu0
        %v5186 = vpop.f32.mrb[0].mxu0
        %5187 = vdwg.mxu0
        %v5188 = vadd.f32 %v5077, %v5162
        %v5189 = vadd.f32 %v5078, %v5164
        %v5190 = vadd.f32 %v5079, %v5166
        %v5191 = vadd.f32 %v5080, %v5168
        %v5192 = vadd.f32 %v5081, %v5172
        %v5193 = vadd.f32 %v5082, %v5174
        %v5194 = vadd.f32 %v5083, %v5176
        %v5195 = vadd.f32 %v5084, %v5178
        %v5196 = vadd.f32 %v5085, %v5182
        %v5197 = vadd.f32 %v5086, %v5184
        %s5198 = scalar_lea.vmem %s1, 900
        %v5199 = vld [vmem:[%s5198] sm:$0xf]
        %v5200 = vld [vmem:[%s5198 + $0x4] sm:$0xf]
        %v5201 = vld [vmem:[%s5198 + $0x8] sm:$0xf]
        %v5202 = vld [vmem:[%s5198 + $0xc] sm:$0xf]
        %v5203 = vld [vmem:[%s5198 + $0x10] sm:$0xf]
        %v5209 = vunpack.c.l.b16 %v5199
        %v5210 = vunpack.c.l.b16 %v5200
        %v5211 = vunpack.c.l.b16 %v5201
        %v5212 = vunpack.c.l.b16 %v5202
        %v5213 = vunpack.c.l.b16 %v5203
        %v5214 = vpack.c.b16 %v5210, %v5209
        %v5215 = vpack.c.b16 %v5212, %v5211
        %v5216 = vpack.c.b16 %v5213, %v5213
        %5217 = vrot.lane.b32.xlu0 %v250, 83
        %v5218 = vpop.permute.xlu0 %5217
        %5219 = vrot.lane.b32.xlu0 %v251, 83
        %v5220 = vpop.permute.xlu0 %5219
        %vm5221 = vcmask 678912
        %v5222 = vsel %vm5221, %v5218, %v5220
        %v5224 = vsel %vm258, %v5214, 0
        %v5227 = vsel %vm258, %v5215, 0
        %v5230 = vsel %vm258, %v5216, 0
        %v5233 = vsel %vm268, %v5222, 0
        %v5236 = vsel %vm268, %v5220, 0
        %5238 = vmatprep.subr.bf16.mxu0 %v5236
        %5239 = vmatpush1.bf16.msra.mxu0 %v5233
        %5240 = vmatprep.subr.bf16.mxu0 0
        %5241 = vmatpush1.bf16.msra.mxu0 0
        %5242 = vmatprep.subr.bf16.mxu0 0
        %5243 = vmatpush1.bf16.msra.mxu0 0
        %5244 = vmatprep.subr.bf16.mxu0 0
        %5245 = vmatpush1.bf16.msra.mxu0 0
        %5246 = vmatprep.subr.bf16.mxu0 0
        %5247 = vmatpush1.bf16.msra.mxu0 0
        %5248 = vmatprep.subr.bf16.mxu0 0
        %5249 = vmatpush1.bf16.msra.mxu0 0
        %5250 = vmatprep.subr.bf16.mxu0 0
        %5251 = vmatpush1.bf16.msra.mxu0 0
        %5252 = vmatprep.subr.bf16.mxu0 0
        %5253 = vmatpush1.bf16.msra.mxu0 0
        %5254 = vmatprep.subr.bf16.mxu0 0
        %5255 = vmatpush1.bf16.msra.mxu0 0
        %5256 = vmatprep.subr.bf16.mxu0 0
        %5257 = vmatpush1.bf16.msra.mxu0 0
        %5258 = vmatprep.subr.bf16.mxu0 0
        %5259 = vmatpush1.bf16.msra.mxu0 0
        %5260 = vmatprep.subr.bf16.mxu0 0
        %5261 = vmatpush1.bf16.msra.mxu0 0
        %5262 = vmatprep.subr.bf16.mxu0 0
        %5263 = vmatpush1.bf16.msra.mxu0 0
        %5264 = vmatprep.subr.bf16.mxu0 0
        %5265 = vmatpush1.bf16.msra.mxu0 0
        %5266 = vmatprep.subr.bf16.mxu0 0
        %5267 = vmatpush1.bf16.msra.mxu0 0
        %5268 = vmatprep.subr.bf16.mxu0 0
        %5269 = vmatpush1.bf16.msra.mxu0 0
        %5270 = vmatprep.mubr.bf16.mxu0 0
        %5271 = vmatmul.mubr.bf16.gmra.mrb[0].mxu0 %v5224
        %v5272 = vpop.f32.mrb[0].mxu0
        %v5273 = vadd.f32 0.0, %v5272
        %v5274 = vpop.f32.mrb[0].mxu0
        %v5275 = vadd.f32 0.0, %v5274
        %v5276 = vpop.f32.mrb[0].mxu0
        %v5277 = vadd.f32 0.0, %v5276
        %v5278 = vpop.f32.mrb[0].mxu0
        %v5279 = vadd.f32 0.0, %v5278
        %5280 = vmatprep.mubr.bf16.mxu0 0
        %5281 = vmatmul.mubr.bf16.gmra.mrb[0].mxu0 %v5227
        %v5282 = vpop.f32.mrb[0].mxu0
        %v5283 = vadd.f32 0.0, %v5282
        %v5284 = vpop.f32.mrb[0].mxu0
        %v5285 = vadd.f32 0.0, %v5284
        %v5286 = vpop.f32.mrb[0].mxu0
        %v5287 = vadd.f32 0.0, %v5286
        %v5288 = vpop.f32.mrb[0].mxu0
        %v5289 = vadd.f32 0.0, %v5288
        %5290 = vmatprep.mubr.bf16.mxu0 0
        %5291 = vmatmul.mubr.bf16.gmra.mrb[0].mxu0 %v5230
        %v5292 = vpop.f32.mrb[0].mxu0
        %v5293 = vadd.f32 0.0, %v5292
        %v5294 = vpop.f32.mrb[0].mxu0
        %v5295 = vadd.f32 0.0, %v5294
        %v5296 = vpop.f32.mrb[0].mxu0
        %v5297 = vpop.f32.mrb[0].mxu0
        %5298 = vdwg.mxu0
        %v5299 = vadd.f32 %v5188, %v5273
        %v5300 = vadd.f32 %v5189, %v5275
        %v5301 = vadd.f32 %v5190, %v5277
        %v5302 = vadd.f32 %v5191, %v5279
        %v5303 = vadd.f32 %v5192, %v5283
        %v5304 = vadd.f32 %v5193, %v5285
        %v5305 = vadd.f32 %v5194, %v5287
        %v5306 = vadd.f32 %v5195, %v5289
        %v5307 = vadd.f32 %v5196, %v5293
        %v5308 = vadd.f32 %v5197, %v5295
        %s5309 = scalar_lea.vmem %s1, 920
        %v5310 = vld [vmem:[%s5309] sm:$0xf]
        %v5311 = vld [vmem:[%s5309 + $0x4] sm:$0xf]
        %v5312 = vld [vmem:[%s5309 + $0x8] sm:$0xf]
        %v5313 = vld [vmem:[%s5309 + $0xc] sm:$0xf]
        %v5314 = vld [vmem:[%s5309 + $0x10] sm:$0xf]
        %v5320 = vunpack.c.l.b16 %v5310
        %v5321 = vunpack.c.l.b16 %v5311
        %v5322 = vunpack.c.l.b16 %v5312
        %v5323 = vunpack.c.l.b16 %v5313
        %v5324 = vunpack.c.l.b16 %v5314
        %v5325 = vpack.c.b16 %v5321, %v5320
        %v5326 = vpack.c.b16 %v5323, %v5322
        %v5327 = vpack.c.b16 %v5324, %v5324
        %5328 = vrot.lane.b32.xlu0 %v250, 82
        %v5329 = vpop.permute.xlu0 %5328
        %5330 = vrot.lane.b32.xlu0 %v251, 82
        %v5331 = vpop.permute.xlu0 %5330
        %vm5332 = vcmask 670720
        %v5333 = vsel %vm5332, %v5329, %v5331
        %v5335 = vsel %vm258, %v5325, 0
        %v5338 = vsel %vm258, %v5326, 0
        %v5341 = vsel %vm258, %v5327, 0
        %v5344 = vsel %vm268, %v5333, 0
        %v5347 = vsel %vm268, %v5331, 0
        %5349 = vmatprep.subr.bf16.mxu0 %v5347
        %5350 = vmatpush1.bf16.msra.mxu0 %v5344
        %5351 = vmatprep.subr.bf16.mxu0 0
        %5352 = vmatpush1.bf16.msra.mxu0 0
        %5353 = vmatprep.subr.bf16.mxu0 0
        %5354 = vmatpush1.bf16.msra.mxu0 0
        %5355 = vmatprep.subr.bf16.mxu0 0
        %5356 = vmatpush1.bf16.msra.mxu0 0
        %5357 = vmatprep.subr.bf16.mxu0 0
        %5358 = vmatpush1.bf16.msra.mxu0 0
        %5359 = vmatprep.subr.bf16.mxu0 0
        %5360 = vmatpush1.bf16.msra.mxu0 0
        %5361 = vmatprep.subr.bf16.mxu0 0
        %5362 = vmatpush1.bf16.msra.mxu0 0
        %5363 = vmatprep.subr.bf16.mxu0 0
        %5364 = vmatpush1.bf16.msra.mxu0 0
        %5365 = vmatprep.subr.bf16.mxu0 0
        %5366 = vmatpush1.bf16.msra.mxu0 0
        %5367 = vmatprep.subr.bf16.mxu0 0
        %5368 = vmatpush1.bf16.msra.mxu0 0
        %5369 = vmatprep.subr.bf16.mxu0 0
        %5370 = vmatpush1.bf16.msra.mxu0 0
        %5371 = vmatprep.subr.bf16.mxu0 0
        %5372 = vmatpush1.bf16.msra.mxu0 0
        %5373 = vmatprep.subr.bf16.mxu0 0
        %5374 = vmatpush1.bf16.msra.mxu0 0
        %5375 = vmatprep.subr.bf16.mxu0 0
        %5376 = vmatpush1.bf16.msra.mxu0 0
        %5377 = vmatprep.subr.bf16.mxu0 0
        %5378 = vmatpush1.bf16.msra.mxu0 0
        %5379 = vmatprep.subr.bf16.mxu0 0
        %5380 = vmatpush1.bf16.msra.mxu0 0
        %5381 = vmatprep.mubr.bf16.mxu0 0
        %5382 = vmatmul.mubr.bf16.gmra.mrb[0].mxu0 %v5335
        %v5383 = vpop.f32.mrb[0].mxu0
        %v5384 = vadd.f32 0.0, %v5383
        %v5385 = vpop.f32.mrb[0].mxu0
        %v5386 = vadd.f32 0.0, %v5385
        %v5387 = vpop.f32.mrb[0].mxu0
        %v5388 = vadd.f32 0.0, %v5387
        %v5389 = vpop.f32.mrb[0].mxu0
        %v5390 = vadd.f32 0.0, %v5389
        %5391 = vmatprep.mubr.bf16.mxu0 0
        %5392 = vmatmul.mubr.bf16.gmra.mrb[0].mxu0 %v5338
        %v5393 = vpop.f32.mrb[0].mxu0
        %v5394 = vadd.f32 0.0, %v5393
        %v5395 = vpop.f32.mrb[0].mxu0
        %v5396 = vadd.f32 0.0, %v5395
        %v5397 = vpop.f32.mrb[0].mxu0
        %v5398 = vadd.f32 0.0, %v5397
        %v5399 = vpop.f32.mrb[0].mxu0
        %v5400 = vadd.f32 0.0, %v5399
        %5401 = vmatprep.mubr.bf16.mxu0 0
        %5402 = vmatmul.mubr.bf16.gmra.mrb[0].mxu0 %v5341
        %v5403 = vpop.f32.mrb[0].mxu0
        %v5404 = vadd.f32 0.0, %v5403
        %v5405 = vpop.f32.mrb[0].mxu0
        %v5406 = vadd.f32 0.0, %v5405
        %v5407 = vpop.f32.mrb[0].mxu0
        %v5408 = vpop.f32.mrb[0].mxu0
        %5409 = vdwg.mxu0
        %v5410 = vadd.f32 %v5299, %v5384
        %v5411 = vadd.f32 %v5300, %v5386
        %v5412 = vadd.f32 %v5301, %v5388
        %v5413 = vadd.f32 %v5302, %v5390
        %v5414 = vadd.f32 %v5303, %v5394
        %v5415 = vadd.f32 %v5304, %v5396
        %v5416 = vadd.f32 %v5305, %v5398
        %v5417 = vadd.f32 %v5306, %v5400
        %v5418 = vadd.f32 %v5307, %v5404
        %v5419 = vadd.f32 %v5308, %v5406
        %s5420 = scalar_lea.vmem %s1, 940
        %v5421 = vld [vmem:[%s5420] sm:$0xf]
        %v5422 = vld [vmem:[%s5420 + $0x4] sm:$0xf]
        %v5423 = vld [vmem:[%s5420 + $0x8] sm:$0xf]
        %v5424 = vld [vmem:[%s5420 + $0xc] sm:$0xf]
        %v5425 = vld [vmem:[%s5420 + $0x10] sm:$0xf]
        %v5431 = vunpack.c.l.b16 %v5421
        %v5432 = vunpack.c.l.b16 %v5422
        %v5433 = vunpack.c.l.b16 %v5423
        %v5434 = vunpack.c.l.b16 %v5424
        %v5435 = vunpack.c.l.b16 %v5425
        %v5436 = vpack.c.b16 %v5432, %v5431
        %v5437 = vpack.c.b16 %v5434, %v5433
        %v5438 = vpack.c.b16 %v5435, %v5435
        %5439 = vrot.lane.b32.xlu0 %v250, 81
        %v5440 = vpop.permute.xlu0 %5439
        %5441 = vrot.lane.b32.xlu0 %v251, 81
        %v5442 = vpop.permute.xlu0 %5441
        %vm5443 = vcmask 662528
        %v5444 = vsel %vm5443, %v5440, %v5442
        %v5446 = vsel %vm258, %v5436, 0
        %v5449 = vsel %vm258, %v5437, 0
        %v5452 = vsel %vm258, %v5438, 0
        %v5455 = vsel %vm268, %v5444, 0
        %v5458 = vsel %vm268, %v5442, 0
        %5460 = vmatprep.subr.bf16.mxu0 %v5458
        %5461 = vmatpush1.bf16.msra.mxu0 %v5455
        %5462 = vmatprep.subr.bf16.mxu0 0
        %5463 = vmatpush1.bf16.msra.mxu0 0
        %5464 = vmatprep.subr.bf16.mxu0 0
        %5465 = vmatpush1.bf16.msra.mxu0 0
        %5466 = vmatprep.subr.bf16.mxu0 0
        %5467 = vmatpush1.bf16.msra.mxu0 0
        %5468 = vmatprep.subr.bf16.mxu0 0
        %5469 = vmatpush1.bf16.msra.mxu0 0
        %5470 = vmatprep.subr.bf16.mxu0 0
        %5471 = vmatpush1.bf16.msra.mxu0 0
        %5472 = vmatprep.subr.bf16.mxu0 0
        %5473 = vmatpush1.bf16.msra.mxu0 0
        %5474 = vmatprep.subr.bf16.mxu0 0
        %5475 = vmatpush1.bf16.msra.mxu0 0
        %5476 = vmatprep.subr.bf16.mxu0 0
        %5477 = vmatpush1.bf16.msra.mxu0 0
        %5478 = vmatprep.subr.bf16.mxu0 0
        %5479 = vmatpush1.bf16.msra.mxu0 0
        %5480 = vmatprep.subr.bf16.mxu0 0
        %5481 = vmatpush1.bf16.msra.mxu0 0
        %5482 = vmatprep.subr.bf16.mxu0 0
        %5483 = vmatpush1.bf16.msra.mxu0 0
        %5484 = vmatprep.subr.bf16.mxu0 0
        %5485 = vmatpush1.bf16.msra.mxu0 0
        %5486 = vmatprep.subr.bf16.mxu0 0
        %5487 = vmatpush1.bf16.msra.mxu0 0
        %5488 = vmatprep.subr.bf16.mxu0 0
        %5489 = vmatpush1.bf16.msra.mxu0 0
        %5490 = vmatprep.subr.bf16.mxu0 0
        %5491 = vmatpush1.bf16.msra.mxu0 0
        %5492 = vmatprep.mubr.bf16.mxu0 0
        %5493 = vmatmul.mubr.bf16.gmra.mrb[0].mxu0 %v5446
        %v5494 = vpop.f32.mrb[0].mxu0
        %v5495 = vadd.f32 0.0, %v5494
        %v5496 = vpop.f32.mrb[0].mxu0
        %v5497 = vadd.f32 0.0, %v5496
        %v5498 = vpop.f32.mrb[0].mxu0
        %v5499 = vadd.f32 0.0, %v5498
        %v5500 = vpop.f32.mrb[0].mxu0
        %v5501 = vadd.f32 0.0, %v5500
        %5502 = vmatprep.mubr.bf16.mxu0 0
        %5503 = vmatmul.mubr.bf16.gmra.mrb[0].mxu0 %v5449
        %v5504 = vpop.f32.mrb[0].mxu0
        %v5505 = vadd.f32 0.0, %v5504
        %v5506 = vpop.f32.mrb[0].mxu0
        %v5507 = vadd.f32 0.0, %v5506
        %v5508 = vpop.f32.mrb[0].mxu0
        %v5509 = vadd.f32 0.0, %v5508
        %v5510 = vpop.f32.mrb[0].mxu0
        %v5511 = vadd.f32 0.0, %v5510
        %5512 = vmatprep.mubr.bf16.mxu0 0
        %5513 = vmatmul.mubr.bf16.gmra.mrb[0].mxu0 %v5452
        %v5514 = vpop.f32.mrb[0].mxu0
        %v5515 = vadd.f32 0.0, %v5514
        %v5516 = vpop.f32.mrb[0].mxu0
        %v5517 = vadd.f32 0.0, %v5516
        %v5518 = vpop.f32.mrb[0].mxu0
        %v5519 = vpop.f32.mrb[0].mxu0
        %5520 = vdwg.mxu0
        %v5521 = vadd.f32 %v5410, %v5495
        %v5522 = vadd.f32 %v5411, %v5497
        %v5523 = vadd.f32 %v5412, %v5499
        %v5524 = vadd.f32 %v5413, %v5501
        %v5525 = vadd.f32 %v5414, %v5505
        %v5526 = vadd.f32 %v5415, %v5507
        %v5527 = vadd.f32 %v5416, %v5509
        %v5528 = vadd.f32 %v5417, %v5511
        %v5529 = vadd.f32 %v5418, %v5515
        %v5530 = vadd.f32 %v5419, %v5517
        %s5531 = scalar_lea.vmem %s1, 960
        %v5532 = vld [vmem:[%s5531] sm:$0xf]
        %v5533 = vld [vmem:[%s5531 + $0x4] sm:$0xf]
        %v5534 = vld [vmem:[%s5531 + $0x8] sm:$0xf]
        %v5535 = vld [vmem:[%s5531 + $0xc] sm:$0xf]
        %v5536 = vld [vmem:[%s5531 + $0x10] sm:$0xf]
        %v5542 = vunpack.c.l.b16 %v5532
        %v5543 = vunpack.c.l.b16 %v5533
        %v5544 = vunpack.c.l.b16 %v5534
        %v5545 = vunpack.c.l.b16 %v5535
        %v5546 = vunpack.c.l.b16 %v5536
        %v5547 = vpack.c.b16 %v5543, %v5542
        %v5548 = vpack.c.b16 %v5545, %v5544
        %v5549 = vpack.c.b16 %v5546, %v5546
        %5550 = vrot.lane.b32.xlu0 %v250, 80
        %v5551 = vpop.permute.xlu0 %5550
        %5552 = vrot.lane.b32.xlu0 %v251, 80
        %v5553 = vpop.permute.xlu0 %5552
        %vm5554 = vcmask 654336
        %v5555 = vsel %vm5554, %v5551, %v5553
        %v5557 = vsel %vm258, %v5547, 0
        %v5560 = vsel %vm258, %v5548, 0
        %v5563 = vsel %vm258, %v5549, 0
        %v5566 = vsel %vm268, %v5555, 0
        %v5569 = vsel %vm268, %v5553, 0
        %5571 = vmatprep.subr.bf16.mxu0 %v5569
        %5572 = vmatpush1.bf16.msra.mxu0 %v5566
        %5573 = vmatprep.subr.bf16.mxu0 0
        %5574 = vmatpush1.bf16.msra.mxu0 0
        %5575 = vmatprep.subr.bf16.mxu0 0
        %5576 = vmatpush1.bf16.msra.mxu0 0
        %5577 = vmatprep.subr.bf16.mxu0 0
        %5578 = vmatpush1.bf16.msra.mxu0 0
        %5579 = vmatprep.subr.bf16.mxu0 0
        %5580 = vmatpush1.bf16.msra.mxu0 0
        %5581 = vmatprep.subr.bf16.mxu0 0
        %5582 = vmatpush1.bf16.msra.mxu0 0
        %5583 = vmatprep.subr.bf16.mxu0 0
        %5584 = vmatpush1.bf16.msra.mxu0 0
        %5585 = vmatprep.subr.bf16.mxu0 0
        %5586 = vmatpush1.bf16.msra.mxu0 0
        %5587 = vmatprep.subr.bf16.mxu0 0
        %5588 = vmatpush1.bf16.msra.mxu0 0
        %5589 = vmatprep.subr.bf16.mxu0 0
        %5590 = vmatpush1.bf16.msra.mxu0 0
        %5591 = vmatprep.subr.bf16.mxu0 0
        %5592 = vmatpush1.bf16.msra.mxu0 0
        %5593 = vmatprep.subr.bf16.mxu0 0
        %5594 = vmatpush1.bf16.msra.mxu0 0
        %5595 = vmatprep.subr.bf16.mxu0 0
        %5596 = vmatpush1.bf16.msra.mxu0 0
        %5597 = vmatprep.subr.bf16.mxu0 0
        %5598 = vmatpush1.bf16.msra.mxu0 0
        %5599 = vmatprep.subr.bf16.mxu0 0
        %5600 = vmatpush1.bf16.msra.mxu0 0
        %5601 = vmatprep.subr.bf16.mxu0 0
        %5602 = vmatpush1.bf16.msra.mxu0 0
        %5603 = vmatprep.mubr.bf16.mxu0 0
        %5604 = vmatmul.mubr.bf16.gmra.mrb[0].mxu0 %v5557
        %v5605 = vpop.f32.mrb[0].mxu0
        %v5606 = vadd.f32 0.0, %v5605
        %v5607 = vpop.f32.mrb[0].mxu0
        %v5608 = vadd.f32 0.0, %v5607
        %v5609 = vpop.f32.mrb[0].mxu0
        %v5610 = vadd.f32 0.0, %v5609
        %v5611 = vpop.f32.mrb[0].mxu0
        %v5612 = vadd.f32 0.0, %v5611
        %5613 = vmatprep.mubr.bf16.mxu0 0
        %5614 = vmatmul.mubr.bf16.gmra.mrb[0].mxu0 %v5560
        %v5615 = vpop.f32.mrb[0].mxu0
        %v5616 = vadd.f32 0.0, %v5615
        %v5617 = vpop.f32.mrb[0].mxu0
        %v5618 = vadd.f32 0.0, %v5617
        %v5619 = vpop.f32.mrb[0].mxu0
        %v5620 = vadd.f32 0.0, %v5619
        %v5621 = vpop.f32.mrb[0].mxu0
        %v5622 = vadd.f32 0.0, %v5621
        %5623 = vmatprep.mubr.bf16.mxu0 0
        %5624 = vmatmul.mubr.bf16.gmra.mrb[0].mxu0 %v5563
        %v5625 = vpop.f32.mrb[0].mxu0
        %v5626 = vadd.f32 0.0, %v5625
        %v5627 = vpop.f32.mrb[0].mxu0
        %v5628 = vadd.f32 0.0, %v5627
        %v5629 = vpop.f32.mrb[0].mxu0
        %v5630 = vpop.f32.mrb[0].mxu0
        %5631 = vdwg.mxu0
        %v5632 = vadd.f32 %v5521, %v5606
        %v5633 = vadd.f32 %v5522, %v5608
        %v5634 = vadd.f32 %v5523, %v5610
        %v5635 = vadd.f32 %v5524, %v5612
        %v5636 = vadd.f32 %v5525, %v5616
        %v5637 = vadd.f32 %v5526, %v5618
        %v5638 = vadd.f32 %v5527, %v5620
        %v5639 = vadd.f32 %v5528, %v5622
        %v5640 = vadd.f32 %v5529, %v5626
        %v5641 = vadd.f32 %v5530, %v5628
        %s5642 = scalar_lea.vmem %s1, 980
        %v5643 = vld [vmem:[%s5642] sm:$0xf]
        %v5644 = vld [vmem:[%s5642 + $0x4] sm:$0xf]
        %v5645 = vld [vmem:[%s5642 + $0x8] sm:$0xf]
        %v5646 = vld [vmem:[%s5642 + $0xc] sm:$0xf]
        %v5647 = vld [vmem:[%s5642 + $0x10] sm:$0xf]
        %v5653 = vunpack.c.l.b16 %v5643
        %v5654 = vunpack.c.l.b16 %v5644
        %v5655 = vunpack.c.l.b16 %v5645
        %v5656 = vunpack.c.l.b16 %v5646
        %v5657 = vunpack.c.l.b16 %v5647
        %v5658 = vpack.c.b16 %v5654, %v5653
        %v5659 = vpack.c.b16 %v5656, %v5655
        %v5660 = vpack.c.b16 %v5657, %v5657
        %5661 = vrot.lane.b32.xlu0 %v250, 79
        %v5662 = vpop.permute.xlu0 %5661
        %5663 = vrot.lane.b32.xlu0 %v251, 79
        %v5664 = vpop.permute.xlu0 %5663
        %vm5665 = vcmask 646144
        %v5666 = vsel %vm5665, %v5662, %v5664
        %v5668 = vsel %vm258, %v5658, 0
        %v5671 = vsel %vm258, %v5659, 0
        %v5674 = vsel %vm258, %v5660, 0
        %v5677 = vsel %vm268, %v5666, 0
        %v5680 = vsel %vm268, %v5664, 0
        %5682 = vmatprep.subr.bf16.mxu0 %v5680
        %5683 = vmatpush1.bf16.msra.mxu0 %v5677
        %5684 = vmatprep.subr.bf16.mxu0 0
        %5685 = vmatpush1.bf16.msra.mxu0 0
        %5686 = vmatprep.subr.bf16.mxu0 0
        %5687 = vmatpush1.bf16.msra.mxu0 0
        %5688 = vmatprep.subr.bf16.mxu0 0
        %5689 = vmatpush1.bf16.msra.mxu0 0
        %5690 = vmatprep.subr.bf16.mxu0 0
        %5691 = vmatpush1.bf16.msra.mxu0 0
        %5692 = vmatprep.subr.bf16.mxu0 0
        %5693 = vmatpush1.bf16.msra.mxu0 0
        %5694 = vmatprep.subr.bf16.mxu0 0
        %5695 = vmatpush1.bf16.msra.mxu0 0
        %5696 = vmatprep.subr.bf16.mxu0 0
        %5697 = vmatpush1.bf16.msra.mxu0 0
        %5698 = vmatprep.subr.bf16.mxu0 0
        %5699 = vmatpush1.bf16.msra.mxu0 0
        %5700 = vmatprep.subr.bf16.mxu0 0
        %5701 = vmatpush1.bf16.msra.mxu0 0
        %5702 = vmatprep.subr.bf16.mxu0 0
        %5703 = vmatpush1.bf16.msra.mxu0 0
        %5704 = vmatprep.subr.bf16.mxu0 0
        %5705 = vmatpush1.bf16.msra.mxu0 0
        %5706 = vmatprep.subr.bf16.mxu0 0
        %5707 = vmatpush1.bf16.msra.mxu0 0
        %5708 = vmatprep.subr.bf16.mxu0 0
        %5709 = vmatpush1.bf16.msra.mxu0 0
        %5710 = vmatprep.subr.bf16.mxu0 0
        %5711 = vmatpush1.bf16.msra.mxu0 0
        %5712 = vmatprep.subr.bf16.mxu0 0
        %5713 = vmatpush1.bf16.msra.mxu0 0
        %5714 = vmatprep.mubr.bf16.mxu0 0
        %5715 = vmatmul.mubr.bf16.gmra.mrb[0].mxu0 %v5668
        %v5716 = vpop.f32.mrb[0].mxu0
        %v5717 = vadd.f32 0.0, %v5716
        %v5718 = vpop.f32.mrb[0].mxu0
        %v5719 = vadd.f32 0.0, %v5718
        %v5720 = vpop.f32.mrb[0].mxu0
        %v5721 = vadd.f32 0.0, %v5720
        %v5722 = vpop.f32.mrb[0].mxu0
        %v5723 = vadd.f32 0.0, %v5722
        %5724 = vmatprep.mubr.bf16.mxu0 0
        %5725 = vmatmul.mubr.bf16.gmra.mrb[0].mxu0 %v5671
        %v5726 = vpop.f32.mrb[0].mxu0
        %v5727 = vadd.f32 0.0, %v5726
        %v5728 = vpop.f32.mrb[0].mxu0
        %v5729 = vadd.f32 0.0, %v5728
        %v5730 = vpop.f32.mrb[0].mxu0
        %v5731 = vadd.f32 0.0, %v5730
        %v5732 = vpop.f32.mrb[0].mxu0
        %v5733 = vadd.f32 0.0, %v5732
        %5734 = vmatprep.mubr.bf16.mxu0 0
        %5735 = vmatmul.mubr.bf16.gmra.mrb[0].mxu0 %v5674
        %v5736 = vpop.f32.mrb[0].mxu0
        %v5737 = vadd.f32 0.0, %v5736
        %v5738 = vpop.f32.mrb[0].mxu0
        %v5739 = vadd.f32 0.0, %v5738
        %v5740 = vpop.f32.mrb[0].mxu0
        %v5741 = vpop.f32.mrb[0].mxu0
        %5742 = vdwg.mxu0
        %v5743 = vadd.f32 %v5632, %v5717
        %v5744 = vadd.f32 %v5633, %v5719
        %v5745 = vadd.f32 %v5634, %v5721
        %v5746 = vadd.f32 %v5635, %v5723
        %v5747 = vadd.f32 %v5636, %v5727
        %v5748 = vadd.f32 %v5637, %v5729
        %v5749 = vadd.f32 %v5638, %v5731
        %v5750 = vadd.f32 %v5639, %v5733
        %v5751 = vadd.f32 %v5640, %v5737
        %v5752 = vadd.f32 %v5641, %v5739
        %s5753 = scalar_lea.vmem %s1, 1000
        %v5754 = vld [vmem:[%s5753] sm:$0xf]
        %v5755 = vld [vmem:[%s5753 + $0x4] sm:$0xf]
        %v5756 = vld [vmem:[%s5753 + $0x8] sm:$0xf]
        %v5757 = vld [vmem:[%s5753 + $0xc] sm:$0xf]
        %v5758 = vld [vmem:[%s5753 + $0x10] sm:$0xf]
        %v5764 = vunpack.c.l.b16 %v5754
        %v5765 = vunpack.c.l.b16 %v5755
        %v5766 = vunpack.c.l.b16 %v5756
        %v5767 = vunpack.c.l.b16 %v5757
        %v5768 = vunpack.c.l.b16 %v5758
        %v5769 = vpack.c.b16 %v5765, %v5764
        %v5770 = vpack.c.b16 %v5767, %v5766
        %v5771 = vpack.c.b16 %v5768, %v5768
        %5772 = vrot.lane.b32.xlu0 %v250, 78
        %v5773 = vpop.permute.xlu0 %5772
        %5774 = vrot.lane.b32.xlu0 %v251, 78
        %v5775 = vpop.permute.xlu0 %5774
        %vm5776 = vcmask 637952
        %v5777 = vsel %vm5776, %v5773, %v5775
        %v5779 = vsel %vm258, %v5769, 0
        %v5782 = vsel %vm258, %v5770, 0
        %v5785 = vsel %vm258, %v5771, 0
        %v5788 = vsel %vm268, %v5777, 0
        %v5791 = vsel %vm268, %v5775, 0
        %5793 = vmatprep.subr.bf16.mxu0 %v5791
        %5794 = vmatpush1.bf16.msra.mxu0 %v5788
        %5795 = vmatprep.subr.bf16.mxu0 0
        %5796 = vmatpush1.bf16.msra.mxu0 0
        %5797 = vmatprep.subr.bf16.mxu0 0
        %5798 = vmatpush1.bf16.msra.mxu0 0
        %5799 = vmatprep.subr.bf16.mxu0 0
        %5800 = vmatpush1.bf16.msra.mxu0 0
        %5801 = vmatprep.subr.bf16.mxu0 0
        %5802 = vmatpush1.bf16.msra.mxu0 0
        %5803 = vmatprep.subr.bf16.mxu0 0
        %5804 = vmatpush1.bf16.msra.mxu0 0
        %5805 = vmatprep.subr.bf16.mxu0 0
        %5806 = vmatpush1.bf16.msra.mxu0 0
        %5807 = vmatprep.subr.bf16.mxu0 0
        %5808 = vmatpush1.bf16.msra.mxu0 0
        %5809 = vmatprep.subr.bf16.mxu0 0
        %5810 = vmatpush1.bf16.msra.mxu0 0
        %5811 = vmatprep.subr.bf16.mxu0 0
        %5812 = vmatpush1.bf16.msra.mxu0 0
        %5813 = vmatprep.subr.bf16.mxu0 0
        %5814 = vmatpush1.bf16.msra.mxu0 0
        %5815 = vmatprep.subr.bf16.mxu0 0
        %5816 = vmatpush1.bf16.msra.mxu0 0
        %5817 = vmatprep.subr.bf16.mxu0 0
        %5818 = vmatpush1.bf16.msra.mxu0 0
        %5819 = vmatprep.subr.bf16.mxu0 0
        %5820 = vmatpush1.bf16.msra.mxu0 0
        %5821 = vmatprep.subr.bf16.mxu0 0
        %5822 = vmatpush1.bf16.msra.mxu0 0
        %5823 = vmatprep.subr.bf16.mxu0 0
        %5824 = vmatpush1.bf16.msra.mxu0 0
        %5825 = vmatprep.mubr.bf16.mxu0 0
        %5826 = vmatmul.mubr.bf16.gmra.mrb[0].mxu0 %v5779
        %v5827 = vpop.f32.mrb[0].mxu0
        %v5828 = vadd.f32 0.0, %v5827
        %v5829 = vpop.f32.mrb[0].mxu0
        %v5830 = vadd.f32 0.0, %v5829
        %v5831 = vpop.f32.mrb[0].mxu0
        %v5832 = vadd.f32 0.0, %v5831
        %v5833 = vpop.f32.mrb[0].mxu0
        %v5834 = vadd.f32 0.0, %v5833
        %5835 = vmatprep.mubr.bf16.mxu0 0
        %5836 = vmatmul.mubr.bf16.gmra.mrb[0].mxu0 %v5782
        %v5837 = vpop.f32.mrb[0].mxu0
        %v5838 = vadd.f32 0.0, %v5837
        %v5839 = vpop.f32.mrb[0].mxu0
        %v5840 = vadd.f32 0.0, %v5839
        %v5841 = vpop.f32.mrb[0].mxu0
        %v5842 = vadd.f32 0.0, %v5841
        %v5843 = vpop.f32.mrb[0].mxu0
        %v5844 = vadd.f32 0.0, %v5843
        %5845 = vmatprep.mubr.bf16.mxu0 0
        %5846 = vmatmul.mubr.bf16.gmra.mrb[0].mxu0 %v5785
        %v5847 = vpop.f32.mrb[0].mxu0
        %v5848 = vadd.f32 0.0, %v5847
        %v5849 = vpop.f32.mrb[0].mxu0
        %v5850 = vadd.f32 0.0, %v5849
        %v5851 = vpop.f32.mrb[0].mxu0
        %v5852 = vpop.f32.mrb[0].mxu0
        %5853 = vdwg.mxu0
        %v5854 = vadd.f32 %v5743, %v5828
        %v5855 = vadd.f32 %v5744, %v5830
        %v5856 = vadd.f32 %v5745, %v5832
        %v5857 = vadd.f32 %v5746, %v5834
        %v5858 = vadd.f32 %v5747, %v5838
        %v5859 = vadd.f32 %v5748, %v5840
        %v5860 = vadd.f32 %v5749, %v5842
        %v5861 = vadd.f32 %v5750, %v5844
        %v5862 = vadd.f32 %v5751, %v5848
        %v5863 = vadd.f32 %v5752, %v5850
        %s5864 = scalar_lea.vmem %s1, 1020
        %v5865 = vld [vmem:[%s5864] sm:$0xf]
        %v5866 = vld [vmem:[%s5864 + $0x4] sm:$0xf]
        %v5867 = vld [vmem:[%s5864 + $0x8] sm:$0xf]
        %v5868 = vld [vmem:[%s5864 + $0xc] sm:$0xf]
        %v5869 = vld [vmem:[%s5864 + $0x10] sm:$0xf]
        %v5875 = vunpack.c.l.b16 %v5865
        %v5876 = vunpack.c.l.b16 %v5866
        %v5877 = vunpack.c.l.b16 %v5867
        %v5878 = vunpack.c.l.b16 %v5868
        %v5879 = vunpack.c.l.b16 %v5869
        %v5880 = vpack.c.b16 %v5876, %v5875
        %v5881 = vpack.c.b16 %v5878, %v5877
        %v5882 = vpack.c.b16 %v5879, %v5879
        %5883 = vrot.lane.b32.xlu0 %v250, 77
        %v5884 = vpop.permute.xlu0 %5883
        %5885 = vrot.lane.b32.xlu0 %v251, 77
        %v5886 = vpop.permute.xlu0 %5885
        %vm5887 = vcmask 629760
        %v5888 = vsel %vm5887, %v5884, %v5886
        %v5890 = vsel %vm258, %v5880, 0
        %v5893 = vsel %vm258, %v5881, 0
        %v5896 = vsel %vm258, %v5882, 0
        %v5899 = vsel %vm268, %v5888, 0
        %v5902 = vsel %vm268, %v5886, 0
        %5904 = vmatprep.subr.bf16.mxu0 %v5902
        %5905 = vmatpush1.bf16.msra.mxu0 %v5899
        %5906 = vmatprep.subr.bf16.mxu0 0
        %5907 = vmatpush1.bf16.msra.mxu0 0
        %5908 = vmatprep.subr.bf16.mxu0 0
        %5909 = vmatpush1.bf16.msra.mxu0 0
        %5910 = vmatprep.subr.bf16.mxu0 0
        %5911 = vmatpush1.bf16.msra.mxu0 0
        %5912 = vmatprep.subr.bf16.mxu0 0
        %5913 = vmatpush1.bf16.msra.mxu0 0
        %5914 = vmatprep.subr.bf16.mxu0 0
        %5915 = vmatpush1.bf16.msra.mxu0 0
        %5916 = vmatprep.subr.bf16.mxu0 0
        %5917 = vmatpush1.bf16.msra.mxu0 0
        %5918 = vmatprep.subr.bf16.mxu0 0
        %5919 = vmatpush1.bf16.msra.mxu0 0
        %5920 = vmatprep.subr.bf16.mxu0 0
        %5921 = vmatpush1.bf16.msra.mxu0 0
        %5922 = vmatprep.subr.bf16.mxu0 0
        %5923 = vmatpush1.bf16.msra.mxu0 0
        %5924 = vmatprep.subr.bf16.mxu0 0
        %5925 = vmatpush1.bf16.msra.mxu0 0
        %5926 = vmatprep.subr.bf16.mxu0 0
        %5927 = vmatpush1.bf16.msra.mxu0 0
        %5928 = vmatprep.subr.bf16.mxu0 0
        %5929 = vmatpush1.bf16.msra.mxu0 0
        %5930 = vmatprep.subr.bf16.mxu0 0
        %5931 = vmatpush1.bf16.msra.mxu0 0
        %5932 = vmatprep.subr.bf16.mxu0 0
        %5933 = vmatpush1.bf16.msra.mxu0 0
        %5934 = vmatprep.subr.bf16.mxu0 0
        %5935 = vmatpush1.bf16.msra.mxu0 0
        %5936 = vmatprep.mubr.bf16.mxu0 0
        %5937 = vmatmul.mubr.bf16.gmra.mrb[0].mxu0 %v5890
        %v5938 = vpop.f32.mrb[0].mxu0
        %v5939 = vadd.f32 0.0, %v5938
        %v5940 = vpop.f32.mrb[0].mxu0
        %v5941 = vadd.f32 0.0, %v5940
        %v5942 = vpop.f32.mrb[0].mxu0
        %v5943 = vadd.f32 0.0, %v5942
        %v5944 = vpop.f32.mrb[0].mxu0
        %v5945 = vadd.f32 0.0, %v5944
        %5946 = vmatprep.mubr.bf16.mxu0 0
        %5947 = vmatmul.mubr.bf16.gmra.mrb[0].mxu0 %v5893
        %v5948 = vpop.f32.mrb[0].mxu0
        %v5949 = vadd.f32 0.0, %v5948
        %v5950 = vpop.f32.mrb[0].mxu0
        %v5951 = vadd.f32 0.0, %v5950
        %v5952 = vpop.f32.mrb[0].mxu0
        %v5953 = vadd.f32 0.0, %v5952
        %v5954 = vpop.f32.mrb[0].mxu0
        %v5955 = vadd.f32 0.0, %v5954
        %5956 = vmatprep.mubr.bf16.mxu0 0
        %5957 = vmatmul.mubr.bf16.gmra.mrb[0].mxu0 %v5896
        %v5958 = vpop.f32.mrb[0].mxu0
        %v5959 = vadd.f32 0.0, %v5958
        %v5960 = vpop.f32.mrb[0].mxu0
        %v5961 = vadd.f32 0.0, %v5960
        %v5962 = vpop.f32.mrb[0].mxu0
        %v5963 = vpop.f32.mrb[0].mxu0
        %5964 = vdwg.mxu0
        %v5965 = vadd.f32 %v5854, %v5939
        %v5966 = vadd.f32 %v5855, %v5941
        %v5967 = vadd.f32 %v5856, %v5943
        %v5968 = vadd.f32 %v5857, %v5945
        %v5969 = vadd.f32 %v5858, %v5949
        %v5970 = vadd.f32 %v5859, %v5951
        %v5971 = vadd.f32 %v5860, %v5953
        %v5972 = vadd.f32 %v5861, %v5955
        %v5973 = vadd.f32 %v5862, %v5959
        %v5974 = vadd.f32 %v5863, %v5961
        %s5975 = scalar_lea.vmem %s1, 1040
        %v5976 = vld [vmem:[%s5975] sm:$0xf]
        %v5977 = vld [vmem:[%s5975 + $0x4] sm:$0xf]
        %v5978 = vld [vmem:[%s5975 + $0x8] sm:$0xf]
        %v5979 = vld [vmem:[%s5975 + $0xc] sm:$0xf]
        %v5980 = vld [vmem:[%s5975 + $0x10] sm:$0xf]
        %v5986 = vunpack.c.l.b16 %v5976
        %v5987 = vunpack.c.l.b16 %v5977
        %v5988 = vunpack.c.l.b16 %v5978
        %v5989 = vunpack.c.l.b16 %v5979
        %v5990 = vunpack.c.l.b16 %v5980
        %v5991 = vpack.c.b16 %v5987, %v5986
        %v5992 = vpack.c.b16 %v5989, %v5988
        %v5993 = vpack.c.b16 %v5990, %v5990
        %5994 = vrot.lane.b32.xlu0 %v250, 76
        %v5995 = vpop.permute.xlu0 %5994
        %5996 = vrot.lane.b32.xlu0 %v251, 76
        %v5997 = vpop.permute.xlu0 %5996
        %vm5998 = vcmask 621568
        %v5999 = vsel %vm5998, %v5995, %v5997
        %v6001 = vsel %vm258, %v5991, 0
        %v6004 = vsel %vm258, %v5992, 0
        %v6007 = vsel %vm258, %v5993, 0
        %v6010 = vsel %vm268, %v5999, 0
        %v6013 = vsel %vm268, %v5997, 0
        %6015 = vmatprep.subr.bf16.mxu0 %v6013
        %6016 = vmatpush1.bf16.msra.mxu0 %v6010
        %6017 = vmatprep.subr.bf16.mxu0 0
        %6018 = vmatpush1.bf16.msra.mxu0 0
        %6019 = vmatprep.subr.bf16.mxu0 0
        %6020 = vmatpush1.bf16.msra.mxu0 0
        %6021 = vmatprep.subr.bf16.mxu0 0
        %6022 = vmatpush1.bf16.msra.mxu0 0
        %6023 = vmatprep.subr.bf16.mxu0 0
        %6024 = vmatpush1.bf16.msra.mxu0 0
        %6025 = vmatprep.subr.bf16.mxu0 0
        %6026 = vmatpush1.bf16.msra.mxu0 0
        %6027 = vmatprep.subr.bf16.mxu0 0
        %6028 = vmatpush1.bf16.msra.mxu0 0
        %6029 = vmatprep.subr.bf16.mxu0 0
        %6030 = vmatpush1.bf16.msra.mxu0 0
        %6031 = vmatprep.subr.bf16.mxu0 0
        %6032 = vmatpush1.bf16.msra.mxu0 0
        %6033 = vmatprep.subr.bf16.mxu0 0
        %6034 = vmatpush1.bf16.msra.mxu0 0
        %6035 = vmatprep.subr.bf16.mxu0 0
        %6036 = vmatpush1.bf16.msra.mxu0 0
        %6037 = vmatprep.subr.bf16.mxu0 0
        %6038 = vmatpush1.bf16.msra.mxu0 0
        %6039 = vmatprep.subr.bf16.mxu0 0
        %6040 = vmatpush1.bf16.msra.mxu0 0
        %6041 = vmatprep.subr.bf16.mxu0 0
        %6042 = vmatpush1.bf16.msra.mxu0 0
        %6043 = vmatprep.subr.bf16.mxu0 0
        %6044 = vmatpush1.bf16.msra.mxu0 0
        %6045 = vmatprep.subr.bf16.mxu0 0
        %6046 = vmatpush1.bf16.msra.mxu0 0
        %6047 = vmatprep.mubr.bf16.mxu0 0
        %6048 = vmatmul.mubr.bf16.gmra.mrb[0].mxu0 %v6001
        %v6049 = vpop.f32.mrb[0].mxu0
        %v6050 = vadd.f32 0.0, %v6049
        %v6051 = vpop.f32.mrb[0].mxu0
        %v6052 = vadd.f32 0.0, %v6051
        %v6053 = vpop.f32.mrb[0].mxu0
        %v6054 = vadd.f32 0.0, %v6053
        %v6055 = vpop.f32.mrb[0].mxu0
        %v6056 = vadd.f32 0.0, %v6055
        %6057 = vmatprep.mubr.bf16.mxu0 0
        %6058 = vmatmul.mubr.bf16.gmra.mrb[0].mxu0 %v6004
        %v6059 = vpop.f32.mrb[0].mxu0
        %v6060 = vadd.f32 0.0, %v6059
        %v6061 = vpop.f32.mrb[0].mxu0
        %v6062 = vadd.f32 0.0, %v6061
        %v6063 = vpop.f32.mrb[0].mxu0
        %v6064 = vadd.f32 0.0, %v6063
        %v6065 = vpop.f32.mrb[0].mxu0
        %v6066 = vadd.f32 0.0, %v6065
        %6067 = vmatprep.mubr.bf16.mxu0 0
        %6068 = vmatmul.mubr.bf16.gmra.mrb[0].mxu0 %v6007
        %v6069 = vpop.f32.mrb[0].mxu0
        %v6070 = vadd.f32 0.0, %v6069
        %v6071 = vpop.f32.mrb[0].mxu0
        %v6072 = vadd.f32 0.0, %v6071
        %v6073 = vpop.f32.mrb[0].mxu0
        %v6074 = vpop.f32.mrb[0].mxu0
        %6075 = vdwg.mxu0
        %v6076 = vadd.f32 %v5965, %v6050
        %v6077 = vadd.f32 %v5966, %v6052
        %v6078 = vadd.f32 %v5967, %v6054
        %v6079 = vadd.f32 %v5968, %v6056
        %v6080 = vadd.f32 %v5969, %v6060
        %v6081 = vadd.f32 %v5970, %v6062
        %v6082 = vadd.f32 %v5971, %v6064
        %v6083 = vadd.f32 %v5972, %v6066
        %v6084 = vadd.f32 %v5973, %v6070
        %v6085 = vadd.f32 %v5974, %v6072
        %s6086 = scalar_lea.vmem %s1, 1060
        %v6087 = vld [vmem:[%s6086] sm:$0xf]
        %v6088 = vld [vmem:[%s6086 + $0x4] sm:$0xf]
        %v6089 = vld [vmem:[%s6086 + $0x8] sm:$0xf]
        %v6090 = vld [vmem:[%s6086 + $0xc] sm:$0xf]
        %v6091 = vld [vmem:[%s6086 + $0x10] sm:$0xf]
        %v6097 = vunpack.c.l.b16 %v6087
        %v6098 = vunpack.c.l.b16 %v6088
        %v6099 = vunpack.c.l.b16 %v6089
        %v6100 = vunpack.c.l.b16 %v6090
        %v6101 = vunpack.c.l.b16 %v6091
        %v6102 = vpack.c.b16 %v6098, %v6097
        %v6103 = vpack.c.b16 %v6100, %v6099
        %v6104 = vpack.c.b16 %v6101, %v6101
        %6105 = vrot.lane.b32.xlu0 %v250, 75
        %v6106 = vpop.permute.xlu0 %6105
        %6107 = vrot.lane.b32.xlu0 %v251, 75
        %v6108 = vpop.permute.xlu0 %6107
        %vm6109 = vcmask 613376
        %v6110 = vsel %vm6109, %v6106, %v6108
        %v6112 = vsel %vm258, %v6102, 0
        %v6115 = vsel %vm258, %v6103, 0
        %v6118 = vsel %vm258, %v6104, 0
        %v6121 = vsel %vm268, %v6110, 0
        %v6124 = vsel %vm268, %v6108, 0
        %6126 = vmatprep.subr.bf16.mxu0 %v6124
        %6127 = vmatpush1.bf16.msra.mxu0 %v6121
        %6128 = vmatprep.subr.bf16.mxu0 0
        %6129 = vmatpush1.bf16.msra.mxu0 0
        %6130 = vmatprep.subr.bf16.mxu0 0
        %6131 = vmatpush1.bf16.msra.mxu0 0
        %6132 = vmatprep.subr.bf16.mxu0 0
        %6133 = vmatpush1.bf16.msra.mxu0 0
        %6134 = vmatprep.subr.bf16.mxu0 0
        %6135 = vmatpush1.bf16.msra.mxu0 0
        %6136 = vmatprep.subr.bf16.mxu0 0
        %6137 = vmatpush1.bf16.msra.mxu0 0
        %6138 = vmatprep.subr.bf16.mxu0 0
        %6139 = vmatpush1.bf16.msra.mxu0 0
        %6140 = vmatprep.subr.bf16.mxu0 0
        %6141 = vmatpush1.bf16.msra.mxu0 0
        %6142 = vmatprep.subr.bf16.mxu0 0
        %6143 = vmatpush1.bf16.msra.mxu0 0
        %6144 = vmatprep.subr.bf16.mxu0 0
        %6145 = vmatpush1.bf16.msra.mxu0 0
        %6146 = vmatprep.subr.bf16.mxu0 0
        %6147 = vmatpush1.bf16.msra.mxu0 0
        %6148 = vmatprep.subr.bf16.mxu0 0
        %6149 = vmatpush1.bf16.msra.mxu0 0
        %6150 = vmatprep.subr.bf16.mxu0 0
        %6151 = vmatpush1.bf16.msra.mxu0 0
        %6152 = vmatprep.subr.bf16.mxu0 0
        %6153 = vmatpush1.bf16.msra.mxu0 0
        %6154 = vmatprep.subr.bf16.mxu0 0
        %6155 = vmatpush1.bf16.msra.mxu0 0
        %6156 = vmatprep.subr.bf16.mxu0 0
        %6157 = vmatpush1.bf16.msra.mxu0 0
        %6158 = vmatprep.mubr.bf16.mxu0 0
        %6159 = vmatmul.mubr.bf16.gmra.mrb[0].mxu0 %v6112
        %v6160 = vpop.f32.mrb[0].mxu0
        %v6161 = vadd.f32 0.0, %v6160
        %v6162 = vpop.f32.mrb[0].mxu0
        %v6163 = vadd.f32 0.0, %v6162
        %v6164 = vpop.f32.mrb[0].mxu0
        %v6165 = vadd.f32 0.0, %v6164
        %v6166 = vpop.f32.mrb[0].mxu0
        %v6167 = vadd.f32 0.0, %v6166
        %6168 = vmatprep.mubr.bf16.mxu0 0
        %6169 = vmatmul.mubr.bf16.gmra.mrb[0].mxu0 %v6115
        %v6170 = vpop.f32.mrb[0].mxu0
        %v6171 = vadd.f32 0.0, %v6170
        %v6172 = vpop.f32.mrb[0].mxu0
        %v6173 = vadd.f32 0.0, %v6172
        %v6174 = vpop.f32.mrb[0].mxu0
        %v6175 = vadd.f32 0.0, %v6174
        %v6176 = vpop.f32.mrb[0].mxu0
        %v6177 = vadd.f32 0.0, %v6176
        %6178 = vmatprep.mubr.bf16.mxu0 0
        %6179 = vmatmul.mubr.bf16.gmra.mrb[0].mxu0 %v6118
        %v6180 = vpop.f32.mrb[0].mxu0
        %v6181 = vadd.f32 0.0, %v6180
        %v6182 = vpop.f32.mrb[0].mxu0
        %v6183 = vadd.f32 0.0, %v6182
        %v6184 = vpop.f32.mrb[0].mxu0
        %v6185 = vpop.f32.mrb[0].mxu0
        %6186 = vdwg.mxu0
        %v6187 = vadd.f32 %v6076, %v6161
        %v6188 = vadd.f32 %v6077, %v6163
        %v6189 = vadd.f32 %v6078, %v6165
        %v6190 = vadd.f32 %v6079, %v6167
        %v6191 = vadd.f32 %v6080, %v6171
        %v6192 = vadd.f32 %v6081, %v6173
        %v6193 = vadd.f32 %v6082, %v6175
        %v6194 = vadd.f32 %v6083, %v6177
        %v6195 = vadd.f32 %v6084, %v6181
        %v6196 = vadd.f32 %v6085, %v6183
        %s6197 = scalar_lea.vmem %s1, 1080
        %v6198 = vld [vmem:[%s6197] sm:$0xf]
        %v6199 = vld [vmem:[%s6197 + $0x4] sm:$0xf]
        %v6200 = vld [vmem:[%s6197 + $0x8] sm:$0xf]
        %v6201 = vld [vmem:[%s6197 + $0xc] sm:$0xf]
        %v6202 = vld [vmem:[%s6197 + $0x10] sm:$0xf]
        %v6208 = vunpack.c.l.b16 %v6198
        %v6209 = vunpack.c.l.b16 %v6199
        %v6210 = vunpack.c.l.b16 %v6200
        %v6211 = vunpack.c.l.b16 %v6201
        %v6212 = vunpack.c.l.b16 %v6202
        %v6213 = vpack.c.b16 %v6209, %v6208
        %v6214 = vpack.c.b16 %v6211, %v6210
        %v6215 = vpack.c.b16 %v6212, %v6212
        %6216 = vrot.lane.b32.xlu0 %v250, 74
        %v6217 = vpop.permute.xlu0 %6216
        %6218 = vrot.lane.b32.xlu0 %v251, 74
        %v6219 = vpop.permute.xlu0 %6218
        %vm6220 = vcmask 605184
        %v6221 = vsel %vm6220, %v6217, %v6219
        %v6223 = vsel %vm258, %v6213, 0
        %v6226 = vsel %vm258, %v6214, 0
        %v6229 = vsel %vm258, %v6215, 0
        %v6232 = vsel %vm268, %v6221, 0
        %v6235 = vsel %vm268, %v6219, 0
        %6237 = vmatprep.subr.bf16.mxu0 %v6235
        %6238 = vmatpush1.bf16.msra.mxu0 %v6232
        %6239 = vmatprep.subr.bf16.mxu0 0
        %6240 = vmatpush1.bf16.msra.mxu0 0
        %6241 = vmatprep.subr.bf16.mxu0 0
        %6242 = vmatpush1.bf16.msra.mxu0 0
        %6243 = vmatprep.subr.bf16.mxu0 0
        %6244 = vmatpush1.bf16.msra.mxu0 0
        %6245 = vmatprep.subr.bf16.mxu0 0
        %6246 = vmatpush1.bf16.msra.mxu0 0
        %6247 = vmatprep.subr.bf16.mxu0 0
        %6248 = vmatpush1.bf16.msra.mxu0 0
        %6249 = vmatprep.subr.bf16.mxu0 0
        %6250 = vmatpush1.bf16.msra.mxu0 0
        %6251 = vmatprep.subr.bf16.mxu0 0
        %6252 = vmatpush1.bf16.msra.mxu0 0
        %6253 = vmatprep.subr.bf16.mxu0 0
        %6254 = vmatpush1.bf16.msra.mxu0 0
        %6255 = vmatprep.subr.bf16.mxu0 0
        %6256 = vmatpush1.bf16.msra.mxu0 0
        %6257 = vmatprep.subr.bf16.mxu0 0
        %6258 = vmatpush1.bf16.msra.mxu0 0
        %6259 = vmatprep.subr.bf16.mxu0 0
        %6260 = vmatpush1.bf16.msra.mxu0 0
        %6261 = vmatprep.subr.bf16.mxu0 0
        %6262 = vmatpush1.bf16.msra.mxu0 0
        %6263 = vmatprep.subr.bf16.mxu0 0
        %6264 = vmatpush1.bf16.msra.mxu0 0
        %6265 = vmatprep.subr.bf16.mxu0 0
        %6266 = vmatpush1.bf16.msra.mxu0 0
        %6267 = vmatprep.subr.bf16.mxu0 0
        %6268 = vmatpush1.bf16.msra.mxu0 0
        %6269 = vmatprep.mubr.bf16.mxu0 0
        %6270 = vmatmul.mubr.bf16.gmra.mrb[0].mxu0 %v6223
        %v6271 = vpop.f32.mrb[0].mxu0
        %v6272 = vadd.f32 0.0, %v6271
        %v6273 = vpop.f32.mrb[0].mxu0
        %v6274 = vadd.f32 0.0, %v6273
        %v6275 = vpop.f32.mrb[0].mxu0
        %v6276 = vadd.f32 0.0, %v6275
        %v6277 = vpop.f32.mrb[0].mxu0
        %v6278 = vadd.f32 0.0, %v6277
        %6279 = vmatprep.mubr.bf16.mxu0 0
        %6280 = vmatmul.mubr.bf16.gmra.mrb[0].mxu0 %v6226
        %v6281 = vpop.f32.mrb[0].mxu0
        %v6282 = vadd.f32 0.0, %v6281
        %v6283 = vpop.f32.mrb[0].mxu0
        %v6284 = vadd.f32 0.0, %v6283
        %v6285 = vpop.f32.mrb[0].mxu0
        %v6286 = vadd.f32 0.0, %v6285
        %v6287 = vpop.f32.mrb[0].mxu0
        %v6288 = vadd.f32 0.0, %v6287
        %6289 = vmatprep.mubr.bf16.mxu0 0
        %6290 = vmatmul.mubr.bf16.gmra.mrb[0].mxu0 %v6229
        %v6291 = vpop.f32.mrb[0].mxu0
        %v6292 = vadd.f32 0.0, %v6291
        %v6293 = vpop.f32.mrb[0].mxu0
        %v6294 = vadd.f32 0.0, %v6293
        %v6295 = vpop.f32.mrb[0].mxu0
        %v6296 = vpop.f32.mrb[0].mxu0
        %6297 = vdwg.mxu0
        %v6298 = vadd.f32 %v6187, %v6272
        %v6299 = vadd.f32 %v6188, %v6274
        %v6300 = vadd.f32 %v6189, %v6276
        %v6301 = vadd.f32 %v6190, %v6278
        %v6302 = vadd.f32 %v6191, %v6282
        %v6303 = vadd.f32 %v6192, %v6284
        %v6304 = vadd.f32 %v6193, %v6286
        %v6305 = vadd.f32 %v6194, %v6288
        %v6306 = vadd.f32 %v6195, %v6292
        %v6307 = vadd.f32 %v6196, %v6294
        %s6308 = scalar_lea.vmem %s1, 1100
        %v6309 = vld [vmem:[%s6308] sm:$0xf]
        %v6310 = vld [vmem:[%s6308 + $0x4] sm:$0xf]
        %v6311 = vld [vmem:[%s6308 + $0x8] sm:$0xf]
        %v6312 = vld [vmem:[%s6308 + $0xc] sm:$0xf]
        %v6313 = vld [vmem:[%s6308 + $0x10] sm:$0xf]
        %v6319 = vunpack.c.l.b16 %v6309
        %v6320 = vunpack.c.l.b16 %v6310
        %v6321 = vunpack.c.l.b16 %v6311
        %v6322 = vunpack.c.l.b16 %v6312
        %v6323 = vunpack.c.l.b16 %v6313
        %v6324 = vpack.c.b16 %v6320, %v6319
        %v6325 = vpack.c.b16 %v6322, %v6321
        %v6326 = vpack.c.b16 %v6323, %v6323
        %6327 = vrot.lane.b32.xlu0 %v250, 73
        %v6328 = vpop.permute.xlu0 %6327
        %6329 = vrot.lane.b32.xlu0 %v251, 73
        %v6330 = vpop.permute.xlu0 %6329
        %vm6331 = vcmask 596992
        %v6332 = vsel %vm6331, %v6328, %v6330
        %v6334 = vsel %vm258, %v6324, 0
        %v6337 = vsel %vm258, %v6325, 0
        %v6340 = vsel %vm258, %v6326, 0
        %v6343 = vsel %vm268, %v6332, 0
        %v6346 = vsel %vm268, %v6330, 0
        %6348 = vmatprep.subr.bf16.mxu0 %v6346
        %6349 = vmatpush1.bf16.msra.mxu0 %v6343
        %6350 = vmatprep.subr.bf16.mxu0 0
        %6351 = vmatpush1.bf16.msra.mxu0 0
        %6352 = vmatprep.subr.bf16.mxu0 0
        %6353 = vmatpush1.bf16.msra.mxu0 0
        %6354 = vmatprep.subr.bf16.mxu0 0
        %6355 = vmatpush1.bf16.msra.mxu0 0
        %6356 = vmatprep.subr.bf16.mxu0 0
        %6357 = vmatpush1.bf16.msra.mxu0 0
        %6358 = vmatprep.subr.bf16.mxu0 0
        %6359 = vmatpush1.bf16.msra.mxu0 0
        %6360 = vmatprep.subr.bf16.mxu0 0
        %6361 = vmatpush1.bf16.msra.mxu0 0
        %6362 = vmatprep.subr.bf16.mxu0 0
        %6363 = vmatpush1.bf16.msra.mxu0 0
        %6364 = vmatprep.subr.bf16.mxu0 0
        %6365 = vmatpush1.bf16.msra.mxu0 0
        %6366 = vmatprep.subr.bf16.mxu0 0
        %6367 = vmatpush1.bf16.msra.mxu0 0
        %6368 = vmatprep.subr.bf16.mxu0 0
        %6369 = vmatpush1.bf16.msra.mxu0 0
        %6370 = vmatprep.subr.bf16.mxu0 0
        %6371 = vmatpush1.bf16.msra.mxu0 0
        %6372 = vmatprep.subr.bf16.mxu0 0
        %6373 = vmatpush1.bf16.msra.mxu0 0
        %6374 = vmatprep.subr.bf16.mxu0 0
        %6375 = vmatpush1.bf16.msra.mxu0 0
        %6376 = vmatprep.subr.bf16.mxu0 0
        %6377 = vmatpush1.bf16.msra.mxu0 0
        %6378 = vmatprep.subr.bf16.mxu0 0
        %6379 = vmatpush1.bf16.msra.mxu0 0
        %6380 = vmatprep.mubr.bf16.mxu0 0
        %6381 = vmatmul.mubr.bf16.gmra.mrb[0].mxu0 %v6334
        %v6382 = vpop.f32.mrb[0].mxu0
        %v6383 = vadd.f32 0.0, %v6382
        %v6384 = vpop.f32.mrb[0].mxu0
        %v6385 = vadd.f32 0.0, %v6384
        %v6386 = vpop.f32.mrb[0].mxu0
        %v6387 = vadd.f32 0.0, %v6386
        %v6388 = vpop.f32.mrb[0].mxu0
        %v6389 = vadd.f32 0.0, %v6388
        %6390 = vmatprep.mubr.bf16.mxu0 0
        %6391 = vmatmul.mubr.bf16.gmra.mrb[0].mxu0 %v6337
        %v6392 = vpop.f32.mrb[0].mxu0
        %v6393 = vadd.f32 0.0, %v6392
        %v6394 = vpop.f32.mrb[0].mxu0
        %v6395 = vadd.f32 0.0, %v6394
        %v6396 = vpop.f32.mrb[0].mxu0
        %v6397 = vadd.f32 0.0, %v6396
        %v6398 = vpop.f32.mrb[0].mxu0
        %v6399 = vadd.f32 0.0, %v6398
        %6400 = vmatprep.mubr.bf16.mxu0 0
        %6401 = vmatmul.mubr.bf16.gmra.mrb[0].mxu0 %v6340
        %v6402 = vpop.f32.mrb[0].mxu0
        %v6403 = vadd.f32 0.0, %v6402
        %v6404 = vpop.f32.mrb[0].mxu0
        %v6405 = vadd.f32 0.0, %v6404
        %v6406 = vpop.f32.mrb[0].mxu0
        %v6407 = vpop.f32.mrb[0].mxu0
        %6408 = vdwg.mxu0
        %v6409 = vadd.f32 %v6298, %v6383
        %v6410 = vadd.f32 %v6299, %v6385
        %v6411 = vadd.f32 %v6300, %v6387
        %v6412 = vadd.f32 %v6301, %v6389
        %v6413 = vadd.f32 %v6302, %v6393
        %v6414 = vadd.f32 %v6303, %v6395
        %v6415 = vadd.f32 %v6304, %v6397
        %v6416 = vadd.f32 %v6305, %v6399
        %v6417 = vadd.f32 %v6306, %v6403
        %v6418 = vadd.f32 %v6307, %v6405
        %s6419 = scalar_lea.vmem %s1, 1120
        %v6420 = vld [vmem:[%s6419] sm:$0xf]
        %v6421 = vld [vmem:[%s6419 + $0x4] sm:$0xf]
        %v6422 = vld [vmem:[%s6419 + $0x8] sm:$0xf]
        %v6423 = vld [vmem:[%s6419 + $0xc] sm:$0xf]
        %v6424 = vld [vmem:[%s6419 + $0x10] sm:$0xf]
        %v6430 = vunpack.c.l.b16 %v6420
        %v6431 = vunpack.c.l.b16 %v6421
        %v6432 = vunpack.c.l.b16 %v6422
        %v6433 = vunpack.c.l.b16 %v6423
        %v6434 = vunpack.c.l.b16 %v6424
        %v6435 = vpack.c.b16 %v6431, %v6430
        %v6436 = vpack.c.b16 %v6433, %v6432
        %v6437 = vpack.c.b16 %v6434, %v6434
        %6438 = vrot.lane.b32.xlu0 %v250, 72
        %v6439 = vpop.permute.xlu0 %6438
        %6440 = vrot.lane.b32.xlu0 %v251, 72
        %v6441 = vpop.permute.xlu0 %6440
        %vm6442 = vcmask 588800
        %v6443 = vsel %vm6442, %v6439, %v6441
        %v6445 = vsel %vm258, %v6435, 0
        %v6448 = vsel %vm258, %v6436, 0
        %v6451 = vsel %vm258, %v6437, 0
        %v6454 = vsel %vm268, %v6443, 0
        %v6457 = vsel %vm268, %v6441, 0
        %6459 = vmatprep.subr.bf16.mxu0 %v6457
        %6460 = vmatpush1.bf16.msra.mxu0 %v6454
        %6461 = vmatprep.subr.bf16.mxu0 0
        %6462 = vmatpush1.bf16.msra.mxu0 0
        %6463 = vmatprep.subr.bf16.mxu0 0
        %6464 = vmatpush1.bf16.msra.mxu0 0
        %6465 = vmatprep.subr.bf16.mxu0 0
        %6466 = vmatpush1.bf16.msra.mxu0 0
        %6467 = vmatprep.subr.bf16.mxu0 0
        %6468 = vmatpush1.bf16.msra.mxu0 0
        %6469 = vmatprep.subr.bf16.mxu0 0
        %6470 = vmatpush1.bf16.msra.mxu0 0
        %6471 = vmatprep.subr.bf16.mxu0 0
        %6472 = vmatpush1.bf16.msra.mxu0 0
        %6473 = vmatprep.subr.bf16.mxu0 0
        %6474 = vmatpush1.bf16.msra.mxu0 0
        %6475 = vmatprep.subr.bf16.mxu0 0
        %6476 = vmatpush1.bf16.msra.mxu0 0
        %6477 = vmatprep.subr.bf16.mxu0 0
        %6478 = vmatpush1.bf16.msra.mxu0 0
        %6479 = vmatprep.subr.bf16.mxu0 0
        %6480 = vmatpush1.bf16.msra.mxu0 0
        %6481 = vmatprep.subr.bf16.mxu0 0
        %6482 = vmatpush1.bf16.msra.mxu0 0
        %6483 = vmatprep.subr.bf16.mxu0 0
        %6484 = vmatpush1.bf16.msra.mxu0 0
        %6485 = vmatprep.subr.bf16.mxu0 0
        %6486 = vmatpush1.bf16.msra.mxu0 0
        %6487 = vmatprep.subr.bf16.mxu0 0
        %6488 = vmatpush1.bf16.msra.mxu0 0
        %6489 = vmatprep.subr.bf16.mxu0 0
        %6490 = vmatpush1.bf16.msra.mxu0 0
        %6491 = vmatprep.mubr.bf16.mxu0 0
        %6492 = vmatmul.mubr.bf16.gmra.mrb[0].mxu0 %v6445
        %v6493 = vpop.f32.mrb[0].mxu0
        %v6494 = vadd.f32 0.0, %v6493
        %v6495 = vpop.f32.mrb[0].mxu0
        %v6496 = vadd.f32 0.0, %v6495
        %v6497 = vpop.f32.mrb[0].mxu0
        %v6498 = vadd.f32 0.0, %v6497
        %v6499 = vpop.f32.mrb[0].mxu0
        %v6500 = vadd.f32 0.0, %v6499
        %6501 = vmatprep.mubr.bf16.mxu0 0
        %6502 = vmatmul.mubr.bf16.gmra.mrb[0].mxu0 %v6448
        %v6503 = vpop.f32.mrb[0].mxu0
        %v6504 = vadd.f32 0.0, %v6503
        %v6505 = vpop.f32.mrb[0].mxu0
        %v6506 = vadd.f32 0.0, %v6505
        %v6507 = vpop.f32.mrb[0].mxu0
        %v6508 = vadd.f32 0.0, %v6507
        %v6509 = vpop.f32.mrb[0].mxu0
        %v6510 = vadd.f32 0.0, %v6509
        %6511 = vmatprep.mubr.bf16.mxu0 0
        %6512 = vmatmul.mubr.bf16.gmra.mrb[0].mxu0 %v6451
        %v6513 = vpop.f32.mrb[0].mxu0
        %v6514 = vadd.f32 0.0, %v6513
        %v6515 = vpop.f32.mrb[0].mxu0
        %v6516 = vadd.f32 0.0, %v6515
        %v6517 = vpop.f32.mrb[0].mxu0
        %v6518 = vpop.f32.mrb[0].mxu0
        %6519 = vdwg.mxu0
        %v6520 = vadd.f32 %v6409, %v6494
        %v6521 = vadd.f32 %v6410, %v6496
        %v6522 = vadd.f32 %v6411, %v6498
        %v6523 = vadd.f32 %v6412, %v6500
        %v6524 = vadd.f32 %v6413, %v6504
        %v6525 = vadd.f32 %v6414, %v6506
        %v6526 = vadd.f32 %v6415, %v6508
        %v6527 = vadd.f32 %v6416, %v6510
        %v6528 = vadd.f32 %v6417, %v6514
        %v6529 = vadd.f32 %v6418, %v6516
        %s6530 = scalar_lea.vmem %s1, 1140
        %v6531 = vld [vmem:[%s6530] sm:$0xf]
        %v6532 = vld [vmem:[%s6530 + $0x4] sm:$0xf]
        %v6533 = vld [vmem:[%s6530 + $0x8] sm:$0xf]
        %v6534 = vld [vmem:[%s6530 + $0xc] sm:$0xf]
        %v6535 = vld [vmem:[%s6530 + $0x10] sm:$0xf]
        %v6541 = vunpack.c.l.b16 %v6531
        %v6542 = vunpack.c.l.b16 %v6532
        %v6543 = vunpack.c.l.b16 %v6533
        %v6544 = vunpack.c.l.b16 %v6534
        %v6545 = vunpack.c.l.b16 %v6535
        %v6546 = vpack.c.b16 %v6542, %v6541
        %v6547 = vpack.c.b16 %v6544, %v6543
        %v6548 = vpack.c.b16 %v6545, %v6545
        %6549 = vrot.lane.b32.xlu0 %v250, 71
        %v6550 = vpop.permute.xlu0 %6549
        %6551 = vrot.lane.b32.xlu0 %v251, 71
        %v6552 = vpop.permute.xlu0 %6551
        %vm6553 = vcmask 580608
        %v6554 = vsel %vm6553, %v6550, %v6552
        %v6556 = vsel %vm258, %v6546, 0
        %v6559 = vsel %vm258, %v6547, 0
        %v6562 = vsel %vm258, %v6548, 0
        %v6565 = vsel %vm268, %v6554, 0
        %v6568 = vsel %vm268, %v6552, 0
        %6570 = vmatprep.subr.bf16.mxu0 %v6568
        %6571 = vmatpush1.bf16.msra.mxu0 %v6565
        %6572 = vmatprep.subr.bf16.mxu0 0
        %6573 = vmatpush1.bf16.msra.mxu0 0
        %6574 = vmatprep.subr.bf16.mxu0 0
        %6575 = vmatpush1.bf16.msra.mxu0 0
        %6576 = vmatprep.subr.bf16.mxu0 0
        %6577 = vmatpush1.bf16.msra.mxu0 0
        %6578 = vmatprep.subr.bf16.mxu0 0
        %6579 = vmatpush1.bf16.msra.mxu0 0
        %6580 = vmatprep.subr.bf16.mxu0 0
        %6581 = vmatpush1.bf16.msra.mxu0 0
        %6582 = vmatprep.subr.bf16.mxu0 0
        %6583 = vmatpush1.bf16.msra.mxu0 0
        %6584 = vmatprep.subr.bf16.mxu0 0
        %6585 = vmatpush1.bf16.msra.mxu0 0
        %6586 = vmatprep.subr.bf16.mxu0 0
        %6587 = vmatpush1.bf16.msra.mxu0 0
        %6588 = vmatprep.subr.bf16.mxu0 0
        %6589 = vmatpush1.bf16.msra.mxu0 0
        %6590 = vmatprep.subr.bf16.mxu0 0
        %6591 = vmatpush1.bf16.msra.mxu0 0
        %6592 = vmatprep.subr.bf16.mxu0 0
        %6593 = vmatpush1.bf16.msra.mxu0 0
        %6594 = vmatprep.subr.bf16.mxu0 0
        %6595 = vmatpush1.bf16.msra.mxu0 0
        %6596 = vmatprep.subr.bf16.mxu0 0
        %6597 = vmatpush1.bf16.msra.mxu0 0
        %6598 = vmatprep.subr.bf16.mxu0 0
        %6599 = vmatpush1.bf16.msra.mxu0 0
        %6600 = vmatprep.subr.bf16.mxu0 0
        %6601 = vmatpush1.bf16.msra.mxu0 0
        %6602 = vmatprep.mubr.bf16.mxu0 0
        %6603 = vmatmul.mubr.bf16.gmra.mrb[0].mxu0 %v6556
        %v6604 = vpop.f32.mrb[0].mxu0
        %v6605 = vadd.f32 0.0, %v6604
        %v6606 = vpop.f32.mrb[0].mxu0
        %v6607 = vadd.f32 0.0, %v6606
        %v6608 = vpop.f32.mrb[0].mxu0
        %v6609 = vadd.f32 0.0, %v6608
        %v6610 = vpop.f32.mrb[0].mxu0
        %v6611 = vadd.f32 0.0, %v6610
        %6612 = vmatprep.mubr.bf16.mxu0 0
        %6613 = vmatmul.mubr.bf16.gmra.mrb[0].mxu0 %v6559
        %v6614 = vpop.f32.mrb[0].mxu0
        %v6615 = vadd.f32 0.0, %v6614
        %v6616 = vpop.f32.mrb[0].mxu0
        %v6617 = vadd.f32 0.0, %v6616
        %v6618 = vpop.f32.mrb[0].mxu0
        %v6619 = vadd.f32 0.0, %v6618
        %v6620 = vpop.f32.mrb[0].mxu0
        %v6621 = vadd.f32 0.0, %v6620
        %6622 = vmatprep.mubr.bf16.mxu0 0
        %6623 = vmatmul.mubr.bf16.gmra.mrb[0].mxu0 %v6562
        %v6624 = vpop.f32.mrb[0].mxu0
        %v6625 = vadd.f32 0.0, %v6624
        %v6626 = vpop.f32.mrb[0].mxu0
        %v6627 = vadd.f32 0.0, %v6626
        %v6628 = vpop.f32.mrb[0].mxu0
        %v6629 = vpop.f32.mrb[0].mxu0
        %6630 = vdwg.mxu0
        %v6631 = vadd.f32 %v6520, %v6605
        %v6632 = vadd.f32 %v6521, %v6607
        %v6633 = vadd.f32 %v6522, %v6609
        %v6634 = vadd.f32 %v6523, %v6611
        %v6635 = vadd.f32 %v6524, %v6615
        %v6636 = vadd.f32 %v6525, %v6617
        %v6637 = vadd.f32 %v6526, %v6619
        %v6638 = vadd.f32 %v6527, %v6621
        %v6639 = vadd.f32 %v6528, %v6625
        %v6640 = vadd.f32 %v6529, %v6627
        %s6641 = scalar_lea.vmem %s1, 1160
        %v6642 = vld [vmem:[%s6641] sm:$0xf]
        %v6643 = vld [vmem:[%s6641 + $0x4] sm:$0xf]
        %v6644 = vld [vmem:[%s6641 + $0x8] sm:$0xf]
        %v6645 = vld [vmem:[%s6641 + $0xc] sm:$0xf]
        %v6646 = vld [vmem:[%s6641 + $0x10] sm:$0xf]
        %v6652 = vunpack.c.l.b16 %v6642
        %v6653 = vunpack.c.l.b16 %v6643
        %v6654 = vunpack.c.l.b16 %v6644
        %v6655 = vunpack.c.l.b16 %v6645
        %v6656 = vunpack.c.l.b16 %v6646
        %v6657 = vpack.c.b16 %v6653, %v6652
        %v6658 = vpack.c.b16 %v6655, %v6654
        %v6659 = vpack.c.b16 %v6656, %v6656
        %6660 = vrot.lane.b32.xlu0 %v250, 70
        %v6661 = vpop.permute.xlu0 %6660
        %6662 = vrot.lane.b32.xlu0 %v251, 70
        %v6663 = vpop.permute.xlu0 %6662
        %vm6664 = vcmask 572416
        %v6665 = vsel %vm6664, %v6661, %v6663
        %v6667 = vsel %vm258, %v6657, 0
        %v6670 = vsel %vm258, %v6658, 0
        %v6673 = vsel %vm258, %v6659, 0
        %v6676 = vsel %vm268, %v6665, 0
        %v6679 = vsel %vm268, %v6663, 0
        %6681 = vmatprep.subr.bf16.mxu0 %v6679
        %6682 = vmatpush1.bf16.msra.mxu0 %v6676
        %6683 = vmatprep.subr.bf16.mxu0 0
        %6684 = vmatpush1.bf16.msra.mxu0 0
        %6685 = vmatprep.subr.bf16.mxu0 0
        %6686 = vmatpush1.bf16.msra.mxu0 0
        %6687 = vmatprep.subr.bf16.mxu0 0
        %6688 = vmatpush1.bf16.msra.mxu0 0
        %6689 = vmatprep.subr.bf16.mxu0 0
        %6690 = vmatpush1.bf16.msra.mxu0 0
        %6691 = vmatprep.subr.bf16.mxu0 0
        %6692 = vmatpush1.bf16.msra.mxu0 0
        %6693 = vmatprep.subr.bf16.mxu0 0
        %6694 = vmatpush1.bf16.msra.mxu0 0
        %6695 = vmatprep.subr.bf16.mxu0 0
        %6696 = vmatpush1.bf16.msra.mxu0 0
        %6697 = vmatprep.subr.bf16.mxu0 0
        %6698 = vmatpush1.bf16.msra.mxu0 0
        %6699 = vmatprep.subr.bf16.mxu0 0
        %6700 = vmatpush1.bf16.msra.mxu0 0
        %6701 = vmatprep.subr.bf16.mxu0 0
        %6702 = vmatpush1.bf16.msra.mxu0 0
        %6703 = vmatprep.subr.bf16.mxu0 0
        %6704 = vmatpush1.bf16.msra.mxu0 0
        %6705 = vmatprep.subr.bf16.mxu0 0
        %6706 = vmatpush1.bf16.msra.mxu0 0
        %6707 = vmatprep.subr.bf16.mxu0 0
        %6708 = vmatpush1.bf16.msra.mxu0 0
        %6709 = vmatprep.subr.bf16.mxu0 0
        %6710 = vmatpush1.bf16.msra.mxu0 0
        %6711 = vmatprep.subr.bf16.mxu0 0
        %6712 = vmatpush1.bf16.msra.mxu0 0
        %6713 = vmatprep.mubr.bf16.mxu0 0
        %6714 = vmatmul.mubr.bf16.gmra.mrb[0].mxu0 %v6667
        %v6715 = vpop.f32.mrb[0].mxu0
        %v6716 = vadd.f32 0.0, %v6715
        %v6717 = vpop.f32.mrb[0].mxu0
        %v6718 = vadd.f32 0.0, %v6717
        %v6719 = vpop.f32.mrb[0].mxu0
        %v6720 = vadd.f32 0.0, %v6719
        %v6721 = vpop.f32.mrb[0].mxu0
        %v6722 = vadd.f32 0.0, %v6721
        %6723 = vmatprep.mubr.bf16.mxu0 0
        %6724 = vmatmul.mubr.bf16.gmra.mrb[0].mxu0 %v6670
        %v6725 = vpop.f32.mrb[0].mxu0
        %v6726 = vadd.f32 0.0, %v6725
        %v6727 = vpop.f32.mrb[0].mxu0
        %v6728 = vadd.f32 0.0, %v6727
        %v6729 = vpop.f32.mrb[0].mxu0
        %v6730 = vadd.f32 0.0, %v6729
        %v6731 = vpop.f32.mrb[0].mxu0
        %v6732 = vadd.f32 0.0, %v6731
        %6733 = vmatprep.mubr.bf16.mxu0 0
        %6734 = vmatmul.mubr.bf16.gmra.mrb[0].mxu0 %v6673
        %v6735 = vpop.f32.mrb[0].mxu0
        %v6736 = vadd.f32 0.0, %v6735
        %v6737 = vpop.f32.mrb[0].mxu0
        %v6738 = vadd.f32 0.0, %v6737
        %v6739 = vpop.f32.mrb[0].mxu0
        %v6740 = vpop.f32.mrb[0].mxu0
        %6741 = vdwg.mxu0
        %v6742 = vadd.f32 %v6631, %v6716
        %v6743 = vadd.f32 %v6632, %v6718
        %v6744 = vadd.f32 %v6633, %v6720
        %v6745 = vadd.f32 %v6634, %v6722
        %v6746 = vadd.f32 %v6635, %v6726
        %v6747 = vadd.f32 %v6636, %v6728
        %v6748 = vadd.f32 %v6637, %v6730
        %v6749 = vadd.f32 %v6638, %v6732
        %v6750 = vadd.f32 %v6639, %v6736
        %v6751 = vadd.f32 %v6640, %v6738
        %s6752 = scalar_lea.vmem %s1, 1180
        %v6753 = vld [vmem:[%s6752] sm:$0xf]
        %v6754 = vld [vmem:[%s6752 + $0x4] sm:$0xf]
        %v6755 = vld [vmem:[%s6752 + $0x8] sm:$0xf]
        %v6756 = vld [vmem:[%s6752 + $0xc] sm:$0xf]
        %v6757 = vld [vmem:[%s6752 + $0x10] sm:$0xf]
        %v6763 = vunpack.c.l.b16 %v6753
        %v6764 = vunpack.c.l.b16 %v6754
        %v6765 = vunpack.c.l.b16 %v6755
        %v6766 = vunpack.c.l.b16 %v6756
        %v6767 = vunpack.c.l.b16 %v6757
        %v6768 = vpack.c.b16 %v6764, %v6763
        %v6769 = vpack.c.b16 %v6766, %v6765
        %v6770 = vpack.c.b16 %v6767, %v6767
        %6771 = vrot.lane.b32.xlu0 %v250, 69
        %v6772 = vpop.permute.xlu0 %6771
        %6773 = vrot.lane.b32.xlu0 %v251, 69
        %v6774 = vpop.permute.xlu0 %6773
        %vm6775 = vcmask 564224
        %v6776 = vsel %vm6775, %v6772, %v6774
        %v6778 = vsel %vm258, %v6768, 0
        %v6781 = vsel %vm258, %v6769, 0
        %v6784 = vsel %vm258, %v6770, 0
        %v6787 = vsel %vm268, %v6776, 0
        %v6790 = vsel %vm268, %v6774, 0
        %6792 = vmatprep.subr.bf16.mxu0 %v6790
        %6793 = vmatpush1.bf16.msra.mxu0 %v6787
        %6794 = vmatprep.subr.bf16.mxu0 0
        %6795 = vmatpush1.bf16.msra.mxu0 0
        %6796 = vmatprep.subr.bf16.mxu0 0
        %6797 = vmatpush1.bf16.msra.mxu0 0
        %6798 = vmatprep.subr.bf16.mxu0 0
        %6799 = vmatpush1.bf16.msra.mxu0 0
        %6800 = vmatprep.subr.bf16.mxu0 0
        %6801 = vmatpush1.bf16.msra.mxu0 0
        %6802 = vmatprep.subr.bf16.mxu0 0
        %6803 = vmatpush1.bf16.msra.mxu0 0
        %6804 = vmatprep.subr.bf16.mxu0 0
        %6805 = vmatpush1.bf16.msra.mxu0 0
        %6806 = vmatprep.subr.bf16.mxu0 0
        %6807 = vmatpush1.bf16.msra.mxu0 0
        %6808 = vmatprep.subr.bf16.mxu0 0
        %6809 = vmatpush1.bf16.msra.mxu0 0
        %6810 = vmatprep.subr.bf16.mxu0 0
        %6811 = vmatpush1.bf16.msra.mxu0 0
        %6812 = vmatprep.subr.bf16.mxu0 0
        %6813 = vmatpush1.bf16.msra.mxu0 0
        %6814 = vmatprep.subr.bf16.mxu0 0
        %6815 = vmatpush1.bf16.msra.mxu0 0
        %6816 = vmatprep.subr.bf16.mxu0 0
        %6817 = vmatpush1.bf16.msra.mxu0 0
        %6818 = vmatprep.subr.bf16.mxu0 0
        %6819 = vmatpush1.bf16.msra.mxu0 0
        %6820 = vmatprep.subr.bf16.mxu0 0
        %6821 = vmatpush1.bf16.msra.mxu0 0
        %6822 = vmatprep.subr.bf16.mxu0 0
        %6823 = vmatpush1.bf16.msra.mxu0 0
        %6824 = vmatprep.mubr.bf16.mxu0 0
        %6825 = vmatmul.mubr.bf16.gmra.mrb[0].mxu0 %v6778
        %v6826 = vpop.f32.mrb[0].mxu0
        %v6827 = vadd.f32 0.0, %v6826
        %v6828 = vpop.f32.mrb[0].mxu0
        %v6829 = vadd.f32 0.0, %v6828
        %v6830 = vpop.f32.mrb[0].mxu0
        %v6831 = vadd.f32 0.0, %v6830
        %v6832 = vpop.f32.mrb[0].mxu0
        %v6833 = vadd.f32 0.0, %v6832
        %6834 = vmatprep.mubr.bf16.mxu0 0
        %6835 = vmatmul.mubr.bf16.gmra.mrb[0].mxu0 %v6781
        %v6836 = vpop.f32.mrb[0].mxu0
        %v6837 = vadd.f32 0.0, %v6836
        %v6838 = vpop.f32.mrb[0].mxu0
        %v6839 = vadd.f32 0.0, %v6838
        %v6840 = vpop.f32.mrb[0].mxu0
        %v6841 = vadd.f32 0.0, %v6840
        %v6842 = vpop.f32.mrb[0].mxu0
        %v6843 = vadd.f32 0.0, %v6842
        %6844 = vmatprep.mubr.bf16.mxu0 0
        %6845 = vmatmul.mubr.bf16.gmra.mrb[0].mxu0 %v6784
        %v6846 = vpop.f32.mrb[0].mxu0
        %v6847 = vadd.f32 0.0, %v6846
        %v6848 = vpop.f32.mrb[0].mxu0
        %v6849 = vadd.f32 0.0, %v6848
        %v6850 = vpop.f32.mrb[0].mxu0
        %v6851 = vpop.f32.mrb[0].mxu0
        %6852 = vdwg.mxu0
        %v6853 = vadd.f32 %v6742, %v6827
        %v6854 = vadd.f32 %v6743, %v6829
        %v6855 = vadd.f32 %v6744, %v6831
        %v6856 = vadd.f32 %v6745, %v6833
        %v6857 = vadd.f32 %v6746, %v6837
        %v6858 = vadd.f32 %v6747, %v6839
        %v6859 = vadd.f32 %v6748, %v6841
        %v6860 = vadd.f32 %v6749, %v6843
        %v6861 = vadd.f32 %v6750, %v6847
        %v6862 = vadd.f32 %v6751, %v6849
        %s6863 = scalar_lea.vmem %s1, 1200
        %v6864 = vld [vmem:[%s6863] sm:$0xf]
        %v6865 = vld [vmem:[%s6863 + $0x4] sm:$0xf]
        %v6866 = vld [vmem:[%s6863 + $0x8] sm:$0xf]
        %v6867 = vld [vmem:[%s6863 + $0xc] sm:$0xf]
        %v6868 = vld [vmem:[%s6863 + $0x10] sm:$0xf]
        %v6874 = vunpack.c.l.b16 %v6864
        %v6875 = vunpack.c.l.b16 %v6865
        %v6876 = vunpack.c.l.b16 %v6866
        %v6877 = vunpack.c.l.b16 %v6867
        %v6878 = vunpack.c.l.b16 %v6868
        %v6879 = vpack.c.b16 %v6875, %v6874
        %v6880 = vpack.c.b16 %v6877, %v6876
        %v6881 = vpack.c.b16 %v6878, %v6878
        %6882 = vrot.lane.b32.xlu0 %v250, 68
        %v6883 = vpop.permute.xlu0 %6882
        %6884 = vrot.lane.b32.xlu0 %v251, 68
        %v6885 = vpop.permute.xlu0 %6884
        %vm6886 = vcmask 556032
        %v6887 = vsel %vm6886, %v6883, %v6885
        %v6889 = vsel %vm258, %v6879, 0
        %v6892 = vsel %vm258, %v6880, 0
        %v6895 = vsel %vm258, %v6881, 0
        %v6898 = vsel %vm268, %v6887, 0
        %v6901 = vsel %vm268, %v6885, 0
        %6903 = vmatprep.subr.bf16.mxu0 %v6901
        %6904 = vmatpush1.bf16.msra.mxu0 %v6898
        %6905 = vmatprep.subr.bf16.mxu0 0
        %6906 = vmatpush1.bf16.msra.mxu0 0
        %6907 = vmatprep.subr.bf16.mxu0 0
        %6908 = vmatpush1.bf16.msra.mxu0 0
        %6909 = vmatprep.subr.bf16.mxu0 0
        %6910 = vmatpush1.bf16.msra.mxu0 0
        %6911 = vmatprep.subr.bf16.mxu0 0
        %6912 = vmatpush1.bf16.msra.mxu0 0
        %6913 = vmatprep.subr.bf16.mxu0 0
        %6914 = vmatpush1.bf16.msra.mxu0 0
        %6915 = vmatprep.subr.bf16.mxu0 0
        %6916 = vmatpush1.bf16.msra.mxu0 0
        %6917 = vmatprep.subr.bf16.mxu0 0
        %6918 = vmatpush1.bf16.msra.mxu0 0
        %6919 = vmatprep.subr.bf16.mxu0 0
        %6920 = vmatpush1.bf16.msra.mxu0 0
        %6921 = vmatprep.subr.bf16.mxu0 0
        %6922 = vmatpush1.bf16.msra.mxu0 0
        %6923 = vmatprep.subr.bf16.mxu0 0
        %6924 = vmatpush1.bf16.msra.mxu0 0
        %6925 = vmatprep.subr.bf16.mxu0 0
        %6926 = vmatpush1.bf16.msra.mxu0 0
        %6927 = vmatprep.subr.bf16.mxu0 0
        %6928 = vmatpush1.bf16.msra.mxu0 0
        %6929 = vmatprep.subr.bf16.mxu0 0
        %6930 = vmatpush1.bf16.msra.mxu0 0
        %6931 = vmatprep.subr.bf16.mxu0 0
        %6932 = vmatpush1.bf16.msra.mxu0 0
        %6933 = vmatprep.subr.bf16.mxu0 0
        %6934 = vmatpush1.bf16.msra.mxu0 0
        %6935 = vmatprep.mubr.bf16.mxu0 0
        %6936 = vmatmul.mubr.bf16.gmra.mrb[0].mxu0 %v6889
        %v6937 = vpop.f32.mrb[0].mxu0
        %v6938 = vadd.f32 0.0, %v6937
        %v6939 = vpop.f32.mrb[0].mxu0
        %v6940 = vadd.f32 0.0, %v6939
        %v6941 = vpop.f32.mrb[0].mxu0
        %v6942 = vadd.f32 0.0, %v6941
        %v6943 = vpop.f32.mrb[0].mxu0
        %v6944 = vadd.f32 0.0, %v6943
        %6945 = vmatprep.mubr.bf16.mxu0 0
        %6946 = vmatmul.mubr.bf16.gmra.mrb[0].mxu0 %v6892
        %v6947 = vpop.f32.mrb[0].mxu0
        %v6948 = vadd.f32 0.0, %v6947
        %v6949 = vpop.f32.mrb[0].mxu0
        %v6950 = vadd.f32 0.0, %v6949
        %v6951 = vpop.f32.mrb[0].mxu0
        %v6952 = vadd.f32 0.0, %v6951
        %v6953 = vpop.f32.mrb[0].mxu0
        %v6954 = vadd.f32 0.0, %v6953
        %6955 = vmatprep.mubr.bf16.mxu0 0
        %6956 = vmatmul.mubr.bf16.gmra.mrb[0].mxu0 %v6895
        %v6957 = vpop.f32.mrb[0].mxu0
        %v6958 = vadd.f32 0.0, %v6957
        %v6959 = vpop.f32.mrb[0].mxu0
        %v6960 = vadd.f32 0.0, %v6959
        %v6961 = vpop.f32.mrb[0].mxu0
        %v6962 = vpop.f32.mrb[0].mxu0
        %6963 = vdwg.mxu0
        %v6964 = vadd.f32 %v6853, %v6938
        %v6965 = vadd.f32 %v6854, %v6940
        %v6966 = vadd.f32 %v6855, %v6942
        %v6967 = vadd.f32 %v6856, %v6944
        %v6968 = vadd.f32 %v6857, %v6948
        %v6969 = vadd.f32 %v6858, %v6950
        %v6970 = vadd.f32 %v6859, %v6952
        %v6971 = vadd.f32 %v6860, %v6954
        %v6972 = vadd.f32 %v6861, %v6958
        %v6973 = vadd.f32 %v6862, %v6960
        %s6974 = scalar_lea.vmem %s1, 1220
        %v6975 = vld [vmem:[%s6974] sm:$0xf]
        %v6976 = vld [vmem:[%s6974 + $0x4] sm:$0xf]
        %v6977 = vld [vmem:[%s6974 + $0x8] sm:$0xf]
        %v6978 = vld [vmem:[%s6974 + $0xc] sm:$0xf]
        %v6979 = vld [vmem:[%s6974 + $0x10] sm:$0xf]
        %v6985 = vunpack.c.l.b16 %v6975
        %v6986 = vunpack.c.l.b16 %v6976
        %v6987 = vunpack.c.l.b16 %v6977
        %v6988 = vunpack.c.l.b16 %v6978
        %v6989 = vunpack.c.l.b16 %v6979
        %v6990 = vpack.c.b16 %v6986, %v6985
        %v6991 = vpack.c.b16 %v6988, %v6987
        %v6992 = vpack.c.b16 %v6989, %v6989
        %6993 = vrot.lane.b32.xlu0 %v250, 67
        %v6994 = vpop.permute.xlu0 %6993
        %6995 = vrot.lane.b32.xlu0 %v251, 67
        %v6996 = vpop.permute.xlu0 %6995
        %vm6997 = vcmask 547840
        %v6998 = vsel %vm6997, %v6994, %v6996
        %v7000 = vsel %vm258, %v6990, 0
        %v7003 = vsel %vm258, %v6991, 0
        %v7006 = vsel %vm258, %v6992, 0
        %v7009 = vsel %vm268, %v6998, 0
        %v7012 = vsel %vm268, %v6996, 0
        %7014 = vmatprep.subr.bf16.mxu0 %v7012
        %7015 = vmatpush1.bf16.msra.mxu0 %v7009
        %7016 = vmatprep.subr.bf16.mxu0 0
        %7017 = vmatpush1.bf16.msra.mxu0 0
        %7018 = vmatprep.subr.bf16.mxu0 0
        %7019 = vmatpush1.bf16.msra.mxu0 0
        %7020 = vmatprep.subr.bf16.mxu0 0
        %7021 = vmatpush1.bf16.msra.mxu0 0
        %7022 = vmatprep.subr.bf16.mxu0 0
        %7023 = vmatpush1.bf16.msra.mxu0 0
        %7024 = vmatprep.subr.bf16.mxu0 0
        %7025 = vmatpush1.bf16.msra.mxu0 0
        %7026 = vmatprep.subr.bf16.mxu0 0
        %7027 = vmatpush1.bf16.msra.mxu0 0
        %7028 = vmatprep.subr.bf16.mxu0 0
        %7029 = vmatpush1.bf16.msra.mxu0 0
        %7030 = vmatprep.subr.bf16.mxu0 0
        %7031 = vmatpush1.bf16.msra.mxu0 0
        %7032 = vmatprep.subr.bf16.mxu0 0
        %7033 = vmatpush1.bf16.msra.mxu0 0
        %7034 = vmatprep.subr.bf16.mxu0 0
        %7035 = vmatpush1.bf16.msra.mxu0 0
        %7036 = vmatprep.subr.bf16.mxu0 0
        %7037 = vmatpush1.bf16.msra.mxu0 0
        %7038 = vmatprep.subr.bf16.mxu0 0
        %7039 = vmatpush1.bf16.msra.mxu0 0
        %7040 = vmatprep.subr.bf16.mxu0 0
        %7041 = vmatpush1.bf16.msra.mxu0 0
        %7042 = vmatprep.subr.bf16.mxu0 0
        %7043 = vmatpush1.bf16.msra.mxu0 0
        %7044 = vmatprep.subr.bf16.mxu0 0
        %7045 = vmatpush1.bf16.msra.mxu0 0
        %7046 = vmatprep.mubr.bf16.mxu0 0
        %7047 = vmatmul.mubr.bf16.gmra.mrb[0].mxu0 %v7000
        %v7048 = vpop.f32.mrb[0].mxu0
        %v7049 = vadd.f32 0.0, %v7048
        %v7050 = vpop.f32.mrb[0].mxu0
        %v7051 = vadd.f32 0.0, %v7050
        %v7052 = vpop.f32.mrb[0].mxu0
        %v7053 = vadd.f32 0.0, %v7052
        %v7054 = vpop.f32.mrb[0].mxu0
        %v7055 = vadd.f32 0.0, %v7054
        %7056 = vmatprep.mubr.bf16.mxu0 0
        %7057 = vmatmul.mubr.bf16.gmra.mrb[0].mxu0 %v7003
        %v7058 = vpop.f32.mrb[0].mxu0
        %v7059 = vadd.f32 0.0, %v7058
        %v7060 = vpop.f32.mrb[0].mxu0
        %v7061 = vadd.f32 0.0, %v7060
        %v7062 = vpop.f32.mrb[0].mxu0
        %v7063 = vadd.f32 0.0, %v7062
        %v7064 = vpop.f32.mrb[0].mxu0
        %v7065 = vadd.f32 0.0, %v7064
        %7066 = vmatprep.mubr.bf16.mxu0 0
        %7067 = vmatmul.mubr.bf16.gmra.mrb[0].mxu0 %v7006
        %v7068 = vpop.f32.mrb[0].mxu0
        %v7069 = vadd.f32 0.0, %v7068
        %v7070 = vpop.f32.mrb[0].mxu0
        %v7071 = vadd.f32 0.0, %v7070
        %v7072 = vpop.f32.mrb[0].mxu0
        %v7073 = vpop.f32.mrb[0].mxu0
        %7074 = vdwg.mxu0
        %v7075 = vadd.f32 %v6964, %v7049
        %v7076 = vadd.f32 %v6965, %v7051
        %v7077 = vadd.f32 %v6966, %v7053
        %v7078 = vadd.f32 %v6967, %v7055
        %v7079 = vadd.f32 %v6968, %v7059
        %v7080 = vadd.f32 %v6969, %v7061
        %v7081 = vadd.f32 %v6970, %v7063
        %v7082 = vadd.f32 %v6971, %v7065
        %v7083 = vadd.f32 %v6972, %v7069
        %v7084 = vadd.f32 %v6973, %v7071
        %s7085 = scalar_lea.vmem %s1, 1240
        %v7086 = vld [vmem:[%s7085] sm:$0xf]
        %v7087 = vld [vmem:[%s7085 + $0x4] sm:$0xf]
        %v7088 = vld [vmem:[%s7085 + $0x8] sm:$0xf]
        %v7089 = vld [vmem:[%s7085 + $0xc] sm:$0xf]
        %v7090 = vld [vmem:[%s7085 + $0x10] sm:$0xf]
        %v7096 = vunpack.c.l.b16 %v7086
        %v7097 = vunpack.c.l.b16 %v7087
        %v7098 = vunpack.c.l.b16 %v7088
        %v7099 = vunpack.c.l.b16 %v7089
        %v7100 = vunpack.c.l.b16 %v7090
        %v7101 = vpack.c.b16 %v7097, %v7096
        %v7102 = vpack.c.b16 %v7099, %v7098
        %v7103 = vpack.c.b16 %v7100, %v7100
        %7104 = vrot.lane.b32.xlu0 %v250, 66
        %v7105 = vpop.permute.xlu0 %7104
        %7106 = vrot.lane.b32.xlu0 %v251, 66
        %v7107 = vpop.permute.xlu0 %7106
        %vm7108 = vcmask 539648
        %v7109 = vsel %vm7108, %v7105, %v7107
        %v7111 = vsel %vm258, %v7101, 0
        %v7114 = vsel %vm258, %v7102, 0
        %v7117 = vsel %vm258, %v7103, 0
        %v7120 = vsel %vm268, %v7109, 0
        %v7123 = vsel %vm268, %v7107, 0
        %7125 = vmatprep.subr.bf16.mxu0 %v7123
        %7126 = vmatpush1.bf16.msra.mxu0 %v7120
        %7127 = vmatprep.subr.bf16.mxu0 0
        %7128 = vmatpush1.bf16.msra.mxu0 0
        %7129 = vmatprep.subr.bf16.mxu0 0
        %7130 = vmatpush1.bf16.msra.mxu0 0
        %7131 = vmatprep.subr.bf16.mxu0 0
        %7132 = vmatpush1.bf16.msra.mxu0 0
        %7133 = vmatprep.subr.bf16.mxu0 0
        %7134 = vmatpush1.bf16.msra.mxu0 0
        %7135 = vmatprep.subr.bf16.mxu0 0
        %7136 = vmatpush1.bf16.msra.mxu0 0
        %7137 = vmatprep.subr.bf16.mxu0 0
        %7138 = vmatpush1.bf16.msra.mxu0 0
        %7139 = vmatprep.subr.bf16.mxu0 0
        %7140 = vmatpush1.bf16.msra.mxu0 0
        %7141 = vmatprep.subr.bf16.mxu0 0
        %7142 = vmatpush1.bf16.msra.mxu0 0
        %7143 = vmatprep.subr.bf16.mxu0 0
        %7144 = vmatpush1.bf16.msra.mxu0 0
        %7145 = vmatprep.subr.bf16.mxu0 0
        %7146 = vmatpush1.bf16.msra.mxu0 0
        %7147 = vmatprep.subr.bf16.mxu0 0
        %7148 = vmatpush1.bf16.msra.mxu0 0
        %7149 = vmatprep.subr.bf16.mxu0 0
        %7150 = vmatpush1.bf16.msra.mxu0 0
        %7151 = vmatprep.subr.bf16.mxu0 0
        %7152 = vmatpush1.bf16.msra.mxu0 0
        %7153 = vmatprep.subr.bf16.mxu0 0
        %7154 = vmatpush1.bf16.msra.mxu0 0
        %7155 = vmatprep.subr.bf16.mxu0 0
        %7156 = vmatpush1.bf16.msra.mxu0 0
        %7157 = vmatprep.mubr.bf16.mxu0 0
        %7158 = vmatmul.mubr.bf16.gmra.mrb[0].mxu0 %v7111
        %v7159 = vpop.f32.mrb[0].mxu0
        %v7160 = vadd.f32 0.0, %v7159
        %v7161 = vpop.f32.mrb[0].mxu0
        %v7162 = vadd.f32 0.0, %v7161
        %v7163 = vpop.f32.mrb[0].mxu0
        %v7164 = vadd.f32 0.0, %v7163
        %v7165 = vpop.f32.mrb[0].mxu0
        %v7166 = vadd.f32 0.0, %v7165
        %7167 = vmatprep.mubr.bf16.mxu0 0
        %7168 = vmatmul.mubr.bf16.gmra.mrb[0].mxu0 %v7114
        %v7169 = vpop.f32.mrb[0].mxu0
        %v7170 = vadd.f32 0.0, %v7169
        %v7171 = vpop.f32.mrb[0].mxu0
        %v7172 = vadd.f32 0.0, %v7171
        %v7173 = vpop.f32.mrb[0].mxu0
        %v7174 = vadd.f32 0.0, %v7173
        %v7175 = vpop.f32.mrb[0].mxu0
        %v7176 = vadd.f32 0.0, %v7175
        %7177 = vmatprep.mubr.bf16.mxu0 0
        %7178 = vmatmul.mubr.bf16.gmra.mrb[0].mxu0 %v7117
        %v7179 = vpop.f32.mrb[0].mxu0
        %v7180 = vadd.f32 0.0, %v7179
        %v7181 = vpop.f32.mrb[0].mxu0
        %v7182 = vadd.f32 0.0, %v7181
        %v7183 = vpop.f32.mrb[0].mxu0
        %v7184 = vpop.f32.mrb[0].mxu0
        %7185 = vdwg.mxu0
        %v7186 = vadd.f32 %v7075, %v7160
        %v7187 = vadd.f32 %v7076, %v7162
        %v7188 = vadd.f32 %v7077, %v7164
        %v7189 = vadd.f32 %v7078, %v7166
        %v7190 = vadd.f32 %v7079, %v7170
        %v7191 = vadd.f32 %v7080, %v7172
        %v7192 = vadd.f32 %v7081, %v7174
        %v7193 = vadd.f32 %v7082, %v7176
        %v7194 = vadd.f32 %v7083, %v7180
        %v7195 = vadd.f32 %v7084, %v7182
        %s7196 = scalar_lea.vmem %s1, 1260
        %v7197 = vld [vmem:[%s7196] sm:$0xf]
        %v7198 = vld [vmem:[%s7196 + $0x4] sm:$0xf]
        %v7199 = vld [vmem:[%s7196 + $0x8] sm:$0xf]
        %v7200 = vld [vmem:[%s7196 + $0xc] sm:$0xf]
        %v7201 = vld [vmem:[%s7196 + $0x10] sm:$0xf]
        %v7207 = vunpack.c.l.b16 %v7197
        %v7208 = vunpack.c.l.b16 %v7198
        %v7209 = vunpack.c.l.b16 %v7199
        %v7210 = vunpack.c.l.b16 %v7200
        %v7211 = vunpack.c.l.b16 %v7201
        %v7212 = vpack.c.b16 %v7208, %v7207
        %v7213 = vpack.c.b16 %v7210, %v7209
        %v7214 = vpack.c.b16 %v7211, %v7211
        %7215 = vrot.lane.b32.xlu0 %v250, 65
        %v7216 = vpop.permute.xlu0 %7215
        %7217 = vrot.lane.b32.xlu0 %v251, 65
        %v7218 = vpop.permute.xlu0 %7217
        %vm7219 = vcmask 531456
        %v7220 = vsel %vm7219, %v7216, %v7218
        %v7222 = vsel %vm258, %v7212, 0
        %v7225 = vsel %vm258, %v7213, 0
        %v7228 = vsel %vm258, %v7214, 0
        %v7231 = vsel %vm268, %v7220, 0
        %v7234 = vsel %vm268, %v7218, 0
        %7236 = vmatprep.subr.bf16.mxu0 %v7234
        %7237 = vmatpush1.bf16.msra.mxu0 %v7231
        %7238 = vmatprep.subr.bf16.mxu0 0
        %7239 = vmatpush1.bf16.msra.mxu0 0
        %7240 = vmatprep.subr.bf16.mxu0 0
        %7241 = vmatpush1.bf16.msra.mxu0 0
        %7242 = vmatprep.subr.bf16.mxu0 0
        %7243 = vmatpush1.bf16.msra.mxu0 0
        %7244 = vmatprep.subr.bf16.mxu0 0
        %7245 = vmatpush1.bf16.msra.mxu0 0
        %7246 = vmatprep.subr.bf16.mxu0 0
        %7247 = vmatpush1.bf16.msra.mxu0 0
        %7248 = vmatprep.subr.bf16.mxu0 0
        %7249 = vmatpush1.bf16.msra.mxu0 0
        %7250 = vmatprep.subr.bf16.mxu0 0
        %7251 = vmatpush1.bf16.msra.mxu0 0
        %7252 = vmatprep.subr.bf16.mxu0 0
        %7253 = vmatpush1.bf16.msra.mxu0 0
        %7254 = vmatprep.subr.bf16.mxu0 0
        %7255 = vmatpush1.bf16.msra.mxu0 0
        %7256 = vmatprep.subr.bf16.mxu0 0
        %7257 = vmatpush1.bf16.msra.mxu0 0
        %7258 = vmatprep.subr.bf16.mxu0 0
        %7259 = vmatpush1.bf16.msra.mxu0 0
        %7260 = vmatprep.subr.bf16.mxu0 0
        %7261 = vmatpush1.bf16.msra.mxu0 0
        %7262 = vmatprep.subr.bf16.mxu0 0
        %7263 = vmatpush1.bf16.msra.mxu0 0
        %7264 = vmatprep.subr.bf16.mxu0 0
        %7265 = vmatpush1.bf16.msra.mxu0 0
        %7266 = vmatprep.subr.bf16.mxu0 0
        %7267 = vmatpush1.bf16.msra.mxu0 0
        %7268 = vmatprep.mubr.bf16.mxu0 0
        %7269 = vmatmul.mubr.bf16.gmra.mrb[0].mxu0 %v7222
        %v7270 = vpop.f32.mrb[0].mxu0
        %v7271 = vadd.f32 0.0, %v7270
        %v7272 = vpop.f32.mrb[0].mxu0
        %v7273 = vadd.f32 0.0, %v7272
        %v7274 = vpop.f32.mrb[0].mxu0
        %v7275 = vadd.f32 0.0, %v7274
        %v7276 = vpop.f32.mrb[0].mxu0
        %v7277 = vadd.f32 0.0, %v7276
        %7278 = vmatprep.mubr.bf16.mxu0 0
        %7279 = vmatmul.mubr.bf16.gmra.mrb[0].mxu0 %v7225
        %v7280 = vpop.f32.mrb[0].mxu0
        %v7281 = vadd.f32 0.0, %v7280
        %v7282 = vpop.f32.mrb[0].mxu0
        %v7283 = vadd.f32 0.0, %v7282
        %v7284 = vpop.f32.mrb[0].mxu0
        %v7285 = vadd.f32 0.0, %v7284
        %v7286 = vpop.f32.mrb[0].mxu0
        %v7287 = vadd.f32 0.0, %v7286
        %7288 = vmatprep.mubr.bf16.mxu0 0
        %7289 = vmatmul.mubr.bf16.gmra.mrb[0].mxu0 %v7228
        %v7290 = vpop.f32.mrb[0].mxu0
        %v7291 = vadd.f32 0.0, %v7290
        %v7292 = vpop.f32.mrb[0].mxu0
        %v7293 = vadd.f32 0.0, %v7292
        %v7294 = vpop.f32.mrb[0].mxu0
        %v7295 = vpop.f32.mrb[0].mxu0
        %7296 = vdwg.mxu0
        %v7297 = vadd.f32 %v7186, %v7271
        %v7298 = vadd.f32 %v7187, %v7273
        %v7299 = vadd.f32 %v7188, %v7275
        %v7300 = vadd.f32 %v7189, %v7277
        %v7301 = vadd.f32 %v7190, %v7281
        %v7302 = vadd.f32 %v7191, %v7283
        %v7303 = vadd.f32 %v7192, %v7285
        %v7304 = vadd.f32 %v7193, %v7287
        %v7305 = vadd.f32 %v7194, %v7291
        %v7306 = vadd.f32 %v7195, %v7293
        %v7307 = vpack.c.bf16 %v7299, %v7297
        %v7308 = vpack.c.bf16 %v7300, %v7298
        %v7309 = vpack.c.bf16 %v7303, %v7301
        %v7310 = vpack.c.bf16 %v7304, %v7302
        %v7311 = vpack.c.bf16 %v7305, %v7305
        %v7312 = vpack.c.bf16 %v7306, %v7306
        %v7319 = vunpack.c.l.b16 %v7307
        %v7320 = vunpack.c.l.b16 %v7308
        %v7321 = vunpack.c.h.b16 %v7307
        %v7322 = vunpack.c.h.b16 %v7308
        %v7323 = vunpack.c.l.b16 %v7309
        %v7324 = vunpack.c.l.b16 %v7310
        %v7325 = vunpack.c.h.b16 %v7309
        %v7326 = vunpack.c.h.b16 %v7310
        %v7327 = vunpack.c.l.b16 %v7311
        %v7328 = vunpack.c.l.b16 %v7312
        %v7329 = vpack.c.b16 %v7320, %v7319
        %v7330 = vpack.c.b16 %v7322, %v7321
        %v7331 = vpack.c.b16 %v7324, %v7323
        %v7332 = vpack.c.b16 %v7326, %v7325
        %v7333 = vpack.c.b16 %v7328, %v7327
        %vm7339 = vcmask 515076
        %vm7340 = vmor %vm7339, %vm268
        %7341 = vst.msk [vmem:[%s191] sm:$0xff] %vm7340, %v7329
        %7342 = vst.msk [vmem:[%s191 + $0x8] sm:$0xff] %vm7340, %v7330
        %7343 = vst.msk [vmem:[%s191 + $0x10] sm:$0xff] %vm7340, %v7331
        %7344 = vst.msk [vmem:[%s191 + $0x18] sm:$0xff] %vm7340, %v7332
        %7345 = vst.msk [vmem:[%s191 + $0x20] sm:$0xff] %vm7340, %v7333
        %7356 = vrot.lane.b32.xlu0 %v7297, 96
        %v7357 = vpop.permute.xlu0 %7356
        %7358 = vrot.lane.b32.xlu0 %v7298, 96
        %v7359 = vpop.permute.xlu0 %7358
        %7360 = vrot.lane.b32.xlu0 %v7299, 96
        %v7361 = vpop.permute.xlu0 %7360
        %7362 = vrot.lane.b32.xlu0 %v7300, 96
        %v7363 = vpop.permute.xlu0 %7362
        %7364 = vrot.lane.b32.xlu0 %v7301, 96
        %v7365 = vpop.permute.xlu0 %7364
        %7366 = vrot.lane.b32.xlu0 %v7302, 96
        %v7367 = vpop.permute.xlu0 %7366
        %7368 = vrot.lane.b32.xlu0 %v7303, 96
        %v7369 = vpop.permute.xlu0 %7368
        %7370 = vrot.lane.b32.xlu0 %v7304, 96
        %v7371 = vpop.permute.xlu0 %7370
        %7372 = vrot.lane.b32.xlu0 %v7305, 96
        %v7373 = vpop.permute.xlu0 %7372
        %7374 = vrot.lane.b32.xlu0 %v7306, 96
        %v7375 = vpop.permute.xlu0 %7374
        %vm7376 = vcmask 785408
        %v7377 = vsel %vm7376, %v7357, %v7359
        %v7378 = vsel %vm7376, %v7361, %v7363
        %v7379 = vsel %vm7376, %v7365, %v7367
        %v7380 = vsel %vm7376, %v7369, %v7371
        %v7381 = vsel %vm7376, %v7373, %v7375
        %7387 = vadd.xlane.f32.xlu0 %v7377
        %v7388 = vpop.xlane.xlu0 %7387
        %7389 = vadd.xlane.f32.xlu0 %v7378
        %v7390 = vpop.xlane.xlu0 %7389
        %7391 = vadd.xlane.f32.xlu0 %v7379
        %v7392 = vpop.xlane.xlu0 %7391
        %7393 = vadd.xlane.f32.xlu0 %v7380
        %v7394 = vpop.xlane.xlu0 %7393
        %7395 = vadd.xlane.f32.xlu0 %v7381
        %v7396 = vpop.xlane.xlu0 %7395
        %vm7397 = vcmask 7168
        %7398 = vst.msk [vmem:[%s215] sm:$0xff] %vm7397, %v7388
        %7399 = vst.msk [vmem:[%s215 + $0x8] sm:$0xff] %vm7397, %v7390
        %7400 = vst.msk [vmem:[%s215 + $0x10] sm:$0xff] %vm7397, %v7392
        %7401 = vst.msk [vmem:[%s215 + $0x18] sm:$0xff] %vm7397, %v7394
        %7402 = vst.msk [vmem:[%s215 + $0x20] sm:$0xff] %vm7397, %v7396
        %v7403 = vmul.f32 %v7297, %v7297
        %v7404 = vmul.f32 %v7298, %v7298
        %v7405 = vmul.f32 %v7299, %v7299
        %v7406 = vmul.f32 %v7300, %v7300
        %v7407 = vmul.f32 %v7301, %v7301
        %v7408 = vmul.f32 %v7302, %v7302
        %v7409 = vmul.f32 %v7303, %v7303
        %v7410 = vmul.f32 %v7304, %v7304
        %v7411 = vmul.f32 %v7305, %v7305
        %v7412 = vmul.f32 %v7306, %v7306
        %7423 = vrot.lane.b32.xlu0 %v7403, 96
        %v7424 = vpop.permute.xlu0 %7423
        %7425 = vrot.lane.b32.xlu0 %v7404, 96
        %v7426 = vpop.permute.xlu0 %7425
        %7427 = vrot.lane.b32.xlu0 %v7405, 96
        %v7428 = vpop.permute.xlu0 %7427
        %7429 = vrot.lane.b32.xlu0 %v7406, 96
        %v7430 = vpop.permute.xlu0 %7429
        %7431 = vrot.lane.b32.xlu0 %v7407, 96
        %v7432 = vpop.permute.xlu0 %7431
        %7433 = vrot.lane.b32.xlu0 %v7408, 96
        %v7434 = vpop.permute.xlu0 %7433
        %7435 = vrot.lane.b32.xlu0 %v7409, 96
        %v7436 = vpop.permute.xlu0 %7435
        %7437 = vrot.lane.b32.xlu0 %v7410, 96
        %v7438 = vpop.permute.xlu0 %7437
        %7439 = vrot.lane.b32.xlu0 %v7411, 96
        %v7440 = vpop.permute.xlu0 %7439
        %7441 = vrot.lane.b32.xlu0 %v7412, 96
        %v7442 = vpop.permute.xlu0 %7441
        %v7443 = vsel %vm7376, %v7424, %v7426
        %v7444 = vsel %vm7376, %v7428, %v7430
        %v7445 = vsel %vm7376, %v7432, %v7434
        %v7446 = vsel %vm7376, %v7436, %v7438
        %v7447 = vsel %vm7376, %v7440, %v7442
        %7453 = vadd.xlane.f32.xlu0 %v7443
        %v7454 = vpop.xlane.xlu0 %7453
        %7455 = vadd.xlane.f32.xlu0 %v7444
        %v7456 = vpop.xlane.xlu0 %7455
        %7457 = vadd.xlane.f32.xlu0 %v7445
        %v7458 = vpop.xlane.xlu0 %7457
        %7459 = vadd.xlane.f32.xlu0 %v7446
        %v7460 = vpop.xlane.xlu0 %7459
        %7461 = vadd.xlane.f32.xlu0 %v7447
        %v7462 = vpop.xlane.xlu0 %7461
        %7463 = vst.msk [vmem:[%s220] sm:$0xff] %vm7397, %v7454
        %7464 = vst.msk [vmem:[%s220 + $0x8] sm:$0xff] %vm7397, %v7456
        %7465 = vst.msk [vmem:[%s220 + $0x10] sm:$0xff] %vm7397, %v7458
        %7466 = vst.msk [vmem:[%s220 + $0x18] sm:$0xff] %vm7397, %v7460
        %7467 = vst.msk [vmem:[%s220 + $0x20] sm:$0xff] %vm7397, %v7462
        %s7468 = sand.u32 %s74, 1
        %s7469 = scalar_lea.sflag [#allocation3], %s7468
        %s7470 = sand.u32 %s74, 1
        %s7471 = smul.addr %s7470, 40
        %s7472 = scalar_lea.vmem [#allocation2], %s7471
        %p7473 = scmp.lt.s32.totalorder %s19, 1
        %s7474 = scalar_select %p7473, %s19, 1
        %s7475 = smul.addr %s7474, 5
        %s7476 = smul.addr %s7475, 8
        %s7477 = scalar_lea.vmem %s3, %s7476
        %p7478 = scmp.lt.s32.totalorder %s19, 1
        %s7479 = scalar_select %p7478, %s19, 1
        %s7480 = smul.addr %s7479, 5
        %s7481 = smul.addr %s7480, 8
        %s7482 = scalar_lea.vmem %s4, %s7481
        // Predicated region
        $region29: #{tpu_custom_call.1} parent=27 // pred_check
          %p7483 = pneg %p84
        $region30: #{tpu_custom_call.1} parent=27 // pred_check_branch
          %7485 = sbr.rel (%p7483) target = $region32
        $region31: #{tpu_custom_call.1} parent=27 // pred_region
          %s7487 = ssub.s32 640, 640
          %7488 = vsyncadd %s7469, %s7487
          %s7489 = smul.addr %s19, 10
          %s7490 = smul.addr %s7489, 64
          %s7491 = scalar_lea.hbm %s2, %s7490
          %s7492 = sshll.u32 %s7472, 4
          %s7493 = int_to_ptr.vmem [resolvable:$true] %s7492
          %7498 = dma.vmem_to_hbm [thread:$0]  %s7493, 640, %s7491, %s7469, 128, 128, 8
        $region32: #{tpu_custom_call.1} parent=27 // pred_fallthru
          _
        // Predicated region
        $region33: #{tpu_custom_call.1} parent=27 // pred_check
          %p7499 = pneg %p110
        $region34: #{tpu_custom_call.1} parent=27 // pred_check_branch
          %7501 = sbr.rel (%p7499) target = $region36
        $region35: #{tpu_custom_call.1} parent=27 // pred_region
          _
        $region36: #{tpu_custom_call.1} parent=27 // pred_fallthru
          _
        // Predicated region
        $region37: #{tpu_custom_call.1} parent=27 // pred_check
          %p7502 = pneg %p136
        $region38: #{tpu_custom_call.1} parent=27 // pred_check_branch
          %7504 = sbr.rel (%p7502) target = $region40
        $region39: #{tpu_custom_call.1} parent=27 // pred_region
          _
        $region40: #{tpu_custom_call.1} parent=27 // pred_fallthru
          _
      $region28: #{tpu_custom_call.1} parent=5 // pred_fallthru
        _
      %p7505 = scmp.le.s32.totalorder 2, %s14
      // Predicated region
      $region41: #{tpu_custom_call.1} parent=5 // pred_check
        %p7506 = pneg %p7505
      $region42: #{tpu_custom_call.1} parent=5 // pred_check_branch
        %7508 = sbr.rel (%p7506) target = $region44
      $region43: #{tpu_custom_call.1} parent=5 // pred_region
        %s7509 = ssub.s32 %s14, 2
        // Predicated region
        $region45: #{tpu_custom_call.1} parent=43 // pred_check
          %p7510 = pneg %p90
        $region46: #{tpu_custom_call.1} parent=43 // pred_check_branch
          %7512 = sbr.rel (%p7510) target = $region48
        $region47: #{tpu_custom_call.1} parent=43 // pred_region
          %s7513 = sand.u32 %s75, 1
          %s7514 = scalar_lea.sflag [#allocation3], %s7513
          %s7515 = sand.u32 %s75, 1
          %s7516 = smul.addr %s7515, 40
          %s7517 = scalar_lea.vmem [#allocation2], %s7516
          %7518 = dma.done %s7514, 640
        $region48: #{tpu_custom_call.1} parent=43 // pred_fallthru
          _
        // Predicated region
        $region49: #{tpu_custom_call.1} parent=43 // pred_check
          %p7519 = pneg %p116
        $region50: #{tpu_custom_call.1} parent=43 // pred_check_branch
          %7521 = sbr.rel (%p7519) target = $region52
        $region51: #{tpu_custom_call.1} parent=43 // pred_region
          %p7522 = scmp.lt.s32.totalorder %s20, 1
          %s7523 = scalar_select %p7522, %s20, 1
          %s7524 = smul.addr %s7523, 5
          %s7525 = smul.addr %s7524, 8
          %s7526 = scalar_lea.vmem %s3, %s7525
        $region52: #{tpu_custom_call.1} parent=43 // pred_fallthru
          _
        // Predicated region
        $region53: #{tpu_custom_call.1} parent=43 // pred_check
          %p7527 = pneg %p142
        $region54: #{tpu_custom_call.1} parent=43 // pred_check_branch
          %7529 = sbr.rel (%p7527) target = $region56
        $region55: #{tpu_custom_call.1} parent=43 // pred_region
          %p7530 = scmp.lt.s32.totalorder %s20, 1
          %s7531 = scalar_select %p7530, %s20, 1
          %s7532 = smul.addr %s7531, 5
          %s7533 = smul.addr %s7532, 8
          %s7534 = scalar_lea.vmem %s4, %s7533
        $region56: #{tpu_custom_call.1} parent=43 // pred_fallthru
          _
      $region44: #{tpu_custom_call.1} parent=5 // pred_fallthru
        _
    $region6: #{tpu_custom_call.1} parent=1 // loop_footer
      %s18 = sadd.s32 1, %s14
    $region7: #{tpu_custom_call.1} parent=1 // loop_footer_branch
      %13 = sbr.rel target = $region3
    $region8: #{tpu_custom_call.1} parent=1 // loop_exit
      _
    %7535 = vsyncpa [#allocation3], 1
    %s7536 = scalar_lea.sflag [#allocation3], 1
    %7537 = vsyncpa %s7536, 1

</llo_original>
